<compile_context>
chip_gen: v7x
topology: tpu7x:2x2x1
jax: 0.10.0
libtpu: 0.0.40
codegen_flags: <defaults>
</compile_context>

<pallas_src>
import functools

import jax
import jax.numpy as jnp
from jax.experimental import pallas as pl
from jax.experimental.pallas import tpu as pltpu


def _round_up(v, m):
    return (v + m - 1) // m * m


def _basic_block_kernel(x_ref, w1_ref, b1_ref, w2_ref, b2_ref, mask_ref,
                        out_ref, hpad_ref, acc_ref, *, H, W, G):
    """Fused BasicBlock for one batch element (grid iterates over batch).

    x_ref   : (L, Cip)      flattened zero-padded input, channels lane-dense
    w1_ref  : (9, Cip, Cmp) conv1 weights (BN1 scale folded), one tap per row
    b1_ref  : (1, Cmp)      folded BN1 bias (zero-padded)
    w2_ref  : (9, Cmp, Cop) conv2 weights (BN2 scale folded)
    b2_ref  : (1, Cop)      folded BN2 bias
    mask_ref: (M, 1)        1.0 on interior columns, 0.0 on the two halo cols
    out_ref : (M, Cop)      wide output slab (rows 1..H, all W+2 columns)
    hpad_ref: (L, Cmp)      padded intermediate activation (input dtype)
    acc_ref : (M, Cmp)      shared f32 matmul accumulator
    """
    f32 = jnp.float32
    Wp = W + 2
    M = H * Wp
    slab = G + Wp                       # first row of the interior slab

    # hpad's halo rows / guard rows need zeros exactly once: scratch persists
    # across grid iterations and those rows are never overwritten afterwards.
    @pl.when(pl.program_id(0) == 0)
    def _init():
        hpad_ref[...] = jnp.zeros_like(hpad_ref)

    def conv3x3(src_ref, w_ref):
        # 3x3 conv as 9 accumulating shifted matmuls (no im2col scratch):
        # the tap offset is a static row (sublane) shift, channels stay on
        # the lane axis, K = N = padded channel count (MXU-friendly).
        for t in range(9):
            dy, dx = divmod(t, 3)
            shift = (dy - 1) * Wp + (dx - 1)
            lhs = src_ref[pl.ds(slab + shift, M), :]
            contrib = jnp.dot(lhs, w_ref[t], preferred_element_type=f32)
            if t == 0:
                acc_ref[...] = contrib
            else:
                acc_ref[...] += contrib

    # conv1 + bn1 + relu -> written straight into hpad's interior slab
    # (the intermediate activation never touches HBM).
    conv3x3(x_ref, w1_ref)
    h = jnp.maximum(acc_ref[...] + b1_ref[...], 0.0)
    h = h * mask_ref[...]               # keep conv zero-padding in halo columns
    hpad_ref[pl.ds(slab, M), :] = h.astype(hpad_ref.dtype)

    # conv2 + bn2 + identity residual + relu.  The residual is re-read from
    # the already-resident input slab in the same flattened layout (its halo
    # columns are zeros, so no masking needed); epilogue stays f32.
    conv3x3(hpad_ref, w2_ref)
    o = acc_ref[...] + b2_ref[...] + x_ref[pl.ds(slab, M), :].astype(f32)
    out_ref[...] = jnp.maximum(o, 0.0).astype(out_ref.dtype)


def _fold_bn_into_conv(w_hwio, gamma, beta, mean, var, ci_pad, co_pad,
                       w_dtype, eps=1e-5):
    """Fold inference BatchNorm into conv weights, zero-pad channels."""
    scale = gamma / jnp.sqrt(var + eps)                       # (Co,)
    bias = beta - mean * scale                                # (Co,)
    kh, kw, ci, co = w_hwio.shape
    w = w_hwio.astype(jnp.float32) * scale[None, None, None, :]
    w = jnp.pad(w, ((0, 0), (0, 0), (0, ci_pad - ci), (0, co_pad - co)))
    w = w.reshape(kh * kw, ci_pad, co_pad).astype(w_dtype)    # (9, Cip, Cop)
    b = jnp.pad(bias, (0, co_pad - co)).reshape(1, co_pad).astype(jnp.float32)
    return w, b


def basic_block_forward_nhwc(x_nhwc, params):
    """Fused BasicBlock forward (stride=1, upsample=None), NHWC in/out."""
    N, H, W, Cin = x_nhwc.shape
    dtype = x_nhwc.dtype
    planes = params["w1_hwio"].shape[3]
    Cout = params["w2_hwio"].shape[3]
    assert Cin == planes == Cout, "identity residual requires inplanes == planes"

    LANE = 128                          # lane-dense channel padding
    Cip = _round_up(Cin, LANE)
    Cmp = _round_up(planes, LANE)
    Cop = _round_up(Cout, LANE)

    w1, b1 = _fold_bn_into_conv(params["w1_hwio"], params["bn1_gamma"],
                                params["bn1_beta"], params["bn1_mean"],
                                params["bn1_var"], Cip, Cmp, dtype)
    w2, b2 = _fold_bn_into_conv(params["w2_hwio"], params["bn2_gamma"],
                                params["bn2_beta"], params["bn2_mean"],
                                params["bn2_var"], Cmp, Cop, dtype)

    Wp = W + 2
    G = (-Wp) % 8 or 8                  # front guard row count -> slab 8-aligned
    L = _round_up(G + (H + 2) * Wp + 1, 8)
    M = H * Wp

    # Flattened, zero-padded, lane-dense input: (N, L, Cip).  XLA fuses these
    # pads / reshapes with the surrounding layout change into one pass.
    xp = jnp.pad(x_nhwc, ((0, 0), (1, 1), (1, 1), (0, Cip - Cin)))
    xp = xp.reshape(N, (H + 2) * Wp, Cip)
    xp = jnp.pad(xp, ((0, 0), (G, L - G - (H + 2) * Wp), (0, 0)))

    # Interior-column mask for the wide rows (padded column index in [1, W]).
    col = jnp.arange(Wp, dtype=jnp.int32)
    mask = jnp.tile(((col >= 1) & (col <= W)).astype(jnp.float32), H)
    mask = mask.reshape(M, 1)

    kernel = functools.partial(_basic_block_kernel, H=H, W=W, G=G)

    out_flat = pl.pallas_call(
        kernel,
        out_shape=jax.ShapeDtypeStruct((N, M, Cop), dtype),
        grid_spec=pltpu.PrefetchScalarGridSpec(
            num_scalar_prefetch=0,
            grid=(N,),
            in_specs=[
                pl.BlockSpec((None, L, Cip), lambda n: (n, 0, 0)),
                pl.BlockSpec((9, Cip, Cmp), lambda n: (0, 0, 0)),
                pl.BlockSpec((1, Cmp), lambda n: (0, 0)),
                pl.BlockSpec((9, Cmp, Cop), lambda n: (0, 0, 0)),
                pl.BlockSpec((1, Cop), lambda n: (0, 0)),
                pl.BlockSpec((M, 1), lambda n: (0, 0)),
            ],
            out_specs=pl.BlockSpec((None, M, Cop), lambda n: (n, 0, 0)),
            scratch_shapes=[
                pltpu.VMEM((L, Cmp), dtype),          # padded intermediate h
                pltpu.VMEM((M, Cmp), jnp.float32),    # shared f32 accumulator
            ]),
        compiler_params=pltpu.CompilerParams(
            dimension_semantics=("parallel",),
            vmem_limit_bytes=32 * 1024 * 1024),
    )(xp, w1, b1, w2, b2, mask)

    # Strip the wide-row halo columns and the channel padding.
    return out_flat.reshape(N, H, Wp, Cop)[:, :, 1:W + 1, :Cout]


@jax.jit
def basic_block_forward(x_nchw, params):
    """NCHW wrapper matching the PyTorch module interface.

    In a full channels-last pipeline call basic_block_forward_nhwc directly
    and skip the two layout transposes.
    """
    x = jnp.transpose(x_nchw, (0, 2, 3, 1))          # NCHW -> NHWC
    out = basic_block_forward_nhwc(x, params)
    return jnp.transpose(out, (0, 3, 1, 2))          # NHWC -> NCHW


def init_basic_block_params(key, inplanes, planes, dtype=jnp.float32):
    """Deterministic parameter init matching BasicBlock(inplanes, planes)."""
    keys = jax.random.split(key, 10)
    # conv weights, PyTorch layout (Cout, Cin, 3, 3) -> stored HWIO (3,3,Ci,Co)
    w1 = jax.random.normal(keys[0], (planes, inplanes, 3, 3), dtype) * 0.1
    w2 = jax.random.normal(keys[1], (planes, planes, 3, 3), dtype) * 0.1
    w1_hwio = jnp.transpose(w1, (2, 3, 1, 0))
    w2_hwio = jnp.transpose(w2, (2, 3, 1, 0))

    def bn(k0, k1, k2, k3):
        gamma = 1.0 + 0.1 * jax.random.normal(keys[k0], (planes,), jnp.float32)
        beta = 0.1 * jax.random.normal(keys[k1], (planes,), jnp.float32)
        mean = 0.1 * jax.random.normal(keys[k2], (planes,), jnp.float32)
        var = jax.random.uniform(keys[k3], (planes,), jnp.float32, 0.5, 1.5)
        return gamma, beta, mean, var

    g1, b1, m1, v1 = bn(2, 3, 4, 5)
    g2, b2, m2, v2 = bn(6, 7, 8, 9)
    return dict(w1_hwio=w1_hwio, w2_hwio=w2_hwio,
                bn1_gamma=g1, bn1_beta=b1, bn1_mean=m1, bn1_var=v1,
                bn2_gamma=g2, bn2_beta=b2, bn2_mean=m2, bn2_var=v2)


def _reference_forward(x_nchw, params, eps=1e-5):
    """Pure-JAX reference (lax.conv, unfolded BN) for a correctness check."""
    dn = ("NCHW", "HWIO", "NCHW")
    s1 = params["bn1_gamma"] / jnp.sqrt(params["bn1_var"] + eps)
    c1 = params["bn1_beta"] - params["bn1_mean"] * s1
    s2 = params["bn2_gamma"] / jnp.sqrt(params["bn2_var"] + eps)
    c2 = params["bn2_beta"] - params["bn2_mean"] * s2

    h = jax.lax.conv_general_dilated(x_nchw, params["w1_hwio"], (1, 1),
                                     ((1, 1), (1, 1)), dimension_numbers=dn)
    h = h * s1[None, :, None, None] + c1[None, :, None, None]
    h = jnp.maximum(h, 0.0)
    o = jax.lax.conv_general_dilated(h, params["w2_hwio"], (1, 1),
                                     ((1, 1), (1, 1)), dimension_numbers=dn)
    o = o * s2[None, :, None, None] + c2[None, :, None, None]
    o = o + x_nchw
    return jnp.maximum(o, 0.0)


if __name__ == "__main__":
    key = jax.random.PRNGKey(0)
    kx, kp = jax.random.split(key)

    N, C, H, W = 2, 8, 16, 16  # inplanes == planes (identity residual)
    x = jax.random.normal(kx, (N, C, H, W), jnp.float32)
    params = init_basic_block_params(kp, inplanes=C, planes=C)

    out = basic_block_forward(x, params)
    out = jax.block_until_ready(out)

    ref = _reference_forward(x, params)
    assert out.shape == (N, C, H, W)
    assert jnp.allclose(out, ref, atol=1e-4, rtol=1e-4), "mismatch vs reference"

    print("KERNEL_OK")
</pallas_src>

<mosaic_0001>
module attributes {stable_mosaic.version = 11 : i64} {
  func.func @_basic_block_kernel(%arg0: i32, %arg1: memref<1x336x128xf32, #tpu.memory_space<vmem>>, %arg2: memref<9x128x128xf32, #tpu.memory_space<vmem>>, %arg3: memref<1x128xf32, #tpu.memory_space<vmem>>, %arg4: memref<9x128x128xf32, #tpu.memory_space<vmem>>, %arg5: memref<1x128xf32, #tpu.memory_space<vmem>>, %arg6: memref<288x1xf32, #tpu.memory_space<vmem>>, %arg7: memref<1x288x128xf32, #tpu.memory_space<vmem>>, %arg8: memref<336x128xf32, #tpu.memory_space<vmem>>, %arg9: memref<288x128xf32, #tpu.memory_space<vmem>>) attributes {dimension_semantics = [#tpu.dimension_semantics<parallel>], iteration_bounds = array<i64: 2>, scalar_prefetch = 0 : i64, scratch_operands = 2 : i64, tpu.core_type = #tpu.core_type<tc>, window_params = [{transform_indices = @transform_0, window_bounds = array<i64: 1, 336, 128>}, {pipeline_mode = #tpu.pipeline_mode<synchronous>, transform_indices = @transform_1, window_bounds = array<i64: 9, 128, 128>}, {pipeline_mode = #tpu.pipeline_mode<synchronous>, transform_indices = @transform_2, window_bounds = array<i64: 1, 128>}, {pipeline_mode = #tpu.pipeline_mode<synchronous>, transform_indices = @transform_3, window_bounds = array<i64: 9, 128, 128>}, {pipeline_mode = #tpu.pipeline_mode<synchronous>, transform_indices = @transform_4, window_bounds = array<i64: 1, 128>}, {pipeline_mode = #tpu.pipeline_mode<synchronous>, transform_indices = @transform_5, window_bounds = array<i64: 288, 1>}, {transform_indices = @transform_6, window_bounds = array<i64: 1, 288, 128>}]} {
    %c0_i32 = arith.constant 0 : i32
    %0 = arith.cmpi eq, %arg0, %c0_i32 : i32
    %1 = arith.extui %0 : i1 to i32
    %c0_i32_0 = arith.constant 0 : i32
    %2 = arith.cmpi ne, %1, %c0_i32_0 : i32
    scf.if %2 {
      %cst_190 = arith.constant 0.000000e+00 : f32
      %156 = vector.broadcast %cst_190 : f32 to vector<336x128xf32>
      %c0_191 = arith.constant 0 : index
      %c0_192 = arith.constant 0 : index
      %157 = vector.load %arg8[%c0_191, %c0_192] : memref<336x128xf32, #tpu.memory_space<vmem>>, vector<336x128xf32>
      tpu.vector_store %arg8[%c0_191, %c0_192], %156 {strides = array<i32>} : memref<336x128xf32, #tpu.memory_space<vmem>>, vector<336x128xf32>,
    } else {
    }
    %c0 = arith.constant 0 : index
    %c5 = arith.constant 5 : index
    %c0_1 = arith.constant 0 : index
    %3 = vector.load %arg1[%c0, %c5, %c0_1] : memref<1x336x128xf32, #tpu.memory_space<vmem>>, vector<1x288x128xf32>
    %4 = vector.shape_cast %3 : vector<1x288x128xf32> to vector<288x128xf32>
    %c0_2 = arith.constant 0 : index
    %c0_3 = arith.constant 0 : index
    %c0_4 = arith.constant 0 : index
    %5 = vector.load %arg2[%c0_2, %c0_3, %c0_4] : memref<9x128x128xf32, #tpu.memory_space<vmem>>, vector<1x128x128xf32>
    %6 = vector.shape_cast %5 : vector<1x128x128xf32> to vector<128x128xf32>
    %cst = arith.constant dense<0.000000e+00> : vector<288x128xf32>
    %7 = tpu.matmul %4, %6, %cst {dimension_numbers = #tpu.dot_dimension_numbers<[1], [0], [0], [1], [0, 0, 1, 1], [], []>} : vector<288x128xf32>, vector<128x128xf32>, vector<288x128xf32> -> vector<288x128xf32>
    %c0_5 = arith.constant 0 : index
    %c0_6 = arith.constant 0 : index
    %8 = vector.load %arg9[%c0_5, %c0_6] : memref<288x128xf32, #tpu.memory_space<vmem>>, vector<288x128xf32>
    tpu.vector_store %arg9[%c0_5, %c0_6], %7 {strides = array<i32>} : memref<288x128xf32, #tpu.memory_space<vmem>>, vector<288x128xf32>,
    %c0_7 = arith.constant 0 : index
    %c6 = arith.constant 6 : index
    %c0_8 = arith.constant 0 : index
    %9 = vector.load %arg1[%c0_7, %c6, %c0_8] : memref<1x336x128xf32, #tpu.memory_space<vmem>>, vector<1x288x128xf32>
    %10 = vector.shape_cast %9 : vector<1x288x128xf32> to vector<288x128xf32>
    %c1 = arith.constant 1 : index
    %c0_9 = arith.constant 0 : index
    %c0_10 = arith.constant 0 : index
    %11 = vector.load %arg2[%c1, %c0_9, %c0_10] : memref<9x128x128xf32, #tpu.memory_space<vmem>>, vector<1x128x128xf32>
    %12 = vector.shape_cast %11 : vector<1x128x128xf32> to vector<128x128xf32>
    %cst_11 = arith.constant dense<0.000000e+00> : vector<288x128xf32>
    %13 = tpu.matmul %10, %12, %cst_11 {dimension_numbers = #tpu.dot_dimension_numbers<[1], [0], [0], [1], [0, 0, 1, 1], [], []>} : vector<288x128xf32>, vector<128x128xf32>, vector<288x128xf32> -> vector<288x128xf32>
    %c0_12 = arith.constant 0 : index
    %c0_13 = arith.constant 0 : index
    %14 = vector.load %arg9[%c0_12, %c0_13] : memref<288x128xf32, #tpu.memory_space<vmem>>, vector<288x128xf32>
    %15 = arith.addf %14, %13 : vector<288x128xf32>
    %c0_14 = arith.constant 0 : index
    %c0_15 = arith.constant 0 : index
    %16 = vector.load %arg9[%c0_14, %c0_15] : memref<288x128xf32, #tpu.memory_space<vmem>>, vector<288x128xf32>
    tpu.vector_store %arg9[%c0_14, %c0_15], %15 {strides = array<i32>} : memref<288x128xf32, #tpu.memory_space<vmem>>, vector<288x128xf32>,
    %c0_16 = arith.constant 0 : index
    %c7 = arith.constant 7 : index
    %c0_17 = arith.constant 0 : index
    %17 = vector.load %arg1[%c0_16, %c7, %c0_17] : memref<1x336x128xf32, #tpu.memory_space<vmem>>, vector<1x288x128xf32>
    %18 = vector.shape_cast %17 : vector<1x288x128xf32> to vector<288x128xf32>
    %c2 = arith.constant 2 : index
    %c0_18 = arith.constant 0 : index
    %c0_19 = arith.constant 0 : index
    %19 = vector.load %arg2[%c2, %c0_18, %c0_19] : memref<9x128x128xf32, #tpu.memory_space<vmem>>, vector<1x128x128xf32>
    %20 = vector.shape_cast %19 : vector<1x128x128xf32> to vector<128x128xf32>
    %cst_20 = arith.constant dense<0.000000e+00> : vector<288x128xf32>
    %21 = tpu.matmul %18, %20, %cst_20 {dimension_numbers = #tpu.dot_dimension_numbers<[1], [0], [0], [1], [0, 0, 1, 1], [], []>} : vector<288x128xf32>, vector<128x128xf32>, vector<288x128xf32> -> vector<288x128xf32>
    %c0_21 = arith.constant 0 : index
    %c0_22 = arith.constant 0 : index
    %22 = vector.load %arg9[%c0_21, %c0_22] : memref<288x128xf32, #tpu.memory_space<vmem>>, vector<288x128xf32>
    %23 = arith.addf %22, %21 : vector<288x128xf32>
    %c0_23 = arith.constant 0 : index
    %c0_24 = arith.constant 0 : index
    %24 = vector.load %arg9[%c0_23, %c0_24] : memref<288x128xf32, #tpu.memory_space<vmem>>, vector<288x128xf32>
    tpu.vector_store %arg9[%c0_23, %c0_24], %23 {strides = array<i32>} : memref<288x128xf32, #tpu.memory_space<vmem>>, vector<288x128xf32>,
    %c0_25 = arith.constant 0 : index
    %c23 = arith.constant 23 : index
    %c0_26 = arith.constant 0 : index
    %25 = vector.load %arg1[%c0_25, %c23, %c0_26] : memref<1x336x128xf32, #tpu.memory_space<vmem>>, vector<1x288x128xf32>
    %26 = vector.shape_cast %25 : vector<1x288x128xf32> to vector<288x128xf32>
    %c3 = arith.constant 3 : index
    %c0_27 = arith.constant 0 : index
    %c0_28 = arith.constant 0 : index
    %27 = vector.load %arg2[%c3, %c0_27, %c0_28] : memref<9x128x128xf32, #tpu.memory_space<vmem>>, vector<1x128x128xf32>
    %28 = vector.shape_cast %27 : vector<1x128x128xf32> to vector<128x128xf32>
    %cst_29 = arith.constant dense<0.000000e+00> : vector<288x128xf32>
    %29 = tpu.matmul %26, %28, %cst_29 {dimension_numbers = #tpu.dot_dimension_numbers<[1], [0], [0], [1], [0, 0, 1, 1], [], []>} : vector<288x128xf32>, vector<128x128xf32>, vector<288x128xf32> -> vector<288x128xf32>
    %c0_30 = arith.constant 0 : index
    %c0_31 = arith.constant 0 : index
    %30 = vector.load %arg9[%c0_30, %c0_31] : memref<288x128xf32, #tpu.memory_space<vmem>>, vector<288x128xf32>
    %31 = arith.addf %30, %29 : vector<288x128xf32>
    %c0_32 = arith.constant 0 : index
    %c0_33 = arith.constant 0 : index
    %32 = vector.load %arg9[%c0_32, %c0_33] : memref<288x128xf32, #tpu.memory_space<vmem>>, vector<288x128xf32>
    tpu.vector_store %arg9[%c0_32, %c0_33], %31 {strides = array<i32>} : memref<288x128xf32, #tpu.memory_space<vmem>>, vector<288x128xf32>,
    %c0_34 = arith.constant 0 : index
    %c24 = arith.constant 24 : index
    %c0_35 = arith.constant 0 : index
    %33 = vector.load %arg1[%c0_34, %c24, %c0_35] : memref<1x336x128xf32, #tpu.memory_space<vmem>>, vector<1x288x128xf32>
    %34 = vector.shape_cast %33 : vector<1x288x128xf32> to vector<288x128xf32>
    %c4 = arith.constant 4 : index
    %c0_36 = arith.constant 0 : index
    %c0_37 = arith.constant 0 : index
    %35 = vector.load %arg2[%c4, %c0_36, %c0_37] : memref<9x128x128xf32, #tpu.memory_space<vmem>>, vector<1x128x128xf32>
    %36 = vector.shape_cast %35 : vector<1x128x128xf32> to vector<128x128xf32>
    %cst_38 = arith.constant dense<0.000000e+00> : vector<288x128xf32>
    %37 = tpu.matmul %34, %36, %cst_38 {dimension_numbers = #tpu.dot_dimension_numbers<[1], [0], [0], [1], [0, 0, 1, 1], [], []>} : vector<288x128xf32>, vector<128x128xf32>, vector<288x128xf32> -> vector<288x128xf32>
    %c0_39 = arith.constant 0 : index
    %c0_40 = arith.constant 0 : index
    %38 = vector.load %arg9[%c0_39, %c0_40] : memref<288x128xf32, #tpu.memory_space<vmem>>, vector<288x128xf32>
    %39 = arith.addf %38, %37 : vector<288x128xf32>
    %c0_41 = arith.constant 0 : index
    %c0_42 = arith.constant 0 : index
    %40 = vector.load %arg9[%c0_41, %c0_42] : memref<288x128xf32, #tpu.memory_space<vmem>>, vector<288x128xf32>
    tpu.vector_store %arg9[%c0_41, %c0_42], %39 {strides = array<i32>} : memref<288x128xf32, #tpu.memory_space<vmem>>, vector<288x128xf32>,
    %c0_43 = arith.constant 0 : index
    %c25 = arith.constant 25 : index
    %c0_44 = arith.constant 0 : index
    %41 = vector.load %arg1[%c0_43, %c25, %c0_44] : memref<1x336x128xf32, #tpu.memory_space<vmem>>, vector<1x288x128xf32>
    %42 = vector.shape_cast %41 : vector<1x288x128xf32> to vector<288x128xf32>
    %c5_45 = arith.constant 5 : index
    %c0_46 = arith.constant 0 : index
    %c0_47 = arith.constant 0 : index
    %43 = vector.load %arg2[%c5_45, %c0_46, %c0_47] : memref<9x128x128xf32, #tpu.memory_space<vmem>>, vector<1x128x128xf32>
    %44 = vector.shape_cast %43 : vector<1x128x128xf32> to vector<128x128xf32>
    %cst_48 = arith.constant dense<0.000000e+00> : vector<288x128xf32>
    %45 = tpu.matmul %42, %44, %cst_48 {dimension_numbers = #tpu.dot_dimension_numbers<[1], [0], [0], [1], [0, 0, 1, 1], [], []>} : vector<288x128xf32>, vector<128x128xf32>, vector<288x128xf32> -> vector<288x128xf32>
    %c0_49 = arith.constant 0 : index
    %c0_50 = arith.constant 0 : index
    %46 = vector.load %arg9[%c0_49, %c0_50] : memref<288x128xf32, #tpu.memory_space<vmem>>, vector<288x128xf32>
    %47 = arith.addf %46, %45 : vector<288x128xf32>
    %c0_51 = arith.constant 0 : index
    %c0_52 = arith.constant 0 : index
    %48 = vector.load %arg9[%c0_51, %c0_52] : memref<288x128xf32, #tpu.memory_space<vmem>>, vector<288x128xf32>
    tpu.vector_store %arg9[%c0_51, %c0_52], %47 {strides = array<i32>} : memref<288x128xf32, #tpu.memory_space<vmem>>, vector<288x128xf32>,
    %c0_53 = arith.constant 0 : index
    %c41 = arith.constant 41 : index
    %c0_54 = arith.constant 0 : index
    %49 = vector.load %arg1[%c0_53, %c41, %c0_54] : memref<1x336x128xf32, #tpu.memory_space<vmem>>, vector<1x288x128xf32>
    %50 = vector.shape_cast %49 : vector<1x288x128xf32> to vector<288x128xf32>
    %c6_55 = arith.constant 6 : index
    %c0_56 = arith.constant 0 : index
    %c0_57 = arith.constant 0 : index
    %51 = vector.load %arg2[%c6_55, %c0_56, %c0_57] : memref<9x128x128xf32, #tpu.memory_space<vmem>>, vector<1x128x128xf32>
    %52 = vector.shape_cast %51 : vector<1x128x128xf32> to vector<128x128xf32>
    %cst_58 = arith.constant dense<0.000000e+00> : vector<288x128xf32>
    %53 = tpu.matmul %50, %52, %cst_58 {dimension_numbers = #tpu.dot_dimension_numbers<[1], [0], [0], [1], [0, 0, 1, 1], [], []>} : vector<288x128xf32>, vector<128x128xf32>, vector<288x128xf32> -> vector<288x128xf32>
    %c0_59 = arith.constant 0 : index
    %c0_60 = arith.constant 0 : index
    %54 = vector.load %arg9[%c0_59, %c0_60] : memref<288x128xf32, #tpu.memory_space<vmem>>, vector<288x128xf32>
    %55 = arith.addf %54, %53 : vector<288x128xf32>
    %c0_61 = arith.constant 0 : index
    %c0_62 = arith.constant 0 : index
    %56 = vector.load %arg9[%c0_61, %c0_62] : memref<288x128xf32, #tpu.memory_space<vmem>>, vector<288x128xf32>
    tpu.vector_store %arg9[%c0_61, %c0_62], %55 {strides = array<i32>} : memref<288x128xf32, #tpu.memory_space<vmem>>, vector<288x128xf32>,
    %c0_63 = arith.constant 0 : index
    %c42 = arith.constant 42 : index
    %c0_64 = arith.constant 0 : index
    %57 = vector.load %arg1[%c0_63, %c42, %c0_64] : memref<1x336x128xf32, #tpu.memory_space<vmem>>, vector<1x288x128xf32>
    %58 = vector.shape_cast %57 : vector<1x288x128xf32> to vector<288x128xf32>
    %c7_65 = arith.constant 7 : index
    %c0_66 = arith.constant 0 : index
    %c0_67 = arith.constant 0 : index
    %59 = vector.load %arg2[%c7_65, %c0_66, %c0_67] : memref<9x128x128xf32, #tpu.memory_space<vmem>>, vector<1x128x128xf32>
    %60 = vector.shape_cast %59 : vector<1x128x128xf32> to vector<128x128xf32>
    %cst_68 = arith.constant dense<0.000000e+00> : vector<288x128xf32>
    %61 = tpu.matmul %58, %60, %cst_68 {dimension_numbers = #tpu.dot_dimension_numbers<[1], [0], [0], [1], [0, 0, 1, 1], [], []>} : vector<288x128xf32>, vector<128x128xf32>, vector<288x128xf32> -> vector<288x128xf32>
    %c0_69 = arith.constant 0 : index
    %c0_70 = arith.constant 0 : index
    %62 = vector.load %arg9[%c0_69, %c0_70] : memref<288x128xf32, #tpu.memory_space<vmem>>, vector<288x128xf32>
    %63 = arith.addf %62, %61 : vector<288x128xf32>
    %c0_71 = arith.constant 0 : index
    %c0_72 = arith.constant 0 : index
    %64 = vector.load %arg9[%c0_71, %c0_72] : memref<288x128xf32, #tpu.memory_space<vmem>>, vector<288x128xf32>
    tpu.vector_store %arg9[%c0_71, %c0_72], %63 {strides = array<i32>} : memref<288x128xf32, #tpu.memory_space<vmem>>, vector<288x128xf32>,
    %c0_73 = arith.constant 0 : index
    %c43 = arith.constant 43 : index
    %c0_74 = arith.constant 0 : index
    %65 = vector.load %arg1[%c0_73, %c43, %c0_74] : memref<1x336x128xf32, #tpu.memory_space<vmem>>, vector<1x288x128xf32>
    %66 = vector.shape_cast %65 : vector<1x288x128xf32> to vector<288x128xf32>
    %c8 = arith.constant 8 : index
    %c0_75 = arith.constant 0 : index
    %c0_76 = arith.constant 0 : index
    %67 = vector.load %arg2[%c8, %c0_75, %c0_76] : memref<9x128x128xf32, #tpu.memory_space<vmem>>, vector<1x128x128xf32>
    %68 = vector.shape_cast %67 : vector<1x128x128xf32> to vector<128x128xf32>
    %cst_77 = arith.constant dense<0.000000e+00> : vector<288x128xf32>
    %69 = tpu.matmul %66, %68, %cst_77 {dimension_numbers = #tpu.dot_dimension_numbers<[1], [0], [0], [1], [0, 0, 1, 1], [], []>} : vector<288x128xf32>, vector<128x128xf32>, vector<288x128xf32> -> vector<288x128xf32>
    %c0_78 = arith.constant 0 : index
    %c0_79 = arith.constant 0 : index
    %70 = vector.load %arg9[%c0_78, %c0_79] : memref<288x128xf32, #tpu.memory_space<vmem>>, vector<288x128xf32>
    %71 = arith.addf %70, %69 : vector<288x128xf32>
    %c0_80 = arith.constant 0 : index
    %c0_81 = arith.constant 0 : index
    %72 = vector.load %arg9[%c0_80, %c0_81] : memref<288x128xf32, #tpu.memory_space<vmem>>, vector<288x128xf32>
    tpu.vector_store %arg9[%c0_80, %c0_81], %71 {strides = array<i32>} : memref<288x128xf32, #tpu.memory_space<vmem>>, vector<288x128xf32>,
    %c0_82 = arith.constant 0 : index
    %c0_83 = arith.constant 0 : index
    %73 = vector.load %arg9[%c0_82, %c0_83] : memref<288x128xf32, #tpu.memory_space<vmem>>, vector<288x128xf32>
    %c0_84 = arith.constant 0 : index
    %c0_85 = arith.constant 0 : index
    %74 = vector.load %arg3[%c0_84, %c0_85] : memref<1x128xf32, #tpu.memory_space<vmem>>, vector<1x128xf32>
    %75 = vector.broadcast %74 : vector<1x128xf32> to vector<288x128xf32>
    %76 = arith.addf %73, %75 : vector<288x128xf32>
    %cst_86 = arith.constant 0.000000e+00 : f32
    %77 = vector.broadcast %cst_86 : f32 to vector<288x128xf32>
    %78 = arith.maximumf %76, %77 : vector<288x128xf32>
    %c0_87 = arith.constant 0 : index
    %c0_88 = arith.constant 0 : index
    %79 = vector.load %arg6[%c0_87, %c0_88] : memref<288x1xf32, #tpu.memory_space<vmem>>, vector<288x1xf32>
    %80 = vector.broadcast %79 : vector<288x1xf32> to vector<288x128xf32>
    %81 = arith.mulf %78, %80 : vector<288x128xf32>
    %c24_89 = arith.constant 24 : index
    %c0_90 = arith.constant 0 : index
    %82 = vector.load %arg8[%c24_89, %c0_90] : memref<336x128xf32, #tpu.memory_space<vmem>>, vector<288x128xf32>
    tpu.vector_store %arg8[%c24_89, %c0_90], %81 {strides = array<i32>} : memref<336x128xf32, #tpu.memory_space<vmem>>, vector<288x128xf32>,
    %c5_91 = arith.constant 5 : index
    %c0_92 = arith.constant 0 : index
    %83 = vector.load %arg8[%c5_91, %c0_92] : memref<336x128xf32, #tpu.memory_space<vmem>>, vector<288x128xf32>
    %c0_93 = arith.constant 0 : index
    %c0_94 = arith.constant 0 : index
    %c0_95 = arith.constant 0 : index
    %84 = vector.load %arg4[%c0_93, %c0_94, %c0_95] : memref<9x128x128xf32, #tpu.memory_space<vmem>>, vector<1x128x128xf32>
    %85 = vector.shape_cast %84 : vector<1x128x128xf32> to vector<128x128xf32>
    %cst_96 = arith.constant dense<0.000000e+00> : vector<288x128xf32>
    %86 = tpu.matmul %83, %85, %cst_96 {dimension_numbers = #tpu.dot_dimension_numbers<[1], [0], [0], [1], [0, 0, 1, 1], [], []>} : vector<288x128xf32>, vector<128x128xf32>, vector<288x128xf32> -> vector<288x128xf32>
    %c0_97 = arith.constant 0 : index
    %c0_98 = arith.constant 0 : index
    %87 = vector.load %arg9[%c0_97, %c0_98] : memref<288x128xf32, #tpu.memory_space<vmem>>, vector<288x128xf32>
    tpu.vector_store %arg9[%c0_97, %c0_98], %86 {strides = array<i32>} : memref<288x128xf32, #tpu.memory_space<vmem>>, vector<288x128xf32>,
    %c6_99 = arith.constant 6 : index
    %c0_100 = arith.constant 0 : index
    %88 = vector.load %arg8[%c6_99, %c0_100] : memref<336x128xf32, #tpu.memory_space<vmem>>, vector<288x128xf32>
    %c1_101 = arith.constant 1 : index
    %c0_102 = arith.constant 0 : index
    %c0_103 = arith.constant 0 : index
    %89 = vector.load %arg4[%c1_101, %c0_102, %c0_103] : memref<9x128x128xf32, #tpu.memory_space<vmem>>, vector<1x128x128xf32>
    %90 = vector.shape_cast %89 : vector<1x128x128xf32> to vector<128x128xf32>
    %cst_104 = arith.constant dense<0.000000e+00> : vector<288x128xf32>
    %91 = tpu.matmul %88, %90, %cst_104 {dimension_numbers = #tpu.dot_dimension_numbers<[1], [0], [0], [1], [0, 0, 1, 1], [], []>} : vector<288x128xf32>, vector<128x128xf32>, vector<288x128xf32> -> vector<288x128xf32>
    %c0_105 = arith.constant 0 : index
    %c0_106 = arith.constant 0 : index
    %92 = vector.load %arg9[%c0_105, %c0_106] : memref<288x128xf32, #tpu.memory_space<vmem>>, vector<288x128xf32>
    %93 = arith.addf %92, %91 : vector<288x128xf32>
    %c0_107 = arith.constant 0 : index
    %c0_108 = arith.constant 0 : index
    %94 = vector.load %arg9[%c0_107, %c0_108] : memref<288x128xf32, #tpu.memory_space<vmem>>, vector<288x128xf32>
    tpu.vector_store %arg9[%c0_107, %c0_108], %93 {strides = array<i32>} : memref<288x128xf32, #tpu.memory_space<vmem>>, vector<288x128xf32>,
    %c7_109 = arith.constant 7 : index
    %c0_110 = arith.constant 0 : index
    %95 = vector.load %arg8[%c7_109, %c0_110] : memref<336x128xf32, #tpu.memory_space<vmem>>, vector<288x128xf32>
    %c2_111 = arith.constant 2 : index
    %c0_112 = arith.constant 0 : index
    %c0_113 = arith.constant 0 : index
    %96 = vector.load %arg4[%c2_111, %c0_112, %c0_113] : memref<9x128x128xf32, #tpu.memory_space<vmem>>, vector<1x128x128xf32>
    %97 = vector.shape_cast %96 : vector<1x128x128xf32> to vector<128x128xf32>
    %cst_114 = arith.constant dense<0.000000e+00> : vector<288x128xf32>
    %98 = tpu.matmul %95, %97, %cst_114 {dimension_numbers = #tpu.dot_dimension_numbers<[1], [0], [0], [1], [0, 0, 1, 1], [], []>} : vector<288x128xf32>, vector<128x128xf32>, vector<288x128xf32> -> vector<288x128xf32>
    %c0_115 = arith.constant 0 : index
    %c0_116 = arith.constant 0 : index
    %99 = vector.load %arg9[%c0_115, %c0_116] : memref<288x128xf32, #tpu.memory_space<vmem>>, vector<288x128xf32>
    %100 = arith.addf %99, %98 : vector<288x128xf32>
    %c0_117 = arith.constant 0 : index
    %c0_118 = arith.constant 0 : index
    %101 = vector.load %arg9[%c0_117, %c0_118] : memref<288x128xf32, #tpu.memory_space<vmem>>, vector<288x128xf32>
    tpu.vector_store %arg9[%c0_117, %c0_118], %100 {strides = array<i32>} : memref<288x128xf32, #tpu.memory_space<vmem>>, vector<288x128xf32>,
    %c23_119 = arith.constant 23 : index
    %c0_120 = arith.constant 0 : index
    %102 = vector.load %arg8[%c23_119, %c0_120] : memref<336x128xf32, #tpu.memory_space<vmem>>, vector<288x128xf32>
    %c3_121 = arith.constant 3 : index
    %c0_122 = arith.constant 0 : index
    %c0_123 = arith.constant 0 : index
    %103 = vector.load %arg4[%c3_121, %c0_122, %c0_123] : memref<9x128x128xf32, #tpu.memory_space<vmem>>, vector<1x128x128xf32>
    %104 = vector.shape_cast %103 : vector<1x128x128xf32> to vector<128x128xf32>
    %cst_124 = arith.constant dense<0.000000e+00> : vector<288x128xf32>
    %105 = tpu.matmul %102, %104, %cst_124 {dimension_numbers = #tpu.dot_dimension_numbers<[1], [0], [0], [1], [0, 0, 1, 1], [], []>} : vector<288x128xf32>, vector<128x128xf32>, vector<288x128xf32> -> vector<288x128xf32>
    %c0_125 = arith.constant 0 : index
    %c0_126 = arith.constant 0 : index
    %106 = vector.load %arg9[%c0_125, %c0_126] : memref<288x128xf32, #tpu.memory_space<vmem>>, vector<288x128xf32>
    %107 = arith.addf %106, %105 : vector<288x128xf32>
    %c0_127 = arith.constant 0 : index
    %c0_128 = arith.constant 0 : index
    %108 = vector.load %arg9[%c0_127, %c0_128] : memref<288x128xf32, #tpu.memory_space<vmem>>, vector<288x128xf32>
    tpu.vector_store %arg9[%c0_127, %c0_128], %107 {strides = array<i32>} : memref<288x128xf32, #tpu.memory_space<vmem>>, vector<288x128xf32>,
    %c24_129 = arith.constant 24 : index
    %c0_130 = arith.constant 0 : index
    %109 = vector.load %arg8[%c24_129, %c0_130] : memref<336x128xf32, #tpu.memory_space<vmem>>, vector<288x128xf32>
    %c4_131 = arith.constant 4 : index
    %c0_132 = arith.constant 0 : index
    %c0_133 = arith.constant 0 : index
    %110 = vector.load %arg4[%c4_131, %c0_132, %c0_133] : memref<9x128x128xf32, #tpu.memory_space<vmem>>, vector<1x128x128xf32>
    %111 = vector.shape_cast %110 : vector<1x128x128xf32> to vector<128x128xf32>
    %cst_134 = arith.constant dense<0.000000e+00> : vector<288x128xf32>
    %112 = tpu.matmul %109, %111, %cst_134 {dimension_numbers = #tpu.dot_dimension_numbers<[1], [0], [0], [1], [0, 0, 1, 1], [], []>} : vector<288x128xf32>, vector<128x128xf32>, vector<288x128xf32> -> vector<288x128xf32>
    %c0_135 = arith.constant 0 : index
    %c0_136 = arith.constant 0 : index
    %113 = vector.load %arg9[%c0_135, %c0_136] : memref<288x128xf32, #tpu.memory_space<vmem>>, vector<288x128xf32>
    %114 = arith.addf %113, %112 : vector<288x128xf32>
    %c0_137 = arith.constant 0 : index
    %c0_138 = arith.constant 0 : index
    %115 = vector.load %arg9[%c0_137, %c0_138] : memref<288x128xf32, #tpu.memory_space<vmem>>, vector<288x128xf32>
    tpu.vector_store %arg9[%c0_137, %c0_138], %114 {strides = array<i32>} : memref<288x128xf32, #tpu.memory_space<vmem>>, vector<288x128xf32>,
    %c25_139 = arith.constant 25 : index
    %c0_140 = arith.constant 0 : index
    %116 = vector.load %arg8[%c25_139, %c0_140] : memref<336x128xf32, #tpu.memory_space<vmem>>, vector<288x128xf32>
    %c5_141 = arith.constant 5 : index
    %c0_142 = arith.constant 0 : index
    %c0_143 = arith.constant 0 : index
    %117 = vector.load %arg4[%c5_141, %c0_142, %c0_143] : memref<9x128x128xf32, #tpu.memory_space<vmem>>, vector<1x128x128xf32>
    %118 = vector.shape_cast %117 : vector<1x128x128xf32> to vector<128x128xf32>
    %cst_144 = arith.constant dense<0.000000e+00> : vector<288x128xf32>
    %119 = tpu.matmul %116, %118, %cst_144 {dimension_numbers = #tpu.dot_dimension_numbers<[1], [0], [0], [1], [0, 0, 1, 1], [], []>} : vector<288x128xf32>, vector<128x128xf32>, vector<288x128xf32> -> vector<288x128xf32>
    %c0_145 = arith.constant 0 : index
    %c0_146 = arith.constant 0 : index
    %120 = vector.load %arg9[%c0_145, %c0_146] : memref<288x128xf32, #tpu.memory_space<vmem>>, vector<288x128xf32>
    %121 = arith.addf %120, %119 : vector<288x128xf32>
    %c0_147 = arith.constant 0 : index
    %c0_148 = arith.constant 0 : index
    %122 = vector.load %arg9[%c0_147, %c0_148] : memref<288x128xf32, #tpu.memory_space<vmem>>, vector<288x128xf32>
    tpu.vector_store %arg9[%c0_147, %c0_148], %121 {strides = array<i32>} : memref<288x128xf32, #tpu.memory_space<vmem>>, vector<288x128xf32>,
    %c41_149 = arith.constant 41 : index
    %c0_150 = arith.constant 0 : index
    %123 = vector.load %arg8[%c41_149, %c0_150] : memref<336x128xf32, #tpu.memory_space<vmem>>, vector<288x128xf32>
    %c6_151 = arith.constant 6 : index
    %c0_152 = arith.constant 0 : index
    %c0_153 = arith.constant 0 : index
    %124 = vector.load %arg4[%c6_151, %c0_152, %c0_153] : memref<9x128x128xf32, #tpu.memory_space<vmem>>, vector<1x128x128xf32>
    %125 = vector.shape_cast %124 : vector<1x128x128xf32> to vector<128x128xf32>
    %cst_154 = arith.constant dense<0.000000e+00> : vector<288x128xf32>
    %126 = tpu.matmul %123, %125, %cst_154 {dimension_numbers = #tpu.dot_dimension_numbers<[1], [0], [0], [1], [0, 0, 1, 1], [], []>} : vector<288x128xf32>, vector<128x128xf32>, vector<288x128xf32> -> vector<288x128xf32>
    %c0_155 = arith.constant 0 : index
    %c0_156 = arith.constant 0 : index
    %127 = vector.load %arg9[%c0_155, %c0_156] : memref<288x128xf32, #tpu.memory_space<vmem>>, vector<288x128xf32>
    %128 = arith.addf %127, %126 : vector<288x128xf32>
    %c0_157 = arith.constant 0 : index
    %c0_158 = arith.constant 0 : index
    %129 = vector.load %arg9[%c0_157, %c0_158] : memref<288x128xf32, #tpu.memory_space<vmem>>, vector<288x128xf32>
    tpu.vector_store %arg9[%c0_157, %c0_158], %128 {strides = array<i32>} : memref<288x128xf32, #tpu.memory_space<vmem>>, vector<288x128xf32>,
    %c42_159 = arith.constant 42 : index
    %c0_160 = arith.constant 0 : index
    %130 = vector.load %arg8[%c42_159, %c0_160] : memref<336x128xf32, #tpu.memory_space<vmem>>, vector<288x128xf32>
    %c7_161 = arith.constant 7 : index
    %c0_162 = arith.constant 0 : index
    %c0_163 = arith.constant 0 : index
    %131 = vector.load %arg4[%c7_161, %c0_162, %c0_163] : memref<9x128x128xf32, #tpu.memory_space<vmem>>, vector<1x128x128xf32>
    %132 = vector.shape_cast %131 : vector<1x128x128xf32> to vector<128x128xf32>
    %cst_164 = arith.constant dense<0.000000e+00> : vector<288x128xf32>
    %133 = tpu.matmul %130, %132, %cst_164 {dimension_numbers = #tpu.dot_dimension_numbers<[1], [0], [0], [1], [0, 0, 1, 1], [], []>} : vector<288x128xf32>, vector<128x128xf32>, vector<288x128xf32> -> vector<288x128xf32>
    %c0_165 = arith.constant 0 : index
    %c0_166 = arith.constant 0 : index
    %134 = vector.load %arg9[%c0_165, %c0_166] : memref<288x128xf32, #tpu.memory_space<vmem>>, vector<288x128xf32>
    %135 = arith.addf %134, %133 : vector<288x128xf32>
    %c0_167 = arith.constant 0 : index
    %c0_168 = arith.constant 0 : index
    %136 = vector.load %arg9[%c0_167, %c0_168] : memref<288x128xf32, #tpu.memory_space<vmem>>, vector<288x128xf32>
    tpu.vector_store %arg9[%c0_167, %c0_168], %135 {strides = array<i32>} : memref<288x128xf32, #tpu.memory_space<vmem>>, vector<288x128xf32>,
    %c43_169 = arith.constant 43 : index
    %c0_170 = arith.constant 0 : index
    %137 = vector.load %arg8[%c43_169, %c0_170] : memref<336x128xf32, #tpu.memory_space<vmem>>, vector<288x128xf32>
    %c8_171 = arith.constant 8 : index
    %c0_172 = arith.constant 0 : index
    %c0_173 = arith.constant 0 : index
    %138 = vector.load %arg4[%c8_171, %c0_172, %c0_173] : memref<9x128x128xf32, #tpu.memory_space<vmem>>, vector<1x128x128xf32>
    %139 = vector.shape_cast %138 : vector<1x128x128xf32> to vector<128x128xf32>
    %cst_174 = arith.constant dense<0.000000e+00> : vector<288x128xf32>
    %140 = tpu.matmul %137, %139, %cst_174 {dimension_numbers = #tpu.dot_dimension_numbers<[1], [0], [0], [1], [0, 0, 1, 1], [], []>} : vector<288x128xf32>, vector<128x128xf32>, vector<288x128xf32> -> vector<288x128xf32>
    %c0_175 = arith.constant 0 : index
    %c0_176 = arith.constant 0 : index
    %141 = vector.load %arg9[%c0_175, %c0_176] : memref<288x128xf32, #tpu.memory_space<vmem>>, vector<288x128xf32>
    %142 = arith.addf %141, %140 : vector<288x128xf32>
    %c0_177 = arith.constant 0 : index
    %c0_178 = arith.constant 0 : index
    %143 = vector.load %arg9[%c0_177, %c0_178] : memref<288x128xf32, #tpu.memory_space<vmem>>, vector<288x128xf32>
    tpu.vector_store %arg9[%c0_177, %c0_178], %142 {strides = array<i32>} : memref<288x128xf32, #tpu.memory_space<vmem>>, vector<288x128xf32>,
    %c0_179 = arith.constant 0 : index
    %c0_180 = arith.constant 0 : index
    %144 = vector.load %arg9[%c0_179, %c0_180] : memref<288x128xf32, #tpu.memory_space<vmem>>, vector<288x128xf32>
    %c0_181 = arith.constant 0 : index
    %c0_182 = arith.constant 0 : index
    %145 = vector.load %arg5[%c0_181, %c0_182] : memref<1x128xf32, #tpu.memory_space<vmem>>, vector<1x128xf32>
    %146 = vector.broadcast %145 : vector<1x128xf32> to vector<288x128xf32>
    %147 = arith.addf %144, %146 : vector<288x128xf32>
    %c0_183 = arith.constant 0 : index
    %c24_184 = arith.constant 24 : index
    %c0_185 = arith.constant 0 : index
    %148 = vector.load %arg1[%c0_183, %c24_184, %c0_185] : memref<1x336x128xf32, #tpu.memory_space<vmem>>, vector<1x288x128xf32>
    %149 = vector.shape_cast %148 : vector<1x288x128xf32> to vector<288x128xf32>
    %150 = arith.addf %147, %149 : vector<288x128xf32>
    %cst_186 = arith.constant 0.000000e+00 : f32
    %151 = vector.broadcast %cst_186 : f32 to vector<288x128xf32>
    %152 = arith.maximumf %150, %151 : vector<288x128xf32>
    %c0_187 = arith.constant 0 : index
    %c0_188 = arith.constant 0 : index
    %c0_189 = arith.constant 0 : index
    %153 = vector.load %arg7[%c0_187, %c0_188, %c0_189] : memref<1x288x128xf32, #tpu.memory_space<vmem>>, vector<1x288x128xf32>
    %154 = vector.shape_cast %153 : vector<1x288x128xf32> to vector<288x128xf32>
    %155 = vector.shape_cast %152 : vector<288x128xf32> to vector<1x288x128xf32>
    tpu.vector_store %arg7[%c0_187, %c0_188, %c0_189], %155 {strides = array<i32>} : memref<1x288x128xf32, #tpu.memory_space<vmem>>, vector<1x288x128xf32>,
    return
  }
  func.func @transform_0(%arg0: i32) -> (i32, i32, i32) {
    %c0_i32 = arith.constant 0 : i32
    %c0_i32_0 = arith.constant 0 : i32
    %c0_i32_1 = arith.constant 0 : i32
    return %arg0, %c0_i32, %c0_i32_0 : i32, i32, i32
  }
  func.func @transform_1(%arg0: i32) -> (i32, i32, i32) {
    %c0_i32 = arith.constant 0 : i32
    %c0_i32_0 = arith.constant 0 : i32
    %c0_i32_1 = arith.constant 0 : i32
    %c0_i32_2 = arith.constant 0 : i32
    return %c0_i32, %c0_i32_0, %c0_i32_1 : i32, i32, i32
  }
  func.func @transform_2(%arg0: i32) -> (i32, i32) {
    %c0_i32 = arith.constant 0 : i32
    %c0_i32_0 = arith.constant 0 : i32
    %c0_i32_1 = arith.constant 0 : i32
    return %c0_i32, %c0_i32_0 : i32, i32
  }
  func.func @transform_3(%arg0: i32) -> (i32, i32, i32) {
    %c0_i32 = arith.constant 0 : i32
    %c0_i32_0 = arith.constant 0 : i32
    %c0_i32_1 = arith.constant 0 : i32
    %c0_i32_2 = arith.constant 0 : i32
    return %c0_i32, %c0_i32_0, %c0_i32_1 : i32, i32, i32
  }
  func.func @transform_4(%arg0: i32) -> (i32, i32) {
    %c0_i32 = arith.constant 0 : i32
    %c0_i32_0 = arith.constant 0 : i32
    %c0_i32_1 = arith.constant 0 : i32
    return %c0_i32, %c0_i32_0 : i32, i32
  }
  func.func @transform_5(%arg0: i32) -> (i32, i32) {
    %c0_i32 = arith.constant 0 : i32
    %c0_i32_0 = arith.constant 0 : i32
    %c0_i32_1 = arith.constant 0 : i32
    return %c0_i32, %c0_i32_0 : i32, i32
  }
  func.func @transform_6(%arg0: i32) -> (i32, i32, i32) {
    %c0_i32 = arith.constant 0 : i32
    %c0_i32_0 = arith.constant 0 : i32
    %c0_i32_1 = arith.constant 0 : i32
    return %arg0, %c0_i32, %c0_i32_0 : i32, i32, i32
  }
}

</mosaic_0001>

<llo_original>
// kernel: tile.8
$region0: #{tile.8}
  #allocation0 [shape = 's32[1]{0}', space=sflag, size = 0x4, scoped, tag = 'scoped memory for tile.8']
  %s0 = inlined_call_operand.vmem [shape: f32[18], index: 0, kind: input, shape index: {}]
  %s1 = inlined_call_operand.vmem [shape: f32[16,18], index: 1, kind: output, shape index: {}]
  // Predicated region
  $region2: #{tile.8} parent=0 // pred_check
    _
  $region3: #{tile.8} parent=0 // pred_check_branch
    %3 = sbr.rel (0) target = $region5
  $region4: #{tile.8} parent=0 // pred_region
    _
  $region5: #{tile.8} parent=0 // pred_fallthru
    _
  %v4 = vld [vmem:[%s0] ss:$0 sm:$0xff]
  %5 = vst [vmem:[%s1] sm:$0xff] %v4
  %s6 = scalar_lea.vmem %s1, 8
  %7 = vst [vmem:[%s6] sm:$0xff] %v4

// kernel: tile.0
$region0: #{tile.0}
  %s0 = inlined_call_operand.vmem [shape: f32[16,18], index: 0, kind: input, shape index: {}]
  %s1 = inlined_call_operand.vmem [shape: f32[288,1], index: 1, kind: output, shape index: {}]
  %v2 = vld [vmem:[%s0] sm:$0xff]
  %vm3 = vcmask 7168
  %4 = vst.msk [vmem:[%s1] ss:$18 sm:$0xff] %vm3, %v2
  %s5 = scalar_lea.vmem %s0, 8
  %v6 = vld [vmem:[%s5] sm:$0xff]
  %vm7 = vcmask 7168
  %s8 = scalar_lea.vmem %s1, 144
  %9 = vst.msk [vmem:[%s8] ss:$18 sm:$0xff] %vm7, %v6
  %v10 = vld.sshfl [vmem:[%s0] sm:$0xff pattern:$0xf6d4b290]
  %11 = vrot.lane.b32.xlu0 %v10, 127
  %v12 = vpop.permute.xlu0 %11
  %vm13 = vcmask 7168
  %s14 = scalar_lea.vmem %s1, 1
  %15 = vst.msk [vmem:[%s14] ss:$162 sm:$0x3] %vm13, %v12
  %s16 = scalar_lea.vmem %s1, 4294967009
  %17 = vst.msk [vmem:[%s16] ss:$162 sm:$0xc] %vm13, %v12
  %s18 = scalar_lea.vmem %s1, 4294966721
  %19 = vst.msk [vmem:[%s18] ss:$162 sm:$0x30] %vm13, %v12
  %s20 = scalar_lea.vmem %s1, 4294966433
  %21 = vst.msk [vmem:[%s20] ss:$162 sm:$0xc0] %vm13, %v12
  %s22 = scalar_lea.vmem %s0, 1
  %v23 = vld.sshfl [vmem:[%s22] sm:$0xff pattern:$0x6d4b2907]
  %24 = vrot.lane.b32.xlu0 %v23, 127
  %v25 = vpop.permute.xlu0 %24
  %vm26 = vcmask 7168
  %s27 = scalar_lea.vmem %s1, 145
  %28 = vst.msk [vmem:[%s27] ss:$-126 sm:$0x3] %vm26, %v25
  %s29 = scalar_lea.vmem %s1, 433
  %30 = vst.msk [vmem:[%s29] ss:$-126 sm:$0xc] %vm26, %v25
  %s31 = scalar_lea.vmem %s1, 721
  %32 = vst.msk [vmem:[%s31] ss:$-126 sm:$0x30] %vm26, %v25
  %s33 = scalar_lea.vmem %s1, 1009
  %34 = vst.msk [vmem:[%s33] ss:$-126 sm:$0xc0] %vm26, %v25
  %v35 = vld.sshfl [vmem:[%s0] sm:$0xff pattern:$0x6d4b2907]
  %36 = vrot.lane.b32.xlu0 %v35, 126
  %v37 = vpop.permute.xlu0 %36
  %vm38 = vcmask 7168
  %s39 = scalar_lea.vmem %s1, 128
  %40 = vst.msk [vmem:[%s39] ss:$-126 sm:$0x3] %vm38, %v37
  %s41 = scalar_lea.vmem %s1, 416
  %42 = vst.msk [vmem:[%s41] ss:$-126 sm:$0xc] %vm38, %v37
  %s43 = scalar_lea.vmem %s1, 704
  %44 = vst.msk [vmem:[%s43] ss:$-126 sm:$0x30] %vm38, %v37
  %s45 = scalar_lea.vmem %s1, 992
  %46 = vst.msk [vmem:[%s45] ss:$-126 sm:$0xc0] %vm38, %v37
  %s47 = scalar_lea.vmem %s0, 1
  %v48 = vld.sshfl [vmem:[%s47] sm:$0xff pattern:$0xd4b2907e]
  %49 = vrot.lane.b32.xlu0 %v48, 126
  %v50 = vpop.permute.xlu0 %49
  %vm51 = vcmask 7168
  %s52 = scalar_lea.vmem %s1, 272
  %53 = vst.msk [vmem:[%s52] ss:$-126 sm:$0x7] %vm51, %v50
  %s54 = scalar_lea.vmem %s1, 560
  %55 = vst.msk [vmem:[%s54] ss:$-126 sm:$0x18] %vm51, %v50
  %s56 = scalar_lea.vmem %s1, 848
  %57 = vst.msk [vmem:[%s56] ss:$-126 sm:$0x60] %vm51, %v50
  %s58 = scalar_lea.vmem %s1, 247
  %59 = vst.msk [vmem:[%s58] sm:$0x80] %vm51, %v50
  %v60 = vld.sshfl [vmem:[%s0] sm:$0xff pattern:$0x6d4b2907]
  %61 = vrot.lane.b32.xlu0 %v60, 125
  %v62 = vpop.permute.xlu0 %61
  %vm63 = vcmask 7168
  %s64 = scalar_lea.vmem %s1, 129
  %65 = vst.msk [vmem:[%s64] ss:$-126 sm:$0x3] %vm63, %v62
  %s66 = scalar_lea.vmem %s1, 417
  %67 = vst.msk [vmem:[%s66] ss:$-126 sm:$0xc] %vm63, %v62
  %s68 = scalar_lea.vmem %s1, 705
  %69 = vst.msk [vmem:[%s68] ss:$-126 sm:$0x30] %vm63, %v62
  %s70 = scalar_lea.vmem %s1, 993
  %71 = vst.msk [vmem:[%s70] ss:$-126 sm:$0xc0] %vm63, %v62
  %s72 = scalar_lea.vmem %s0, 1
  %v73 = vld.sshfl [vmem:[%s72] sm:$0xff pattern:$0xd4b2907e]
  %74 = vrot.lane.b32.xlu0 %v73, 125
  %v75 = vpop.permute.xlu0 %74
  %vm76 = vcmask 7168
  %s77 = scalar_lea.vmem %s1, 273
  %78 = vst.msk [vmem:[%s77] ss:$-126 sm:$0x7] %vm76, %v75
  %s79 = scalar_lea.vmem %s1, 561
  %80 = vst.msk [vmem:[%s79] ss:$-126 sm:$0x18] %vm76, %v75
  %s81 = scalar_lea.vmem %s1, 849
  %82 = vst.msk [vmem:[%s81] ss:$-126 sm:$0x60] %vm76, %v75
  %s83 = scalar_lea.vmem %s1, 248
  %84 = vst.msk [vmem:[%s83] sm:$0x80] %vm76, %v75
  %v85 = vld.sshfl [vmem:[%s0] sm:$0xff pattern:$0xd4b2907e]
  %86 = vrot.lane.b32.xlu0 %v85, 124
  %v87 = vpop.permute.xlu0 %86
  %vm88 = vcmask 7168
  %s89 = scalar_lea.vmem %s1, 256
  %90 = vst.msk [vmem:[%s89] ss:$-126 sm:$0x7] %vm88, %v87
  %s91 = scalar_lea.vmem %s1, 544
  %92 = vst.msk [vmem:[%s91] ss:$-126 sm:$0x18] %vm88, %v87
  %s93 = scalar_lea.vmem %s1, 832
  %94 = vst.msk [vmem:[%s93] ss:$-126 sm:$0x60] %vm88, %v87
  %s95 = scalar_lea.vmem %s1, 231
  %96 = vst.msk [vmem:[%s95] sm:$0x80] %vm88, %v87
  %s97 = scalar_lea.vmem %s0, 1
  %v98 = vld.sshfl [vmem:[%s97] sm:$0xff pattern:$0x4b2907e5]
  %99 = vrot.lane.b32.xlu0 %v98, 124
  %v100 = vpop.permute.xlu0 %99
  %vm101 = vcmask 7168
  %s102 = scalar_lea.vmem %s1, 112
  %103 = vst.msk [vmem:[%s102] ss:$162 sm:$0x3] %vm101, %v100
  %s104 = scalar_lea.vmem %s1, 400
  %105 = vst.msk [vmem:[%s104] ss:$-126 sm:$0xc] %vm101, %v100
  %s106 = scalar_lea.vmem %s1, 688
  %107 = vst.msk [vmem:[%s106] ss:$-126 sm:$0x30] %vm101, %v100
  %s108 = scalar_lea.vmem %s1, 976
  %109 = vst.msk [vmem:[%s108] ss:$-126 sm:$0xc0] %vm101, %v100
  %v110 = vld.sshfl [vmem:[%s0] sm:$0xff pattern:$0xd4b2907e]
  %111 = vrot.lane.b32.xlu0 %v110, 123
  %v112 = vpop.permute.xlu0 %111
  %vm113 = vcmask 7168
  %s114 = scalar_lea.vmem %s1, 257
  %115 = vst.msk [vmem:[%s114] ss:$-126 sm:$0x7] %vm113, %v112
  %s116 = scalar_lea.vmem %s1, 545
  %117 = vst.msk [vmem:[%s116] ss:$-126 sm:$0x18] %vm113, %v112
  %s118 = scalar_lea.vmem %s1, 833
  %119 = vst.msk [vmem:[%s118] ss:$-126 sm:$0x60] %vm113, %v112
  %s120 = scalar_lea.vmem %s1, 232
  %121 = vst.msk [vmem:[%s120] sm:$0x80] %vm113, %v112
  %s122 = scalar_lea.vmem %s0, 1
  %v123 = vld.sshfl [vmem:[%s122] sm:$0xff pattern:$0x4b2907e5]
  %124 = vrot.lane.b32.xlu0 %v123, 123
  %v125 = vpop.permute.xlu0 %124
  %vm126 = vcmask 7168
  %s127 = scalar_lea.vmem %s1, 113
  %128 = vst.msk [vmem:[%s127] ss:$162 sm:$0x3] %vm126, %v125
  %s129 = scalar_lea.vmem %s1, 401
  %130 = vst.msk [vmem:[%s129] ss:$-126 sm:$0xc] %vm126, %v125
  %s131 = scalar_lea.vmem %s1, 689
  %132 = vst.msk [vmem:[%s131] ss:$-126 sm:$0x30] %vm126, %v125
  %s133 = scalar_lea.vmem %s1, 977
  %134 = vst.msk [vmem:[%s133] ss:$-126 sm:$0xc0] %vm126, %v125
  %v135 = vld.sshfl [vmem:[%s0] sm:$0xff pattern:$0x4b2907e5]
  %136 = vrot.lane.b32.xlu0 %v135, 122
  %v137 = vpop.permute.xlu0 %136
  %vm138 = vcmask 7168
  %s139 = scalar_lea.vmem %s1, 96
  %140 = vst.msk [vmem:[%s139] ss:$162 sm:$0x3] %vm138, %v137
  %s141 = scalar_lea.vmem %s1, 384
  %142 = vst.msk [vmem:[%s141] ss:$-126 sm:$0xc] %vm138, %v137
  %s143 = scalar_lea.vmem %s1, 672
  %144 = vst.msk [vmem:[%s143] ss:$-126 sm:$0x30] %vm138, %v137
  %s145 = scalar_lea.vmem %s1, 960
  %146 = vst.msk [vmem:[%s145] ss:$-126 sm:$0xc0] %vm138, %v137
  %s147 = scalar_lea.vmem %s0, 1
  %v148 = vld.sshfl [vmem:[%s147] sm:$0xff pattern:$0xb2907e5c]
  %149 = vrot.lane.b32.xlu0 %v148, 122
  %v150 = vpop.permute.xlu0 %149
  %vm151 = vcmask 7168
  %s152 = scalar_lea.vmem %s1, 240
  %153 = vst.msk [vmem:[%s152] ss:$-126 sm:$0x3] %vm151, %v150
  %s154 = scalar_lea.vmem %s1, 528
  %155 = vst.msk [vmem:[%s154] ss:$-126 sm:$0x1c] %vm151, %v150
  %s156 = scalar_lea.vmem %s1, 816
  %157 = vst.msk [vmem:[%s156] ss:$-126 sm:$0x60] %vm151, %v150
  %s158 = scalar_lea.vmem %s1, 215
  %159 = vst.msk [vmem:[%s158] sm:$0x80] %vm151, %v150
  %v160 = vld.sshfl [vmem:[%s0] sm:$0xff pattern:$0x4b2907e5]
  %161 = vrot.lane.b32.xlu0 %v160, 121
  %v162 = vpop.permute.xlu0 %161
  %vm163 = vcmask 7168
  %s164 = scalar_lea.vmem %s1, 97
  %165 = vst.msk [vmem:[%s164] ss:$162 sm:$0x3] %vm163, %v162
  %s166 = scalar_lea.vmem %s1, 385
  %167 = vst.msk [vmem:[%s166] ss:$-126 sm:$0xc] %vm163, %v162
  %s168 = scalar_lea.vmem %s1, 673
  %169 = vst.msk [vmem:[%s168] ss:$-126 sm:$0x30] %vm163, %v162
  %s170 = scalar_lea.vmem %s1, 961
  %171 = vst.msk [vmem:[%s170] ss:$-126 sm:$0xc0] %vm163, %v162
  %s172 = scalar_lea.vmem %s0, 1
  %v173 = vld.sshfl [vmem:[%s172] sm:$0xff pattern:$0xb2907e5c]
  %174 = vrot.lane.b32.xlu0 %v173, 121
  %v175 = vpop.permute.xlu0 %174
  %vm176 = vcmask 7168
  %s177 = scalar_lea.vmem %s1, 241
  %178 = vst.msk [vmem:[%s177] ss:$-126 sm:$0x3] %vm176, %v175
  %s179 = scalar_lea.vmem %s1, 529
  %180 = vst.msk [vmem:[%s179] ss:$-126 sm:$0x1c] %vm176, %v175
  %s181 = scalar_lea.vmem %s1, 817
  %182 = vst.msk [vmem:[%s181] ss:$-126 sm:$0x60] %vm176, %v175
  %s183 = scalar_lea.vmem %s1, 216
  %184 = vst.msk [vmem:[%s183] sm:$0x80] %vm176, %v175
  %v185 = vld.sshfl [vmem:[%s0] sm:$0xff pattern:$0xb2907e5c]
  %186 = vrot.lane.b32.xlu0 %v185, 120
  %v187 = vpop.permute.xlu0 %186
  %vm188 = vcmask 7168
  %s189 = scalar_lea.vmem %s1, 224
  %190 = vst.msk [vmem:[%s189] ss:$-126 sm:$0x3] %vm188, %v187
  %s191 = scalar_lea.vmem %s1, 512
  %192 = vst.msk [vmem:[%s191] ss:$-126 sm:$0x1c] %vm188, %v187
  %s193 = scalar_lea.vmem %s1, 800
  %194 = vst.msk [vmem:[%s193] ss:$-126 sm:$0x60] %vm188, %v187
  %s195 = scalar_lea.vmem %s1, 199
  %196 = vst.msk [vmem:[%s195] sm:$0x80] %vm188, %v187
  %s197 = scalar_lea.vmem %s0, 1
  %v198 = vld.sshfl [vmem:[%s197] sm:$0xff pattern:$0x2907e5c3]
  %199 = vrot.lane.b32.xlu0 %v198, 120
  %v200 = vpop.permute.xlu0 %199
  %vm201 = vcmask 7168
  %s202 = scalar_lea.vmem %s1, 80
  %203 = vst.msk [vmem:[%s202] ss:$162 sm:$0x3] %vm201, %v200
  %s204 = scalar_lea.vmem %s1, 4294967088
  %205 = vst.msk [vmem:[%s204] ss:$162 sm:$0xc] %vm201, %v200
  %s206 = scalar_lea.vmem %s1, 656
  %207 = vst.msk [vmem:[%s206] ss:$-126 sm:$0x30] %vm201, %v200
  %s208 = scalar_lea.vmem %s1, 944
  %209 = vst.msk [vmem:[%s208] ss:$-126 sm:$0xc0] %vm201, %v200
  %v210 = vld.sshfl [vmem:[%s0] sm:$0xff pattern:$0xb2907e5c]
  %211 = vrot.lane.b32.xlu0 %v210, 119
  %v212 = vpop.permute.xlu0 %211
  %vm213 = vcmask 7168
  %s214 = scalar_lea.vmem %s1, 225
  %215 = vst.msk [vmem:[%s214] ss:$-126 sm:$0x3] %vm213, %v212
  %s216 = scalar_lea.vmem %s1, 513
  %217 = vst.msk [vmem:[%s216] ss:$-126 sm:$0x1c] %vm213, %v212
  %s218 = scalar_lea.vmem %s1, 801
  %219 = vst.msk [vmem:[%s218] ss:$-126 sm:$0x60] %vm213, %v212
  %s220 = scalar_lea.vmem %s1, 200
  %221 = vst.msk [vmem:[%s220] sm:$0x80] %vm213, %v212
  %s222 = scalar_lea.vmem %s0, 1
  %v223 = vld.sshfl [vmem:[%s222] sm:$0xff pattern:$0x2907e5c3]
  %224 = vrot.lane.b32.xlu0 %v223, 119
  %v225 = vpop.permute.xlu0 %224
  %vm226 = vcmask 7168
  %s227 = scalar_lea.vmem %s1, 81
  %228 = vst.msk [vmem:[%s227] ss:$162 sm:$0x3] %vm226, %v225
  %s229 = scalar_lea.vmem %s1, 4294967089
  %230 = vst.msk [vmem:[%s229] ss:$162 sm:$0xc] %vm226, %v225
  %s231 = scalar_lea.vmem %s1, 657
  %232 = vst.msk [vmem:[%s231] ss:$-126 sm:$0x30] %vm226, %v225
  %s233 = scalar_lea.vmem %s1, 945
  %234 = vst.msk [vmem:[%s233] ss:$-126 sm:$0xc0] %vm226, %v225
  %v235 = vld.sshfl [vmem:[%s0] sm:$0xff pattern:$0x2907e5c3]
  %236 = vrot.lane.b32.xlu0 %v235, 118
  %v237 = vpop.permute.xlu0 %236
  %vm238 = vcmask 7168
  %s239 = scalar_lea.vmem %s1, 64
  %240 = vst.msk [vmem:[%s239] ss:$162 sm:$0x3] %vm238, %v237
  %s241 = scalar_lea.vmem %s1, 4294967072
  %242 = vst.msk [vmem:[%s241] ss:$162 sm:$0xc] %vm238, %v237
  %s243 = scalar_lea.vmem %s1, 640
  %244 = vst.msk [vmem:[%s243] ss:$-126 sm:$0x30] %vm238, %v237
  %s245 = scalar_lea.vmem %s1, 928
  %246 = vst.msk [vmem:[%s245] ss:$-126 sm:$0xc0] %vm238, %v237
  %s247 = scalar_lea.vmem %s0, 1
  %v248 = vld.sshfl [vmem:[%s247] sm:$0xff pattern:$0x907e5c3a]
  %249 = vrot.lane.b32.xlu0 %v248, 118
  %v250 = vpop.permute.xlu0 %249
  %vm251 = vcmask 7168
  %s252 = scalar_lea.vmem %s1, 208
  %253 = vst.msk [vmem:[%s252] ss:$-126 sm:$0x3] %vm251, %v250
  %s254 = scalar_lea.vmem %s1, 496
  %255 = vst.msk [vmem:[%s254] ss:$-126 sm:$0xc] %vm251, %v250
  %s256 = scalar_lea.vmem %s1, 784
  %257 = vst.msk [vmem:[%s256] ss:$-126 sm:$0x70] %vm251, %v250
  %s258 = scalar_lea.vmem %s1, 183
  %259 = vst.msk [vmem:[%s258] sm:$0x80] %vm251, %v250
  %v260 = vld.sshfl [vmem:[%s0] sm:$0xff pattern:$0x2907e5c3]
  %261 = vrot.lane.b32.xlu0 %v260, 117
  %v262 = vpop.permute.xlu0 %261
  %vm263 = vcmask 7168
  %s264 = scalar_lea.vmem %s1, 65
  %265 = vst.msk [vmem:[%s264] ss:$162 sm:$0x3] %vm263, %v262
  %s266 = scalar_lea.vmem %s1, 4294967073
  %267 = vst.msk [vmem:[%s266] ss:$162 sm:$0xc] %vm263, %v262
  %s268 = scalar_lea.vmem %s1, 641
  %269 = vst.msk [vmem:[%s268] ss:$-126 sm:$0x30] %vm263, %v262
  %s270 = scalar_lea.vmem %s1, 929
  %271 = vst.msk [vmem:[%s270] ss:$-126 sm:$0xc0] %vm263, %v262
  %s272 = scalar_lea.vmem %s0, 1
  %v273 = vld.sshfl [vmem:[%s272] sm:$0xff pattern:$0x907e5c3a]
  %274 = vrot.lane.b32.xlu0 %v273, 117
  %v275 = vpop.permute.xlu0 %274
  %vm276 = vcmask 7168
  %s277 = scalar_lea.vmem %s1, 209
  %278 = vst.msk [vmem:[%s277] ss:$-126 sm:$0x3] %vm276, %v275
  %s279 = scalar_lea.vmem %s1, 497
  %280 = vst.msk [vmem:[%s279] ss:$-126 sm:$0xc] %vm276, %v275
  %s281 = scalar_lea.vmem %s1, 785
  %282 = vst.msk [vmem:[%s281] ss:$-126 sm:$0x70] %vm276, %v275
  %s283 = scalar_lea.vmem %s1, 184
  %284 = vst.msk [vmem:[%s283] sm:$0x80] %vm276, %v275
  %v285 = vld.sshfl [vmem:[%s0] sm:$0xff pattern:$0x907e5c3a]
  %286 = vrot.lane.b32.xlu0 %v285, 116
  %v287 = vpop.permute.xlu0 %286
  %vm288 = vcmask 7168
  %s289 = scalar_lea.vmem %s1, 192
  %290 = vst.msk [vmem:[%s289] ss:$-126 sm:$0x3] %vm288, %v287
  %s291 = scalar_lea.vmem %s1, 480
  %292 = vst.msk [vmem:[%s291] ss:$-126 sm:$0xc] %vm288, %v287
  %s293 = scalar_lea.vmem %s1, 768
  %294 = vst.msk [vmem:[%s293] ss:$-126 sm:$0x70] %vm288, %v287
  %s295 = scalar_lea.vmem %s1, 167
  %296 = vst.msk [vmem:[%s295] sm:$0x80] %vm288, %v287
  %s297 = scalar_lea.vmem %s0, 1
  %v298 = vld.sshfl [vmem:[%s297] sm:$0xff pattern:$0x7e5c3a1]
  %299 = vrot.lane.b32.xlu0 %v298, 116
  %v300 = vpop.permute.xlu0 %299
  %vm301 = vcmask 7168
  %s302 = scalar_lea.vmem %s1, 48
  %303 = vst.msk [vmem:[%s302] ss:$162 sm:$0x3] %vm301, %v300
  %s304 = scalar_lea.vmem %s1, 4294967056
  %305 = vst.msk [vmem:[%s304] ss:$162 sm:$0xc] %vm301, %v300
  %s306 = scalar_lea.vmem %s1, 4294966768
  %307 = vst.msk [vmem:[%s306] ss:$162 sm:$0x30] %vm301, %v300
  %s308 = scalar_lea.vmem %s1, 912
  %309 = vst.msk [vmem:[%s308] ss:$-126 sm:$0xc0] %vm301, %v300
  %v310 = vld.sshfl [vmem:[%s0] sm:$0xff pattern:$0x907e5c3a]
  %311 = vrot.lane.b32.xlu0 %v310, 115
  %v312 = vpop.permute.xlu0 %311
  %vm313 = vcmask 7168
  %s314 = scalar_lea.vmem %s1, 193
  %315 = vst.msk [vmem:[%s314] ss:$-126 sm:$0x3] %vm313, %v312
  %s316 = scalar_lea.vmem %s1, 481
  %317 = vst.msk [vmem:[%s316] ss:$-126 sm:$0xc] %vm313, %v312
  %s318 = scalar_lea.vmem %s1, 769
  %319 = vst.msk [vmem:[%s318] ss:$-126 sm:$0x70] %vm313, %v312
  %s320 = scalar_lea.vmem %s1, 168
  %321 = vst.msk [vmem:[%s320] sm:$0x80] %vm313, %v312
  %s322 = scalar_lea.vmem %s0, 1
  %v323 = vld.sshfl [vmem:[%s322] sm:$0xff pattern:$0x7e5c3a1]
  %324 = vrot.lane.b32.xlu0 %v323, 115
  %v325 = vpop.permute.xlu0 %324
  %vm326 = vcmask 7168
  %s327 = scalar_lea.vmem %s1, 49
  %328 = vst.msk [vmem:[%s327] ss:$162 sm:$0x3] %vm326, %v325
  %s329 = scalar_lea.vmem %s1, 4294967057
  %330 = vst.msk [vmem:[%s329] ss:$162 sm:$0xc] %vm326, %v325
  %s331 = scalar_lea.vmem %s1, 4294966769
  %332 = vst.msk [vmem:[%s331] ss:$162 sm:$0x30] %vm326, %v325
  %s333 = scalar_lea.vmem %s1, 913
  %334 = vst.msk [vmem:[%s333] ss:$-126 sm:$0xc0] %vm326, %v325
  %v335 = vld.sshfl [vmem:[%s0] sm:$0xff pattern:$0x7e5c3a1]
  %336 = vrot.lane.b32.xlu0 %v335, 114
  %v337 = vpop.permute.xlu0 %336
  %vm338 = vcmask 7168
  %s339 = scalar_lea.vmem %s1, 32
  %340 = vst.msk [vmem:[%s339] ss:$162 sm:$0x3] %vm338, %v337
  %s341 = scalar_lea.vmem %s1, 4294967040
  %342 = vst.msk [vmem:[%s341] ss:$162 sm:$0xc] %vm338, %v337
  %s343 = scalar_lea.vmem %s1, 4294966752
  %344 = vst.msk [vmem:[%s343] ss:$162 sm:$0x30] %vm338, %v337
  %s345 = scalar_lea.vmem %s1, 896
  %346 = vst.msk [vmem:[%s345] ss:$-126 sm:$0xc0] %vm338, %v337
  %s347 = scalar_lea.vmem %s0, 2
  %v348 = vld.sshfl [vmem:[%s347] sm:$0xff pattern:$0x6d4b2907]
  %349 = vrot.lane.b32.xlu0 %v348, 114
  %v350 = vpop.permute.xlu0 %349
  %vm351 = vcmask 7168
  %s352 = scalar_lea.vmem %s1, 176
  %353 = vst.msk [vmem:[%s352] ss:$-126 sm:$0x3] %vm351, %v350
  %s354 = scalar_lea.vmem %s1, 464
  %355 = vst.msk [vmem:[%s354] ss:$-126 sm:$0xc] %vm351, %v350
  %s356 = scalar_lea.vmem %s1, 752
  %357 = vst.msk [vmem:[%s356] ss:$-126 sm:$0x30] %vm351, %v350
  %s358 = scalar_lea.vmem %s1, 1040
  %359 = vst.msk [vmem:[%s358] ss:$-126 sm:$0xc0] %vm351, %v350
  %v360 = vld.sshfl [vmem:[%s0] sm:$0xff pattern:$0x7e5c3a1]
  %361 = vrot.lane.b32.xlu0 %v360, 113
  %v362 = vpop.permute.xlu0 %361
  %vm363 = vcmask 7168
  %s364 = scalar_lea.vmem %s1, 33
  %365 = vst.msk [vmem:[%s364] ss:$162 sm:$0x3] %vm363, %v362
  %s366 = scalar_lea.vmem %s1, 4294967041
  %367 = vst.msk [vmem:[%s366] ss:$162 sm:$0xc] %vm363, %v362
  %s368 = scalar_lea.vmem %s1, 4294966753
  %369 = vst.msk [vmem:[%s368] ss:$162 sm:$0x30] %vm363, %v362
  %s370 = scalar_lea.vmem %s1, 897
  %371 = vst.msk [vmem:[%s370] ss:$-126 sm:$0xc0] %vm363, %v362
  %s372 = scalar_lea.vmem %s0, 2
  %v373 = vld.sshfl [vmem:[%s372] sm:$0xff pattern:$0x6d4b2907]
  %374 = vrot.lane.b32.xlu0 %v373, 113
  %v375 = vpop.permute.xlu0 %374
  %vm376 = vcmask 7168
  %s377 = scalar_lea.vmem %s1, 177
  %378 = vst.msk [vmem:[%s377] ss:$-126 sm:$0x3] %vm376, %v375
  %s379 = scalar_lea.vmem %s1, 465
  %380 = vst.msk [vmem:[%s379] ss:$-126 sm:$0xc] %vm376, %v375
  %s381 = scalar_lea.vmem %s1, 753
  %382 = vst.msk [vmem:[%s381] ss:$-126 sm:$0x30] %vm376, %v375
  %s383 = scalar_lea.vmem %s1, 1041
  %384 = vst.msk [vmem:[%s383] ss:$-126 sm:$0xc0] %vm376, %v375
  %s385 = scalar_lea.vmem %s0, 1
  %v386 = vld.sshfl [vmem:[%s385] sm:$0xff pattern:$0x6d4b2907]
  %387 = vrot.lane.b32.xlu0 %v386, 112
  %v388 = vpop.permute.xlu0 %387
  %vm389 = vcmask 7168
  %s390 = scalar_lea.vmem %s1, 160
  %391 = vst.msk [vmem:[%s390] ss:$-126 sm:$0x3] %vm389, %v388
  %s392 = scalar_lea.vmem %s1, 448
  %393 = vst.msk [vmem:[%s392] ss:$-126 sm:$0xc] %vm389, %v388
  %s394 = scalar_lea.vmem %s1, 736
  %395 = vst.msk [vmem:[%s394] ss:$-126 sm:$0x30] %vm389, %v388
  %s396 = scalar_lea.vmem %s1, 1024
  %397 = vst.msk [vmem:[%s396] ss:$-126 sm:$0xc0] %vm389, %v388
  %v398 = vld.sshfl [vmem:[%s0] sm:$0xff pattern:$0xf6d4b290]
  %399 = vrot.lane.b32.xlu0 %v398, 112
  %v400 = vpop.permute.xlu0 %399
  %vm401 = vcmask 7168
  %s402 = scalar_lea.vmem %s1, 16
  %403 = vst.msk [vmem:[%s402] ss:$162 sm:$0x3] %vm401, %v400
  %s404 = scalar_lea.vmem %s1, 4294967024
  %405 = vst.msk [vmem:[%s404] ss:$162 sm:$0xc] %vm401, %v400
  %s406 = scalar_lea.vmem %s1, 4294966736
  %407 = vst.msk [vmem:[%s406] ss:$162 sm:$0x30] %vm401, %v400
  %s408 = scalar_lea.vmem %s1, 4294966448
  %409 = vst.msk [vmem:[%s408] ss:$162 sm:$0xc0] %vm401, %v400
  %s410 = scalar_lea.vmem %s0, 1
  %v411 = vld.sshfl [vmem:[%s410] sm:$0xff pattern:$0x6d4b2907]
  %412 = vrot.lane.b32.xlu0 %v411, 111
  %v413 = vpop.permute.xlu0 %412
  %vm414 = vcmask 7168
  %s415 = scalar_lea.vmem %s1, 161
  %416 = vst.msk [vmem:[%s415] ss:$-126 sm:$0x3] %vm414, %v413
  %s417 = scalar_lea.vmem %s1, 449
  %418 = vst.msk [vmem:[%s417] ss:$-126 sm:$0xc] %vm414, %v413
  %s419 = scalar_lea.vmem %s1, 737
  %420 = vst.msk [vmem:[%s419] ss:$-126 sm:$0x30] %vm414, %v413
  %s421 = scalar_lea.vmem %s1, 1025
  %422 = vst.msk [vmem:[%s421] ss:$-126 sm:$0xc0] %vm414, %v413
  %v423 = vld.sshfl [vmem:[%s0] sm:$0xff pattern:$0xf6d4b290]
  %424 = vrot.lane.b32.xlu0 %v423, 111
  %v425 = vpop.permute.xlu0 %424
  %vm426 = vcmask 7168
  %s427 = scalar_lea.vmem %s1, 17
  %428 = vst.msk [vmem:[%s427] ss:$162 sm:$0x3] %vm426, %v425
  %s429 = scalar_lea.vmem %s1, 4294967025
  %430 = vst.msk [vmem:[%s429] ss:$162 sm:$0xc] %vm426, %v425
  %s431 = scalar_lea.vmem %s1, 4294966737
  %432 = vst.msk [vmem:[%s431] ss:$162 sm:$0x30] %vm426, %v425
  %s433 = scalar_lea.vmem %s1, 4294966449
  %434 = vst.msk [vmem:[%s433] ss:$162 sm:$0xc0] %vm426, %v425

// kernel: basic_block_forward.1
$region0: #{basic_block_forward.1}
  #allocation0 [shape = 'u32[]', space=smem, size = 0x4, offset = 0x4, fixed_abs, tag = 'smem constant byte address 0x4 - core index']
  #allocation1 [shape = 'u32[144,128]{1,0:T(1,128)}', space=vmem, size = 0x12000, scoped, tag = 'internal scratch']
  #allocation2 [shape = 'f32[336,128]{1,0:T(8,128)}', space=vmem, size = 0x2a000, scoped, tag = 'scratch operand']
  #allocation3 [shape = 'f32[288,128]{1,0:T(8,128)}', space=vmem, size = 0x24000, scoped, tag = 'scratch operand']
  %s0 = inlined_call_operand.vmem [shape: f32[2,336,128], index: 0, kind: input, shape index: {}]
  %s1 = inlined_call_operand.vmem [shape: f32[9,128,128], index: 1, kind: input, shape index: {}]
  %s2 = inlined_call_operand.vmem [shape: f32[1,128], index: 2, kind: input, shape index: {}]
  %s3 = inlined_call_operand.vmem [shape: f32[9,128,128], index: 3, kind: input, shape index: {}]
  %s4 = inlined_call_operand.vmem [shape: f32[1,128], index: 4, kind: input, shape index: {}]
  %s5 = inlined_call_operand.vmem [shape: f32[288,1], index: 5, kind: input, shape index: {}]
  %s6 = inlined_call_operand.vmem [shape: f32[2,288,128], index: 6, kind: output, shape index: {}]
  %s7 = sld [smem:[#allocation0]]
  $region61: #{basic_block_forward.1} parent=0
    _
  %s9 = ssub.s32 1, %s7
  %s10 = scalar_select 0, %s9, %s7
  loop: start=0, step=1, limit=4
  $region2: #{basic_block_forward.1} parent=0 // loop_pre_header
    _
  $region3: #{basic_block_forward.1} parent=0 // loop_header
    %s12 = sphi 0, %s16
    %p13 = scmp.ge.s32.totalorder %s12, 4
    %s22 = sphi 0, %s24
    %s25 = sphi 0, %s22
    %s26 = sphi 0, %s25
    %s42 = sphi 0, %s26
    %s46 = sphi 0, %s46
    %s48 = sphi 0, %s46
    %s49 = sphi 0, %s48
    %s63 = sphi 0, %s49
    %s67 = sphi 0, %s67
    %s69 = sphi 0, %s67
    %s70 = sphi 0, %s69
    %s84 = sphi 0, %s70
    %s88 = sphi 0, %s88
    %s90 = sphi 0, %s88
    %s91 = sphi 0, %s90
    %s105 = sphi 0, %s91
    %s109 = sphi 0, %s109
    %s111 = sphi 0, %s109
    %s112 = sphi 0, %s111
    %s126 = sphi 0, %s112
    %s130 = sphi 0, %s130
    %s132 = sphi 0, %s130
    %s133 = sphi 0, %s132
    %s147 = sphi 0, %s133
    %s153 = sphi 0, %s155
    %s156 = sphi 0, %s153
    %s157 = sphi 0, %s156
    %s173 = sphi 0, %s157
  $region4: #{basic_block_forward.1} parent=0 // loop_header_branch
    %15 = sbr.rel (%p13) target = $region8
  $region5: #{basic_block_forward.1} parent=0 // loop_body
    %s17 = ssub.s32 %s12, 1
    %s18 = ssub.s32 %s12, 2
    %s19 = sadd.s32 %s12, 1
    %s20 = ssub.s32 %s12, %s19
    %p21 = scmp.eq.s32.totalorder %s20, 0
    %s23 = sadd.s32 %s22, 1
    %s24 = scalar_select %p21, %s22, %s23
    %p27 = pneg %p21
    %p28 = scmp.eq.s32.totalorder %s12, 1
    %p29 = por %p27, %p28
    %p30 = scmp.ne.s32.totalorder %s22, %s25
    %p31 = scmp.eq.s32.totalorder %s12, 0
    %p32 = por %p30, %p31
    %p33 = scmp.ne.s32.totalorder %s22, %s25
    %p34 = scmp.eq.s32.totalorder %s17, 1
    %p35 = por %p33, %p34
    %p36 = scmp.ne.s32.totalorder %s25, %s26
    %p37 = scmp.eq.s32.totalorder %s17, 0
    %p38 = por %p36, %p37
    %p39 = scmp.ne.s32.totalorder %s25, %s26
    %p40 = scmp.eq.s32.totalorder %s18, 1
    %p41 = por %p39, %p40
    %p43 = scmp.ne.s32.totalorder %s26, %s42
    %p44 = scmp.eq.s32.totalorder %s18, 0
    %p45 = por %p43, %p44
    %s47 = sadd.s32 %s46, 1
    %p50 = scmp.eq.s32.totalorder %s12, 1
    %p51 = scmp.ne.s32.totalorder %s46, %s48
    %p52 = scmp.eq.s32.totalorder %s12, 0
    %p53 = por %p51, %p52
    %p54 = scmp.ne.s32.totalorder %s46, %s48
    %p55 = scmp.eq.s32.totalorder %s17, 1
    %p56 = por %p54, %p55
    %p57 = scmp.ne.s32.totalorder %s48, %s49
    %p58 = scmp.eq.s32.totalorder %s17, 0
    %p59 = por %p57, %p58
    %p60 = scmp.ne.s32.totalorder %s48, %s49
    %p61 = scmp.eq.s32.totalorder %s18, 1
    %p62 = por %p60, %p61
    %p64 = scmp.ne.s32.totalorder %s49, %s63
    %p65 = scmp.eq.s32.totalorder %s18, 0
    %p66 = por %p64, %p65
    %s68 = sadd.s32 %s67, 1
    %p71 = scmp.eq.s32.totalorder %s12, 1
    %p72 = scmp.ne.s32.totalorder %s67, %s69
    %p73 = scmp.eq.s32.totalorder %s12, 0
    %p74 = por %p72, %p73
    %p75 = scmp.ne.s32.totalorder %s67, %s69
    %p76 = scmp.eq.s32.totalorder %s17, 1
    %p77 = por %p75, %p76
    %p78 = scmp.ne.s32.totalorder %s69, %s70
    %p79 = scmp.eq.s32.totalorder %s17, 0
    %p80 = por %p78, %p79
    %p81 = scmp.ne.s32.totalorder %s69, %s70
    %p82 = scmp.eq.s32.totalorder %s18, 1
    %p83 = por %p81, %p82
    %p85 = scmp.ne.s32.totalorder %s70, %s84
    %p86 = scmp.eq.s32.totalorder %s18, 0
    %p87 = por %p85, %p86
    %s89 = sadd.s32 %s88, 1
    %p92 = scmp.eq.s32.totalorder %s12, 1
    %p93 = scmp.ne.s32.totalorder %s88, %s90
    %p94 = scmp.eq.s32.totalorder %s12, 0
    %p95 = por %p93, %p94
    %p96 = scmp.ne.s32.totalorder %s88, %s90
    %p97 = scmp.eq.s32.totalorder %s17, 1
    %p98 = por %p96, %p97
    %p99 = scmp.ne.s32.totalorder %s90, %s91
    %p100 = scmp.eq.s32.totalorder %s17, 0
    %p101 = por %p99, %p100
    %p102 = scmp.ne.s32.totalorder %s90, %s91
    %p103 = scmp.eq.s32.totalorder %s18, 1
    %p104 = por %p102, %p103
    %p106 = scmp.ne.s32.totalorder %s91, %s105
    %p107 = scmp.eq.s32.totalorder %s18, 0
    %p108 = por %p106, %p107
    %s110 = sadd.s32 %s109, 1
    %p113 = scmp.eq.s32.totalorder %s12, 1
    %p114 = scmp.ne.s32.totalorder %s109, %s111
    %p115 = scmp.eq.s32.totalorder %s12, 0
    %p116 = por %p114, %p115
    %p117 = scmp.ne.s32.totalorder %s109, %s111
    %p118 = scmp.eq.s32.totalorder %s17, 1
    %p119 = por %p117, %p118
    %p120 = scmp.ne.s32.totalorder %s111, %s112
    %p121 = scmp.eq.s32.totalorder %s17, 0
    %p122 = por %p120, %p121
    %p123 = scmp.ne.s32.totalorder %s111, %s112
    %p124 = scmp.eq.s32.totalorder %s18, 1
    %p125 = por %p123, %p124
    %p127 = scmp.ne.s32.totalorder %s112, %s126
    %p128 = scmp.eq.s32.totalorder %s18, 0
    %p129 = por %p127, %p128
    %s131 = sadd.s32 %s130, 1
    %p134 = scmp.eq.s32.totalorder %s12, 1
    %p135 = scmp.ne.s32.totalorder %s130, %s132
    %p136 = scmp.eq.s32.totalorder %s12, 0
    %p137 = por %p135, %p136
    %p138 = scmp.ne.s32.totalorder %s130, %s132
    %p139 = scmp.eq.s32.totalorder %s17, 1
    %p140 = por %p138, %p139
    %p141 = scmp.ne.s32.totalorder %s132, %s133
    %p142 = scmp.eq.s32.totalorder %s17, 0
    %p143 = por %p141, %p142
    %p144 = scmp.ne.s32.totalorder %s132, %s133
    %p145 = scmp.eq.s32.totalorder %s18, 1
    %p146 = por %p144, %p145
    %p148 = scmp.ne.s32.totalorder %s133, %s147
    %p149 = scmp.eq.s32.totalorder %s18, 0
    %p150 = por %p148, %p149
    %s151 = ssub.s32 %s12, %s19
    %p152 = scmp.eq.s32.totalorder %s151, 0
    %s154 = sadd.s32 %s153, 1
    %s155 = scalar_select %p152, %s153, %s154
    %p158 = pneg %p152
    %p159 = scmp.eq.s32.totalorder %s12, 1
    %p160 = por %p158, %p159
    %p161 = scmp.ne.s32.totalorder %s153, %s156
    %p162 = scmp.eq.s32.totalorder %s12, 0
    %p163 = por %p161, %p162
    %p164 = scmp.ne.s32.totalorder %s153, %s156
    %p165 = scmp.eq.s32.totalorder %s17, 1
    %p166 = por %p164, %p165
    %p167 = scmp.ne.s32.totalorder %s156, %s157
    %p168 = scmp.eq.s32.totalorder %s17, 0
    %p169 = por %p167, %p168
    %p170 = scmp.ne.s32.totalorder %s156, %s157
    %p171 = scmp.eq.s32.totalorder %s18, 1
    %p172 = por %p170, %p171
    %p174 = scmp.ne.s32.totalorder %s157, %s173
    %p175 = scmp.eq.s32.totalorder %s18, 0
    %p176 = por %p174, %p175
    %p177 = scmp.le.s32.totalorder 1, %s12
    %p178 = scmp.lt.s32.totalorder %s12, 3
    %p179 = pnand %p177, %p178
    %p180 = pneg %p179
    // Predicated region
    $region9: #{basic_block_forward.1} parent=5 // pred_check
      _
    $region10: #{basic_block_forward.1} parent=5 // pred_check_branch
      %182 = sbr.rel (%p179) target = $region12
    $region11: #{basic_block_forward.1} parent=5 // pred_region
      %s183 = ssub.s32 %s12, 1
      // Predicated region
      $region13: #{basic_block_forward.1} parent=11 // pred_check
        %p184 = pneg %p59
      $region14: #{basic_block_forward.1} parent=11 // pred_check_branch
        %186 = sbr.rel (%p184) target = $region16
      $region15: #{basic_block_forward.1} parent=11 // pred_region
        _
      $region16: #{basic_block_forward.1} parent=11 // pred_fallthru
        _
      // Predicated region
      $region17: #{basic_block_forward.1} parent=11 // pred_check
        %p187 = pneg %p80
      $region18: #{basic_block_forward.1} parent=11 // pred_check_branch
        %189 = sbr.rel (%p187) target = $region20
      $region19: #{basic_block_forward.1} parent=11 // pred_region
        _
      $region20: #{basic_block_forward.1} parent=11 // pred_fallthru
        _
      // Predicated region
      $region21: #{basic_block_forward.1} parent=11 // pred_check
        %p190 = pneg %p101
      $region22: #{basic_block_forward.1} parent=11 // pred_check_branch
        %192 = sbr.rel (%p190) target = $region24
      $region23: #{basic_block_forward.1} parent=11 // pred_region
        _
      $region24: #{basic_block_forward.1} parent=11 // pred_fallthru
        _
      // Predicated region
      $region25: #{basic_block_forward.1} parent=11 // pred_check
        %p193 = pneg %p122
      $region26: #{basic_block_forward.1} parent=11 // pred_check_branch
        %195 = sbr.rel (%p193) target = $region28
      $region27: #{basic_block_forward.1} parent=11 // pred_region
        _
      $region28: #{basic_block_forward.1} parent=11 // pred_fallthru
        _
      // Predicated region
      $region29: #{basic_block_forward.1} parent=11 // pred_check
        %p196 = pneg %p143
      $region30: #{basic_block_forward.1} parent=11 // pred_check_branch
        %198 = sbr.rel (%p196) target = $region32
      $region31: #{basic_block_forward.1} parent=11 // pred_region
        _
      $region32: #{basic_block_forward.1} parent=11 // pred_fallthru
        _
    $region12: #{basic_block_forward.1} parent=5 // pred_fallthru
      _
    %p199 = scmp.lt.s32.totalorder %s12, 2
    // Predicated region
    $region33: #{basic_block_forward.1} parent=5 // pred_check
      %p200 = pneg %p199
    $region34: #{basic_block_forward.1} parent=5 // pred_check_branch
      %202 = sbr.rel (%p200) target = $region36
    $region35: #{basic_block_forward.1} parent=5 // pred_region
      // Predicated region
      $region37: #{basic_block_forward.1} parent=35 // pred_check
        %p203 = pneg %p32
      $region38: #{basic_block_forward.1} parent=35 // pred_check_branch
        %205 = sbr.rel (%p203) target = $region40
      $region39: #{basic_block_forward.1} parent=35 // pred_region
        %p206 = scmp.lt.s32.totalorder %s12, 1
        %s207 = scalar_select %p206, %s12, 1
        %s208 = smul.addr %s207, 42
        %s209 = smul.addr %s208, 8
        %s210 = scalar_lea.vmem %s0, %s209
      $region40: #{basic_block_forward.1} parent=35 // pred_fallthru
        _
    $region36: #{basic_block_forward.1} parent=5 // pred_fallthru
      _
    %p211 = scmp.le.s32.totalorder 1, %s12
    %p212 = scmp.lt.s32.totalorder %s12, 3
    %p213 = pnand %p211, %p212
    %p214 = pneg %p213
    // Predicated region
    $region41: #{basic_block_forward.1} parent=5 // pred_check
      _
    $region42: #{basic_block_forward.1} parent=5 // pred_check_branch
      %216 = sbr.rel (%p213) target = $region44
    $region43: #{basic_block_forward.1} parent=5 // pred_region
      %s217 = ssub.s32 %s12, 1
      %p218 = scmp.lt.s32.totalorder %s17, 1
      %s219 = scalar_select %p218, %s17, 1
      %s220 = smul.addr %s219, 42
      %s221 = smul.addr %s220, 8
      %s222 = scalar_lea.vmem %s0, %s221
      %p223 = pneg %p38
      %p224 = pneg %p35
      %p225 = pneg %p59
      %p226 = pneg %p56
      %p227 = pneg %p80
      %p228 = pneg %p77
      %p229 = pneg %p101
      %p230 = pneg %p98
      %p231 = pneg %p122
      %p232 = pneg %p119
      %p233 = pneg %p143
      %p234 = pneg %p140
      %p235 = pneg %p169
      %p236 = pneg %p166
      %p237 = scmp.lt.s32.totalorder %s17, 1
      %s238 = scalar_select %p237, %s17, 1
      %s239 = smul.addr %s238, 36
      %s240 = smul.addr %s239, 8
      %s241 = scalar_lea.vmem %s6, %s240
      %p242 = scmp.lt.s32.totalorder %s17, 1
      %s243 = scalar_select %p242, %s17, 1
      %s244 = smul.addr %s243, 42
      %s245 = smul.addr %s244, 8
      %s246 = scalar_lea.vmem %s0, %s245
      %p247 = scmp.lt.s32.totalorder %s17, 1
      %s248 = scalar_select %p247, %s17, 1
      %s249 = smul.addr %s248, 36
      %s250 = smul.addr %s249, 8
      %s251 = scalar_lea.vmem %s6, %s250
      %p252 = scmp.eq.s32.totalorder %s17, 0
      // Predicated region
      $region45: #{basic_block_forward.1} parent=43 // pred_check
        %p253 = pneg %p252
      $region46: #{basic_block_forward.1} parent=43 // pred_check_branch
        %255 = sbr.rel (%p253) target = $region48
      $region47: #{basic_block_forward.1} parent=43 // pred_region
        %256 = vst [vmem:[#allocation2] sm:$0xff] 0.0
        %257 = vst [vmem:[#allocation2 + $0x8] sm:$0xff] 0.0
        %258 = vst [vmem:[#allocation2 + $0x10] sm:$0xff] 0.0
        %259 = vst [vmem:[#allocation2 + $0x18] sm:$0xff] 0.0
        %260 = vst [vmem:[#allocation2 + $0x20] sm:$0xff] 0.0
        %261 = vst [vmem:[#allocation2 + $0x28] sm:$0xff] 0.0
        %262 = vst [vmem:[#allocation2 + $0x30] sm:$0xff] 0.0
        %263 = vst [vmem:[#allocation2 + $0x38] sm:$0xff] 0.0
        %264 = vst [vmem:[#allocation2 + $0x40] sm:$0xff] 0.0
        %265 = vst [vmem:[#allocation2 + $0x48] sm:$0xff] 0.0
        %266 = vst [vmem:[#allocation2 + $0x50] sm:$0xff] 0.0
        %267 = vst [vmem:[#allocation2 + $0x58] sm:$0xff] 0.0
        %268 = vst [vmem:[#allocation2 + $0x60] sm:$0xff] 0.0
        %269 = vst [vmem:[#allocation2 + $0x68] sm:$0xff] 0.0
        %270 = vst [vmem:[#allocation2 + $0x70] sm:$0xff] 0.0
        %271 = vst [vmem:[#allocation2 + $0x78] sm:$0xff] 0.0
        %272 = vst [vmem:[#allocation2 + $0x80] sm:$0xff] 0.0
        %273 = vst [vmem:[#allocation2 + $0x88] sm:$0xff] 0.0
        %274 = vst [vmem:[#allocation2 + $0x90] sm:$0xff] 0.0
        %275 = vst [vmem:[#allocation2 + $0x98] sm:$0xff] 0.0
        %276 = vst [vmem:[#allocation2 + $0xa0] sm:$0xff] 0.0
        %277 = vst [vmem:[#allocation2 + $0xa8] sm:$0xff] 0.0
        %278 = vst [vmem:[#allocation2 + $0xb0] sm:$0xff] 0.0
        %279 = vst [vmem:[#allocation2 + $0xb8] sm:$0xff] 0.0
        %280 = vst [vmem:[#allocation2 + $0xc0] sm:$0xff] 0.0
        %281 = vst [vmem:[#allocation2 + $0xc8] sm:$0xff] 0.0
        %282 = vst [vmem:[#allocation2 + $0xd0] sm:$0xff] 0.0
        %283 = vst [vmem:[#allocation2 + $0xd8] sm:$0xff] 0.0
        %284 = vst [vmem:[#allocation2 + $0xe0] sm:$0xff] 0.0
        %285 = vst [vmem:[#allocation2 + $0xe8] sm:$0xff] 0.0
        %286 = vst [vmem:[#allocation2 + $0xf0] sm:$0xff] 0.0
        %287 = vst [vmem:[#allocation2 + $0xf8] sm:$0xff] 0.0
        %288 = vst [vmem:[#allocation2 + $0x100] sm:$0xff] 0.0
        %289 = vst [vmem:[#allocation2 + $0x108] sm:$0xff] 0.0
        %290 = vst [vmem:[#allocation2 + $0x110] sm:$0xff] 0.0
        %291 = vst [vmem:[#allocation2 + $0x118] sm:$0xff] 0.0
        %292 = vst [vmem:[#allocation2 + $0x120] sm:$0xff] 0.0
        %293 = vst [vmem:[#allocation2 + $0x128] sm:$0xff] 0.0
        %294 = vst [vmem:[#allocation2 + $0x130] sm:$0xff] 0.0
        %295 = vst [vmem:[#allocation2 + $0x138] sm:$0xff] 0.0
        %296 = vst [vmem:[#allocation2 + $0x140] sm:$0xff] 0.0
        %297 = vst [vmem:[#allocation2 + $0x148] sm:$0xff] 0.0
      $region48: #{basic_block_forward.1} parent=43 // pred_fallthru
        _
      %v298 = vld [vmem:[%s246 + $0x5] sm:$0xff]
      %v299 = vld [vmem:[%s246 + $0xd] sm:$0xff]
      %v300 = vld [vmem:[%s246 + $0x15] sm:$0xff]
      %v301 = vld [vmem:[%s246 + $0x1d] sm:$0xff]
      %v302 = vld [vmem:[%s246 + $0x25] sm:$0xff]
      %v303 = vld [vmem:[%s246 + $0x2d] sm:$0xff]
      %v304 = vld [vmem:[%s246 + $0x35] sm:$0xff]
      %v305 = vld [vmem:[%s246 + $0x3d] sm:$0xff]
      %v306 = vld [vmem:[%s246 + $0x45] sm:$0xff]
      %v307 = vld [vmem:[%s246 + $0x4d] sm:$0xff]
      %v308 = vld [vmem:[%s246 + $0x55] sm:$0xff]
      %v309 = vld [vmem:[%s246 + $0x5d] sm:$0xff]
      %v310 = vld [vmem:[%s246 + $0x65] sm:$0xff]
      %v311 = vld [vmem:[%s246 + $0x6d] sm:$0xff]
      %v312 = vld [vmem:[%s246 + $0x75] sm:$0xff]
      %v313 = vld [vmem:[%s246 + $0x7d] sm:$0xff]
      %v314 = vld [vmem:[%s246 + $0x85] sm:$0xff]
      %v315 = vld [vmem:[%s246 + $0x8d] sm:$0xff]
      %v316 = vld [vmem:[%s246 + $0x95] sm:$0xff]
      %v317 = vld [vmem:[%s246 + $0x9d] sm:$0xff]
      %v318 = vld [vmem:[%s246 + $0xa5] sm:$0xff]
      %v319 = vld [vmem:[%s246 + $0xad] sm:$0xff]
      %v320 = vld [vmem:[%s246 + $0xb5] sm:$0xff]
      %v321 = vld [vmem:[%s246 + $0xbd] sm:$0xff]
      %v322 = vld [vmem:[%s246 + $0xc5] sm:$0xff]
      %v323 = vld [vmem:[%s246 + $0xcd] sm:$0xff]
      %v324 = vld [vmem:[%s246 + $0xd5] sm:$0xff]
      %v325 = vld [vmem:[%s246 + $0xdd] sm:$0xff]
      %v326 = vld [vmem:[%s246 + $0xe5] sm:$0xff]
      %v327 = vld [vmem:[%s246 + $0xed] sm:$0xff]
      %v328 = vld [vmem:[%s246 + $0xf5] sm:$0xff]
      %v329 = vld [vmem:[%s246 + $0xfd] sm:$0xff]
      %v330 = vld [vmem:[%s246 + $0x105] sm:$0xff]
      %v331 = vld [vmem:[%s246 + $0x10d] sm:$0xff]
      %v332 = vld [vmem:[%s246 + $0x115] sm:$0xff]
      %v333 = vld [vmem:[%s246 + $0x11d] sm:$0xff]
      %v334 = vld [vmem:[%s1] sm:$0xff]
      %v335 = vld [vmem:[%s1 + $0x8] sm:$0xff]
      %v336 = vld [vmem:[%s1 + $0x10] sm:$0xff]
      %v337 = vld [vmem:[%s1 + $0x18] sm:$0xff]
      %v338 = vld [vmem:[%s1 + $0x20] sm:$0xff]
      %v339 = vld [vmem:[%s1 + $0x28] sm:$0xff]
      %v340 = vld [vmem:[%s1 + $0x30] sm:$0xff]
      %v341 = vld [vmem:[%s1 + $0x38] sm:$0xff]
      %v342 = vld [vmem:[%s1 + $0x40] sm:$0xff]
      %v343 = vld [vmem:[%s1 + $0x48] sm:$0xff]
      %v344 = vld [vmem:[%s1 + $0x50] sm:$0xff]
      %v345 = vld [vmem:[%s1 + $0x58] sm:$0xff]
      %v346 = vld [vmem:[%s1 + $0x60] sm:$0xff]
      %v347 = vld [vmem:[%s1 + $0x68] sm:$0xff]
      %v348 = vld [vmem:[%s1 + $0x70] sm:$0xff]
      %v349 = vld [vmem:[%s1 + $0x78] sm:$0xff]
      %350 = vmatprep.subr.mxu0 0.0
      %351 = vmatpush1.msra.mxu0 %v334
      %352 = vmatprep.subr.mxu0 0.0
      %353 = vmatpush1.msra.mxu0 %v335
      %354 = vmatprep.subr.mxu0 0.0
      %355 = vmatpush1.msra.mxu0 %v336
      %356 = vmatprep.subr.mxu0 0.0
      %357 = vmatpush1.msra.mxu0 %v337
      %358 = vmatprep.subr.mxu0 0.0
      %359 = vmatpush1.msra.mxu0 %v338
      %360 = vmatprep.subr.mxu0 0.0
      %361 = vmatpush1.msra.mxu0 %v339
      %362 = vmatprep.subr.mxu0 0.0
      %363 = vmatpush1.msra.mxu0 %v340
      %364 = vmatprep.subr.mxu0 0.0
      %365 = vmatpush1.msra.mxu0 %v341
      %366 = vmatprep.subr.mxu0 0.0
      %367 = vmatpush1.msra.mxu0 %v342
      %368 = vmatprep.subr.mxu0 0.0
      %369 = vmatpush1.msra.mxu0 %v343
      %370 = vmatprep.subr.mxu0 0.0
      %371 = vmatpush1.msra.mxu0 %v344
      %372 = vmatprep.subr.mxu0 0.0
      %373 = vmatpush1.msra.mxu0 %v345
      %374 = vmatprep.subr.mxu0 0.0
      %375 = vmatpush1.msra.mxu0 %v346
      %376 = vmatprep.subr.mxu0 0.0
      %377 = vmatpush1.msra.mxu0 %v347
      %378 = vmatprep.subr.mxu0 0.0
      %379 = vmatpush1.msra.mxu0 %v348
      %380 = vmatprep.subr.mxu0 0.0
      %381 = vmatpush1.msra.mxu0 %v349
      %382 = vmatprep.subr.mxu0 0.0
      %383 = vmatpush1.msra.mxu0 0.0
      %384 = vmatprep.subr.mxu0 0.0
      %385 = vmatpush1.msra.mxu0 0.0
      %386 = vmatprep.subr.mxu0 0.0
      %387 = vmatpush1.msra.mxu0 0.0
      %388 = vmatprep.subr.mxu0 0.0
      %389 = vmatpush1.msra.mxu0 0.0
      %390 = vmatprep.subr.mxu0 0.0
      %391 = vmatpush1.msra.mxu0 0.0
      %392 = vmatprep.subr.mxu0 0.0
      %393 = vmatpush1.msra.mxu0 0.0
      %394 = vmatprep.subr.mxu0 0.0
      %395 = vmatpush1.msra.mxu0 0.0
      %396 = vmatprep.subr.mxu0 0.0
      %397 = vmatpush1.msra.mxu0 0.0
      %398 = vmatprep.subr.mxu0 0.0
      %399 = vmatpush1.msra.mxu0 0.0
      %400 = vmatprep.subr.mxu0 0.0
      %401 = vmatpush1.msra.mxu0 0.0
      %402 = vmatprep.subr.mxu0 0.0
      %403 = vmatpush1.msra.mxu0 0.0
      %404 = vmatprep.subr.mxu0 0.0
      %405 = vmatpush1.msra.mxu0 0.0
      %406 = vmatprep.subr.mxu0 0.0
      %407 = vmatpush1.msra.mxu0 0.0
      %408 = vmatprep.subr.mxu0 0.0
      %409 = vmatpush1.msra.mxu0 0.0
      %410 = vmatprep.subr.mxu0 0.0
      %411 = vmatpush1.msra.mxu0 0.0
      %412 = vmatprep.subr.mxu0 0.0
      %413 = vmatpush1.msra.mxu0 0.0
      %414 = vmatprep.mubr.f32.mxu0 0.0
      %415 = vmatmul.mubr.f32.gmra.mrb[0].mxu0 %v298
      %v416 = vpop.f32.mrb[0].mxu0
      %v417 = vadd.f32 0.0, %v416
      %v418 = vpop.f32.mrb[0].mxu0
      %419 = vmatprep.mubr.f32.mxu0 0.0
      %420 = vmatmul.mubr.f32.gmra.mrb[0].mxu0 %v299
      %v421 = vpop.f32.mrb[0].mxu0
      %v422 = vadd.f32 0.0, %v421
      %v423 = vpop.f32.mrb[0].mxu0
      %424 = vmatprep.mubr.f32.mxu0 0.0
      %425 = vmatmul.mubr.f32.gmra.mrb[0].mxu0 %v300
      %v426 = vpop.f32.mrb[0].mxu0
      %v427 = vadd.f32 0.0, %v426
      %v428 = vpop.f32.mrb[0].mxu0
      %429 = vmatprep.mubr.f32.mxu0 0.0
      %430 = vmatmul.mubr.f32.gmra.mrb[0].mxu0 %v301
      %v431 = vpop.f32.mrb[0].mxu0
      %v432 = vadd.f32 0.0, %v431
      %v433 = vpop.f32.mrb[0].mxu0
      %434 = vmatprep.mubr.f32.mxu0 0.0
      %435 = vmatmul.mubr.f32.gmra.mrb[0].mxu0 %v302
      %v436 = vpop.f32.mrb[0].mxu0
      %v437 = vadd.f32 0.0, %v436
      %v438 = vpop.f32.mrb[0].mxu0
      %439 = vmatprep.mubr.f32.mxu0 0.0
      %440 = vmatmul.mubr.f32.gmra.mrb[0].mxu0 %v303
      %v441 = vpop.f32.mrb[0].mxu0
      %v442 = vadd.f32 0.0, %v441
      %v443 = vpop.f32.mrb[0].mxu0
      %444 = vmatprep.mubr.f32.mxu0 0.0
      %445 = vmatmul.mubr.f32.gmra.mrb[0].mxu0 %v304
      %v446 = vpop.f32.mrb[0].mxu0
      %v447 = vadd.f32 0.0, %v446
      %v448 = vpop.f32.mrb[0].mxu0
      %449 = vmatprep.mubr.f32.mxu0 0.0
      %450 = vmatmul.mubr.f32.gmra.mrb[0].mxu0 %v305
      %v451 = vpop.f32.mrb[0].mxu0
      %v452 = vadd.f32 0.0, %v451
      %v453 = vpop.f32.mrb[0].mxu0
      %454 = vmatprep.mubr.f32.mxu0 0.0
      %455 = vmatmul.mubr.f32.gmra.mrb[0].mxu0 %v306
      %v456 = vpop.f32.mrb[0].mxu0
      %v457 = vadd.f32 0.0, %v456
      %v458 = vpop.f32.mrb[0].mxu0
      %459 = vmatprep.mubr.f32.mxu0 0.0
      %460 = vmatmul.mubr.f32.gmra.mrb[0].mxu0 %v307
      %v461 = vpop.f32.mrb[0].mxu0
      %v462 = vadd.f32 0.0, %v461
      %v463 = vpop.f32.mrb[0].mxu0
      %464 = vmatprep.mubr.f32.mxu0 0.0
      %465 = vmatmul.mubr.f32.gmra.mrb[0].mxu0 %v308
      %v466 = vpop.f32.mrb[0].mxu0
      %v467 = vadd.f32 0.0, %v466
      %v468 = vpop.f32.mrb[0].mxu0
      %469 = vmatprep.mubr.f32.mxu0 0.0
      %470 = vmatmul.mubr.f32.gmra.mrb[0].mxu0 %v309
      %v471 = vpop.f32.mrb[0].mxu0
      %v472 = vadd.f32 0.0, %v471
      %v473 = vpop.f32.mrb[0].mxu0
      %474 = vmatprep.mubr.f32.mxu0 0.0
      %475 = vmatmul.mubr.f32.gmra.mrb[0].mxu0 %v310
      %v476 = vpop.f32.mrb[0].mxu0
      %v477 = vadd.f32 0.0, %v476
      %v478 = vpop.f32.mrb[0].mxu0
      %479 = vmatprep.mubr.f32.mxu0 0.0
      %480 = vmatmul.mubr.f32.gmra.mrb[0].mxu0 %v311
      %v481 = vpop.f32.mrb[0].mxu0
      %v482 = vadd.f32 0.0, %v481
      %v483 = vpop.f32.mrb[0].mxu0
      %484 = vmatprep.mubr.f32.mxu0 0.0
      %485 = vmatmul.mubr.f32.gmra.mrb[0].mxu0 %v312
      %v486 = vpop.f32.mrb[0].mxu0
      %v487 = vadd.f32 0.0, %v486
      %v488 = vpop.f32.mrb[0].mxu0
      %489 = vmatprep.mubr.f32.mxu0 0.0
      %490 = vmatmul.mubr.f32.gmra.mrb[0].mxu0 %v313
      %v491 = vpop.f32.mrb[0].mxu0
      %v492 = vadd.f32 0.0, %v491
      %v493 = vpop.f32.mrb[0].mxu0
      %494 = vmatprep.mubr.f32.mxu0 0.0
      %495 = vmatmul.mubr.f32.gmra.mrb[0].mxu0 %v314
      %v496 = vpop.f32.mrb[0].mxu0
      %v497 = vadd.f32 0.0, %v496
      %v498 = vpop.f32.mrb[0].mxu0
      %499 = vmatprep.mubr.f32.mxu0 0.0
      %500 = vmatmul.mubr.f32.gmra.mrb[0].mxu0 %v315
      %v501 = vpop.f32.mrb[0].mxu0
      %v502 = vadd.f32 0.0, %v501
      %v503 = vpop.f32.mrb[0].mxu0
      %504 = vmatprep.mubr.f32.mxu0 0.0
      %505 = vmatmul.mubr.f32.gmra.mrb[0].mxu0 %v316
      %v506 = vpop.f32.mrb[0].mxu0
      %v507 = vadd.f32 0.0, %v506
      %v508 = vpop.f32.mrb[0].mxu0
      %509 = vmatprep.mubr.f32.mxu0 0.0
      %510 = vmatmul.mubr.f32.gmra.mrb[0].mxu0 %v317
      %v511 = vpop.f32.mrb[0].mxu0
      %v512 = vadd.f32 0.0, %v511
      %v513 = vpop.f32.mrb[0].mxu0
      %514 = vmatprep.mubr.f32.mxu0 0.0
      %515 = vmatmul.mubr.f32.gmra.mrb[0].mxu0 %v318
      %v516 = vpop.f32.mrb[0].mxu0
      %v517 = vadd.f32 0.0, %v516
      %v518 = vpop.f32.mrb[0].mxu0
      %519 = vmatprep.mubr.f32.mxu0 0.0
      %520 = vmatmul.mubr.f32.gmra.mrb[0].mxu0 %v319
      %v521 = vpop.f32.mrb[0].mxu0
      %v522 = vadd.f32 0.0, %v521
      %v523 = vpop.f32.mrb[0].mxu0
      %524 = vmatprep.mubr.f32.mxu0 0.0
      %525 = vmatmul.mubr.f32.gmra.mrb[0].mxu0 %v320
      %v526 = vpop.f32.mrb[0].mxu0
      %v527 = vadd.f32 0.0, %v526
      %v528 = vpop.f32.mrb[0].mxu0
      %529 = vmatprep.mubr.f32.mxu0 0.0
      %530 = vmatmul.mubr.f32.gmra.mrb[0].mxu0 %v321
      %v531 = vpop.f32.mrb[0].mxu0
      %v532 = vadd.f32 0.0, %v531
      %v533 = vpop.f32.mrb[0].mxu0
      %534 = vmatprep.mubr.f32.mxu0 0.0
      %535 = vmatmul.mubr.f32.gmra.mrb[0].mxu0 %v322
      %v536 = vpop.f32.mrb[0].mxu0
      %v537 = vadd.f32 0.0, %v536
      %v538 = vpop.f32.mrb[0].mxu0
      %539 = vmatprep.mubr.f32.mxu0 0.0
      %540 = vmatmul.mubr.f32.gmra.mrb[0].mxu0 %v323
      %v541 = vpop.f32.mrb[0].mxu0
      %v542 = vadd.f32 0.0, %v541
      %v543 = vpop.f32.mrb[0].mxu0
      %544 = vmatprep.mubr.f32.mxu0 0.0
      %545 = vmatmul.mubr.f32.gmra.mrb[0].mxu0 %v324
      %v546 = vpop.f32.mrb[0].mxu0
      %v547 = vadd.f32 0.0, %v546
      %v548 = vpop.f32.mrb[0].mxu0
      %549 = vmatprep.mubr.f32.mxu0 0.0
      %550 = vmatmul.mubr.f32.gmra.mrb[0].mxu0 %v325
      %v551 = vpop.f32.mrb[0].mxu0
      %v552 = vadd.f32 0.0, %v551
      %v553 = vpop.f32.mrb[0].mxu0
      %554 = vmatprep.mubr.f32.mxu0 0.0
      %555 = vmatmul.mubr.f32.gmra.mrb[0].mxu0 %v326
      %v556 = vpop.f32.mrb[0].mxu0
      %v557 = vadd.f32 0.0, %v556
      %v558 = vpop.f32.mrb[0].mxu0
      %559 = vmatprep.mubr.f32.mxu0 0.0
      %560 = vmatmul.mubr.f32.gmra.mrb[0].mxu0 %v327
      %v561 = vpop.f32.mrb[0].mxu0
      %v562 = vadd.f32 0.0, %v561
      %v563 = vpop.f32.mrb[0].mxu0
      %564 = vmatprep.mubr.f32.mxu0 0.0
      %565 = vmatmul.mubr.f32.gmra.mrb[0].mxu0 %v328
      %v566 = vpop.f32.mrb[0].mxu0
      %v567 = vadd.f32 0.0, %v566
      %v568 = vpop.f32.mrb[0].mxu0
      %569 = vmatprep.mubr.f32.mxu0 0.0
      %570 = vmatmul.mubr.f32.gmra.mrb[0].mxu0 %v329
      %v571 = vpop.f32.mrb[0].mxu0
      %v572 = vadd.f32 0.0, %v571
      %v573 = vpop.f32.mrb[0].mxu0
      %574 = vmatprep.mubr.f32.mxu0 0.0
      %575 = vmatmul.mubr.f32.gmra.mrb[0].mxu0 %v330
      %v576 = vpop.f32.mrb[0].mxu0
      %v577 = vadd.f32 0.0, %v576
      %v578 = vpop.f32.mrb[0].mxu0
      %579 = vmatprep.mubr.f32.mxu0 0.0
      %580 = vmatmul.mubr.f32.gmra.mrb[0].mxu0 %v331
      %v581 = vpop.f32.mrb[0].mxu0
      %v582 = vadd.f32 0.0, %v581
      %v583 = vpop.f32.mrb[0].mxu0
      %584 = vmatprep.mubr.f32.mxu0 0.0
      %585 = vmatmul.mubr.f32.gmra.mrb[0].mxu0 %v332
      %v586 = vpop.f32.mrb[0].mxu0
      %v587 = vadd.f32 0.0, %v586
      %v588 = vpop.f32.mrb[0].mxu0
      %589 = vmatprep.mubr.f32.mxu0 0.0
      %590 = vmatmul.mubr.f32.gmra.mrb[0].mxu0 %v333
      %v591 = vpop.f32.mrb[0].mxu0
      %v592 = vadd.f32 0.0, %v591
      %v593 = vpop.f32.mrb[0].mxu0
      %594 = vdwg.mxu0
      %595 = vst [vmem:[#allocation3] sm:$0xff] %v417
      %596 = vst [vmem:[#allocation3 + $0x8] sm:$0xff] %v422
      %597 = vst [vmem:[#allocation3 + $0x10] sm:$0xff] %v427
      %598 = vst [vmem:[#allocation3 + $0x18] sm:$0xff] %v432
      %599 = vst [vmem:[#allocation3 + $0x20] sm:$0xff] %v437
      %600 = vst [vmem:[#allocation3 + $0x28] sm:$0xff] %v442
      %601 = vst [vmem:[#allocation3 + $0x30] sm:$0xff] %v447
      %602 = vst [vmem:[#allocation3 + $0x38] sm:$0xff] %v452
      %603 = vst [vmem:[#allocation3 + $0x40] sm:$0xff] %v457
      %604 = vst [vmem:[#allocation3 + $0x48] sm:$0xff] %v462
      %605 = vst [vmem:[#allocation3 + $0x50] sm:$0xff] %v467
      %606 = vst [vmem:[#allocation3 + $0x58] sm:$0xff] %v472
      %607 = vst [vmem:[#allocation3 + $0x60] sm:$0xff] %v477
      %608 = vst [vmem:[#allocation3 + $0x68] sm:$0xff] %v482
      %609 = vst [vmem:[#allocation3 + $0x70] sm:$0xff] %v487
      %610 = vst [vmem:[#allocation3 + $0x78] sm:$0xff] %v492
      %611 = vst [vmem:[#allocation3 + $0x80] sm:$0xff] %v497
      %612 = vst [vmem:[#allocation3 + $0x88] sm:$0xff] %v502
      %613 = vst [vmem:[#allocation3 + $0x90] sm:$0xff] %v507
      %614 = vst [vmem:[#allocation3 + $0x98] sm:$0xff] %v512
      %615 = vst [vmem:[#allocation3 + $0xa0] sm:$0xff] %v517
      %616 = vst [vmem:[#allocation3 + $0xa8] sm:$0xff] %v522
      %617 = vst [vmem:[#allocation3 + $0xb0] sm:$0xff] %v527
      %618 = vst [vmem:[#allocation3 + $0xb8] sm:$0xff] %v532
      %619 = vst [vmem:[#allocation3 + $0xc0] sm:$0xff] %v537
      %620 = vst [vmem:[#allocation3 + $0xc8] sm:$0xff] %v542
      %621 = vst [vmem:[#allocation3 + $0xd0] sm:$0xff] %v547
      %622 = vst [vmem:[#allocation3 + $0xd8] sm:$0xff] %v552
      %623 = vst [vmem:[#allocation3 + $0xe0] sm:$0xff] %v557
      %624 = vst [vmem:[#allocation3 + $0xe8] sm:$0xff] %v562
      %625 = vst [vmem:[#allocation3 + $0xf0] sm:$0xff] %v567
      %626 = vst [vmem:[#allocation3 + $0xf8] sm:$0xff] %v572
      %627 = vst [vmem:[#allocation3 + $0x100] sm:$0xff] %v577
      %628 = vst [vmem:[#allocation3 + $0x108] sm:$0xff] %v582
      %629 = vst [vmem:[#allocation3 + $0x110] sm:$0xff] %v587
      %630 = vst [vmem:[#allocation3 + $0x118] sm:$0xff] %v592
      %v631 = vld [vmem:[%s246 + $0x6] sm:$0xff]
      %v632 = vld [vmem:[%s246 + $0xe] sm:$0xff]
      %v633 = vld [vmem:[%s246 + $0x16] sm:$0xff]
      %v634 = vld [vmem:[%s246 + $0x1e] sm:$0xff]
      %v635 = vld [vmem:[%s246 + $0x26] sm:$0xff]
      %v636 = vld [vmem:[%s246 + $0x2e] sm:$0xff]
      %v637 = vld [vmem:[%s246 + $0x36] sm:$0xff]
      %v638 = vld [vmem:[%s246 + $0x3e] sm:$0xff]
      %v639 = vld [vmem:[%s246 + $0x46] sm:$0xff]
      %v640 = vld [vmem:[%s246 + $0x4e] sm:$0xff]
      %v641 = vld [vmem:[%s246 + $0x56] sm:$0xff]
      %v642 = vld [vmem:[%s246 + $0x5e] sm:$0xff]
      %v643 = vld [vmem:[%s246 + $0x66] sm:$0xff]
      %v644 = vld [vmem:[%s246 + $0x6e] sm:$0xff]
      %v645 = vld [vmem:[%s246 + $0x76] sm:$0xff]
      %v646 = vld [vmem:[%s246 + $0x7e] sm:$0xff]
      %v647 = vld [vmem:[%s246 + $0x86] sm:$0xff]
      %v648 = vld [vmem:[%s246 + $0x8e] sm:$0xff]
      %v649 = vld [vmem:[%s246 + $0x96] sm:$0xff]
      %v650 = vld [vmem:[%s246 + $0x9e] sm:$0xff]
      %v651 = vld [vmem:[%s246 + $0xa6] sm:$0xff]
      %v652 = vld [vmem:[%s246 + $0xae] sm:$0xff]
      %v653 = vld [vmem:[%s246 + $0xb6] sm:$0xff]
      %v654 = vld [vmem:[%s246 + $0xbe] sm:$0xff]
      %v655 = vld [vmem:[%s246 + $0xc6] sm:$0xff]
      %v656 = vld [vmem:[%s246 + $0xce] sm:$0xff]
      %v657 = vld [vmem:[%s246 + $0xd6] sm:$0xff]
      %v658 = vld [vmem:[%s246 + $0xde] sm:$0xff]
      %v659 = vld [vmem:[%s246 + $0xe6] sm:$0xff]
      %v660 = vld [vmem:[%s246 + $0xee] sm:$0xff]
      %v661 = vld [vmem:[%s246 + $0xf6] sm:$0xff]
      %v662 = vld [vmem:[%s246 + $0xfe] sm:$0xff]
      %v663 = vld [vmem:[%s246 + $0x106] sm:$0xff]
      %v664 = vld [vmem:[%s246 + $0x10e] sm:$0xff]
      %v665 = vld [vmem:[%s246 + $0x116] sm:$0xff]
      %v666 = vld [vmem:[%s246 + $0x11e] sm:$0xff]
      %s667 = scalar_lea.vmem %s1, 128
      %v668 = vld [vmem:[%s667] sm:$0xff]
      %v669 = vld [vmem:[%s667 + $0x8] sm:$0xff]
      %v670 = vld [vmem:[%s667 + $0x10] sm:$0xff]
      %v671 = vld [vmem:[%s667 + $0x18] sm:$0xff]
      %v672 = vld [vmem:[%s667 + $0x20] sm:$0xff]
      %v673 = vld [vmem:[%s667 + $0x28] sm:$0xff]
      %v674 = vld [vmem:[%s667 + $0x30] sm:$0xff]
      %v675 = vld [vmem:[%s667 + $0x38] sm:$0xff]
      %v676 = vld [vmem:[%s667 + $0x40] sm:$0xff]
      %v677 = vld [vmem:[%s667 + $0x48] sm:$0xff]
      %v678 = vld [vmem:[%s667 + $0x50] sm:$0xff]
      %v679 = vld [vmem:[%s667 + $0x58] sm:$0xff]
      %v680 = vld [vmem:[%s667 + $0x60] sm:$0xff]
      %v681 = vld [vmem:[%s667 + $0x68] sm:$0xff]
      %v682 = vld [vmem:[%s667 + $0x70] sm:$0xff]
      %v683 = vld [vmem:[%s667 + $0x78] sm:$0xff]
      %684 = vmatprep.subr.mxu0 0.0
      %685 = vmatpush1.msra.mxu0 %v668
      %686 = vmatprep.subr.mxu0 0.0
      %687 = vmatpush1.msra.mxu0 %v669
      %688 = vmatprep.subr.mxu0 0.0
      %689 = vmatpush1.msra.mxu0 %v670
      %690 = vmatprep.subr.mxu0 0.0
      %691 = vmatpush1.msra.mxu0 %v671
      %692 = vmatprep.subr.mxu0 0.0
      %693 = vmatpush1.msra.mxu0 %v672
      %694 = vmatprep.subr.mxu0 0.0
      %695 = vmatpush1.msra.mxu0 %v673
      %696 = vmatprep.subr.mxu0 0.0
      %697 = vmatpush1.msra.mxu0 %v674
      %698 = vmatprep.subr.mxu0 0.0
      %699 = vmatpush1.msra.mxu0 %v675
      %700 = vmatprep.subr.mxu0 0.0
      %701 = vmatpush1.msra.mxu0 %v676
      %702 = vmatprep.subr.mxu0 0.0
      %703 = vmatpush1.msra.mxu0 %v677
      %704 = vmatprep.subr.mxu0 0.0
      %705 = vmatpush1.msra.mxu0 %v678
      %706 = vmatprep.subr.mxu0 0.0
      %707 = vmatpush1.msra.mxu0 %v679
      %708 = vmatprep.subr.mxu0 0.0
      %709 = vmatpush1.msra.mxu0 %v680
      %710 = vmatprep.subr.mxu0 0.0
      %711 = vmatpush1.msra.mxu0 %v681
      %712 = vmatprep.subr.mxu0 0.0
      %713 = vmatpush1.msra.mxu0 %v682
      %714 = vmatprep.subr.mxu0 0.0
      %715 = vmatpush1.msra.mxu0 %v683
      %716 = vmatprep.subr.mxu0 0.0
      %717 = vmatpush1.msra.mxu0 0.0
      %718 = vmatprep.subr.mxu0 0.0
      %719 = vmatpush1.msra.mxu0 0.0
      %720 = vmatprep.subr.mxu0 0.0
      %721 = vmatpush1.msra.mxu0 0.0
      %722 = vmatprep.subr.mxu0 0.0
      %723 = vmatpush1.msra.mxu0 0.0
      %724 = vmatprep.subr.mxu0 0.0
      %725 = vmatpush1.msra.mxu0 0.0
      %726 = vmatprep.subr.mxu0 0.0
      %727 = vmatpush1.msra.mxu0 0.0
      %728 = vmatprep.subr.mxu0 0.0
      %729 = vmatpush1.msra.mxu0 0.0
      %730 = vmatprep.subr.mxu0 0.0
      %731 = vmatpush1.msra.mxu0 0.0
      %732 = vmatprep.subr.mxu0 0.0
      %733 = vmatpush1.msra.mxu0 0.0
      %734 = vmatprep.subr.mxu0 0.0
      %735 = vmatpush1.msra.mxu0 0.0
      %736 = vmatprep.subr.mxu0 0.0
      %737 = vmatpush1.msra.mxu0 0.0
      %738 = vmatprep.subr.mxu0 0.0
      %739 = vmatpush1.msra.mxu0 0.0
      %740 = vmatprep.subr.mxu0 0.0
      %741 = vmatpush1.msra.mxu0 0.0
      %742 = vmatprep.subr.mxu0 0.0
      %743 = vmatpush1.msra.mxu0 0.0
      %744 = vmatprep.subr.mxu0 0.0
      %745 = vmatpush1.msra.mxu0 0.0
      %746 = vmatprep.subr.mxu0 0.0
      %747 = vmatpush1.msra.mxu0 0.0
      %748 = vmatprep.mubr.f32.mxu0 0.0
      %749 = vmatmul.mubr.f32.gmra.mrb[0].mxu0 %v631
      %v750 = vpop.f32.mrb[0].mxu0
      %v751 = vadd.f32 0.0, %v750
      %v752 = vpop.f32.mrb[0].mxu0
      %753 = vmatprep.mubr.f32.mxu0 0.0
      %754 = vmatmul.mubr.f32.gmra.mrb[0].mxu0 %v632
      %v755 = vpop.f32.mrb[0].mxu0
      %v756 = vadd.f32 0.0, %v755
      %v757 = vpop.f32.mrb[0].mxu0
      %758 = vmatprep.mubr.f32.mxu0 0.0
      %759 = vmatmul.mubr.f32.gmra.mrb[0].mxu0 %v633
      %v760 = vpop.f32.mrb[0].mxu0
      %v761 = vadd.f32 0.0, %v760
      %v762 = vpop.f32.mrb[0].mxu0
      %763 = vmatprep.mubr.f32.mxu0 0.0
      %764 = vmatmul.mubr.f32.gmra.mrb[0].mxu0 %v634
      %v765 = vpop.f32.mrb[0].mxu0
      %v766 = vadd.f32 0.0, %v765
      %v767 = vpop.f32.mrb[0].mxu0
      %768 = vmatprep.mubr.f32.mxu0 0.0
      %769 = vmatmul.mubr.f32.gmra.mrb[0].mxu0 %v635
      %v770 = vpop.f32.mrb[0].mxu0
      %v771 = vadd.f32 0.0, %v770
      %v772 = vpop.f32.mrb[0].mxu0
      %773 = vmatprep.mubr.f32.mxu0 0.0
      %774 = vmatmul.mubr.f32.gmra.mrb[0].mxu0 %v636
      %v775 = vpop.f32.mrb[0].mxu0
      %v776 = vadd.f32 0.0, %v775
      %v777 = vpop.f32.mrb[0].mxu0
      %778 = vmatprep.mubr.f32.mxu0 0.0
      %779 = vmatmul.mubr.f32.gmra.mrb[0].mxu0 %v637
      %v780 = vpop.f32.mrb[0].mxu0
      %v781 = vadd.f32 0.0, %v780
      %v782 = vpop.f32.mrb[0].mxu0
      %783 = vmatprep.mubr.f32.mxu0 0.0
      %784 = vmatmul.mubr.f32.gmra.mrb[0].mxu0 %v638
      %v785 = vpop.f32.mrb[0].mxu0
      %v786 = vadd.f32 0.0, %v785
      %v787 = vpop.f32.mrb[0].mxu0
      %788 = vmatprep.mubr.f32.mxu0 0.0
      %789 = vmatmul.mubr.f32.gmra.mrb[0].mxu0 %v639
      %v790 = vpop.f32.mrb[0].mxu0
      %v791 = vadd.f32 0.0, %v790
      %v792 = vpop.f32.mrb[0].mxu0
      %793 = vmatprep.mubr.f32.mxu0 0.0
      %794 = vmatmul.mubr.f32.gmra.mrb[0].mxu0 %v640
      %v795 = vpop.f32.mrb[0].mxu0
      %v796 = vadd.f32 0.0, %v795
      %v797 = vpop.f32.mrb[0].mxu0
      %798 = vmatprep.mubr.f32.mxu0 0.0
      %799 = vmatmul.mubr.f32.gmra.mrb[0].mxu0 %v641
      %v800 = vpop.f32.mrb[0].mxu0
      %v801 = vadd.f32 0.0, %v800
      %v802 = vpop.f32.mrb[0].mxu0
      %803 = vmatprep.mubr.f32.mxu0 0.0
      %804 = vmatmul.mubr.f32.gmra.mrb[0].mxu0 %v642
      %v805 = vpop.f32.mrb[0].mxu0
      %v806 = vadd.f32 0.0, %v805
      %v807 = vpop.f32.mrb[0].mxu0
      %808 = vmatprep.mubr.f32.mxu0 0.0
      %809 = vmatmul.mubr.f32.gmra.mrb[0].mxu0 %v643
      %v810 = vpop.f32.mrb[0].mxu0
      %v811 = vadd.f32 0.0, %v810
      %v812 = vpop.f32.mrb[0].mxu0
      %813 = vmatprep.mubr.f32.mxu0 0.0
      %814 = vmatmul.mubr.f32.gmra.mrb[0].mxu0 %v644
      %v815 = vpop.f32.mrb[0].mxu0
      %v816 = vadd.f32 0.0, %v815
      %v817 = vpop.f32.mrb[0].mxu0
      %818 = vmatprep.mubr.f32.mxu0 0.0
      %819 = vmatmul.mubr.f32.gmra.mrb[0].mxu0 %v645
      %v820 = vpop.f32.mrb[0].mxu0
      %v821 = vadd.f32 0.0, %v820
      %v822 = vpop.f32.mrb[0].mxu0
      %823 = vmatprep.mubr.f32.mxu0 0.0
      %824 = vmatmul.mubr.f32.gmra.mrb[0].mxu0 %v646
      %v825 = vpop.f32.mrb[0].mxu0
      %v826 = vadd.f32 0.0, %v825
      %v827 = vpop.f32.mrb[0].mxu0
      %828 = vmatprep.mubr.f32.mxu0 0.0
      %829 = vmatmul.mubr.f32.gmra.mrb[0].mxu0 %v647
      %v830 = vpop.f32.mrb[0].mxu0
      %v831 = vadd.f32 0.0, %v830
      %v832 = vpop.f32.mrb[0].mxu0
      %833 = vmatprep.mubr.f32.mxu0 0.0
      %834 = vmatmul.mubr.f32.gmra.mrb[0].mxu0 %v648
      %v835 = vpop.f32.mrb[0].mxu0
      %v836 = vadd.f32 0.0, %v835
      %v837 = vpop.f32.mrb[0].mxu0
      %838 = vmatprep.mubr.f32.mxu0 0.0
      %839 = vmatmul.mubr.f32.gmra.mrb[0].mxu0 %v649
      %v840 = vpop.f32.mrb[0].mxu0
      %v841 = vadd.f32 0.0, %v840
      %v842 = vpop.f32.mrb[0].mxu0
      %843 = vmatprep.mubr.f32.mxu0 0.0
      %844 = vmatmul.mubr.f32.gmra.mrb[0].mxu0 %v650
      %v845 = vpop.f32.mrb[0].mxu0
      %v846 = vadd.f32 0.0, %v845
      %v847 = vpop.f32.mrb[0].mxu0
      %848 = vmatprep.mubr.f32.mxu0 0.0
      %849 = vmatmul.mubr.f32.gmra.mrb[0].mxu0 %v651
      %v850 = vpop.f32.mrb[0].mxu0
      %v851 = vadd.f32 0.0, %v850
      %v852 = vpop.f32.mrb[0].mxu0
      %853 = vmatprep.mubr.f32.mxu0 0.0
      %854 = vmatmul.mubr.f32.gmra.mrb[0].mxu0 %v652
      %v855 = vpop.f32.mrb[0].mxu0
      %v856 = vadd.f32 0.0, %v855
      %v857 = vpop.f32.mrb[0].mxu0
      %858 = vmatprep.mubr.f32.mxu0 0.0
      %859 = vmatmul.mubr.f32.gmra.mrb[0].mxu0 %v653
      %v860 = vpop.f32.mrb[0].mxu0
      %v861 = vadd.f32 0.0, %v860
      %v862 = vpop.f32.mrb[0].mxu0
      %863 = vmatprep.mubr.f32.mxu0 0.0
      %864 = vmatmul.mubr.f32.gmra.mrb[0].mxu0 %v654
      %v865 = vpop.f32.mrb[0].mxu0
      %v866 = vadd.f32 0.0, %v865
      %v867 = vpop.f32.mrb[0].mxu0
      %868 = vmatprep.mubr.f32.mxu0 0.0
      %869 = vmatmul.mubr.f32.gmra.mrb[0].mxu0 %v655
      %v870 = vpop.f32.mrb[0].mxu0
      %v871 = vadd.f32 0.0, %v870
      %v872 = vpop.f32.mrb[0].mxu0
      %873 = vmatprep.mubr.f32.mxu0 0.0
      %874 = vmatmul.mubr.f32.gmra.mrb[0].mxu0 %v656
      %v875 = vpop.f32.mrb[0].mxu0
      %v876 = vadd.f32 0.0, %v875
      %v877 = vpop.f32.mrb[0].mxu0
      %878 = vmatprep.mubr.f32.mxu0 0.0
      %879 = vmatmul.mubr.f32.gmra.mrb[0].mxu0 %v657
      %v880 = vpop.f32.mrb[0].mxu0
      %v881 = vadd.f32 0.0, %v880
      %v882 = vpop.f32.mrb[0].mxu0
      %883 = vmatprep.mubr.f32.mxu0 0.0
      %884 = vmatmul.mubr.f32.gmra.mrb[0].mxu0 %v658
      %v885 = vpop.f32.mrb[0].mxu0
      %v886 = vadd.f32 0.0, %v885
      %v887 = vpop.f32.mrb[0].mxu0
      %888 = vmatprep.mubr.f32.mxu0 0.0
      %889 = vmatmul.mubr.f32.gmra.mrb[0].mxu0 %v659
      %v890 = vpop.f32.mrb[0].mxu0
      %v891 = vadd.f32 0.0, %v890
      %v892 = vpop.f32.mrb[0].mxu0
      %893 = vmatprep.mubr.f32.mxu0 0.0
      %894 = vmatmul.mubr.f32.gmra.mrb[0].mxu0 %v660
      %v895 = vpop.f32.mrb[0].mxu0
      %v896 = vadd.f32 0.0, %v895
      %v897 = vpop.f32.mrb[0].mxu0
      %898 = vmatprep.mubr.f32.mxu0 0.0
      %899 = vmatmul.mubr.f32.gmra.mrb[0].mxu0 %v661
      %v900 = vpop.f32.mrb[0].mxu0
      %v901 = vadd.f32 0.0, %v900
      %v902 = vpop.f32.mrb[0].mxu0
      %903 = vmatprep.mubr.f32.mxu0 0.0
      %904 = vmatmul.mubr.f32.gmra.mrb[0].mxu0 %v662
      %v905 = vpop.f32.mrb[0].mxu0
      %v906 = vadd.f32 0.0, %v905
      %v907 = vpop.f32.mrb[0].mxu0
      %908 = vmatprep.mubr.f32.mxu0 0.0
      %909 = vmatmul.mubr.f32.gmra.mrb[0].mxu0 %v663
      %v910 = vpop.f32.mrb[0].mxu0
      %v911 = vadd.f32 0.0, %v910
      %v912 = vpop.f32.mrb[0].mxu0
      %913 = vmatprep.mubr.f32.mxu0 0.0
      %914 = vmatmul.mubr.f32.gmra.mrb[0].mxu0 %v664
      %v915 = vpop.f32.mrb[0].mxu0
      %v916 = vadd.f32 0.0, %v915
      %v917 = vpop.f32.mrb[0].mxu0
      %918 = vmatprep.mubr.f32.mxu0 0.0
      %919 = vmatmul.mubr.f32.gmra.mrb[0].mxu0 %v665
      %v920 = vpop.f32.mrb[0].mxu0
      %v921 = vadd.f32 0.0, %v920
      %v922 = vpop.f32.mrb[0].mxu0
      %923 = vmatprep.mubr.f32.mxu0 0.0
      %924 = vmatmul.mubr.f32.gmra.mrb[0].mxu0 %v666
      %v925 = vpop.f32.mrb[0].mxu0
      %v926 = vadd.f32 0.0, %v925
      %v927 = vpop.f32.mrb[0].mxu0
      %928 = vdwg.mxu0
      %v929 = vld [vmem:[#allocation3] sm:$0xff]
      %v930 = vld [vmem:[#allocation3 + $0x8] sm:$0xff]
      %v931 = vld [vmem:[#allocation3 + $0x10] sm:$0xff]
      %v932 = vld [vmem:[#allocation3 + $0x18] sm:$0xff]
      %v933 = vld [vmem:[#allocation3 + $0x20] sm:$0xff]
      %v934 = vld [vmem:[#allocation3 + $0x28] sm:$0xff]
      %v935 = vld [vmem:[#allocation3 + $0x30] sm:$0xff]
      %v936 = vld [vmem:[#allocation3 + $0x38] sm:$0xff]
      %v937 = vld [vmem:[#allocation3 + $0x40] sm:$0xff]
      %v938 = vld [vmem:[#allocation3 + $0x48] sm:$0xff]
      %v939 = vld [vmem:[#allocation3 + $0x50] sm:$0xff]
      %v940 = vld [vmem:[#allocation3 + $0x58] sm:$0xff]
      %v941 = vld [vmem:[#allocation3 + $0x60] sm:$0xff]
      %v942 = vld [vmem:[#allocation3 + $0x68] sm:$0xff]
      %v943 = vld [vmem:[#allocation3 + $0x70] sm:$0xff]
      %v944 = vld [vmem:[#allocation3 + $0x78] sm:$0xff]
      %v945 = vld [vmem:[#allocation3 + $0x80] sm:$0xff]
      %v946 = vld [vmem:[#allocation3 + $0x88] sm:$0xff]
      %v947 = vld [vmem:[#allocation3 + $0x90] sm:$0xff]
      %v948 = vld [vmem:[#allocation3 + $0x98] sm:$0xff]
      %v949 = vld [vmem:[#allocation3 + $0xa0] sm:$0xff]
      %v950 = vld [vmem:[#allocation3 + $0xa8] sm:$0xff]
      %v951 = vld [vmem:[#allocation3 + $0xb0] sm:$0xff]
      %v952 = vld [vmem:[#allocation3 + $0xb8] sm:$0xff]
      %v953 = vld [vmem:[#allocation3 + $0xc0] sm:$0xff]
      %v954 = vld [vmem:[#allocation3 + $0xc8] sm:$0xff]
      %v955 = vld [vmem:[#allocation3 + $0xd0] sm:$0xff]
      %v956 = vld [vmem:[#allocation3 + $0xd8] sm:$0xff]
      %v957 = vld [vmem:[#allocation3 + $0xe0] sm:$0xff]
      %v958 = vld [vmem:[#allocation3 + $0xe8] sm:$0xff]
      %v959 = vld [vmem:[#allocation3 + $0xf0] sm:$0xff]
      %v960 = vld [vmem:[#allocation3 + $0xf8] sm:$0xff]
      %v961 = vld [vmem:[#allocation3 + $0x100] sm:$0xff]
      %v962 = vld [vmem:[#allocation3 + $0x108] sm:$0xff]
      %v963 = vld [vmem:[#allocation3 + $0x110] sm:$0xff]
      %v964 = vld [vmem:[#allocation3 + $0x118] sm:$0xff]
      %v965 = vadd.f32 %v929, %v751
      %v966 = vadd.f32 %v930, %v756
      %v967 = vadd.f32 %v931, %v761
      %v968 = vadd.f32 %v932, %v766
      %v969 = vadd.f32 %v933, %v771
      %v970 = vadd.f32 %v934, %v776
      %v971 = vadd.f32 %v935, %v781
      %v972 = vadd.f32 %v936, %v786
      %v973 = vadd.f32 %v937, %v791
      %v974 = vadd.f32 %v938, %v796
      %v975 = vadd.f32 %v939, %v801
      %v976 = vadd.f32 %v940, %v806
      %v977 = vadd.f32 %v941, %v811
      %v978 = vadd.f32 %v942, %v816
      %v979 = vadd.f32 %v943, %v821
      %v980 = vadd.f32 %v944, %v826
      %v981 = vadd.f32 %v945, %v831
      %v982 = vadd.f32 %v946, %v836
      %v983 = vadd.f32 %v947, %v841
      %v984 = vadd.f32 %v948, %v846
      %v985 = vadd.f32 %v949, %v851
      %v986 = vadd.f32 %v950, %v856
      %v987 = vadd.f32 %v951, %v861
      %v988 = vadd.f32 %v952, %v866
      %v989 = vadd.f32 %v953, %v871
      %v990 = vadd.f32 %v954, %v876
      %v991 = vadd.f32 %v955, %v881
      %v992 = vadd.f32 %v956, %v886
      %v993 = vadd.f32 %v957, %v891
      %v994 = vadd.f32 %v958, %v896
      %v995 = vadd.f32 %v959, %v901
      %v996 = vadd.f32 %v960, %v906
      %v997 = vadd.f32 %v961, %v911
      %v998 = vadd.f32 %v962, %v916
      %v999 = vadd.f32 %v963, %v921
      %v1000 = vadd.f32 %v964, %v926
      %1001 = vst [vmem:[#allocation3] sm:$0xff] %v965
      %1002 = vst [vmem:[#allocation3 + $0x8] sm:$0xff] %v966
      %1003 = vst [vmem:[#allocation3 + $0x10] sm:$0xff] %v967
      %1004 = vst [vmem:[#allocation3 + $0x18] sm:$0xff] %v968
      %1005 = vst [vmem:[#allocation3 + $0x20] sm:$0xff] %v969
      %1006 = vst [vmem:[#allocation3 + $0x28] sm:$0xff] %v970
      %1007 = vst [vmem:[#allocation3 + $0x30] sm:$0xff] %v971
      %1008 = vst [vmem:[#allocation3 + $0x38] sm:$0xff] %v972
      %1009 = vst [vmem:[#allocation3 + $0x40] sm:$0xff] %v973
      %1010 = vst [vmem:[#allocation3 + $0x48] sm:$0xff] %v974
      %1011 = vst [vmem:[#allocation3 + $0x50] sm:$0xff] %v975
      %1012 = vst [vmem:[#allocation3 + $0x58] sm:$0xff] %v976
      %1013 = vst [vmem:[#allocation3 + $0x60] sm:$0xff] %v977
      %1014 = vst [vmem:[#allocation3 + $0x68] sm:$0xff] %v978
      %1015 = vst [vmem:[#allocation3 + $0x70] sm:$0xff] %v979
      %1016 = vst [vmem:[#allocation3 + $0x78] sm:$0xff] %v980
      %1017 = vst [vmem:[#allocation3 + $0x80] sm:$0xff] %v981
      %1018 = vst [vmem:[#allocation3 + $0x88] sm:$0xff] %v982
      %1019 = vst [vmem:[#allocation3 + $0x90] sm:$0xff] %v983
      %1020 = vst [vmem:[#allocation3 + $0x98] sm:$0xff] %v984
      %1021 = vst [vmem:[#allocation3 + $0xa0] sm:$0xff] %v985
      %1022 = vst [vmem:[#allocation3 + $0xa8] sm:$0xff] %v986
      %1023 = vst [vmem:[#allocation3 + $0xb0] sm:$0xff] %v987
      %1024 = vst [vmem:[#allocation3 + $0xb8] sm:$0xff] %v988
      %1025 = vst [vmem:[#allocation3 + $0xc0] sm:$0xff] %v989
      %1026 = vst [vmem:[#allocation3 + $0xc8] sm:$0xff] %v990
      %1027 = vst [vmem:[#allocation3 + $0xd0] sm:$0xff] %v991
      %1028 = vst [vmem:[#allocation3 + $0xd8] sm:$0xff] %v992
      %1029 = vst [vmem:[#allocation3 + $0xe0] sm:$0xff] %v993
      %1030 = vst [vmem:[#allocation3 + $0xe8] sm:$0xff] %v994
      %1031 = vst [vmem:[#allocation3 + $0xf0] sm:$0xff] %v995
      %1032 = vst [vmem:[#allocation3 + $0xf8] sm:$0xff] %v996
      %1033 = vst [vmem:[#allocation3 + $0x100] sm:$0xff] %v997
      %1034 = vst [vmem:[#allocation3 + $0x108] sm:$0xff] %v998
      %1035 = vst [vmem:[#allocation3 + $0x110] sm:$0xff] %v999
      %1036 = vst [vmem:[#allocation3 + $0x118] sm:$0xff] %v1000
      %v1037 = vld [vmem:[%s246 + $0x7] sm:$0xff]
      %v1038 = vld [vmem:[%s246 + $0xf] sm:$0xff]
      %v1039 = vld [vmem:[%s246 + $0x17] sm:$0xff]
      %v1040 = vld [vmem:[%s246 + $0x1f] sm:$0xff]
      %v1041 = vld [vmem:[%s246 + $0x27] sm:$0xff]
      %v1042 = vld [vmem:[%s246 + $0x2f] sm:$0xff]
      %v1043 = vld [vmem:[%s246 + $0x37] sm:$0xff]
      %v1044 = vld [vmem:[%s246 + $0x3f] sm:$0xff]
      %v1045 = vld [vmem:[%s246 + $0x47] sm:$0xff]
      %v1046 = vld [vmem:[%s246 + $0x4f] sm:$0xff]
      %v1047 = vld [vmem:[%s246 + $0x57] sm:$0xff]
      %v1048 = vld [vmem:[%s246 + $0x5f] sm:$0xff]
      %v1049 = vld [vmem:[%s246 + $0x67] sm:$0xff]
      %v1050 = vld [vmem:[%s246 + $0x6f] sm:$0xff]
      %v1051 = vld [vmem:[%s246 + $0x77] sm:$0xff]
      %v1052 = vld [vmem:[%s246 + $0x7f] sm:$0xff]
      %v1053 = vld [vmem:[%s246 + $0x87] sm:$0xff]
      %v1054 = vld [vmem:[%s246 + $0x8f] sm:$0xff]
      %v1055 = vld [vmem:[%s246 + $0x97] sm:$0xff]
      %v1056 = vld [vmem:[%s246 + $0x9f] sm:$0xff]
      %v1057 = vld [vmem:[%s246 + $0xa7] sm:$0xff]
      %v1058 = vld [vmem:[%s246 + $0xaf] sm:$0xff]
      %v1059 = vld [vmem:[%s246 + $0xb7] sm:$0xff]
      %v1060 = vld [vmem:[%s246 + $0xbf] sm:$0xff]
      %v1061 = vld [vmem:[%s246 + $0xc7] sm:$0xff]
      %v1062 = vld [vmem:[%s246 + $0xcf] sm:$0xff]
      %v1063 = vld [vmem:[%s246 + $0xd7] sm:$0xff]
      %v1064 = vld [vmem:[%s246 + $0xdf] sm:$0xff]
      %v1065 = vld [vmem:[%s246 + $0xe7] sm:$0xff]
      %v1066 = vld [vmem:[%s246 + $0xef] sm:$0xff]
      %v1067 = vld [vmem:[%s246 + $0xf7] sm:$0xff]
      %v1068 = vld [vmem:[%s246 + $0xff] sm:$0xff]
      %v1069 = vld [vmem:[%s246 + $0x107] sm:$0xff]
      %v1070 = vld [vmem:[%s246 + $0x10f] sm:$0xff]
      %v1071 = vld [vmem:[%s246 + $0x117] sm:$0xff]
      %v1072 = vld [vmem:[%s246 + $0x11f] sm:$0xff]
      %s1073 = scalar_lea.vmem %s1, 256
      %v1074 = vld [vmem:[%s1073] sm:$0xff]
      %v1075 = vld [vmem:[%s1073 + $0x8] sm:$0xff]
      %v1076 = vld [vmem:[%s1073 + $0x10] sm:$0xff]
      %v1077 = vld [vmem:[%s1073 + $0x18] sm:$0xff]
      %v1078 = vld [vmem:[%s1073 + $0x20] sm:$0xff]
      %v1079 = vld [vmem:[%s1073 + $0x28] sm:$0xff]
      %v1080 = vld [vmem:[%s1073 + $0x30] sm:$0xff]
      %v1081 = vld [vmem:[%s1073 + $0x38] sm:$0xff]
      %v1082 = vld [vmem:[%s1073 + $0x40] sm:$0xff]
      %v1083 = vld [vmem:[%s1073 + $0x48] sm:$0xff]
      %v1084 = vld [vmem:[%s1073 + $0x50] sm:$0xff]
      %v1085 = vld [vmem:[%s1073 + $0x58] sm:$0xff]
      %v1086 = vld [vmem:[%s1073 + $0x60] sm:$0xff]
      %v1087 = vld [vmem:[%s1073 + $0x68] sm:$0xff]
      %v1088 = vld [vmem:[%s1073 + $0x70] sm:$0xff]
      %v1089 = vld [vmem:[%s1073 + $0x78] sm:$0xff]
      %1090 = vmatprep.subr.mxu0 0.0
      %1091 = vmatpush1.msra.mxu0 %v1074
      %1092 = vmatprep.subr.mxu0 0.0
      %1093 = vmatpush1.msra.mxu0 %v1075
      %1094 = vmatprep.subr.mxu0 0.0
      %1095 = vmatpush1.msra.mxu0 %v1076
      %1096 = vmatprep.subr.mxu0 0.0
      %1097 = vmatpush1.msra.mxu0 %v1077
      %1098 = vmatprep.subr.mxu0 0.0
      %1099 = vmatpush1.msra.mxu0 %v1078
      %1100 = vmatprep.subr.mxu0 0.0
      %1101 = vmatpush1.msra.mxu0 %v1079
      %1102 = vmatprep.subr.mxu0 0.0
      %1103 = vmatpush1.msra.mxu0 %v1080
      %1104 = vmatprep.subr.mxu0 0.0
      %1105 = vmatpush1.msra.mxu0 %v1081
      %1106 = vmatprep.subr.mxu0 0.0
      %1107 = vmatpush1.msra.mxu0 %v1082
      %1108 = vmatprep.subr.mxu0 0.0
      %1109 = vmatpush1.msra.mxu0 %v1083
      %1110 = vmatprep.subr.mxu0 0.0
      %1111 = vmatpush1.msra.mxu0 %v1084
      %1112 = vmatprep.subr.mxu0 0.0
      %1113 = vmatpush1.msra.mxu0 %v1085
      %1114 = vmatprep.subr.mxu0 0.0
      %1115 = vmatpush1.msra.mxu0 %v1086
      %1116 = vmatprep.subr.mxu0 0.0
      %1117 = vmatpush1.msra.mxu0 %v1087
      %1118 = vmatprep.subr.mxu0 0.0
      %1119 = vmatpush1.msra.mxu0 %v1088
      %1120 = vmatprep.subr.mxu0 0.0
      %1121 = vmatpush1.msra.mxu0 %v1089
      %1122 = vmatprep.subr.mxu0 0.0
      %1123 = vmatpush1.msra.mxu0 0.0
      %1124 = vmatprep.subr.mxu0 0.0
      %1125 = vmatpush1.msra.mxu0 0.0
      %1126 = vmatprep.subr.mxu0 0.0
      %1127 = vmatpush1.msra.mxu0 0.0
      %1128 = vmatprep.subr.mxu0 0.0
      %1129 = vmatpush1.msra.mxu0 0.0
      %1130 = vmatprep.subr.mxu0 0.0
      %1131 = vmatpush1.msra.mxu0 0.0
      %1132 = vmatprep.subr.mxu0 0.0
      %1133 = vmatpush1.msra.mxu0 0.0
      %1134 = vmatprep.subr.mxu0 0.0
      %1135 = vmatpush1.msra.mxu0 0.0
      %1136 = vmatprep.subr.mxu0 0.0
      %1137 = vmatpush1.msra.mxu0 0.0
      %1138 = vmatprep.subr.mxu0 0.0
      %1139 = vmatpush1.msra.mxu0 0.0
      %1140 = vmatprep.subr.mxu0 0.0
      %1141 = vmatpush1.msra.mxu0 0.0
      %1142 = vmatprep.subr.mxu0 0.0
      %1143 = vmatpush1.msra.mxu0 0.0
      %1144 = vmatprep.subr.mxu0 0.0
      %1145 = vmatpush1.msra.mxu0 0.0
      %1146 = vmatprep.subr.mxu0 0.0
      %1147 = vmatpush1.msra.mxu0 0.0
      %1148 = vmatprep.subr.mxu0 0.0
      %1149 = vmatpush1.msra.mxu0 0.0
      %1150 = vmatprep.subr.mxu0 0.0
      %1151 = vmatpush1.msra.mxu0 0.0
      %1152 = vmatprep.subr.mxu0 0.0
      %1153 = vmatpush1.msra.mxu0 0.0
      %1154 = vmatprep.mubr.f32.mxu0 0.0
      %1155 = vmatmul.mubr.f32.gmra.mrb[0].mxu0 %v1037
      %v1156 = vpop.f32.mrb[0].mxu0
      %v1157 = vadd.f32 0.0, %v1156
      %v1158 = vpop.f32.mrb[0].mxu0
      %1159 = vmatprep.mubr.f32.mxu0 0.0
      %1160 = vmatmul.mubr.f32.gmra.mrb[0].mxu0 %v1038
      %v1161 = vpop.f32.mrb[0].mxu0
      %v1162 = vadd.f32 0.0, %v1161
      %v1163 = vpop.f32.mrb[0].mxu0
      %1164 = vmatprep.mubr.f32.mxu0 0.0
      %1165 = vmatmul.mubr.f32.gmra.mrb[0].mxu0 %v1039
      %v1166 = vpop.f32.mrb[0].mxu0
      %v1167 = vadd.f32 0.0, %v1166
      %v1168 = vpop.f32.mrb[0].mxu0
      %1169 = vmatprep.mubr.f32.mxu0 0.0
      %1170 = vmatmul.mubr.f32.gmra.mrb[0].mxu0 %v1040
      %v1171 = vpop.f32.mrb[0].mxu0
      %v1172 = vadd.f32 0.0, %v1171
      %v1173 = vpop.f32.mrb[0].mxu0
      %1174 = vmatprep.mubr.f32.mxu0 0.0
      %1175 = vmatmul.mubr.f32.gmra.mrb[0].mxu0 %v1041
      %v1176 = vpop.f32.mrb[0].mxu0
      %v1177 = vadd.f32 0.0, %v1176
      %v1178 = vpop.f32.mrb[0].mxu0
      %1179 = vmatprep.mubr.f32.mxu0 0.0
      %1180 = vmatmul.mubr.f32.gmra.mrb[0].mxu0 %v1042
      %v1181 = vpop.f32.mrb[0].mxu0
      %v1182 = vadd.f32 0.0, %v1181
      %v1183 = vpop.f32.mrb[0].mxu0
      %1184 = vmatprep.mubr.f32.mxu0 0.0
      %1185 = vmatmul.mubr.f32.gmra.mrb[0].mxu0 %v1043
      %v1186 = vpop.f32.mrb[0].mxu0
      %v1187 = vadd.f32 0.0, %v1186
      %v1188 = vpop.f32.mrb[0].mxu0
      %1189 = vmatprep.mubr.f32.mxu0 0.0
      %1190 = vmatmul.mubr.f32.gmra.mrb[0].mxu0 %v1044
      %v1191 = vpop.f32.mrb[0].mxu0
      %v1192 = vadd.f32 0.0, %v1191
      %v1193 = vpop.f32.mrb[0].mxu0
      %1194 = vmatprep.mubr.f32.mxu0 0.0
      %1195 = vmatmul.mubr.f32.gmra.mrb[0].mxu0 %v1045
      %v1196 = vpop.f32.mrb[0].mxu0
      %v1197 = vadd.f32 0.0, %v1196
      %v1198 = vpop.f32.mrb[0].mxu0
      %1199 = vmatprep.mubr.f32.mxu0 0.0
      %1200 = vmatmul.mubr.f32.gmra.mrb[0].mxu0 %v1046
      %v1201 = vpop.f32.mrb[0].mxu0
      %v1202 = vadd.f32 0.0, %v1201
      %v1203 = vpop.f32.mrb[0].mxu0
      %1204 = vmatprep.mubr.f32.mxu0 0.0
      %1205 = vmatmul.mubr.f32.gmra.mrb[0].mxu0 %v1047
      %v1206 = vpop.f32.mrb[0].mxu0
      %v1207 = vadd.f32 0.0, %v1206
      %v1208 = vpop.f32.mrb[0].mxu0
      %1209 = vmatprep.mubr.f32.mxu0 0.0
      %1210 = vmatmul.mubr.f32.gmra.mrb[0].mxu0 %v1048
      %v1211 = vpop.f32.mrb[0].mxu0
      %v1212 = vadd.f32 0.0, %v1211
      %v1213 = vpop.f32.mrb[0].mxu0
      %1214 = vmatprep.mubr.f32.mxu0 0.0
      %1215 = vmatmul.mubr.f32.gmra.mrb[0].mxu0 %v1049
      %v1216 = vpop.f32.mrb[0].mxu0
      %v1217 = vadd.f32 0.0, %v1216
      %v1218 = vpop.f32.mrb[0].mxu0
      %1219 = vmatprep.mubr.f32.mxu0 0.0
      %1220 = vmatmul.mubr.f32.gmra.mrb[0].mxu0 %v1050
      %v1221 = vpop.f32.mrb[0].mxu0
      %v1222 = vadd.f32 0.0, %v1221
      %v1223 = vpop.f32.mrb[0].mxu0
      %1224 = vmatprep.mubr.f32.mxu0 0.0
      %1225 = vmatmul.mubr.f32.gmra.mrb[0].mxu0 %v1051
      %v1226 = vpop.f32.mrb[0].mxu0
      %v1227 = vadd.f32 0.0, %v1226
      %v1228 = vpop.f32.mrb[0].mxu0
      %1229 = vmatprep.mubr.f32.mxu0 0.0
      %1230 = vmatmul.mubr.f32.gmra.mrb[0].mxu0 %v1052
      %v1231 = vpop.f32.mrb[0].mxu0
      %v1232 = vadd.f32 0.0, %v1231
      %v1233 = vpop.f32.mrb[0].mxu0
      %1234 = vmatprep.mubr.f32.mxu0 0.0
      %1235 = vmatmul.mubr.f32.gmra.mrb[0].mxu0 %v1053
      %v1236 = vpop.f32.mrb[0].mxu0
      %v1237 = vadd.f32 0.0, %v1236
      %v1238 = vpop.f32.mrb[0].mxu0
      %1239 = vmatprep.mubr.f32.mxu0 0.0
      %1240 = vmatmul.mubr.f32.gmra.mrb[0].mxu0 %v1054
      %v1241 = vpop.f32.mrb[0].mxu0
      %v1242 = vadd.f32 0.0, %v1241
      %v1243 = vpop.f32.mrb[0].mxu0
      %1244 = vmatprep.mubr.f32.mxu0 0.0
      %1245 = vmatmul.mubr.f32.gmra.mrb[0].mxu0 %v1055
      %v1246 = vpop.f32.mrb[0].mxu0
      %v1247 = vadd.f32 0.0, %v1246
      %v1248 = vpop.f32.mrb[0].mxu0
      %1249 = vmatprep.mubr.f32.mxu0 0.0
      %1250 = vmatmul.mubr.f32.gmra.mrb[0].mxu0 %v1056
      %v1251 = vpop.f32.mrb[0].mxu0
      %v1252 = vadd.f32 0.0, %v1251
      %v1253 = vpop.f32.mrb[0].mxu0
      %1254 = vmatprep.mubr.f32.mxu0 0.0
      %1255 = vmatmul.mubr.f32.gmra.mrb[0].mxu0 %v1057
      %v1256 = vpop.f32.mrb[0].mxu0
      %v1257 = vadd.f32 0.0, %v1256
      %v1258 = vpop.f32.mrb[0].mxu0
      %1259 = vmatprep.mubr.f32.mxu0 0.0
      %1260 = vmatmul.mubr.f32.gmra.mrb[0].mxu0 %v1058
      %v1261 = vpop.f32.mrb[0].mxu0
      %v1262 = vadd.f32 0.0, %v1261
      %v1263 = vpop.f32.mrb[0].mxu0
      %1264 = vmatprep.mubr.f32.mxu0 0.0
      %1265 = vmatmul.mubr.f32.gmra.mrb[0].mxu0 %v1059
      %v1266 = vpop.f32.mrb[0].mxu0
      %v1267 = vadd.f32 0.0, %v1266
      %v1268 = vpop.f32.mrb[0].mxu0
      %1269 = vmatprep.mubr.f32.mxu0 0.0
      %1270 = vmatmul.mubr.f32.gmra.mrb[0].mxu0 %v1060
      %v1271 = vpop.f32.mrb[0].mxu0
      %v1272 = vadd.f32 0.0, %v1271
      %v1273 = vpop.f32.mrb[0].mxu0
      %1274 = vmatprep.mubr.f32.mxu0 0.0
      %1275 = vmatmul.mubr.f32.gmra.mrb[0].mxu0 %v1061
      %v1276 = vpop.f32.mrb[0].mxu0
      %v1277 = vadd.f32 0.0, %v1276
      %v1278 = vpop.f32.mrb[0].mxu0
      %1279 = vmatprep.mubr.f32.mxu0 0.0
      %1280 = vmatmul.mubr.f32.gmra.mrb[0].mxu0 %v1062
      %v1281 = vpop.f32.mrb[0].mxu0
      %v1282 = vadd.f32 0.0, %v1281
      %v1283 = vpop.f32.mrb[0].mxu0
      %1284 = vmatprep.mubr.f32.mxu0 0.0
      %1285 = vmatmul.mubr.f32.gmra.mrb[0].mxu0 %v1063
      %v1286 = vpop.f32.mrb[0].mxu0
      %v1287 = vadd.f32 0.0, %v1286
      %v1288 = vpop.f32.mrb[0].mxu0
      %1289 = vmatprep.mubr.f32.mxu0 0.0
      %1290 = vmatmul.mubr.f32.gmra.mrb[0].mxu0 %v1064
      %v1291 = vpop.f32.mrb[0].mxu0
      %v1292 = vadd.f32 0.0, %v1291
      %v1293 = vpop.f32.mrb[0].mxu0
      %1294 = vmatprep.mubr.f32.mxu0 0.0
      %1295 = vmatmul.mubr.f32.gmra.mrb[0].mxu0 %v1065
      %v1296 = vpop.f32.mrb[0].mxu0
      %v1297 = vadd.f32 0.0, %v1296
      %v1298 = vpop.f32.mrb[0].mxu0
      %1299 = vmatprep.mubr.f32.mxu0 0.0
      %1300 = vmatmul.mubr.f32.gmra.mrb[0].mxu0 %v1066
      %v1301 = vpop.f32.mrb[0].mxu0
      %v1302 = vadd.f32 0.0, %v1301
      %v1303 = vpop.f32.mrb[0].mxu0
      %1304 = vmatprep.mubr.f32.mxu0 0.0
      %1305 = vmatmul.mubr.f32.gmra.mrb[0].mxu0 %v1067
      %v1306 = vpop.f32.mrb[0].mxu0
      %v1307 = vadd.f32 0.0, %v1306
      %v1308 = vpop.f32.mrb[0].mxu0
      %1309 = vmatprep.mubr.f32.mxu0 0.0
      %1310 = vmatmul.mubr.f32.gmra.mrb[0].mxu0 %v1068
      %v1311 = vpop.f32.mrb[0].mxu0
      %v1312 = vadd.f32 0.0, %v1311
      %v1313 = vpop.f32.mrb[0].mxu0
      %1314 = vmatprep.mubr.f32.mxu0 0.0
      %1315 = vmatmul.mubr.f32.gmra.mrb[0].mxu0 %v1069
      %v1316 = vpop.f32.mrb[0].mxu0
      %v1317 = vadd.f32 0.0, %v1316
      %v1318 = vpop.f32.mrb[0].mxu0
      %1319 = vmatprep.mubr.f32.mxu0 0.0
      %1320 = vmatmul.mubr.f32.gmra.mrb[0].mxu0 %v1070
      %v1321 = vpop.f32.mrb[0].mxu0
      %v1322 = vadd.f32 0.0, %v1321
      %v1323 = vpop.f32.mrb[0].mxu0
      %1324 = vmatprep.mubr.f32.mxu0 0.0
      %1325 = vmatmul.mubr.f32.gmra.mrb[0].mxu0 %v1071
      %v1326 = vpop.f32.mrb[0].mxu0
      %v1327 = vadd.f32 0.0, %v1326
      %v1328 = vpop.f32.mrb[0].mxu0
      %1329 = vmatprep.mubr.f32.mxu0 0.0
      %1330 = vmatmul.mubr.f32.gmra.mrb[0].mxu0 %v1072
      %v1331 = vpop.f32.mrb[0].mxu0
      %v1332 = vadd.f32 0.0, %v1331
      %v1333 = vpop.f32.mrb[0].mxu0
      %1334 = vdwg.mxu0
      %v1335 = vld [vmem:[#allocation3] sm:$0xff]
      %v1336 = vld [vmem:[#allocation3 + $0x8] sm:$0xff]
      %v1337 = vld [vmem:[#allocation3 + $0x10] sm:$0xff]
      %v1338 = vld [vmem:[#allocation3 + $0x18] sm:$0xff]
      %v1339 = vld [vmem:[#allocation3 + $0x20] sm:$0xff]
      %v1340 = vld [vmem:[#allocation3 + $0x28] sm:$0xff]
      %v1341 = vld [vmem:[#allocation3 + $0x30] sm:$0xff]
      %v1342 = vld [vmem:[#allocation3 + $0x38] sm:$0xff]
      %v1343 = vld [vmem:[#allocation3 + $0x40] sm:$0xff]
      %v1344 = vld [vmem:[#allocation3 + $0x48] sm:$0xff]
      %v1345 = vld [vmem:[#allocation3 + $0x50] sm:$0xff]
      %v1346 = vld [vmem:[#allocation3 + $0x58] sm:$0xff]
      %v1347 = vld [vmem:[#allocation3 + $0x60] sm:$0xff]
      %v1348 = vld [vmem:[#allocation3 + $0x68] sm:$0xff]
      %v1349 = vld [vmem:[#allocation3 + $0x70] sm:$0xff]
      %v1350 = vld [vmem:[#allocation3 + $0x78] sm:$0xff]
      %v1351 = vld [vmem:[#allocation3 + $0x80] sm:$0xff]
      %v1352 = vld [vmem:[#allocation3 + $0x88] sm:$0xff]
      %v1353 = vld [vmem:[#allocation3 + $0x90] sm:$0xff]
      %v1354 = vld [vmem:[#allocation3 + $0x98] sm:$0xff]
      %v1355 = vld [vmem:[#allocation3 + $0xa0] sm:$0xff]
      %v1356 = vld [vmem:[#allocation3 + $0xa8] sm:$0xff]
      %v1357 = vld [vmem:[#allocation3 + $0xb0] sm:$0xff]
      %v1358 = vld [vmem:[#allocation3 + $0xb8] sm:$0xff]
      %v1359 = vld [vmem:[#allocation3 + $0xc0] sm:$0xff]
      %v1360 = vld [vmem:[#allocation3 + $0xc8] sm:$0xff]
      %v1361 = vld [vmem:[#allocation3 + $0xd0] sm:$0xff]
      %v1362 = vld [vmem:[#allocation3 + $0xd8] sm:$0xff]
      %v1363 = vld [vmem:[#allocation3 + $0xe0] sm:$0xff]
      %v1364 = vld [vmem:[#allocation3 + $0xe8] sm:$0xff]
      %v1365 = vld [vmem:[#allocation3 + $0xf0] sm:$0xff]
      %v1366 = vld [vmem:[#allocation3 + $0xf8] sm:$0xff]
      %v1367 = vld [vmem:[#allocation3 + $0x100] sm:$0xff]
      %v1368 = vld [vmem:[#allocation3 + $0x108] sm:$0xff]
      %v1369 = vld [vmem:[#allocation3 + $0x110] sm:$0xff]
      %v1370 = vld [vmem:[#allocation3 + $0x118] sm:$0xff]
      %v1371 = vadd.f32 %v1335, %v1157
      %v1372 = vadd.f32 %v1336, %v1162
      %v1373 = vadd.f32 %v1337, %v1167
      %v1374 = vadd.f32 %v1338, %v1172
      %v1375 = vadd.f32 %v1339, %v1177
      %v1376 = vadd.f32 %v1340, %v1182
      %v1377 = vadd.f32 %v1341, %v1187
      %v1378 = vadd.f32 %v1342, %v1192
      %v1379 = vadd.f32 %v1343, %v1197
      %v1380 = vadd.f32 %v1344, %v1202
      %v1381 = vadd.f32 %v1345, %v1207
      %v1382 = vadd.f32 %v1346, %v1212
      %v1383 = vadd.f32 %v1347, %v1217
      %v1384 = vadd.f32 %v1348, %v1222
      %v1385 = vadd.f32 %v1349, %v1227
      %v1386 = vadd.f32 %v1350, %v1232
      %v1387 = vadd.f32 %v1351, %v1237
      %v1388 = vadd.f32 %v1352, %v1242
      %v1389 = vadd.f32 %v1353, %v1247
      %v1390 = vadd.f32 %v1354, %v1252
      %v1391 = vadd.f32 %v1355, %v1257
      %v1392 = vadd.f32 %v1356, %v1262
      %v1393 = vadd.f32 %v1357, %v1267
      %v1394 = vadd.f32 %v1358, %v1272
      %v1395 = vadd.f32 %v1359, %v1277
      %v1396 = vadd.f32 %v1360, %v1282
      %v1397 = vadd.f32 %v1361, %v1287
      %v1398 = vadd.f32 %v1362, %v1292
      %v1399 = vadd.f32 %v1363, %v1297
      %v1400 = vadd.f32 %v1364, %v1302
      %v1401 = vadd.f32 %v1365, %v1307
      %v1402 = vadd.f32 %v1366, %v1312
      %v1403 = vadd.f32 %v1367, %v1317
      %v1404 = vadd.f32 %v1368, %v1322
      %v1405 = vadd.f32 %v1369, %v1327
      %v1406 = vadd.f32 %v1370, %v1332
      %1407 = vst [vmem:[#allocation3] sm:$0xff] %v1371
      %1408 = vst [vmem:[#allocation3 + $0x8] sm:$0xff] %v1372
      %1409 = vst [vmem:[#allocation3 + $0x10] sm:$0xff] %v1373
      %1410 = vst [vmem:[#allocation3 + $0x18] sm:$0xff] %v1374
      %1411 = vst [vmem:[#allocation3 + $0x20] sm:$0xff] %v1375
      %1412 = vst [vmem:[#allocation3 + $0x28] sm:$0xff] %v1376
      %1413 = vst [vmem:[#allocation3 + $0x30] sm:$0xff] %v1377
      %1414 = vst [vmem:[#allocation3 + $0x38] sm:$0xff] %v1378
      %1415 = vst [vmem:[#allocation3 + $0x40] sm:$0xff] %v1379
      %1416 = vst [vmem:[#allocation3 + $0x48] sm:$0xff] %v1380
      %1417 = vst [vmem:[#allocation3 + $0x50] sm:$0xff] %v1381
      %1418 = vst [vmem:[#allocation3 + $0x58] sm:$0xff] %v1382
      %1419 = vst [vmem:[#allocation3 + $0x60] sm:$0xff] %v1383
      %1420 = vst [vmem:[#allocation3 + $0x68] sm:$0xff] %v1384
      %1421 = vst [vmem:[#allocation3 + $0x70] sm:$0xff] %v1385
      %1422 = vst [vmem:[#allocation3 + $0x78] sm:$0xff] %v1386
      %1423 = vst [vmem:[#allocation3 + $0x80] sm:$0xff] %v1387
      %1424 = vst [vmem:[#allocation3 + $0x88] sm:$0xff] %v1388
      %1425 = vst [vmem:[#allocation3 + $0x90] sm:$0xff] %v1389
      %1426 = vst [vmem:[#allocation3 + $0x98] sm:$0xff] %v1390
      %1427 = vst [vmem:[#allocation3 + $0xa0] sm:$0xff] %v1391
      %1428 = vst [vmem:[#allocation3 + $0xa8] sm:$0xff] %v1392
      %1429 = vst [vmem:[#allocation3 + $0xb0] sm:$0xff] %v1393
      %1430 = vst [vmem:[#allocation3 + $0xb8] sm:$0xff] %v1394
      %1431 = vst [vmem:[#allocation3 + $0xc0] sm:$0xff] %v1395
      %1432 = vst [vmem:[#allocation3 + $0xc8] sm:$0xff] %v1396
      %1433 = vst [vmem:[#allocation3 + $0xd0] sm:$0xff] %v1397
      %1434 = vst [vmem:[#allocation3 + $0xd8] sm:$0xff] %v1398
      %1435 = vst [vmem:[#allocation3 + $0xe0] sm:$0xff] %v1399
      %1436 = vst [vmem:[#allocation3 + $0xe8] sm:$0xff] %v1400
      %1437 = vst [vmem:[#allocation3 + $0xf0] sm:$0xff] %v1401
      %1438 = vst [vmem:[#allocation3 + $0xf8] sm:$0xff] %v1402
      %1439 = vst [vmem:[#allocation3 + $0x100] sm:$0xff] %v1403
      %1440 = vst [vmem:[#allocation3 + $0x108] sm:$0xff] %v1404
      %1441 = vst [vmem:[#allocation3 + $0x110] sm:$0xff] %v1405
      %1442 = vst [vmem:[#allocation3 + $0x118] sm:$0xff] %v1406
      %v1443 = vld [vmem:[%s246 + $0x17] sm:$0xff]
      %v1444 = vld [vmem:[%s246 + $0x1f] sm:$0xff]
      %v1445 = vld [vmem:[%s246 + $0x27] sm:$0xff]
      %v1446 = vld [vmem:[%s246 + $0x2f] sm:$0xff]
      %v1447 = vld [vmem:[%s246 + $0x37] sm:$0xff]
      %v1448 = vld [vmem:[%s246 + $0x3f] sm:$0xff]
      %v1449 = vld [vmem:[%s246 + $0x47] sm:$0xff]
      %v1450 = vld [vmem:[%s246 + $0x4f] sm:$0xff]
      %v1451 = vld [vmem:[%s246 + $0x57] sm:$0xff]
      %v1452 = vld [vmem:[%s246 + $0x5f] sm:$0xff]
      %v1453 = vld [vmem:[%s246 + $0x67] sm:$0xff]
      %v1454 = vld [vmem:[%s246 + $0x6f] sm:$0xff]
      %v1455 = vld [vmem:[%s246 + $0x77] sm:$0xff]
      %v1456 = vld [vmem:[%s246 + $0x7f] sm:$0xff]
      %v1457 = vld [vmem:[%s246 + $0x87] sm:$0xff]
      %v1458 = vld [vmem:[%s246 + $0x8f] sm:$0xff]
      %v1459 = vld [vmem:[%s246 + $0x97] sm:$0xff]
      %v1460 = vld [vmem:[%s246 + $0x9f] sm:$0xff]
      %v1461 = vld [vmem:[%s246 + $0xa7] sm:$0xff]
      %v1462 = vld [vmem:[%s246 + $0xaf] sm:$0xff]
      %v1463 = vld [vmem:[%s246 + $0xb7] sm:$0xff]
      %v1464 = vld [vmem:[%s246 + $0xbf] sm:$0xff]
      %v1465 = vld [vmem:[%s246 + $0xc7] sm:$0xff]
      %v1466 = vld [vmem:[%s246 + $0xcf] sm:$0xff]
      %v1467 = vld [vmem:[%s246 + $0xd7] sm:$0xff]
      %v1468 = vld [vmem:[%s246 + $0xdf] sm:$0xff]
      %v1469 = vld [vmem:[%s246 + $0xe7] sm:$0xff]
      %v1470 = vld [vmem:[%s246 + $0xef] sm:$0xff]
      %v1471 = vld [vmem:[%s246 + $0xf7] sm:$0xff]
      %v1472 = vld [vmem:[%s246 + $0xff] sm:$0xff]
      %v1473 = vld [vmem:[%s246 + $0x107] sm:$0xff]
      %v1474 = vld [vmem:[%s246 + $0x10f] sm:$0xff]
      %v1475 = vld [vmem:[%s246 + $0x117] sm:$0xff]
      %v1476 = vld [vmem:[%s246 + $0x11f] sm:$0xff]
      %v1477 = vld [vmem:[%s246 + $0x127] sm:$0xff]
      %v1478 = vld [vmem:[%s246 + $0x12f] sm:$0xff]
      %s1479 = scalar_lea.vmem %s1, 384
      %v1480 = vld [vmem:[%s1479] sm:$0xff]
      %v1481 = vld [vmem:[%s1479 + $0x8] sm:$0xff]
      %v1482 = vld [vmem:[%s1479 + $0x10] sm:$0xff]
      %v1483 = vld [vmem:[%s1479 + $0x18] sm:$0xff]
      %v1484 = vld [vmem:[%s1479 + $0x20] sm:$0xff]
      %v1485 = vld [vmem:[%s1479 + $0x28] sm:$0xff]
      %v1486 = vld [vmem:[%s1479 + $0x30] sm:$0xff]
      %v1487 = vld [vmem:[%s1479 + $0x38] sm:$0xff]
      %v1488 = vld [vmem:[%s1479 + $0x40] sm:$0xff]
      %v1489 = vld [vmem:[%s1479 + $0x48] sm:$0xff]
      %v1490 = vld [vmem:[%s1479 + $0x50] sm:$0xff]
      %v1491 = vld [vmem:[%s1479 + $0x58] sm:$0xff]
      %v1492 = vld [vmem:[%s1479 + $0x60] sm:$0xff]
      %v1493 = vld [vmem:[%s1479 + $0x68] sm:$0xff]
      %v1494 = vld [vmem:[%s1479 + $0x70] sm:$0xff]
      %v1495 = vld [vmem:[%s1479 + $0x78] sm:$0xff]
      %1496 = vmatprep.subr.mxu0 0.0
      %1497 = vmatpush1.msra.mxu0 %v1480
      %1498 = vmatprep.subr.mxu0 0.0
      %1499 = vmatpush1.msra.mxu0 %v1481
      %1500 = vmatprep.subr.mxu0 0.0
      %1501 = vmatpush1.msra.mxu0 %v1482
      %1502 = vmatprep.subr.mxu0 0.0
      %1503 = vmatpush1.msra.mxu0 %v1483
      %1504 = vmatprep.subr.mxu0 0.0
      %1505 = vmatpush1.msra.mxu0 %v1484
      %1506 = vmatprep.subr.mxu0 0.0
      %1507 = vmatpush1.msra.mxu0 %v1485
      %1508 = vmatprep.subr.mxu0 0.0
      %1509 = vmatpush1.msra.mxu0 %v1486
      %1510 = vmatprep.subr.mxu0 0.0
      %1511 = vmatpush1.msra.mxu0 %v1487
      %1512 = vmatprep.subr.mxu0 0.0
      %1513 = vmatpush1.msra.mxu0 %v1488
      %1514 = vmatprep.subr.mxu0 0.0
      %1515 = vmatpush1.msra.mxu0 %v1489
      %1516 = vmatprep.subr.mxu0 0.0
      %1517 = vmatpush1.msra.mxu0 %v1490
      %1518 = vmatprep.subr.mxu0 0.0
      %1519 = vmatpush1.msra.mxu0 %v1491
      %1520 = vmatprep.subr.mxu0 0.0
      %1521 = vmatpush1.msra.mxu0 %v1492
      %1522 = vmatprep.subr.mxu0 0.0
      %1523 = vmatpush1.msra.mxu0 %v1493
      %1524 = vmatprep.subr.mxu0 0.0
      %1525 = vmatpush1.msra.mxu0 %v1494
      %1526 = vmatprep.subr.mxu0 0.0
      %1527 = vmatpush1.msra.mxu0 %v1495
      %1528 = vmatprep.subr.mxu0 0.0
      %1529 = vmatpush1.msra.mxu0 0.0
      %1530 = vmatprep.subr.mxu0 0.0
      %1531 = vmatpush1.msra.mxu0 0.0
      %1532 = vmatprep.subr.mxu0 0.0
      %1533 = vmatpush1.msra.mxu0 0.0
      %1534 = vmatprep.subr.mxu0 0.0
      %1535 = vmatpush1.msra.mxu0 0.0
      %1536 = vmatprep.subr.mxu0 0.0
      %1537 = vmatpush1.msra.mxu0 0.0
      %1538 = vmatprep.subr.mxu0 0.0
      %1539 = vmatpush1.msra.mxu0 0.0
      %1540 = vmatprep.subr.mxu0 0.0
      %1541 = vmatpush1.msra.mxu0 0.0
      %1542 = vmatprep.subr.mxu0 0.0
      %1543 = vmatpush1.msra.mxu0 0.0
      %1544 = vmatprep.subr.mxu0 0.0
      %1545 = vmatpush1.msra.mxu0 0.0
      %1546 = vmatprep.subr.mxu0 0.0
      %1547 = vmatpush1.msra.mxu0 0.0
      %1548 = vmatprep.subr.mxu0 0.0
      %1549 = vmatpush1.msra.mxu0 0.0
      %1550 = vmatprep.subr.mxu0 0.0
      %1551 = vmatpush1.msra.mxu0 0.0
      %1552 = vmatprep.subr.mxu0 0.0
      %1553 = vmatpush1.msra.mxu0 0.0
      %1554 = vmatprep.subr.mxu0 0.0
      %1555 = vmatpush1.msra.mxu0 0.0
      %1556 = vmatprep.subr.mxu0 0.0
      %1557 = vmatpush1.msra.mxu0 0.0
      %1558 = vmatprep.subr.mxu0 0.0
      %1559 = vmatpush1.msra.mxu0 0.0
      %1560 = vmatprep.mubr.f32.mxu0 0.0
      %1561 = vmatmul.mubr.f32.gmra.mrb[0].mxu0 %v1443
      %v1562 = vpop.f32.mrb[0].mxu0
      %v1563 = vadd.f32 0.0, %v1562
      %v1564 = vpop.f32.mrb[0].mxu0
      %1565 = vmatprep.mubr.f32.mxu0 0.0
      %1566 = vmatmul.mubr.f32.gmra.mrb[0].mxu0 %v1444
      %v1567 = vpop.f32.mrb[0].mxu0
      %v1568 = vadd.f32 0.0, %v1567
      %v1569 = vpop.f32.mrb[0].mxu0
      %1570 = vmatprep.mubr.f32.mxu0 0.0
      %1571 = vmatmul.mubr.f32.gmra.mrb[0].mxu0 %v1445
      %v1572 = vpop.f32.mrb[0].mxu0
      %v1573 = vadd.f32 0.0, %v1572
      %v1574 = vpop.f32.mrb[0].mxu0
      %1575 = vmatprep.mubr.f32.mxu0 0.0
      %1576 = vmatmul.mubr.f32.gmra.mrb[0].mxu0 %v1446
      %v1577 = vpop.f32.mrb[0].mxu0
      %v1578 = vadd.f32 0.0, %v1577
      %v1579 = vpop.f32.mrb[0].mxu0
      %1580 = vmatprep.mubr.f32.mxu0 0.0
      %1581 = vmatmul.mubr.f32.gmra.mrb[0].mxu0 %v1447
      %v1582 = vpop.f32.mrb[0].mxu0
      %v1583 = vadd.f32 0.0, %v1582
      %v1584 = vpop.f32.mrb[0].mxu0
      %1585 = vmatprep.mubr.f32.mxu0 0.0
      %1586 = vmatmul.mubr.f32.gmra.mrb[0].mxu0 %v1448
      %v1587 = vpop.f32.mrb[0].mxu0
      %v1588 = vadd.f32 0.0, %v1587
      %v1589 = vpop.f32.mrb[0].mxu0
      %1590 = vmatprep.mubr.f32.mxu0 0.0
      %1591 = vmatmul.mubr.f32.gmra.mrb[0].mxu0 %v1449
      %v1592 = vpop.f32.mrb[0].mxu0
      %v1593 = vadd.f32 0.0, %v1592
      %v1594 = vpop.f32.mrb[0].mxu0
      %1595 = vmatprep.mubr.f32.mxu0 0.0
      %1596 = vmatmul.mubr.f32.gmra.mrb[0].mxu0 %v1450
      %v1597 = vpop.f32.mrb[0].mxu0
      %v1598 = vadd.f32 0.0, %v1597
      %v1599 = vpop.f32.mrb[0].mxu0
      %1600 = vmatprep.mubr.f32.mxu0 0.0
      %1601 = vmatmul.mubr.f32.gmra.mrb[0].mxu0 %v1451
      %v1602 = vpop.f32.mrb[0].mxu0
      %v1603 = vadd.f32 0.0, %v1602
      %v1604 = vpop.f32.mrb[0].mxu0
      %1605 = vmatprep.mubr.f32.mxu0 0.0
      %1606 = vmatmul.mubr.f32.gmra.mrb[0].mxu0 %v1452
      %v1607 = vpop.f32.mrb[0].mxu0
      %v1608 = vadd.f32 0.0, %v1607
      %v1609 = vpop.f32.mrb[0].mxu0
      %1610 = vmatprep.mubr.f32.mxu0 0.0
      %1611 = vmatmul.mubr.f32.gmra.mrb[0].mxu0 %v1453
      %v1612 = vpop.f32.mrb[0].mxu0
      %v1613 = vadd.f32 0.0, %v1612
      %v1614 = vpop.f32.mrb[0].mxu0
      %1615 = vmatprep.mubr.f32.mxu0 0.0
      %1616 = vmatmul.mubr.f32.gmra.mrb[0].mxu0 %v1454
      %v1617 = vpop.f32.mrb[0].mxu0
      %v1618 = vadd.f32 0.0, %v1617
      %v1619 = vpop.f32.mrb[0].mxu0
      %1620 = vmatprep.mubr.f32.mxu0 0.0
      %1621 = vmatmul.mubr.f32.gmra.mrb[0].mxu0 %v1455
      %v1622 = vpop.f32.mrb[0].mxu0
      %v1623 = vadd.f32 0.0, %v1622
      %v1624 = vpop.f32.mrb[0].mxu0
      %1625 = vmatprep.mubr.f32.mxu0 0.0
      %1626 = vmatmul.mubr.f32.gmra.mrb[0].mxu0 %v1456
      %v1627 = vpop.f32.mrb[0].mxu0
      %v1628 = vadd.f32 0.0, %v1627
      %v1629 = vpop.f32.mrb[0].mxu0
      %1630 = vmatprep.mubr.f32.mxu0 0.0
      %1631 = vmatmul.mubr.f32.gmra.mrb[0].mxu0 %v1457
      %v1632 = vpop.f32.mrb[0].mxu0
      %v1633 = vadd.f32 0.0, %v1632
      %v1634 = vpop.f32.mrb[0].mxu0
      %1635 = vmatprep.mubr.f32.mxu0 0.0
      %1636 = vmatmul.mubr.f32.gmra.mrb[0].mxu0 %v1458
      %v1637 = vpop.f32.mrb[0].mxu0
      %v1638 = vadd.f32 0.0, %v1637
      %v1639 = vpop.f32.mrb[0].mxu0
      %1640 = vmatprep.mubr.f32.mxu0 0.0
      %1641 = vmatmul.mubr.f32.gmra.mrb[0].mxu0 %v1459
      %v1642 = vpop.f32.mrb[0].mxu0
      %v1643 = vadd.f32 0.0, %v1642
      %v1644 = vpop.f32.mrb[0].mxu0
      %1645 = vmatprep.mubr.f32.mxu0 0.0
      %1646 = vmatmul.mubr.f32.gmra.mrb[0].mxu0 %v1460
      %v1647 = vpop.f32.mrb[0].mxu0
      %v1648 = vadd.f32 0.0, %v1647
      %v1649 = vpop.f32.mrb[0].mxu0
      %1650 = vmatprep.mubr.f32.mxu0 0.0
      %1651 = vmatmul.mubr.f32.gmra.mrb[0].mxu0 %v1461
      %v1652 = vpop.f32.mrb[0].mxu0
      %v1653 = vadd.f32 0.0, %v1652
      %v1654 = vpop.f32.mrb[0].mxu0
      %1655 = vmatprep.mubr.f32.mxu0 0.0
      %1656 = vmatmul.mubr.f32.gmra.mrb[0].mxu0 %v1462
      %v1657 = vpop.f32.mrb[0].mxu0
      %v1658 = vadd.f32 0.0, %v1657
      %v1659 = vpop.f32.mrb[0].mxu0
      %1660 = vmatprep.mubr.f32.mxu0 0.0
      %1661 = vmatmul.mubr.f32.gmra.mrb[0].mxu0 %v1463
      %v1662 = vpop.f32.mrb[0].mxu0
      %v1663 = vadd.f32 0.0, %v1662
      %v1664 = vpop.f32.mrb[0].mxu0
      %1665 = vmatprep.mubr.f32.mxu0 0.0
      %1666 = vmatmul.mubr.f32.gmra.mrb[0].mxu0 %v1464
      %v1667 = vpop.f32.mrb[0].mxu0
      %v1668 = vadd.f32 0.0, %v1667
      %v1669 = vpop.f32.mrb[0].mxu0
      %1670 = vmatprep.mubr.f32.mxu0 0.0
      %1671 = vmatmul.mubr.f32.gmra.mrb[0].mxu0 %v1465
      %v1672 = vpop.f32.mrb[0].mxu0
      %v1673 = vadd.f32 0.0, %v1672
      %v1674 = vpop.f32.mrb[0].mxu0
      %1675 = vmatprep.mubr.f32.mxu0 0.0
      %1676 = vmatmul.mubr.f32.gmra.mrb[0].mxu0 %v1466
      %v1677 = vpop.f32.mrb[0].mxu0
      %v1678 = vadd.f32 0.0, %v1677
      %v1679 = vpop.f32.mrb[0].mxu0
      %1680 = vmatprep.mubr.f32.mxu0 0.0
      %1681 = vmatmul.mubr.f32.gmra.mrb[0].mxu0 %v1467
      %v1682 = vpop.f32.mrb[0].mxu0
      %v1683 = vadd.f32 0.0, %v1682
      %v1684 = vpop.f32.mrb[0].mxu0
      %1685 = vmatprep.mubr.f32.mxu0 0.0
      %1686 = vmatmul.mubr.f32.gmra.mrb[0].mxu0 %v1468
      %v1687 = vpop.f32.mrb[0].mxu0
      %v1688 = vadd.f32 0.0, %v1687
      %v1689 = vpop.f32.mrb[0].mxu0
      %1690 = vmatprep.mubr.f32.mxu0 0.0
      %1691 = vmatmul.mubr.f32.gmra.mrb[0].mxu0 %v1469
      %v1692 = vpop.f32.mrb[0].mxu0
      %v1693 = vadd.f32 0.0, %v1692
      %v1694 = vpop.f32.mrb[0].mxu0
      %1695 = vmatprep.mubr.f32.mxu0 0.0
      %1696 = vmatmul.mubr.f32.gmra.mrb[0].mxu0 %v1470
      %v1697 = vpop.f32.mrb[0].mxu0
      %v1698 = vadd.f32 0.0, %v1697
      %v1699 = vpop.f32.mrb[0].mxu0
      %1700 = vmatprep.mubr.f32.mxu0 0.0
      %1701 = vmatmul.mubr.f32.gmra.mrb[0].mxu0 %v1471
      %v1702 = vpop.f32.mrb[0].mxu0
      %v1703 = vadd.f32 0.0, %v1702
      %v1704 = vpop.f32.mrb[0].mxu0
      %1705 = vmatprep.mubr.f32.mxu0 0.0
      %1706 = vmatmul.mubr.f32.gmra.mrb[0].mxu0 %v1472
      %v1707 = vpop.f32.mrb[0].mxu0
      %v1708 = vadd.f32 0.0, %v1707
      %v1709 = vpop.f32.mrb[0].mxu0
      %1710 = vmatprep.mubr.f32.mxu0 0.0
      %1711 = vmatmul.mubr.f32.gmra.mrb[0].mxu0 %v1473
      %v1712 = vpop.f32.mrb[0].mxu0
      %v1713 = vadd.f32 0.0, %v1712
      %v1714 = vpop.f32.mrb[0].mxu0
      %1715 = vmatprep.mubr.f32.mxu0 0.0
      %1716 = vmatmul.mubr.f32.gmra.mrb[0].mxu0 %v1474
      %v1717 = vpop.f32.mrb[0].mxu0
      %v1718 = vadd.f32 0.0, %v1717
      %v1719 = vpop.f32.mrb[0].mxu0
      %1720 = vmatprep.mubr.f32.mxu0 0.0
      %1721 = vmatmul.mubr.f32.gmra.mrb[0].mxu0 %v1475
      %v1722 = vpop.f32.mrb[0].mxu0
      %v1723 = vadd.f32 0.0, %v1722
      %v1724 = vpop.f32.mrb[0].mxu0
      %1725 = vmatprep.mubr.f32.mxu0 0.0
      %1726 = vmatmul.mubr.f32.gmra.mrb[0].mxu0 %v1476
      %v1727 = vpop.f32.mrb[0].mxu0
      %v1728 = vadd.f32 0.0, %v1727
      %v1729 = vpop.f32.mrb[0].mxu0
      %1730 = vmatprep.mubr.f32.mxu0 0.0
      %1731 = vmatmul.mubr.f32.gmra.mrb[0].mxu0 %v1477
      %v1732 = vpop.f32.mrb[0].mxu0
      %v1733 = vadd.f32 0.0, %v1732
      %v1734 = vpop.f32.mrb[0].mxu0
      %1735 = vmatprep.mubr.f32.mxu0 0.0
      %1736 = vmatmul.mubr.f32.gmra.mrb[0].mxu0 %v1478
      %v1737 = vpop.f32.mrb[0].mxu0
      %v1738 = vadd.f32 0.0, %v1737
      %v1739 = vpop.f32.mrb[0].mxu0
      %1740 = vdwg.mxu0
      %v1741 = vld [vmem:[#allocation3] sm:$0xff]
      %v1742 = vld [vmem:[#allocation3 + $0x8] sm:$0xff]
      %v1743 = vld [vmem:[#allocation3 + $0x10] sm:$0xff]
      %v1744 = vld [vmem:[#allocation3 + $0x18] sm:$0xff]
      %v1745 = vld [vmem:[#allocation3 + $0x20] sm:$0xff]
      %v1746 = vld [vmem:[#allocation3 + $0x28] sm:$0xff]
      %v1747 = vld [vmem:[#allocation3 + $0x30] sm:$0xff]
      %v1748 = vld [vmem:[#allocation3 + $0x38] sm:$0xff]
      %v1749 = vld [vmem:[#allocation3 + $0x40] sm:$0xff]
      %v1750 = vld [vmem:[#allocation3 + $0x48] sm:$0xff]
      %v1751 = vld [vmem:[#allocation3 + $0x50] sm:$0xff]
      %v1752 = vld [vmem:[#allocation3 + $0x58] sm:$0xff]
      %v1753 = vld [vmem:[#allocation3 + $0x60] sm:$0xff]
      %v1754 = vld [vmem:[#allocation3 + $0x68] sm:$0xff]
      %v1755 = vld [vmem:[#allocation3 + $0x70] sm:$0xff]
      %v1756 = vld [vmem:[#allocation3 + $0x78] sm:$0xff]
      %v1757 = vld [vmem:[#allocation3 + $0x80] sm:$0xff]
      %v1758 = vld [vmem:[#allocation3 + $0x88] sm:$0xff]
      %v1759 = vld [vmem:[#allocation3 + $0x90] sm:$0xff]
      %v1760 = vld [vmem:[#allocation3 + $0x98] sm:$0xff]
      %v1761 = vld [vmem:[#allocation3 + $0xa0] sm:$0xff]
      %v1762 = vld [vmem:[#allocation3 + $0xa8] sm:$0xff]
      %v1763 = vld [vmem:[#allocation3 + $0xb0] sm:$0xff]
      %v1764 = vld [vmem:[#allocation3 + $0xb8] sm:$0xff]
      %v1765 = vld [vmem:[#allocation3 + $0xc0] sm:$0xff]
      %v1766 = vld [vmem:[#allocation3 + $0xc8] sm:$0xff]
      %v1767 = vld [vmem:[#allocation3 + $0xd0] sm:$0xff]
      %v1768 = vld [vmem:[#allocation3 + $0xd8] sm:$0xff]
      %v1769 = vld [vmem:[#allocation3 + $0xe0] sm:$0xff]
      %v1770 = vld [vmem:[#allocation3 + $0xe8] sm:$0xff]
      %v1771 = vld [vmem:[#allocation3 + $0xf0] sm:$0xff]
      %v1772 = vld [vmem:[#allocation3 + $0xf8] sm:$0xff]
      %v1773 = vld [vmem:[#allocation3 + $0x100] sm:$0xff]
      %v1774 = vld [vmem:[#allocation3 + $0x108] sm:$0xff]
      %v1775 = vld [vmem:[#allocation3 + $0x110] sm:$0xff]
      %v1776 = vld [vmem:[#allocation3 + $0x118] sm:$0xff]
      %v1777 = vadd.f32 %v1741, %v1563
      %v1778 = vadd.f32 %v1742, %v1568
      %v1779 = vadd.f32 %v1743, %v1573
      %v1780 = vadd.f32 %v1744, %v1578
      %v1781 = vadd.f32 %v1745, %v1583
      %v1782 = vadd.f32 %v1746, %v1588
      %v1783 = vadd.f32 %v1747, %v1593
      %v1784 = vadd.f32 %v1748, %v1598
      %v1785 = vadd.f32 %v1749, %v1603
      %v1786 = vadd.f32 %v1750, %v1608
      %v1787 = vadd.f32 %v1751, %v1613
      %v1788 = vadd.f32 %v1752, %v1618
      %v1789 = vadd.f32 %v1753, %v1623
      %v1790 = vadd.f32 %v1754, %v1628
      %v1791 = vadd.f32 %v1755, %v1633
      %v1792 = vadd.f32 %v1756, %v1638
      %v1793 = vadd.f32 %v1757, %v1643
      %v1794 = vadd.f32 %v1758, %v1648
      %v1795 = vadd.f32 %v1759, %v1653
      %v1796 = vadd.f32 %v1760, %v1658
      %v1797 = vadd.f32 %v1761, %v1663
      %v1798 = vadd.f32 %v1762, %v1668
      %v1799 = vadd.f32 %v1763, %v1673
      %v1800 = vadd.f32 %v1764, %v1678
      %v1801 = vadd.f32 %v1765, %v1683
      %v1802 = vadd.f32 %v1766, %v1688
      %v1803 = vadd.f32 %v1767, %v1693
      %v1804 = vadd.f32 %v1768, %v1698
      %v1805 = vadd.f32 %v1769, %v1703
      %v1806 = vadd.f32 %v1770, %v1708
      %v1807 = vadd.f32 %v1771, %v1713
      %v1808 = vadd.f32 %v1772, %v1718
      %v1809 = vadd.f32 %v1773, %v1723
      %v1810 = vadd.f32 %v1774, %v1728
      %v1811 = vadd.f32 %v1775, %v1733
      %v1812 = vadd.f32 %v1776, %v1738
      %1813 = vst [vmem:[#allocation3] sm:$0xff] %v1777
      %1814 = vst [vmem:[#allocation3 + $0x8] sm:$0xff] %v1778
      %1815 = vst [vmem:[#allocation3 + $0x10] sm:$0xff] %v1779
      %1816 = vst [vmem:[#allocation3 + $0x18] sm:$0xff] %v1780
      %1817 = vst [vmem:[#allocation3 + $0x20] sm:$0xff] %v1781
      %1818 = vst [vmem:[#allocation3 + $0x28] sm:$0xff] %v1782
      %1819 = vst [vmem:[#allocation3 + $0x30] sm:$0xff] %v1783
      %1820 = vst [vmem:[#allocation3 + $0x38] sm:$0xff] %v1784
      %1821 = vst [vmem:[#allocation3 + $0x40] sm:$0xff] %v1785
      %1822 = vst [vmem:[#allocation3 + $0x48] sm:$0xff] %v1786
      %1823 = vst [vmem:[#allocation3 + $0x50] sm:$0xff] %v1787
      %1824 = vst [vmem:[#allocation3 + $0x58] sm:$0xff] %v1788
      %1825 = vst [vmem:[#allocation3 + $0x60] sm:$0xff] %v1789
      %1826 = vst [vmem:[#allocation3 + $0x68] sm:$0xff] %v1790
      %1827 = vst [vmem:[#allocation3 + $0x70] sm:$0xff] %v1791
      %1828 = vst [vmem:[#allocation3 + $0x78] sm:$0xff] %v1792
      %1829 = vst [vmem:[#allocation3 + $0x80] sm:$0xff] %v1793
      %1830 = vst [vmem:[#allocation3 + $0x88] sm:$0xff] %v1794
      %1831 = vst [vmem:[#allocation3 + $0x90] sm:$0xff] %v1795
      %1832 = vst [vmem:[#allocation3 + $0x98] sm:$0xff] %v1796
      %1833 = vst [vmem:[#allocation3 + $0xa0] sm:$0xff] %v1797
      %1834 = vst [vmem:[#allocation3 + $0xa8] sm:$0xff] %v1798
      %1835 = vst [vmem:[#allocation3 + $0xb0] sm:$0xff] %v1799
      %1836 = vst [vmem:[#allocation3 + $0xb8] sm:$0xff] %v1800
      %1837 = vst [vmem:[#allocation3 + $0xc0] sm:$0xff] %v1801
      %1838 = vst [vmem:[#allocation3 + $0xc8] sm:$0xff] %v1802
      %1839 = vst [vmem:[#allocation3 + $0xd0] sm:$0xff] %v1803
      %1840 = vst [vmem:[#allocation3 + $0xd8] sm:$0xff] %v1804
      %1841 = vst [vmem:[#allocation3 + $0xe0] sm:$0xff] %v1805
      %1842 = vst [vmem:[#allocation3 + $0xe8] sm:$0xff] %v1806
      %1843 = vst [vmem:[#allocation3 + $0xf0] sm:$0xff] %v1807
      %1844 = vst [vmem:[#allocation3 + $0xf8] sm:$0xff] %v1808
      %1845 = vst [vmem:[#allocation3 + $0x100] sm:$0xff] %v1809
      %1846 = vst [vmem:[#allocation3 + $0x108] sm:$0xff] %v1810
      %1847 = vst [vmem:[#allocation3 + $0x110] sm:$0xff] %v1811
      %1848 = vst [vmem:[#allocation3 + $0x118] sm:$0xff] %v1812
      %v1849 = vld [vmem:[%s246 + $0x18] sm:$0xff]
      %v1850 = vld [vmem:[%s246 + $0x20] sm:$0xff]
      %v1851 = vld [vmem:[%s246 + $0x28] sm:$0xff]
      %v1852 = vld [vmem:[%s246 + $0x30] sm:$0xff]
      %v1853 = vld [vmem:[%s246 + $0x38] sm:$0xff]
      %v1854 = vld [vmem:[%s246 + $0x40] sm:$0xff]
      %v1855 = vld [vmem:[%s246 + $0x48] sm:$0xff]
      %v1856 = vld [vmem:[%s246 + $0x50] sm:$0xff]
      %v1857 = vld [vmem:[%s246 + $0x58] sm:$0xff]
      %v1858 = vld [vmem:[%s246 + $0x60] sm:$0xff]
      %v1859 = vld [vmem:[%s246 + $0x68] sm:$0xff]
      %v1860 = vld [vmem:[%s246 + $0x70] sm:$0xff]
      %v1861 = vld [vmem:[%s246 + $0x78] sm:$0xff]
      %v1862 = vld [vmem:[%s246 + $0x80] sm:$0xff]
      %v1863 = vld [vmem:[%s246 + $0x88] sm:$0xff]
      %v1864 = vld [vmem:[%s246 + $0x90] sm:$0xff]
      %v1865 = vld [vmem:[%s246 + $0x98] sm:$0xff]
      %v1866 = vld [vmem:[%s246 + $0xa0] sm:$0xff]
      %v1867 = vld [vmem:[%s246 + $0xa8] sm:$0xff]
      %v1868 = vld [vmem:[%s246 + $0xb0] sm:$0xff]
      %v1869 = vld [vmem:[%s246 + $0xb8] sm:$0xff]
      %v1870 = vld [vmem:[%s246 + $0xc0] sm:$0xff]
      %v1871 = vld [vmem:[%s246 + $0xc8] sm:$0xff]
      %v1872 = vld [vmem:[%s246 + $0xd0] sm:$0xff]
      %v1873 = vld [vmem:[%s246 + $0xd8] sm:$0xff]
      %v1874 = vld [vmem:[%s246 + $0xe0] sm:$0xff]
      %v1875 = vld [vmem:[%s246 + $0xe8] sm:$0xff]
      %v1876 = vld [vmem:[%s246 + $0xf0] sm:$0xff]
      %v1877 = vld [vmem:[%s246 + $0xf8] sm:$0xff]
      %v1878 = vld [vmem:[%s246 + $0x100] sm:$0xff]
      %v1879 = vld [vmem:[%s246 + $0x108] sm:$0xff]
      %v1880 = vld [vmem:[%s246 + $0x110] sm:$0xff]
      %v1881 = vld [vmem:[%s246 + $0x118] sm:$0xff]
      %v1882 = vld [vmem:[%s246 + $0x120] sm:$0xff]
      %v1883 = vld [vmem:[%s246 + $0x128] sm:$0xff]
      %v1884 = vld [vmem:[%s246 + $0x130] sm:$0xff]
      %s1885 = scalar_lea.vmem %s1, 512
      %v1886 = vld [vmem:[%s1885] sm:$0xff]
      %v1887 = vld [vmem:[%s1885 + $0x8] sm:$0xff]
      %v1888 = vld [vmem:[%s1885 + $0x10] sm:$0xff]
      %v1889 = vld [vmem:[%s1885 + $0x18] sm:$0xff]
      %v1890 = vld [vmem:[%s1885 + $0x20] sm:$0xff]
      %v1891 = vld [vmem:[%s1885 + $0x28] sm:$0xff]
      %v1892 = vld [vmem:[%s1885 + $0x30] sm:$0xff]
      %v1893 = vld [vmem:[%s1885 + $0x38] sm:$0xff]
      %v1894 = vld [vmem:[%s1885 + $0x40] sm:$0xff]
      %v1895 = vld [vmem:[%s1885 + $0x48] sm:$0xff]
      %v1896 = vld [vmem:[%s1885 + $0x50] sm:$0xff]
      %v1897 = vld [vmem:[%s1885 + $0x58] sm:$0xff]
      %v1898 = vld [vmem:[%s1885 + $0x60] sm:$0xff]
      %v1899 = vld [vmem:[%s1885 + $0x68] sm:$0xff]
      %v1900 = vld [vmem:[%s1885 + $0x70] sm:$0xff]
      %v1901 = vld [vmem:[%s1885 + $0x78] sm:$0xff]
      %1902 = vmatprep.subr.mxu0 0.0
      %1903 = vmatpush1.msra.mxu0 %v1886
      %1904 = vmatprep.subr.mxu0 0.0
      %1905 = vmatpush1.msra.mxu0 %v1887
      %1906 = vmatprep.subr.mxu0 0.0
      %1907 = vmatpush1.msra.mxu0 %v1888
      %1908 = vmatprep.subr.mxu0 0.0
      %1909 = vmatpush1.msra.mxu0 %v1889
      %1910 = vmatprep.subr.mxu0 0.0
      %1911 = vmatpush1.msra.mxu0 %v1890
      %1912 = vmatprep.subr.mxu0 0.0
      %1913 = vmatpush1.msra.mxu0 %v1891
      %1914 = vmatprep.subr.mxu0 0.0
      %1915 = vmatpush1.msra.mxu0 %v1892
      %1916 = vmatprep.subr.mxu0 0.0
      %1917 = vmatpush1.msra.mxu0 %v1893
      %1918 = vmatprep.subr.mxu0 0.0
      %1919 = vmatpush1.msra.mxu0 %v1894
      %1920 = vmatprep.subr.mxu0 0.0
      %1921 = vmatpush1.msra.mxu0 %v1895
      %1922 = vmatprep.subr.mxu0 0.0
      %1923 = vmatpush1.msra.mxu0 %v1896
      %1924 = vmatprep.subr.mxu0 0.0
      %1925 = vmatpush1.msra.mxu0 %v1897
      %1926 = vmatprep.subr.mxu0 0.0
      %1927 = vmatpush1.msra.mxu0 %v1898
      %1928 = vmatprep.subr.mxu0 0.0
      %1929 = vmatpush1.msra.mxu0 %v1899
      %1930 = vmatprep.subr.mxu0 0.0
      %1931 = vmatpush1.msra.mxu0 %v1900
      %1932 = vmatprep.subr.mxu0 0.0
      %1933 = vmatpush1.msra.mxu0 %v1901
      %1934 = vmatprep.subr.mxu0 0.0
      %1935 = vmatpush1.msra.mxu0 0.0
      %1936 = vmatprep.subr.mxu0 0.0
      %1937 = vmatpush1.msra.mxu0 0.0
      %1938 = vmatprep.subr.mxu0 0.0
      %1939 = vmatpush1.msra.mxu0 0.0
      %1940 = vmatprep.subr.mxu0 0.0
      %1941 = vmatpush1.msra.mxu0 0.0
      %1942 = vmatprep.subr.mxu0 0.0
      %1943 = vmatpush1.msra.mxu0 0.0
      %1944 = vmatprep.subr.mxu0 0.0
      %1945 = vmatpush1.msra.mxu0 0.0
      %1946 = vmatprep.subr.mxu0 0.0
      %1947 = vmatpush1.msra.mxu0 0.0
      %1948 = vmatprep.subr.mxu0 0.0
      %1949 = vmatpush1.msra.mxu0 0.0
      %1950 = vmatprep.subr.mxu0 0.0
      %1951 = vmatpush1.msra.mxu0 0.0
      %1952 = vmatprep.subr.mxu0 0.0
      %1953 = vmatpush1.msra.mxu0 0.0
      %1954 = vmatprep.subr.mxu0 0.0
      %1955 = vmatpush1.msra.mxu0 0.0
      %1956 = vmatprep.subr.mxu0 0.0
      %1957 = vmatpush1.msra.mxu0 0.0
      %1958 = vmatprep.subr.mxu0 0.0
      %1959 = vmatpush1.msra.mxu0 0.0
      %1960 = vmatprep.subr.mxu0 0.0
      %1961 = vmatpush1.msra.mxu0 0.0
      %1962 = vmatprep.subr.mxu0 0.0
      %1963 = vmatpush1.msra.mxu0 0.0
      %1964 = vmatprep.subr.mxu0 0.0
      %1965 = vmatpush1.msra.mxu0 0.0
      %1966 = vmatprep.mubr.f32.mxu0 0.0
      %1967 = vmatmul.mubr.f32.gmra.mrb[0].mxu0 %v1849
      %v1968 = vpop.f32.mrb[0].mxu0
      %v1969 = vadd.f32 0.0, %v1968
      %v1970 = vpop.f32.mrb[0].mxu0
      %1971 = vmatprep.mubr.f32.mxu0 0.0
      %1972 = vmatmul.mubr.f32.gmra.mrb[0].mxu0 %v1850
      %v1973 = vpop.f32.mrb[0].mxu0
      %v1974 = vadd.f32 0.0, %v1973
      %v1975 = vpop.f32.mrb[0].mxu0
      %1976 = vmatprep.mubr.f32.mxu0 0.0
      %1977 = vmatmul.mubr.f32.gmra.mrb[0].mxu0 %v1851
      %v1978 = vpop.f32.mrb[0].mxu0
      %v1979 = vadd.f32 0.0, %v1978
      %v1980 = vpop.f32.mrb[0].mxu0
      %1981 = vmatprep.mubr.f32.mxu0 0.0
      %1982 = vmatmul.mubr.f32.gmra.mrb[0].mxu0 %v1852
      %v1983 = vpop.f32.mrb[0].mxu0
      %v1984 = vadd.f32 0.0, %v1983
      %v1985 = vpop.f32.mrb[0].mxu0
      %1986 = vmatprep.mubr.f32.mxu0 0.0
      %1987 = vmatmul.mubr.f32.gmra.mrb[0].mxu0 %v1853
      %v1988 = vpop.f32.mrb[0].mxu0
      %v1989 = vadd.f32 0.0, %v1988
      %v1990 = vpop.f32.mrb[0].mxu0
      %1991 = vmatprep.mubr.f32.mxu0 0.0
      %1992 = vmatmul.mubr.f32.gmra.mrb[0].mxu0 %v1854
      %v1993 = vpop.f32.mrb[0].mxu0
      %v1994 = vadd.f32 0.0, %v1993
      %v1995 = vpop.f32.mrb[0].mxu0
      %1996 = vmatprep.mubr.f32.mxu0 0.0
      %1997 = vmatmul.mubr.f32.gmra.mrb[0].mxu0 %v1855
      %v1998 = vpop.f32.mrb[0].mxu0
      %v1999 = vadd.f32 0.0, %v1998
      %v2000 = vpop.f32.mrb[0].mxu0
      %2001 = vmatprep.mubr.f32.mxu0 0.0
      %2002 = vmatmul.mubr.f32.gmra.mrb[0].mxu0 %v1856
      %v2003 = vpop.f32.mrb[0].mxu0
      %v2004 = vadd.f32 0.0, %v2003
      %v2005 = vpop.f32.mrb[0].mxu0
      %2006 = vmatprep.mubr.f32.mxu0 0.0
      %2007 = vmatmul.mubr.f32.gmra.mrb[0].mxu0 %v1857
      %v2008 = vpop.f32.mrb[0].mxu0
      %v2009 = vadd.f32 0.0, %v2008
      %v2010 = vpop.f32.mrb[0].mxu0
      %2011 = vmatprep.mubr.f32.mxu0 0.0
      %2012 = vmatmul.mubr.f32.gmra.mrb[0].mxu0 %v1858
      %v2013 = vpop.f32.mrb[0].mxu0
      %v2014 = vadd.f32 0.0, %v2013
      %v2015 = vpop.f32.mrb[0].mxu0
      %2016 = vmatprep.mubr.f32.mxu0 0.0
      %2017 = vmatmul.mubr.f32.gmra.mrb[0].mxu0 %v1859
      %v2018 = vpop.f32.mrb[0].mxu0
      %v2019 = vadd.f32 0.0, %v2018
      %v2020 = vpop.f32.mrb[0].mxu0
      %2021 = vmatprep.mubr.f32.mxu0 0.0
      %2022 = vmatmul.mubr.f32.gmra.mrb[0].mxu0 %v1860
      %v2023 = vpop.f32.mrb[0].mxu0
      %v2024 = vadd.f32 0.0, %v2023
      %v2025 = vpop.f32.mrb[0].mxu0
      %2026 = vmatprep.mubr.f32.mxu0 0.0
      %2027 = vmatmul.mubr.f32.gmra.mrb[0].mxu0 %v1861
      %v2028 = vpop.f32.mrb[0].mxu0
      %v2029 = vadd.f32 0.0, %v2028
      %v2030 = vpop.f32.mrb[0].mxu0
      %2031 = vmatprep.mubr.f32.mxu0 0.0
      %2032 = vmatmul.mubr.f32.gmra.mrb[0].mxu0 %v1862
      %v2033 = vpop.f32.mrb[0].mxu0
      %v2034 = vadd.f32 0.0, %v2033
      %v2035 = vpop.f32.mrb[0].mxu0
      %2036 = vmatprep.mubr.f32.mxu0 0.0
      %2037 = vmatmul.mubr.f32.gmra.mrb[0].mxu0 %v1863
      %v2038 = vpop.f32.mrb[0].mxu0
      %v2039 = vadd.f32 0.0, %v2038
      %v2040 = vpop.f32.mrb[0].mxu0
      %2041 = vmatprep.mubr.f32.mxu0 0.0
      %2042 = vmatmul.mubr.f32.gmra.mrb[0].mxu0 %v1864
      %v2043 = vpop.f32.mrb[0].mxu0
      %v2044 = vadd.f32 0.0, %v2043
      %v2045 = vpop.f32.mrb[0].mxu0
      %2046 = vmatprep.mubr.f32.mxu0 0.0
      %2047 = vmatmul.mubr.f32.gmra.mrb[0].mxu0 %v1865
      %v2048 = vpop.f32.mrb[0].mxu0
      %v2049 = vadd.f32 0.0, %v2048
      %v2050 = vpop.f32.mrb[0].mxu0
      %2051 = vmatprep.mubr.f32.mxu0 0.0
      %2052 = vmatmul.mubr.f32.gmra.mrb[0].mxu0 %v1866
      %v2053 = vpop.f32.mrb[0].mxu0
      %v2054 = vadd.f32 0.0, %v2053
      %v2055 = vpop.f32.mrb[0].mxu0
      %2056 = vmatprep.mubr.f32.mxu0 0.0
      %2057 = vmatmul.mubr.f32.gmra.mrb[0].mxu0 %v1867
      %v2058 = vpop.f32.mrb[0].mxu0
      %v2059 = vadd.f32 0.0, %v2058
      %v2060 = vpop.f32.mrb[0].mxu0
      %2061 = vmatprep.mubr.f32.mxu0 0.0
      %2062 = vmatmul.mubr.f32.gmra.mrb[0].mxu0 %v1868
      %v2063 = vpop.f32.mrb[0].mxu0
      %v2064 = vadd.f32 0.0, %v2063
      %v2065 = vpop.f32.mrb[0].mxu0
      %2066 = vmatprep.mubr.f32.mxu0 0.0
      %2067 = vmatmul.mubr.f32.gmra.mrb[0].mxu0 %v1869
      %v2068 = vpop.f32.mrb[0].mxu0
      %v2069 = vadd.f32 0.0, %v2068
      %v2070 = vpop.f32.mrb[0].mxu0
      %2071 = vmatprep.mubr.f32.mxu0 0.0
      %2072 = vmatmul.mubr.f32.gmra.mrb[0].mxu0 %v1870
      %v2073 = vpop.f32.mrb[0].mxu0
      %v2074 = vadd.f32 0.0, %v2073
      %v2075 = vpop.f32.mrb[0].mxu0
      %2076 = vmatprep.mubr.f32.mxu0 0.0
      %2077 = vmatmul.mubr.f32.gmra.mrb[0].mxu0 %v1871
      %v2078 = vpop.f32.mrb[0].mxu0
      %v2079 = vadd.f32 0.0, %v2078
      %v2080 = vpop.f32.mrb[0].mxu0
      %2081 = vmatprep.mubr.f32.mxu0 0.0
      %2082 = vmatmul.mubr.f32.gmra.mrb[0].mxu0 %v1872
      %v2083 = vpop.f32.mrb[0].mxu0
      %v2084 = vadd.f32 0.0, %v2083
      %v2085 = vpop.f32.mrb[0].mxu0
      %2086 = vmatprep.mubr.f32.mxu0 0.0
      %2087 = vmatmul.mubr.f32.gmra.mrb[0].mxu0 %v1873
      %v2088 = vpop.f32.mrb[0].mxu0
      %v2089 = vadd.f32 0.0, %v2088
      %v2090 = vpop.f32.mrb[0].mxu0
      %2091 = vmatprep.mubr.f32.mxu0 0.0
      %2092 = vmatmul.mubr.f32.gmra.mrb[0].mxu0 %v1874
      %v2093 = vpop.f32.mrb[0].mxu0
      %v2094 = vadd.f32 0.0, %v2093
      %v2095 = vpop.f32.mrb[0].mxu0
      %2096 = vmatprep.mubr.f32.mxu0 0.0
      %2097 = vmatmul.mubr.f32.gmra.mrb[0].mxu0 %v1875
      %v2098 = vpop.f32.mrb[0].mxu0
      %v2099 = vadd.f32 0.0, %v2098
      %v2100 = vpop.f32.mrb[0].mxu0
      %2101 = vmatprep.mubr.f32.mxu0 0.0
      %2102 = vmatmul.mubr.f32.gmra.mrb[0].mxu0 %v1876
      %v2103 = vpop.f32.mrb[0].mxu0
      %v2104 = vadd.f32 0.0, %v2103
      %v2105 = vpop.f32.mrb[0].mxu0
      %2106 = vmatprep.mubr.f32.mxu0 0.0
      %2107 = vmatmul.mubr.f32.gmra.mrb[0].mxu0 %v1877
      %v2108 = vpop.f32.mrb[0].mxu0
      %v2109 = vadd.f32 0.0, %v2108
      %v2110 = vpop.f32.mrb[0].mxu0
      %2111 = vmatprep.mubr.f32.mxu0 0.0
      %2112 = vmatmul.mubr.f32.gmra.mrb[0].mxu0 %v1878
      %v2113 = vpop.f32.mrb[0].mxu0
      %v2114 = vadd.f32 0.0, %v2113
      %v2115 = vpop.f32.mrb[0].mxu0
      %2116 = vmatprep.mubr.f32.mxu0 0.0
      %2117 = vmatmul.mubr.f32.gmra.mrb[0].mxu0 %v1879
      %v2118 = vpop.f32.mrb[0].mxu0
      %v2119 = vadd.f32 0.0, %v2118
      %v2120 = vpop.f32.mrb[0].mxu0
      %2121 = vmatprep.mubr.f32.mxu0 0.0
      %2122 = vmatmul.mubr.f32.gmra.mrb[0].mxu0 %v1880
      %v2123 = vpop.f32.mrb[0].mxu0
      %v2124 = vadd.f32 0.0, %v2123
      %v2125 = vpop.f32.mrb[0].mxu0
      %2126 = vmatprep.mubr.f32.mxu0 0.0
      %2127 = vmatmul.mubr.f32.gmra.mrb[0].mxu0 %v1881
      %v2128 = vpop.f32.mrb[0].mxu0
      %v2129 = vadd.f32 0.0, %v2128
      %v2130 = vpop.f32.mrb[0].mxu0
      %2131 = vmatprep.mubr.f32.mxu0 0.0
      %2132 = vmatmul.mubr.f32.gmra.mrb[0].mxu0 %v1882
      %v2133 = vpop.f32.mrb[0].mxu0
      %v2134 = vadd.f32 0.0, %v2133
      %v2135 = vpop.f32.mrb[0].mxu0
      %2136 = vmatprep.mubr.f32.mxu0 0.0
      %2137 = vmatmul.mubr.f32.gmra.mrb[0].mxu0 %v1883
      %v2138 = vpop.f32.mrb[0].mxu0
      %v2139 = vadd.f32 0.0, %v2138
      %v2140 = vpop.f32.mrb[0].mxu0
      %2141 = vmatprep.mubr.f32.mxu0 0.0
      %2142 = vmatmul.mubr.f32.gmra.mrb[0].mxu0 %v1884
      %v2143 = vpop.f32.mrb[0].mxu0
      %v2144 = vadd.f32 0.0, %v2143
      %v2145 = vpop.f32.mrb[0].mxu0
      %2146 = vdwg.mxu0
      %v2147 = vld [vmem:[#allocation3] sm:$0xff]
      %v2148 = vld [vmem:[#allocation3 + $0x8] sm:$0xff]
      %v2149 = vld [vmem:[#allocation3 + $0x10] sm:$0xff]
      %v2150 = vld [vmem:[#allocation3 + $0x18] sm:$0xff]
      %v2151 = vld [vmem:[#allocation3 + $0x20] sm:$0xff]
      %v2152 = vld [vmem:[#allocation3 + $0x28] sm:$0xff]
      %v2153 = vld [vmem:[#allocation3 + $0x30] sm:$0xff]
      %v2154 = vld [vmem:[#allocation3 + $0x38] sm:$0xff]
      %v2155 = vld [vmem:[#allocation3 + $0x40] sm:$0xff]
      %v2156 = vld [vmem:[#allocation3 + $0x48] sm:$0xff]
      %v2157 = vld [vmem:[#allocation3 + $0x50] sm:$0xff]
      %v2158 = vld [vmem:[#allocation3 + $0x58] sm:$0xff]
      %v2159 = vld [vmem:[#allocation3 + $0x60] sm:$0xff]
      %v2160 = vld [vmem:[#allocation3 + $0x68] sm:$0xff]
      %v2161 = vld [vmem:[#allocation3 + $0x70] sm:$0xff]
      %v2162 = vld [vmem:[#allocation3 + $0x78] sm:$0xff]
      %v2163 = vld [vmem:[#allocation3 + $0x80] sm:$0xff]
      %v2164 = vld [vmem:[#allocation3 + $0x88] sm:$0xff]
      %v2165 = vld [vmem:[#allocation3 + $0x90] sm:$0xff]
      %v2166 = vld [vmem:[#allocation3 + $0x98] sm:$0xff]
      %v2167 = vld [vmem:[#allocation3 + $0xa0] sm:$0xff]
      %v2168 = vld [vmem:[#allocation3 + $0xa8] sm:$0xff]
      %v2169 = vld [vmem:[#allocation3 + $0xb0] sm:$0xff]
      %v2170 = vld [vmem:[#allocation3 + $0xb8] sm:$0xff]
      %v2171 = vld [vmem:[#allocation3 + $0xc0] sm:$0xff]
      %v2172 = vld [vmem:[#allocation3 + $0xc8] sm:$0xff]
      %v2173 = vld [vmem:[#allocation3 + $0xd0] sm:$0xff]
      %v2174 = vld [vmem:[#allocation3 + $0xd8] sm:$0xff]
      %v2175 = vld [vmem:[#allocation3 + $0xe0] sm:$0xff]
      %v2176 = vld [vmem:[#allocation3 + $0xe8] sm:$0xff]
      %v2177 = vld [vmem:[#allocation3 + $0xf0] sm:$0xff]
      %v2178 = vld [vmem:[#allocation3 + $0xf8] sm:$0xff]
      %v2179 = vld [vmem:[#allocation3 + $0x100] sm:$0xff]
      %v2180 = vld [vmem:[#allocation3 + $0x108] sm:$0xff]
      %v2181 = vld [vmem:[#allocation3 + $0x110] sm:$0xff]
      %v2182 = vld [vmem:[#allocation3 + $0x118] sm:$0xff]
      %v2183 = vadd.f32 %v2147, %v1969
      %v2184 = vadd.f32 %v2148, %v1974
      %v2185 = vadd.f32 %v2149, %v1979
      %v2186 = vadd.f32 %v2150, %v1984
      %v2187 = vadd.f32 %v2151, %v1989
      %v2188 = vadd.f32 %v2152, %v1994
      %v2189 = vadd.f32 %v2153, %v1999
      %v2190 = vadd.f32 %v2154, %v2004
      %v2191 = vadd.f32 %v2155, %v2009
      %v2192 = vadd.f32 %v2156, %v2014
      %v2193 = vadd.f32 %v2157, %v2019
      %v2194 = vadd.f32 %v2158, %v2024
      %v2195 = vadd.f32 %v2159, %v2029
      %v2196 = vadd.f32 %v2160, %v2034
      %v2197 = vadd.f32 %v2161, %v2039
      %v2198 = vadd.f32 %v2162, %v2044
      %v2199 = vadd.f32 %v2163, %v2049
      %v2200 = vadd.f32 %v2164, %v2054
      %v2201 = vadd.f32 %v2165, %v2059
      %v2202 = vadd.f32 %v2166, %v2064
      %v2203 = vadd.f32 %v2167, %v2069
      %v2204 = vadd.f32 %v2168, %v2074
      %v2205 = vadd.f32 %v2169, %v2079
      %v2206 = vadd.f32 %v2170, %v2084
      %v2207 = vadd.f32 %v2171, %v2089
      %v2208 = vadd.f32 %v2172, %v2094
      %v2209 = vadd.f32 %v2173, %v2099
      %v2210 = vadd.f32 %v2174, %v2104
      %v2211 = vadd.f32 %v2175, %v2109
      %v2212 = vadd.f32 %v2176, %v2114
      %v2213 = vadd.f32 %v2177, %v2119
      %v2214 = vadd.f32 %v2178, %v2124
      %v2215 = vadd.f32 %v2179, %v2129
      %v2216 = vadd.f32 %v2180, %v2134
      %v2217 = vadd.f32 %v2181, %v2139
      %v2218 = vadd.f32 %v2182, %v2144
      %2219 = vst [vmem:[#allocation3] sm:$0xff] %v2183
      %2220 = vst [vmem:[#allocation3 + $0x8] sm:$0xff] %v2184
      %2221 = vst [vmem:[#allocation3 + $0x10] sm:$0xff] %v2185
      %2222 = vst [vmem:[#allocation3 + $0x18] sm:$0xff] %v2186
      %2223 = vst [vmem:[#allocation3 + $0x20] sm:$0xff] %v2187
      %2224 = vst [vmem:[#allocation3 + $0x28] sm:$0xff] %v2188
      %2225 = vst [vmem:[#allocation3 + $0x30] sm:$0xff] %v2189
      %2226 = vst [vmem:[#allocation3 + $0x38] sm:$0xff] %v2190
      %2227 = vst [vmem:[#allocation3 + $0x40] sm:$0xff] %v2191
      %2228 = vst [vmem:[#allocation3 + $0x48] sm:$0xff] %v2192
      %2229 = vst [vmem:[#allocation3 + $0x50] sm:$0xff] %v2193
      %2230 = vst [vmem:[#allocation3 + $0x58] sm:$0xff] %v2194
      %2231 = vst [vmem:[#allocation3 + $0x60] sm:$0xff] %v2195
      %2232 = vst [vmem:[#allocation3 + $0x68] sm:$0xff] %v2196
      %2233 = vst [vmem:[#allocation3 + $0x70] sm:$0xff] %v2197
      %2234 = vst [vmem:[#allocation3 + $0x78] sm:$0xff] %v2198
      %2235 = vst [vmem:[#allocation3 + $0x80] sm:$0xff] %v2199
      %2236 = vst [vmem:[#allocation3 + $0x88] sm:$0xff] %v2200
      %2237 = vst [vmem:[#allocation3 + $0x90] sm:$0xff] %v2201
      %2238 = vst [vmem:[#allocation3 + $0x98] sm:$0xff] %v2202
      %2239 = vst [vmem:[#allocation3 + $0xa0] sm:$0xff] %v2203
      %2240 = vst [vmem:[#allocation3 + $0xa8] sm:$0xff] %v2204
      %2241 = vst [vmem:[#allocation3 + $0xb0] sm:$0xff] %v2205
      %2242 = vst [vmem:[#allocation3 + $0xb8] sm:$0xff] %v2206
      %2243 = vst [vmem:[#allocation3 + $0xc0] sm:$0xff] %v2207
      %2244 = vst [vmem:[#allocation3 + $0xc8] sm:$0xff] %v2208
      %2245 = vst [vmem:[#allocation3 + $0xd0] sm:$0xff] %v2209
      %2246 = vst [vmem:[#allocation3 + $0xd8] sm:$0xff] %v2210
      %2247 = vst [vmem:[#allocation3 + $0xe0] sm:$0xff] %v2211
      %2248 = vst [vmem:[#allocation3 + $0xe8] sm:$0xff] %v2212
      %2249 = vst [vmem:[#allocation3 + $0xf0] sm:$0xff] %v2213
      %2250 = vst [vmem:[#allocation3 + $0xf8] sm:$0xff] %v2214
      %2251 = vst [vmem:[#allocation3 + $0x100] sm:$0xff] %v2215
      %2252 = vst [vmem:[#allocation3 + $0x108] sm:$0xff] %v2216
      %2253 = vst [vmem:[#allocation3 + $0x110] sm:$0xff] %v2217
      %2254 = vst [vmem:[#allocation3 + $0x118] sm:$0xff] %v2218
      %v2255 = vld [vmem:[%s246 + $0x19] sm:$0xff]
      %v2256 = vld [vmem:[%s246 + $0x21] sm:$0xff]
      %v2257 = vld [vmem:[%s246 + $0x29] sm:$0xff]
      %v2258 = vld [vmem:[%s246 + $0x31] sm:$0xff]
      %v2259 = vld [vmem:[%s246 + $0x39] sm:$0xff]
      %v2260 = vld [vmem:[%s246 + $0x41] sm:$0xff]
      %v2261 = vld [vmem:[%s246 + $0x49] sm:$0xff]
      %v2262 = vld [vmem:[%s246 + $0x51] sm:$0xff]
      %v2263 = vld [vmem:[%s246 + $0x59] sm:$0xff]
      %v2264 = vld [vmem:[%s246 + $0x61] sm:$0xff]
      %v2265 = vld [vmem:[%s246 + $0x69] sm:$0xff]
      %v2266 = vld [vmem:[%s246 + $0x71] sm:$0xff]
      %v2267 = vld [vmem:[%s246 + $0x79] sm:$0xff]
      %v2268 = vld [vmem:[%s246 + $0x81] sm:$0xff]
      %v2269 = vld [vmem:[%s246 + $0x89] sm:$0xff]
      %v2270 = vld [vmem:[%s246 + $0x91] sm:$0xff]
      %v2271 = vld [vmem:[%s246 + $0x99] sm:$0xff]
      %v2272 = vld [vmem:[%s246 + $0xa1] sm:$0xff]
      %v2273 = vld [vmem:[%s246 + $0xa9] sm:$0xff]
      %v2274 = vld [vmem:[%s246 + $0xb1] sm:$0xff]
      %v2275 = vld [vmem:[%s246 + $0xb9] sm:$0xff]
      %v2276 = vld [vmem:[%s246 + $0xc1] sm:$0xff]
      %v2277 = vld [vmem:[%s246 + $0xc9] sm:$0xff]
      %v2278 = vld [vmem:[%s246 + $0xd1] sm:$0xff]
      %v2279 = vld [vmem:[%s246 + $0xd9] sm:$0xff]
      %v2280 = vld [vmem:[%s246 + $0xe1] sm:$0xff]
      %v2281 = vld [vmem:[%s246 + $0xe9] sm:$0xff]
      %v2282 = vld [vmem:[%s246 + $0xf1] sm:$0xff]
      %v2283 = vld [vmem:[%s246 + $0xf9] sm:$0xff]
      %v2284 = vld [vmem:[%s246 + $0x101] sm:$0xff]
      %v2285 = vld [vmem:[%s246 + $0x109] sm:$0xff]
      %v2286 = vld [vmem:[%s246 + $0x111] sm:$0xff]
      %v2287 = vld [vmem:[%s246 + $0x119] sm:$0xff]
      %v2288 = vld [vmem:[%s246 + $0x121] sm:$0xff]
      %v2289 = vld [vmem:[%s246 + $0x129] sm:$0xff]
      %v2290 = vld [vmem:[%s246 + $0x131] sm:$0xff]
      %s2291 = scalar_lea.vmem %s1, 640
      %v2292 = vld [vmem:[%s2291] sm:$0xff]
      %v2293 = vld [vmem:[%s2291 + $0x8] sm:$0xff]
      %v2294 = vld [vmem:[%s2291 + $0x10] sm:$0xff]
      %v2295 = vld [vmem:[%s2291 + $0x18] sm:$0xff]
      %v2296 = vld [vmem:[%s2291 + $0x20] sm:$0xff]
      %v2297 = vld [vmem:[%s2291 + $0x28] sm:$0xff]
      %v2298 = vld [vmem:[%s2291 + $0x30] sm:$0xff]
      %v2299 = vld [vmem:[%s2291 + $0x38] sm:$0xff]
      %v2300 = vld [vmem:[%s2291 + $0x40] sm:$0xff]
      %v2301 = vld [vmem:[%s2291 + $0x48] sm:$0xff]
      %v2302 = vld [vmem:[%s2291 + $0x50] sm:$0xff]
      %v2303 = vld [vmem:[%s2291 + $0x58] sm:$0xff]
      %v2304 = vld [vmem:[%s2291 + $0x60] sm:$0xff]
      %v2305 = vld [vmem:[%s2291 + $0x68] sm:$0xff]
      %v2306 = vld [vmem:[%s2291 + $0x70] sm:$0xff]
      %v2307 = vld [vmem:[%s2291 + $0x78] sm:$0xff]
      %2308 = vmatprep.subr.mxu0 0.0
      %2309 = vmatpush1.msra.mxu0 %v2292
      %2310 = vmatprep.subr.mxu0 0.0
      %2311 = vmatpush1.msra.mxu0 %v2293
      %2312 = vmatprep.subr.mxu0 0.0
      %2313 = vmatpush1.msra.mxu0 %v2294
      %2314 = vmatprep.subr.mxu0 0.0
      %2315 = vmatpush1.msra.mxu0 %v2295
      %2316 = vmatprep.subr.mxu0 0.0
      %2317 = vmatpush1.msra.mxu0 %v2296
      %2318 = vmatprep.subr.mxu0 0.0
      %2319 = vmatpush1.msra.mxu0 %v2297
      %2320 = vmatprep.subr.mxu0 0.0
      %2321 = vmatpush1.msra.mxu0 %v2298
      %2322 = vmatprep.subr.mxu0 0.0
      %2323 = vmatpush1.msra.mxu0 %v2299
      %2324 = vmatprep.subr.mxu0 0.0
      %2325 = vmatpush1.msra.mxu0 %v2300
      %2326 = vmatprep.subr.mxu0 0.0
      %2327 = vmatpush1.msra.mxu0 %v2301
      %2328 = vmatprep.subr.mxu0 0.0
      %2329 = vmatpush1.msra.mxu0 %v2302
      %2330 = vmatprep.subr.mxu0 0.0
      %2331 = vmatpush1.msra.mxu0 %v2303
      %2332 = vmatprep.subr.mxu0 0.0
      %2333 = vmatpush1.msra.mxu0 %v2304
      %2334 = vmatprep.subr.mxu0 0.0
      %2335 = vmatpush1.msra.mxu0 %v2305
      %2336 = vmatprep.subr.mxu0 0.0
      %2337 = vmatpush1.msra.mxu0 %v2306
      %2338 = vmatprep.subr.mxu0 0.0
      %2339 = vmatpush1.msra.mxu0 %v2307
      %2340 = vmatprep.subr.mxu0 0.0
      %2341 = vmatpush1.msra.mxu0 0.0
      %2342 = vmatprep.subr.mxu0 0.0
      %2343 = vmatpush1.msra.mxu0 0.0
      %2344 = vmatprep.subr.mxu0 0.0
      %2345 = vmatpush1.msra.mxu0 0.0
      %2346 = vmatprep.subr.mxu0 0.0
      %2347 = vmatpush1.msra.mxu0 0.0
      %2348 = vmatprep.subr.mxu0 0.0
      %2349 = vmatpush1.msra.mxu0 0.0
      %2350 = vmatprep.subr.mxu0 0.0
      %2351 = vmatpush1.msra.mxu0 0.0
      %2352 = vmatprep.subr.mxu0 0.0
      %2353 = vmatpush1.msra.mxu0 0.0
      %2354 = vmatprep.subr.mxu0 0.0
      %2355 = vmatpush1.msra.mxu0 0.0
      %2356 = vmatprep.subr.mxu0 0.0
      %2357 = vmatpush1.msra.mxu0 0.0
      %2358 = vmatprep.subr.mxu0 0.0
      %2359 = vmatpush1.msra.mxu0 0.0
      %2360 = vmatprep.subr.mxu0 0.0
      %2361 = vmatpush1.msra.mxu0 0.0
      %2362 = vmatprep.subr.mxu0 0.0
      %2363 = vmatpush1.msra.mxu0 0.0
      %2364 = vmatprep.subr.mxu0 0.0
      %2365 = vmatpush1.msra.mxu0 0.0
      %2366 = vmatprep.subr.mxu0 0.0
      %2367 = vmatpush1.msra.mxu0 0.0
      %2368 = vmatprep.subr.mxu0 0.0
      %2369 = vmatpush1.msra.mxu0 0.0
      %2370 = vmatprep.subr.mxu0 0.0
      %2371 = vmatpush1.msra.mxu0 0.0
      %2372 = vmatprep.mubr.f32.mxu0 0.0
      %2373 = vmatmul.mubr.f32.gmra.mrb[0].mxu0 %v2255
      %v2374 = vpop.f32.mrb[0].mxu0
      %v2375 = vadd.f32 0.0, %v2374
      %v2376 = vpop.f32.mrb[0].mxu0
      %2377 = vmatprep.mubr.f32.mxu0 0.0
      %2378 = vmatmul.mubr.f32.gmra.mrb[0].mxu0 %v2256
      %v2379 = vpop.f32.mrb[0].mxu0
      %v2380 = vadd.f32 0.0, %v2379
      %v2381 = vpop.f32.mrb[0].mxu0
      %2382 = vmatprep.mubr.f32.mxu0 0.0
      %2383 = vmatmul.mubr.f32.gmra.mrb[0].mxu0 %v2257
      %v2384 = vpop.f32.mrb[0].mxu0
      %v2385 = vadd.f32 0.0, %v2384
      %v2386 = vpop.f32.mrb[0].mxu0
      %2387 = vmatprep.mubr.f32.mxu0 0.0
      %2388 = vmatmul.mubr.f32.gmra.mrb[0].mxu0 %v2258
      %v2389 = vpop.f32.mrb[0].mxu0
      %v2390 = vadd.f32 0.0, %v2389
      %v2391 = vpop.f32.mrb[0].mxu0
      %2392 = vmatprep.mubr.f32.mxu0 0.0
      %2393 = vmatmul.mubr.f32.gmra.mrb[0].mxu0 %v2259
      %v2394 = vpop.f32.mrb[0].mxu0
      %v2395 = vadd.f32 0.0, %v2394
      %v2396 = vpop.f32.mrb[0].mxu0
      %2397 = vmatprep.mubr.f32.mxu0 0.0
      %2398 = vmatmul.mubr.f32.gmra.mrb[0].mxu0 %v2260
      %v2399 = vpop.f32.mrb[0].mxu0
      %v2400 = vadd.f32 0.0, %v2399
      %v2401 = vpop.f32.mrb[0].mxu0
      %2402 = vmatprep.mubr.f32.mxu0 0.0
      %2403 = vmatmul.mubr.f32.gmra.mrb[0].mxu0 %v2261
      %v2404 = vpop.f32.mrb[0].mxu0
      %v2405 = vadd.f32 0.0, %v2404
      %v2406 = vpop.f32.mrb[0].mxu0
      %2407 = vmatprep.mubr.f32.mxu0 0.0
      %2408 = vmatmul.mubr.f32.gmra.mrb[0].mxu0 %v2262
      %v2409 = vpop.f32.mrb[0].mxu0
      %v2410 = vadd.f32 0.0, %v2409
      %v2411 = vpop.f32.mrb[0].mxu0
      %2412 = vmatprep.mubr.f32.mxu0 0.0
      %2413 = vmatmul.mubr.f32.gmra.mrb[0].mxu0 %v2263
      %v2414 = vpop.f32.mrb[0].mxu0
      %v2415 = vadd.f32 0.0, %v2414
      %v2416 = vpop.f32.mrb[0].mxu0
      %2417 = vmatprep.mubr.f32.mxu0 0.0
      %2418 = vmatmul.mubr.f32.gmra.mrb[0].mxu0 %v2264
      %v2419 = vpop.f32.mrb[0].mxu0
      %v2420 = vadd.f32 0.0, %v2419
      %v2421 = vpop.f32.mrb[0].mxu0
      %2422 = vmatprep.mubr.f32.mxu0 0.0
      %2423 = vmatmul.mubr.f32.gmra.mrb[0].mxu0 %v2265
      %v2424 = vpop.f32.mrb[0].mxu0
      %v2425 = vadd.f32 0.0, %v2424
      %v2426 = vpop.f32.mrb[0].mxu0
      %2427 = vmatprep.mubr.f32.mxu0 0.0
      %2428 = vmatmul.mubr.f32.gmra.mrb[0].mxu0 %v2266
      %v2429 = vpop.f32.mrb[0].mxu0
      %v2430 = vadd.f32 0.0, %v2429
      %v2431 = vpop.f32.mrb[0].mxu0
      %2432 = vmatprep.mubr.f32.mxu0 0.0
      %2433 = vmatmul.mubr.f32.gmra.mrb[0].mxu0 %v2267
      %v2434 = vpop.f32.mrb[0].mxu0
      %v2435 = vadd.f32 0.0, %v2434
      %v2436 = vpop.f32.mrb[0].mxu0
      %2437 = vmatprep.mubr.f32.mxu0 0.0
      %2438 = vmatmul.mubr.f32.gmra.mrb[0].mxu0 %v2268
      %v2439 = vpop.f32.mrb[0].mxu0
      %v2440 = vadd.f32 0.0, %v2439
      %v2441 = vpop.f32.mrb[0].mxu0
      %2442 = vmatprep.mubr.f32.mxu0 0.0
      %2443 = vmatmul.mubr.f32.gmra.mrb[0].mxu0 %v2269
      %v2444 = vpop.f32.mrb[0].mxu0
      %v2445 = vadd.f32 0.0, %v2444
      %v2446 = vpop.f32.mrb[0].mxu0
      %2447 = vmatprep.mubr.f32.mxu0 0.0
      %2448 = vmatmul.mubr.f32.gmra.mrb[0].mxu0 %v2270
      %v2449 = vpop.f32.mrb[0].mxu0
      %v2450 = vadd.f32 0.0, %v2449
      %v2451 = vpop.f32.mrb[0].mxu0
      %2452 = vmatprep.mubr.f32.mxu0 0.0
      %2453 = vmatmul.mubr.f32.gmra.mrb[0].mxu0 %v2271
      %v2454 = vpop.f32.mrb[0].mxu0
      %v2455 = vadd.f32 0.0, %v2454
      %v2456 = vpop.f32.mrb[0].mxu0
      %2457 = vmatprep.mubr.f32.mxu0 0.0
      %2458 = vmatmul.mubr.f32.gmra.mrb[0].mxu0 %v2272
      %v2459 = vpop.f32.mrb[0].mxu0
      %v2460 = vadd.f32 0.0, %v2459
      %v2461 = vpop.f32.mrb[0].mxu0
      %2462 = vmatprep.mubr.f32.mxu0 0.0
      %2463 = vmatmul.mubr.f32.gmra.mrb[0].mxu0 %v2273
      %v2464 = vpop.f32.mrb[0].mxu0
      %v2465 = vadd.f32 0.0, %v2464
      %v2466 = vpop.f32.mrb[0].mxu0
      %2467 = vmatprep.mubr.f32.mxu0 0.0
      %2468 = vmatmul.mubr.f32.gmra.mrb[0].mxu0 %v2274
      %v2469 = vpop.f32.mrb[0].mxu0
      %v2470 = vadd.f32 0.0, %v2469
      %v2471 = vpop.f32.mrb[0].mxu0
      %2472 = vmatprep.mubr.f32.mxu0 0.0
      %2473 = vmatmul.mubr.f32.gmra.mrb[0].mxu0 %v2275
      %v2474 = vpop.f32.mrb[0].mxu0
      %v2475 = vadd.f32 0.0, %v2474
      %v2476 = vpop.f32.mrb[0].mxu0
      %2477 = vmatprep.mubr.f32.mxu0 0.0
      %2478 = vmatmul.mubr.f32.gmra.mrb[0].mxu0 %v2276
      %v2479 = vpop.f32.mrb[0].mxu0
      %v2480 = vadd.f32 0.0, %v2479
      %v2481 = vpop.f32.mrb[0].mxu0
      %2482 = vmatprep.mubr.f32.mxu0 0.0
      %2483 = vmatmul.mubr.f32.gmra.mrb[0].mxu0 %v2277
      %v2484 = vpop.f32.mrb[0].mxu0
      %v2485 = vadd.f32 0.0, %v2484
      %v2486 = vpop.f32.mrb[0].mxu0
      %2487 = vmatprep.mubr.f32.mxu0 0.0
      %2488 = vmatmul.mubr.f32.gmra.mrb[0].mxu0 %v2278
      %v2489 = vpop.f32.mrb[0].mxu0
      %v2490 = vadd.f32 0.0, %v2489
      %v2491 = vpop.f32.mrb[0].mxu0
      %2492 = vmatprep.mubr.f32.mxu0 0.0
      %2493 = vmatmul.mubr.f32.gmra.mrb[0].mxu0 %v2279
      %v2494 = vpop.f32.mrb[0].mxu0
      %v2495 = vadd.f32 0.0, %v2494
      %v2496 = vpop.f32.mrb[0].mxu0
      %2497 = vmatprep.mubr.f32.mxu0 0.0
      %2498 = vmatmul.mubr.f32.gmra.mrb[0].mxu0 %v2280
      %v2499 = vpop.f32.mrb[0].mxu0
      %v2500 = vadd.f32 0.0, %v2499
      %v2501 = vpop.f32.mrb[0].mxu0
      %2502 = vmatprep.mubr.f32.mxu0 0.0
      %2503 = vmatmul.mubr.f32.gmra.mrb[0].mxu0 %v2281
      %v2504 = vpop.f32.mrb[0].mxu0
      %v2505 = vadd.f32 0.0, %v2504
      %v2506 = vpop.f32.mrb[0].mxu0
      %2507 = vmatprep.mubr.f32.mxu0 0.0
      %2508 = vmatmul.mubr.f32.gmra.mrb[0].mxu0 %v2282
      %v2509 = vpop.f32.mrb[0].mxu0
      %v2510 = vadd.f32 0.0, %v2509
      %v2511 = vpop.f32.mrb[0].mxu0
      %2512 = vmatprep.mubr.f32.mxu0 0.0
      %2513 = vmatmul.mubr.f32.gmra.mrb[0].mxu0 %v2283
      %v2514 = vpop.f32.mrb[0].mxu0
      %v2515 = vadd.f32 0.0, %v2514
      %v2516 = vpop.f32.mrb[0].mxu0
      %2517 = vmatprep.mubr.f32.mxu0 0.0
      %2518 = vmatmul.mubr.f32.gmra.mrb[0].mxu0 %v2284
      %v2519 = vpop.f32.mrb[0].mxu0
      %v2520 = vadd.f32 0.0, %v2519
      %v2521 = vpop.f32.mrb[0].mxu0
      %2522 = vmatprep.mubr.f32.mxu0 0.0
      %2523 = vmatmul.mubr.f32.gmra.mrb[0].mxu0 %v2285
      %v2524 = vpop.f32.mrb[0].mxu0
      %v2525 = vadd.f32 0.0, %v2524
      %v2526 = vpop.f32.mrb[0].mxu0
      %2527 = vmatprep.mubr.f32.mxu0 0.0
      %2528 = vmatmul.mubr.f32.gmra.mrb[0].mxu0 %v2286
      %v2529 = vpop.f32.mrb[0].mxu0
      %v2530 = vadd.f32 0.0, %v2529
      %v2531 = vpop.f32.mrb[0].mxu0
      %2532 = vmatprep.mubr.f32.mxu0 0.0
      %2533 = vmatmul.mubr.f32.gmra.mrb[0].mxu0 %v2287
      %v2534 = vpop.f32.mrb[0].mxu0
      %v2535 = vadd.f32 0.0, %v2534
      %v2536 = vpop.f32.mrb[0].mxu0
      %2537 = vmatprep.mubr.f32.mxu0 0.0
      %2538 = vmatmul.mubr.f32.gmra.mrb[0].mxu0 %v2288
      %v2539 = vpop.f32.mrb[0].mxu0
      %v2540 = vadd.f32 0.0, %v2539
      %v2541 = vpop.f32.mrb[0].mxu0
      %2542 = vmatprep.mubr.f32.mxu0 0.0
      %2543 = vmatmul.mubr.f32.gmra.mrb[0].mxu0 %v2289
      %v2544 = vpop.f32.mrb[0].mxu0
      %v2545 = vadd.f32 0.0, %v2544
      %v2546 = vpop.f32.mrb[0].mxu0
      %2547 = vmatprep.mubr.f32.mxu0 0.0
      %2548 = vmatmul.mubr.f32.gmra.mrb[0].mxu0 %v2290
      %v2549 = vpop.f32.mrb[0].mxu0
      %v2550 = vadd.f32 0.0, %v2549
      %v2551 = vpop.f32.mrb[0].mxu0
      %2552 = vdwg.mxu0
      %v2553 = vld [vmem:[#allocation3] sm:$0xff]
      %v2554 = vld [vmem:[#allocation3 + $0x8] sm:$0xff]
      %v2555 = vld [vmem:[#allocation3 + $0x10] sm:$0xff]
      %v2556 = vld [vmem:[#allocation3 + $0x18] sm:$0xff]
      %v2557 = vld [vmem:[#allocation3 + $0x20] sm:$0xff]
      %v2558 = vld [vmem:[#allocation3 + $0x28] sm:$0xff]
      %v2559 = vld [vmem:[#allocation3 + $0x30] sm:$0xff]
      %v2560 = vld [vmem:[#allocation3 + $0x38] sm:$0xff]
      %v2561 = vld [vmem:[#allocation3 + $0x40] sm:$0xff]
      %v2562 = vld [vmem:[#allocation3 + $0x48] sm:$0xff]
      %v2563 = vld [vmem:[#allocation3 + $0x50] sm:$0xff]
      %v2564 = vld [vmem:[#allocation3 + $0x58] sm:$0xff]
      %v2565 = vld [vmem:[#allocation3 + $0x60] sm:$0xff]
      %v2566 = vld [vmem:[#allocation3 + $0x68] sm:$0xff]
      %v2567 = vld [vmem:[#allocation3 + $0x70] sm:$0xff]
      %v2568 = vld [vmem:[#allocation3 + $0x78] sm:$0xff]
      %v2569 = vld [vmem:[#allocation3 + $0x80] sm:$0xff]
      %v2570 = vld [vmem:[#allocation3 + $0x88] sm:$0xff]
      %v2571 = vld [vmem:[#allocation3 + $0x90] sm:$0xff]
      %v2572 = vld [vmem:[#allocation3 + $0x98] sm:$0xff]
      %v2573 = vld [vmem:[#allocation3 + $0xa0] sm:$0xff]
      %v2574 = vld [vmem:[#allocation3 + $0xa8] sm:$0xff]
      %v2575 = vld [vmem:[#allocation3 + $0xb0] sm:$0xff]
      %v2576 = vld [vmem:[#allocation3 + $0xb8] sm:$0xff]
      %v2577 = vld [vmem:[#allocation3 + $0xc0] sm:$0xff]
      %v2578 = vld [vmem:[#allocation3 + $0xc8] sm:$0xff]
      %v2579 = vld [vmem:[#allocation3 + $0xd0] sm:$0xff]
      %v2580 = vld [vmem:[#allocation3 + $0xd8] sm:$0xff]
      %v2581 = vld [vmem:[#allocation3 + $0xe0] sm:$0xff]
      %v2582 = vld [vmem:[#allocation3 + $0xe8] sm:$0xff]
      %v2583 = vld [vmem:[#allocation3 + $0xf0] sm:$0xff]
      %v2584 = vld [vmem:[#allocation3 + $0xf8] sm:$0xff]
      %v2585 = vld [vmem:[#allocation3 + $0x100] sm:$0xff]
      %v2586 = vld [vmem:[#allocation3 + $0x108] sm:$0xff]
      %v2587 = vld [vmem:[#allocation3 + $0x110] sm:$0xff]
      %v2588 = vld [vmem:[#allocation3 + $0x118] sm:$0xff]
      %v2589 = vadd.f32 %v2553, %v2375
      %v2590 = vadd.f32 %v2554, %v2380
      %v2591 = vadd.f32 %v2555, %v2385
      %v2592 = vadd.f32 %v2556, %v2390
      %v2593 = vadd.f32 %v2557, %v2395
      %v2594 = vadd.f32 %v2558, %v2400
      %v2595 = vadd.f32 %v2559, %v2405
      %v2596 = vadd.f32 %v2560, %v2410
      %v2597 = vadd.f32 %v2561, %v2415
      %v2598 = vadd.f32 %v2562, %v2420
      %v2599 = vadd.f32 %v2563, %v2425
      %v2600 = vadd.f32 %v2564, %v2430
      %v2601 = vadd.f32 %v2565, %v2435
      %v2602 = vadd.f32 %v2566, %v2440
      %v2603 = vadd.f32 %v2567, %v2445
      %v2604 = vadd.f32 %v2568, %v2450
      %v2605 = vadd.f32 %v2569, %v2455
      %v2606 = vadd.f32 %v2570, %v2460
      %v2607 = vadd.f32 %v2571, %v2465
      %v2608 = vadd.f32 %v2572, %v2470
      %v2609 = vadd.f32 %v2573, %v2475
      %v2610 = vadd.f32 %v2574, %v2480
      %v2611 = vadd.f32 %v2575, %v2485
      %v2612 = vadd.f32 %v2576, %v2490
      %v2613 = vadd.f32 %v2577, %v2495
      %v2614 = vadd.f32 %v2578, %v2500
      %v2615 = vadd.f32 %v2579, %v2505
      %v2616 = vadd.f32 %v2580, %v2510
      %v2617 = vadd.f32 %v2581, %v2515
      %v2618 = vadd.f32 %v2582, %v2520
      %v2619 = vadd.f32 %v2583, %v2525
      %v2620 = vadd.f32 %v2584, %v2530
      %v2621 = vadd.f32 %v2585, %v2535
      %v2622 = vadd.f32 %v2586, %v2540
      %v2623 = vadd.f32 %v2587, %v2545
      %v2624 = vadd.f32 %v2588, %v2550
      %2625 = vst [vmem:[#allocation3] sm:$0xff] %v2589
      %2626 = vst [vmem:[#allocation3 + $0x8] sm:$0xff] %v2590
      %2627 = vst [vmem:[#allocation3 + $0x10] sm:$0xff] %v2591
      %2628 = vst [vmem:[#allocation3 + $0x18] sm:$0xff] %v2592
      %2629 = vst [vmem:[#allocation3 + $0x20] sm:$0xff] %v2593
      %2630 = vst [vmem:[#allocation3 + $0x28] sm:$0xff] %v2594
      %2631 = vst [vmem:[#allocation3 + $0x30] sm:$0xff] %v2595
      %2632 = vst [vmem:[#allocation3 + $0x38] sm:$0xff] %v2596
      %2633 = vst [vmem:[#allocation3 + $0x40] sm:$0xff] %v2597
      %2634 = vst [vmem:[#allocation3 + $0x48] sm:$0xff] %v2598
      %2635 = vst [vmem:[#allocation3 + $0x50] sm:$0xff] %v2599
      %2636 = vst [vmem:[#allocation3 + $0x58] sm:$0xff] %v2600
      %2637 = vst [vmem:[#allocation3 + $0x60] sm:$0xff] %v2601
      %2638 = vst [vmem:[#allocation3 + $0x68] sm:$0xff] %v2602
      %2639 = vst [vmem:[#allocation3 + $0x70] sm:$0xff] %v2603
      %2640 = vst [vmem:[#allocation3 + $0x78] sm:$0xff] %v2604
      %2641 = vst [vmem:[#allocation3 + $0x80] sm:$0xff] %v2605
      %2642 = vst [vmem:[#allocation3 + $0x88] sm:$0xff] %v2606
      %2643 = vst [vmem:[#allocation3 + $0x90] sm:$0xff] %v2607
      %2644 = vst [vmem:[#allocation3 + $0x98] sm:$0xff] %v2608
      %2645 = vst [vmem:[#allocation3 + $0xa0] sm:$0xff] %v2609
      %2646 = vst [vmem:[#allocation3 + $0xa8] sm:$0xff] %v2610
      %2647 = vst [vmem:[#allocation3 + $0xb0] sm:$0xff] %v2611
      %2648 = vst [vmem:[#allocation3 + $0xb8] sm:$0xff] %v2612
      %2649 = vst [vmem:[#allocation3 + $0xc0] sm:$0xff] %v2613
      %2650 = vst [vmem:[#allocation3 + $0xc8] sm:$0xff] %v2614
      %2651 = vst [vmem:[#allocation3 + $0xd0] sm:$0xff] %v2615
      %2652 = vst [vmem:[#allocation3 + $0xd8] sm:$0xff] %v2616
      %2653 = vst [vmem:[#allocation3 + $0xe0] sm:$0xff] %v2617
      %2654 = vst [vmem:[#allocation3 + $0xe8] sm:$0xff] %v2618
      %2655 = vst [vmem:[#allocation3 + $0xf0] sm:$0xff] %v2619
      %2656 = vst [vmem:[#allocation3 + $0xf8] sm:$0xff] %v2620
      %2657 = vst [vmem:[#allocation3 + $0x100] sm:$0xff] %v2621
      %2658 = vst [vmem:[#allocation3 + $0x108] sm:$0xff] %v2622
      %2659 = vst [vmem:[#allocation3 + $0x110] sm:$0xff] %v2623
      %2660 = vst [vmem:[#allocation3 + $0x118] sm:$0xff] %v2624
      %v2661 = vld [vmem:[%s246 + $0x29] sm:$0xff]
      %v2662 = vld [vmem:[%s246 + $0x31] sm:$0xff]
      %v2663 = vld [vmem:[%s246 + $0x39] sm:$0xff]
      %v2664 = vld [vmem:[%s246 + $0x41] sm:$0xff]
      %v2665 = vld [vmem:[%s246 + $0x49] sm:$0xff]
      %v2666 = vld [vmem:[%s246 + $0x51] sm:$0xff]
      %v2667 = vld [vmem:[%s246 + $0x59] sm:$0xff]
      %v2668 = vld [vmem:[%s246 + $0x61] sm:$0xff]
      %v2669 = vld [vmem:[%s246 + $0x69] sm:$0xff]
      %v2670 = vld [vmem:[%s246 + $0x71] sm:$0xff]
      %v2671 = vld [vmem:[%s246 + $0x79] sm:$0xff]
      %v2672 = vld [vmem:[%s246 + $0x81] sm:$0xff]
      %v2673 = vld [vmem:[%s246 + $0x89] sm:$0xff]
      %v2674 = vld [vmem:[%s246 + $0x91] sm:$0xff]
      %v2675 = vld [vmem:[%s246 + $0x99] sm:$0xff]
      %v2676 = vld [vmem:[%s246 + $0xa1] sm:$0xff]
      %v2677 = vld [vmem:[%s246 + $0xa9] sm:$0xff]
      %v2678 = vld [vmem:[%s246 + $0xb1] sm:$0xff]
      %v2679 = vld [vmem:[%s246 + $0xb9] sm:$0xff]
      %v2680 = vld [vmem:[%s246 + $0xc1] sm:$0xff]
      %v2681 = vld [vmem:[%s246 + $0xc9] sm:$0xff]
      %v2682 = vld [vmem:[%s246 + $0xd1] sm:$0xff]
      %v2683 = vld [vmem:[%s246 + $0xd9] sm:$0xff]
      %v2684 = vld [vmem:[%s246 + $0xe1] sm:$0xff]
      %v2685 = vld [vmem:[%s246 + $0xe9] sm:$0xff]
      %v2686 = vld [vmem:[%s246 + $0xf1] sm:$0xff]
      %v2687 = vld [vmem:[%s246 + $0xf9] sm:$0xff]
      %v2688 = vld [vmem:[%s246 + $0x101] sm:$0xff]
      %v2689 = vld [vmem:[%s246 + $0x109] sm:$0xff]
      %v2690 = vld [vmem:[%s246 + $0x111] sm:$0xff]
      %v2691 = vld [vmem:[%s246 + $0x119] sm:$0xff]
      %v2692 = vld [vmem:[%s246 + $0x121] sm:$0xff]
      %v2693 = vld [vmem:[%s246 + $0x129] sm:$0xff]
      %v2694 = vld [vmem:[%s246 + $0x131] sm:$0xff]
      %v2695 = vld [vmem:[%s246 + $0x139] sm:$0xff]
      %v2696 = vld [vmem:[%s246 + $0x141] sm:$0xff]
      %s2697 = scalar_lea.vmem %s1, 768
      %v2698 = vld [vmem:[%s2697] sm:$0xff]
      %v2699 = vld [vmem:[%s2697 + $0x8] sm:$0xff]
      %v2700 = vld [vmem:[%s2697 + $0x10] sm:$0xff]
      %v2701 = vld [vmem:[%s2697 + $0x18] sm:$0xff]
      %v2702 = vld [vmem:[%s2697 + $0x20] sm:$0xff]
      %v2703 = vld [vmem:[%s2697 + $0x28] sm:$0xff]
      %v2704 = vld [vmem:[%s2697 + $0x30] sm:$0xff]
      %v2705 = vld [vmem:[%s2697 + $0x38] sm:$0xff]
      %v2706 = vld [vmem:[%s2697 + $0x40] sm:$0xff]
      %v2707 = vld [vmem:[%s2697 + $0x48] sm:$0xff]
      %v2708 = vld [vmem:[%s2697 + $0x50] sm:$0xff]
      %v2709 = vld [vmem:[%s2697 + $0x58] sm:$0xff]
      %v2710 = vld [vmem:[%s2697 + $0x60] sm:$0xff]
      %v2711 = vld [vmem:[%s2697 + $0x68] sm:$0xff]
      %v2712 = vld [vmem:[%s2697 + $0x70] sm:$0xff]
      %v2713 = vld [vmem:[%s2697 + $0x78] sm:$0xff]
      %2714 = vmatprep.subr.mxu0 0.0
      %2715 = vmatpush1.msra.mxu0 %v2698
      %2716 = vmatprep.subr.mxu0 0.0
      %2717 = vmatpush1.msra.mxu0 %v2699
      %2718 = vmatprep.subr.mxu0 0.0
      %2719 = vmatpush1.msra.mxu0 %v2700
      %2720 = vmatprep.subr.mxu0 0.0
      %2721 = vmatpush1.msra.mxu0 %v2701
      %2722 = vmatprep.subr.mxu0 0.0
      %2723 = vmatpush1.msra.mxu0 %v2702
      %2724 = vmatprep.subr.mxu0 0.0
      %2725 = vmatpush1.msra.mxu0 %v2703
      %2726 = vmatprep.subr.mxu0 0.0
      %2727 = vmatpush1.msra.mxu0 %v2704
      %2728 = vmatprep.subr.mxu0 0.0
      %2729 = vmatpush1.msra.mxu0 %v2705
      %2730 = vmatprep.subr.mxu0 0.0
      %2731 = vmatpush1.msra.mxu0 %v2706
      %2732 = vmatprep.subr.mxu0 0.0
      %2733 = vmatpush1.msra.mxu0 %v2707
      %2734 = vmatprep.subr.mxu0 0.0
      %2735 = vmatpush1.msra.mxu0 %v2708
      %2736 = vmatprep.subr.mxu0 0.0
      %2737 = vmatpush1.msra.mxu0 %v2709
      %2738 = vmatprep.subr.mxu0 0.0
      %2739 = vmatpush1.msra.mxu0 %v2710
      %2740 = vmatprep.subr.mxu0 0.0
      %2741 = vmatpush1.msra.mxu0 %v2711
      %2742 = vmatprep.subr.mxu0 0.0
      %2743 = vmatpush1.msra.mxu0 %v2712
      %2744 = vmatprep.subr.mxu0 0.0
      %2745 = vmatpush1.msra.mxu0 %v2713
      %2746 = vmatprep.subr.mxu0 0.0
      %2747 = vmatpush1.msra.mxu0 0.0
      %2748 = vmatprep.subr.mxu0 0.0
      %2749 = vmatpush1.msra.mxu0 0.0
      %2750 = vmatprep.subr.mxu0 0.0
      %2751 = vmatpush1.msra.mxu0 0.0
      %2752 = vmatprep.subr.mxu0 0.0
      %2753 = vmatpush1.msra.mxu0 0.0
      %2754 = vmatprep.subr.mxu0 0.0
      %2755 = vmatpush1.msra.mxu0 0.0
      %2756 = vmatprep.subr.mxu0 0.0
      %2757 = vmatpush1.msra.mxu0 0.0
      %2758 = vmatprep.subr.mxu0 0.0
      %2759 = vmatpush1.msra.mxu0 0.0
      %2760 = vmatprep.subr.mxu0 0.0
      %2761 = vmatpush1.msra.mxu0 0.0
      %2762 = vmatprep.subr.mxu0 0.0
      %2763 = vmatpush1.msra.mxu0 0.0
      %2764 = vmatprep.subr.mxu0 0.0
      %2765 = vmatpush1.msra.mxu0 0.0
      %2766 = vmatprep.subr.mxu0 0.0
      %2767 = vmatpush1.msra.mxu0 0.0
      %2768 = vmatprep.subr.mxu0 0.0
      %2769 = vmatpush1.msra.mxu0 0.0
      %2770 = vmatprep.subr.mxu0 0.0
      %2771 = vmatpush1.msra.mxu0 0.0
      %2772 = vmatprep.subr.mxu0 0.0
      %2773 = vmatpush1.msra.mxu0 0.0
      %2774 = vmatprep.subr.mxu0 0.0
      %2775 = vmatpush1.msra.mxu0 0.0
      %2776 = vmatprep.subr.mxu0 0.0
      %2777 = vmatpush1.msra.mxu0 0.0
      %2778 = vmatprep.mubr.f32.mxu0 0.0
      %2779 = vmatmul.mubr.f32.gmra.mrb[0].mxu0 %v2661
      %v2780 = vpop.f32.mrb[0].mxu0
      %v2781 = vadd.f32 0.0, %v2780
      %v2782 = vpop.f32.mrb[0].mxu0
      %2783 = vmatprep.mubr.f32.mxu0 0.0
      %2784 = vmatmul.mubr.f32.gmra.mrb[0].mxu0 %v2662
      %v2785 = vpop.f32.mrb[0].mxu0
      %v2786 = vadd.f32 0.0, %v2785
      %v2787 = vpop.f32.mrb[0].mxu0
      %2788 = vmatprep.mubr.f32.mxu0 0.0
      %2789 = vmatmul.mubr.f32.gmra.mrb[0].mxu0 %v2663
      %v2790 = vpop.f32.mrb[0].mxu0
      %v2791 = vadd.f32 0.0, %v2790
      %v2792 = vpop.f32.mrb[0].mxu0
      %2793 = vmatprep.mubr.f32.mxu0 0.0
      %2794 = vmatmul.mubr.f32.gmra.mrb[0].mxu0 %v2664
      %v2795 = vpop.f32.mrb[0].mxu0
      %v2796 = vadd.f32 0.0, %v2795
      %v2797 = vpop.f32.mrb[0].mxu0
      %2798 = vmatprep.mubr.f32.mxu0 0.0
      %2799 = vmatmul.mubr.f32.gmra.mrb[0].mxu0 %v2665
      %v2800 = vpop.f32.mrb[0].mxu0
      %v2801 = vadd.f32 0.0, %v2800
      %v2802 = vpop.f32.mrb[0].mxu0
      %2803 = vmatprep.mubr.f32.mxu0 0.0
      %2804 = vmatmul.mubr.f32.gmra.mrb[0].mxu0 %v2666
      %v2805 = vpop.f32.mrb[0].mxu0
      %v2806 = vadd.f32 0.0, %v2805
      %v2807 = vpop.f32.mrb[0].mxu0
      %2808 = vmatprep.mubr.f32.mxu0 0.0
      %2809 = vmatmul.mubr.f32.gmra.mrb[0].mxu0 %v2667
      %v2810 = vpop.f32.mrb[0].mxu0
      %v2811 = vadd.f32 0.0, %v2810
      %v2812 = vpop.f32.mrb[0].mxu0
      %2813 = vmatprep.mubr.f32.mxu0 0.0
      %2814 = vmatmul.mubr.f32.gmra.mrb[0].mxu0 %v2668
      %v2815 = vpop.f32.mrb[0].mxu0
      %v2816 = vadd.f32 0.0, %v2815
      %v2817 = vpop.f32.mrb[0].mxu0
      %2818 = vmatprep.mubr.f32.mxu0 0.0
      %2819 = vmatmul.mubr.f32.gmra.mrb[0].mxu0 %v2669
      %v2820 = vpop.f32.mrb[0].mxu0
      %v2821 = vadd.f32 0.0, %v2820
      %v2822 = vpop.f32.mrb[0].mxu0
      %2823 = vmatprep.mubr.f32.mxu0 0.0
      %2824 = vmatmul.mubr.f32.gmra.mrb[0].mxu0 %v2670
      %v2825 = vpop.f32.mrb[0].mxu0
      %v2826 = vadd.f32 0.0, %v2825
      %v2827 = vpop.f32.mrb[0].mxu0
      %2828 = vmatprep.mubr.f32.mxu0 0.0
      %2829 = vmatmul.mubr.f32.gmra.mrb[0].mxu0 %v2671
      %v2830 = vpop.f32.mrb[0].mxu0
      %v2831 = vadd.f32 0.0, %v2830
      %v2832 = vpop.f32.mrb[0].mxu0
      %2833 = vmatprep.mubr.f32.mxu0 0.0
      %2834 = vmatmul.mubr.f32.gmra.mrb[0].mxu0 %v2672
      %v2835 = vpop.f32.mrb[0].mxu0
      %v2836 = vadd.f32 0.0, %v2835
      %v2837 = vpop.f32.mrb[0].mxu0
      %2838 = vmatprep.mubr.f32.mxu0 0.0
      %2839 = vmatmul.mubr.f32.gmra.mrb[0].mxu0 %v2673
      %v2840 = vpop.f32.mrb[0].mxu0
      %v2841 = vadd.f32 0.0, %v2840
      %v2842 = vpop.f32.mrb[0].mxu0
      %2843 = vmatprep.mubr.f32.mxu0 0.0
      %2844 = vmatmul.mubr.f32.gmra.mrb[0].mxu0 %v2674
      %v2845 = vpop.f32.mrb[0].mxu0
      %v2846 = vadd.f32 0.0, %v2845
      %v2847 = vpop.f32.mrb[0].mxu0
      %2848 = vmatprep.mubr.f32.mxu0 0.0
      %2849 = vmatmul.mubr.f32.gmra.mrb[0].mxu0 %v2675
      %v2850 = vpop.f32.mrb[0].mxu0
      %v2851 = vadd.f32 0.0, %v2850
      %v2852 = vpop.f32.mrb[0].mxu0
      %2853 = vmatprep.mubr.f32.mxu0 0.0
      %2854 = vmatmul.mubr.f32.gmra.mrb[0].mxu0 %v2676
      %v2855 = vpop.f32.mrb[0].mxu0
      %v2856 = vadd.f32 0.0, %v2855
      %v2857 = vpop.f32.mrb[0].mxu0
      %2858 = vmatprep.mubr.f32.mxu0 0.0
      %2859 = vmatmul.mubr.f32.gmra.mrb[0].mxu0 %v2677
      %v2860 = vpop.f32.mrb[0].mxu0
      %v2861 = vadd.f32 0.0, %v2860
      %v2862 = vpop.f32.mrb[0].mxu0
      %2863 = vmatprep.mubr.f32.mxu0 0.0
      %2864 = vmatmul.mubr.f32.gmra.mrb[0].mxu0 %v2678
      %v2865 = vpop.f32.mrb[0].mxu0
      %v2866 = vadd.f32 0.0, %v2865
      %v2867 = vpop.f32.mrb[0].mxu0
      %2868 = vmatprep.mubr.f32.mxu0 0.0
      %2869 = vmatmul.mubr.f32.gmra.mrb[0].mxu0 %v2679
      %v2870 = vpop.f32.mrb[0].mxu0
      %v2871 = vadd.f32 0.0, %v2870
      %v2872 = vpop.f32.mrb[0].mxu0
      %2873 = vmatprep.mubr.f32.mxu0 0.0
      %2874 = vmatmul.mubr.f32.gmra.mrb[0].mxu0 %v2680
      %v2875 = vpop.f32.mrb[0].mxu0
      %v2876 = vadd.f32 0.0, %v2875
      %v2877 = vpop.f32.mrb[0].mxu0
      %2878 = vmatprep.mubr.f32.mxu0 0.0
      %2879 = vmatmul.mubr.f32.gmra.mrb[0].mxu0 %v2681
      %v2880 = vpop.f32.mrb[0].mxu0
      %v2881 = vadd.f32 0.0, %v2880
      %v2882 = vpop.f32.mrb[0].mxu0
      %2883 = vmatprep.mubr.f32.mxu0 0.0
      %2884 = vmatmul.mubr.f32.gmra.mrb[0].mxu0 %v2682
      %v2885 = vpop.f32.mrb[0].mxu0
      %v2886 = vadd.f32 0.0, %v2885
      %v2887 = vpop.f32.mrb[0].mxu0
      %2888 = vmatprep.mubr.f32.mxu0 0.0
      %2889 = vmatmul.mubr.f32.gmra.mrb[0].mxu0 %v2683
      %v2890 = vpop.f32.mrb[0].mxu0
      %v2891 = vadd.f32 0.0, %v2890
      %v2892 = vpop.f32.mrb[0].mxu0
      %2893 = vmatprep.mubr.f32.mxu0 0.0
      %2894 = vmatmul.mubr.f32.gmra.mrb[0].mxu0 %v2684
      %v2895 = vpop.f32.mrb[0].mxu0
      %v2896 = vadd.f32 0.0, %v2895
      %v2897 = vpop.f32.mrb[0].mxu0
      %2898 = vmatprep.mubr.f32.mxu0 0.0
      %2899 = vmatmul.mubr.f32.gmra.mrb[0].mxu0 %v2685
      %v2900 = vpop.f32.mrb[0].mxu0
      %v2901 = vadd.f32 0.0, %v2900
      %v2902 = vpop.f32.mrb[0].mxu0
      %2903 = vmatprep.mubr.f32.mxu0 0.0
      %2904 = vmatmul.mubr.f32.gmra.mrb[0].mxu0 %v2686
      %v2905 = vpop.f32.mrb[0].mxu0
      %v2906 = vadd.f32 0.0, %v2905
      %v2907 = vpop.f32.mrb[0].mxu0
      %2908 = vmatprep.mubr.f32.mxu0 0.0
      %2909 = vmatmul.mubr.f32.gmra.mrb[0].mxu0 %v2687
      %v2910 = vpop.f32.mrb[0].mxu0
      %v2911 = vadd.f32 0.0, %v2910
      %v2912 = vpop.f32.mrb[0].mxu0
      %2913 = vmatprep.mubr.f32.mxu0 0.0
      %2914 = vmatmul.mubr.f32.gmra.mrb[0].mxu0 %v2688
      %v2915 = vpop.f32.mrb[0].mxu0
      %v2916 = vadd.f32 0.0, %v2915
      %v2917 = vpop.f32.mrb[0].mxu0
      %2918 = vmatprep.mubr.f32.mxu0 0.0
      %2919 = vmatmul.mubr.f32.gmra.mrb[0].mxu0 %v2689
      %v2920 = vpop.f32.mrb[0].mxu0
      %v2921 = vadd.f32 0.0, %v2920
      %v2922 = vpop.f32.mrb[0].mxu0
      %2923 = vmatprep.mubr.f32.mxu0 0.0
      %2924 = vmatmul.mubr.f32.gmra.mrb[0].mxu0 %v2690
      %v2925 = vpop.f32.mrb[0].mxu0
      %v2926 = vadd.f32 0.0, %v2925
      %v2927 = vpop.f32.mrb[0].mxu0
      %2928 = vmatprep.mubr.f32.mxu0 0.0
      %2929 = vmatmul.mubr.f32.gmra.mrb[0].mxu0 %v2691
      %v2930 = vpop.f32.mrb[0].mxu0
      %v2931 = vadd.f32 0.0, %v2930
      %v2932 = vpop.f32.mrb[0].mxu0
      %2933 = vmatprep.mubr.f32.mxu0 0.0
      %2934 = vmatmul.mubr.f32.gmra.mrb[0].mxu0 %v2692
      %v2935 = vpop.f32.mrb[0].mxu0
      %v2936 = vadd.f32 0.0, %v2935
      %v2937 = vpop.f32.mrb[0].mxu0
      %2938 = vmatprep.mubr.f32.mxu0 0.0
      %2939 = vmatmul.mubr.f32.gmra.mrb[0].mxu0 %v2693
      %v2940 = vpop.f32.mrb[0].mxu0
      %v2941 = vadd.f32 0.0, %v2940
      %v2942 = vpop.f32.mrb[0].mxu0
      %2943 = vmatprep.mubr.f32.mxu0 0.0
      %2944 = vmatmul.mubr.f32.gmra.mrb[0].mxu0 %v2694
      %v2945 = vpop.f32.mrb[0].mxu0
      %v2946 = vadd.f32 0.0, %v2945
      %v2947 = vpop.f32.mrb[0].mxu0
      %2948 = vmatprep.mubr.f32.mxu0 0.0
      %2949 = vmatmul.mubr.f32.gmra.mrb[0].mxu0 %v2695
      %v2950 = vpop.f32.mrb[0].mxu0
      %v2951 = vadd.f32 0.0, %v2950
      %v2952 = vpop.f32.mrb[0].mxu0
      %2953 = vmatprep.mubr.f32.mxu0 0.0
      %2954 = vmatmul.mubr.f32.gmra.mrb[0].mxu0 %v2696
      %v2955 = vpop.f32.mrb[0].mxu0
      %v2956 = vadd.f32 0.0, %v2955
      %v2957 = vpop.f32.mrb[0].mxu0
      %2958 = vdwg.mxu0
      %v2959 = vld [vmem:[#allocation3] sm:$0xff]
      %v2960 = vld [vmem:[#allocation3 + $0x8] sm:$0xff]
      %v2961 = vld [vmem:[#allocation3 + $0x10] sm:$0xff]
      %v2962 = vld [vmem:[#allocation3 + $0x18] sm:$0xff]
      %v2963 = vld [vmem:[#allocation3 + $0x20] sm:$0xff]
      %v2964 = vld [vmem:[#allocation3 + $0x28] sm:$0xff]
      %v2965 = vld [vmem:[#allocation3 + $0x30] sm:$0xff]
      %v2966 = vld [vmem:[#allocation3 + $0x38] sm:$0xff]
      %v2967 = vld [vmem:[#allocation3 + $0x40] sm:$0xff]
      %v2968 = vld [vmem:[#allocation3 + $0x48] sm:$0xff]
      %v2969 = vld [vmem:[#allocation3 + $0x50] sm:$0xff]
      %v2970 = vld [vmem:[#allocation3 + $0x58] sm:$0xff]
      %v2971 = vld [vmem:[#allocation3 + $0x60] sm:$0xff]
      %v2972 = vld [vmem:[#allocation3 + $0x68] sm:$0xff]
      %v2973 = vld [vmem:[#allocation3 + $0x70] sm:$0xff]
      %v2974 = vld [vmem:[#allocation3 + $0x78] sm:$0xff]
      %v2975 = vld [vmem:[#allocation3 + $0x80] sm:$0xff]
      %v2976 = vld [vmem:[#allocation3 + $0x88] sm:$0xff]
      %v2977 = vld [vmem:[#allocation3 + $0x90] sm:$0xff]
      %v2978 = vld [vmem:[#allocation3 + $0x98] sm:$0xff]
      %v2979 = vld [vmem:[#allocation3 + $0xa0] sm:$0xff]
      %v2980 = vld [vmem:[#allocation3 + $0xa8] sm:$0xff]
      %v2981 = vld [vmem:[#allocation3 + $0xb0] sm:$0xff]
      %v2982 = vld [vmem:[#allocation3 + $0xb8] sm:$0xff]
      %v2983 = vld [vmem:[#allocation3 + $0xc0] sm:$0xff]
      %v2984 = vld [vmem:[#allocation3 + $0xc8] sm:$0xff]
      %v2985 = vld [vmem:[#allocation3 + $0xd0] sm:$0xff]
      %v2986 = vld [vmem:[#allocation3 + $0xd8] sm:$0xff]
      %v2987 = vld [vmem:[#allocation3 + $0xe0] sm:$0xff]
      %v2988 = vld [vmem:[#allocation3 + $0xe8] sm:$0xff]
      %v2989 = vld [vmem:[#allocation3 + $0xf0] sm:$0xff]
      %v2990 = vld [vmem:[#allocation3 + $0xf8] sm:$0xff]
      %v2991 = vld [vmem:[#allocation3 + $0x100] sm:$0xff]
      %v2992 = vld [vmem:[#allocation3 + $0x108] sm:$0xff]
      %v2993 = vld [vmem:[#allocation3 + $0x110] sm:$0xff]
      %v2994 = vld [vmem:[#allocation3 + $0x118] sm:$0xff]
      %v2995 = vadd.f32 %v2959, %v2781
      %v2996 = vadd.f32 %v2960, %v2786
      %v2997 = vadd.f32 %v2961, %v2791
      %v2998 = vadd.f32 %v2962, %v2796
      %v2999 = vadd.f32 %v2963, %v2801
      %v3000 = vadd.f32 %v2964, %v2806
      %v3001 = vadd.f32 %v2965, %v2811
      %v3002 = vadd.f32 %v2966, %v2816
      %v3003 = vadd.f32 %v2967, %v2821
      %v3004 = vadd.f32 %v2968, %v2826
      %v3005 = vadd.f32 %v2969, %v2831
      %v3006 = vadd.f32 %v2970, %v2836
      %v3007 = vadd.f32 %v2971, %v2841
      %v3008 = vadd.f32 %v2972, %v2846
      %v3009 = vadd.f32 %v2973, %v2851
      %v3010 = vadd.f32 %v2974, %v2856
      %v3011 = vadd.f32 %v2975, %v2861
      %v3012 = vadd.f32 %v2976, %v2866
      %v3013 = vadd.f32 %v2977, %v2871
      %v3014 = vadd.f32 %v2978, %v2876
      %v3015 = vadd.f32 %v2979, %v2881
      %v3016 = vadd.f32 %v2980, %v2886
      %v3017 = vadd.f32 %v2981, %v2891
      %v3018 = vadd.f32 %v2982, %v2896
      %v3019 = vadd.f32 %v2983, %v2901
      %v3020 = vadd.f32 %v2984, %v2906
      %v3021 = vadd.f32 %v2985, %v2911
      %v3022 = vadd.f32 %v2986, %v2916
      %v3023 = vadd.f32 %v2987, %v2921
      %v3024 = vadd.f32 %v2988, %v2926
      %v3025 = vadd.f32 %v2989, %v2931
      %v3026 = vadd.f32 %v2990, %v2936
      %v3027 = vadd.f32 %v2991, %v2941
      %v3028 = vadd.f32 %v2992, %v2946
      %v3029 = vadd.f32 %v2993, %v2951
      %v3030 = vadd.f32 %v2994, %v2956
      %3031 = vst [vmem:[#allocation3] sm:$0xff] %v2995
      %3032 = vst [vmem:[#allocation3 + $0x8] sm:$0xff] %v2996
      %3033 = vst [vmem:[#allocation3 + $0x10] sm:$0xff] %v2997
      %3034 = vst [vmem:[#allocation3 + $0x18] sm:$0xff] %v2998
      %3035 = vst [vmem:[#allocation3 + $0x20] sm:$0xff] %v2999
      %3036 = vst [vmem:[#allocation3 + $0x28] sm:$0xff] %v3000
      %3037 = vst [vmem:[#allocation3 + $0x30] sm:$0xff] %v3001
      %3038 = vst [vmem:[#allocation3 + $0x38] sm:$0xff] %v3002
      %3039 = vst [vmem:[#allocation3 + $0x40] sm:$0xff] %v3003
      %3040 = vst [vmem:[#allocation3 + $0x48] sm:$0xff] %v3004
      %3041 = vst [vmem:[#allocation3 + $0x50] sm:$0xff] %v3005
      %3042 = vst [vmem:[#allocation3 + $0x58] sm:$0xff] %v3006
      %3043 = vst [vmem:[#allocation3 + $0x60] sm:$0xff] %v3007
      %3044 = vst [vmem:[#allocation3 + $0x68] sm:$0xff] %v3008
      %3045 = vst [vmem:[#allocation3 + $0x70] sm:$0xff] %v3009
      %3046 = vst [vmem:[#allocation3 + $0x78] sm:$0xff] %v3010
      %3047 = vst [vmem:[#allocation3 + $0x80] sm:$0xff] %v3011
      %3048 = vst [vmem:[#allocation3 + $0x88] sm:$0xff] %v3012
      %3049 = vst [vmem:[#allocation3 + $0x90] sm:$0xff] %v3013
      %3050 = vst [vmem:[#allocation3 + $0x98] sm:$0xff] %v3014
      %3051 = vst [vmem:[#allocation3 + $0xa0] sm:$0xff] %v3015
      %3052 = vst [vmem:[#allocation3 + $0xa8] sm:$0xff] %v3016
      %3053 = vst [vmem:[#allocation3 + $0xb0] sm:$0xff] %v3017
      %3054 = vst [vmem:[#allocation3 + $0xb8] sm:$0xff] %v3018
      %3055 = vst [vmem:[#allocation3 + $0xc0] sm:$0xff] %v3019
      %3056 = vst [vmem:[#allocation3 + $0xc8] sm:$0xff] %v3020
      %3057 = vst [vmem:[#allocation3 + $0xd0] sm:$0xff] %v3021
      %3058 = vst [vmem:[#allocation3 + $0xd8] sm:$0xff] %v3022
      %3059 = vst [vmem:[#allocation3 + $0xe0] sm:$0xff] %v3023
      %3060 = vst [vmem:[#allocation3 + $0xe8] sm:$0xff] %v3024
      %3061 = vst [vmem:[#allocation3 + $0xf0] sm:$0xff] %v3025
      %3062 = vst [vmem:[#allocation3 + $0xf8] sm:$0xff] %v3026
      %3063 = vst [vmem:[#allocation3 + $0x100] sm:$0xff] %v3027
      %3064 = vst [vmem:[#allocation3 + $0x108] sm:$0xff] %v3028
      %3065 = vst [vmem:[#allocation3 + $0x110] sm:$0xff] %v3029
      %3066 = vst [vmem:[#allocation3 + $0x118] sm:$0xff] %v3030
      %v3067 = vld [vmem:[%s246 + $0x2a] sm:$0xff]
      %v3068 = vld [vmem:[%s246 + $0x32] sm:$0xff]
      %v3069 = vld [vmem:[%s246 + $0x3a] sm:$0xff]
      %v3070 = vld [vmem:[%s246 + $0x42] sm:$0xff]
      %v3071 = vld [vmem:[%s246 + $0x4a] sm:$0xff]
      %v3072 = vld [vmem:[%s246 + $0x52] sm:$0xff]
      %v3073 = vld [vmem:[%s246 + $0x5a] sm:$0xff]
      %v3074 = vld [vmem:[%s246 + $0x62] sm:$0xff]
      %v3075 = vld [vmem:[%s246 + $0x6a] sm:$0xff]
      %v3076 = vld [vmem:[%s246 + $0x72] sm:$0xff]
      %v3077 = vld [vmem:[%s246 + $0x7a] sm:$0xff]
      %v3078 = vld [vmem:[%s246 + $0x82] sm:$0xff]
      %v3079 = vld [vmem:[%s246 + $0x8a] sm:$0xff]
      %v3080 = vld [vmem:[%s246 + $0x92] sm:$0xff]
      %v3081 = vld [vmem:[%s246 + $0x9a] sm:$0xff]
      %v3082 = vld [vmem:[%s246 + $0xa2] sm:$0xff]
      %v3083 = vld [vmem:[%s246 + $0xaa] sm:$0xff]
      %v3084 = vld [vmem:[%s246 + $0xb2] sm:$0xff]
      %v3085 = vld [vmem:[%s246 + $0xba] sm:$0xff]
      %v3086 = vld [vmem:[%s246 + $0xc2] sm:$0xff]
      %v3087 = vld [vmem:[%s246 + $0xca] sm:$0xff]
      %v3088 = vld [vmem:[%s246 + $0xd2] sm:$0xff]
      %v3089 = vld [vmem:[%s246 + $0xda] sm:$0xff]
      %v3090 = vld [vmem:[%s246 + $0xe2] sm:$0xff]
      %v3091 = vld [vmem:[%s246 + $0xea] sm:$0xff]
      %v3092 = vld [vmem:[%s246 + $0xf2] sm:$0xff]
      %v3093 = vld [vmem:[%s246 + $0xfa] sm:$0xff]
      %v3094 = vld [vmem:[%s246 + $0x102] sm:$0xff]
      %v3095 = vld [vmem:[%s246 + $0x10a] sm:$0xff]
      %v3096 = vld [vmem:[%s246 + $0x112] sm:$0xff]
      %v3097 = vld [vmem:[%s246 + $0x11a] sm:$0xff]
      %v3098 = vld [vmem:[%s246 + $0x122] sm:$0xff]
      %v3099 = vld [vmem:[%s246 + $0x12a] sm:$0xff]
      %v3100 = vld [vmem:[%s246 + $0x132] sm:$0xff]
      %v3101 = vld [vmem:[%s246 + $0x13a] sm:$0xff]
      %v3102 = vld [vmem:[%s246 + $0x142] sm:$0xff]
      %s3103 = scalar_lea.vmem %s1, 896
      %v3104 = vld [vmem:[%s3103] sm:$0xff]
      %v3105 = vld [vmem:[%s3103 + $0x8] sm:$0xff]
      %v3106 = vld [vmem:[%s3103 + $0x10] sm:$0xff]
      %v3107 = vld [vmem:[%s3103 + $0x18] sm:$0xff]
      %v3108 = vld [vmem:[%s3103 + $0x20] sm:$0xff]
      %v3109 = vld [vmem:[%s3103 + $0x28] sm:$0xff]
      %v3110 = vld [vmem:[%s3103 + $0x30] sm:$0xff]
      %v3111 = vld [vmem:[%s3103 + $0x38] sm:$0xff]
      %v3112 = vld [vmem:[%s3103 + $0x40] sm:$0xff]
      %v3113 = vld [vmem:[%s3103 + $0x48] sm:$0xff]
      %v3114 = vld [vmem:[%s3103 + $0x50] sm:$0xff]
      %v3115 = vld [vmem:[%s3103 + $0x58] sm:$0xff]
      %v3116 = vld [vmem:[%s3103 + $0x60] sm:$0xff]
      %v3117 = vld [vmem:[%s3103 + $0x68] sm:$0xff]
      %v3118 = vld [vmem:[%s3103 + $0x70] sm:$0xff]
      %v3119 = vld [vmem:[%s3103 + $0x78] sm:$0xff]
      %3120 = vmatprep.subr.mxu0 0.0
      %3121 = vmatpush1.msra.mxu0 %v3104
      %3122 = vmatprep.subr.mxu0 0.0
      %3123 = vmatpush1.msra.mxu0 %v3105
      %3124 = vmatprep.subr.mxu0 0.0
      %3125 = vmatpush1.msra.mxu0 %v3106
      %3126 = vmatprep.subr.mxu0 0.0
      %3127 = vmatpush1.msra.mxu0 %v3107
      %3128 = vmatprep.subr.mxu0 0.0
      %3129 = vmatpush1.msra.mxu0 %v3108
      %3130 = vmatprep.subr.mxu0 0.0
      %3131 = vmatpush1.msra.mxu0 %v3109
      %3132 = vmatprep.subr.mxu0 0.0
      %3133 = vmatpush1.msra.mxu0 %v3110
      %3134 = vmatprep.subr.mxu0 0.0
      %3135 = vmatpush1.msra.mxu0 %v3111
      %3136 = vmatprep.subr.mxu0 0.0
      %3137 = vmatpush1.msra.mxu0 %v3112
      %3138 = vmatprep.subr.mxu0 0.0
      %3139 = vmatpush1.msra.mxu0 %v3113
      %3140 = vmatprep.subr.mxu0 0.0
      %3141 = vmatpush1.msra.mxu0 %v3114
      %3142 = vmatprep.subr.mxu0 0.0
      %3143 = vmatpush1.msra.mxu0 %v3115
      %3144 = vmatprep.subr.mxu0 0.0
      %3145 = vmatpush1.msra.mxu0 %v3116
      %3146 = vmatprep.subr.mxu0 0.0
      %3147 = vmatpush1.msra.mxu0 %v3117
      %3148 = vmatprep.subr.mxu0 0.0
      %3149 = vmatpush1.msra.mxu0 %v3118
      %3150 = vmatprep.subr.mxu0 0.0
      %3151 = vmatpush1.msra.mxu0 %v3119
      %3152 = vmatprep.subr.mxu0 0.0
      %3153 = vmatpush1.msra.mxu0 0.0
      %3154 = vmatprep.subr.mxu0 0.0
      %3155 = vmatpush1.msra.mxu0 0.0
      %3156 = vmatprep.subr.mxu0 0.0
      %3157 = vmatpush1.msra.mxu0 0.0
      %3158 = vmatprep.subr.mxu0 0.0
      %3159 = vmatpush1.msra.mxu0 0.0
      %3160 = vmatprep.subr.mxu0 0.0
      %3161 = vmatpush1.msra.mxu0 0.0
      %3162 = vmatprep.subr.mxu0 0.0
      %3163 = vmatpush1.msra.mxu0 0.0
      %3164 = vmatprep.subr.mxu0 0.0
      %3165 = vmatpush1.msra.mxu0 0.0
      %3166 = vmatprep.subr.mxu0 0.0
      %3167 = vmatpush1.msra.mxu0 0.0
      %3168 = vmatprep.subr.mxu0 0.0
      %3169 = vmatpush1.msra.mxu0 0.0
      %3170 = vmatprep.subr.mxu0 0.0
      %3171 = vmatpush1.msra.mxu0 0.0
      %3172 = vmatprep.subr.mxu0 0.0
      %3173 = vmatpush1.msra.mxu0 0.0
      %3174 = vmatprep.subr.mxu0 0.0
      %3175 = vmatpush1.msra.mxu0 0.0
      %3176 = vmatprep.subr.mxu0 0.0
      %3177 = vmatpush1.msra.mxu0 0.0
      %3178 = vmatprep.subr.mxu0 0.0
      %3179 = vmatpush1.msra.mxu0 0.0
      %3180 = vmatprep.subr.mxu0 0.0
      %3181 = vmatpush1.msra.mxu0 0.0
      %3182 = vmatprep.subr.mxu0 0.0
      %3183 = vmatpush1.msra.mxu0 0.0
      %3184 = vmatprep.mubr.f32.mxu0 0.0
      %3185 = vmatmul.mubr.f32.gmra.mrb[0].mxu0 %v3067
      %v3186 = vpop.f32.mrb[0].mxu0
      %v3187 = vadd.f32 0.0, %v3186
      %v3188 = vpop.f32.mrb[0].mxu0
      %3189 = vmatprep.mubr.f32.mxu0 0.0
      %3190 = vmatmul.mubr.f32.gmra.mrb[0].mxu0 %v3068
      %v3191 = vpop.f32.mrb[0].mxu0
      %v3192 = vadd.f32 0.0, %v3191
      %v3193 = vpop.f32.mrb[0].mxu0
      %3194 = vmatprep.mubr.f32.mxu0 0.0
      %3195 = vmatmul.mubr.f32.gmra.mrb[0].mxu0 %v3069
      %v3196 = vpop.f32.mrb[0].mxu0
      %v3197 = vadd.f32 0.0, %v3196
      %v3198 = vpop.f32.mrb[0].mxu0
      %3199 = vmatprep.mubr.f32.mxu0 0.0
      %3200 = vmatmul.mubr.f32.gmra.mrb[0].mxu0 %v3070
      %v3201 = vpop.f32.mrb[0].mxu0
      %v3202 = vadd.f32 0.0, %v3201
      %v3203 = vpop.f32.mrb[0].mxu0
      %3204 = vmatprep.mubr.f32.mxu0 0.0
      %3205 = vmatmul.mubr.f32.gmra.mrb[0].mxu0 %v3071
      %v3206 = vpop.f32.mrb[0].mxu0
      %v3207 = vadd.f32 0.0, %v3206
      %v3208 = vpop.f32.mrb[0].mxu0
      %3209 = vmatprep.mubr.f32.mxu0 0.0
      %3210 = vmatmul.mubr.f32.gmra.mrb[0].mxu0 %v3072
      %v3211 = vpop.f32.mrb[0].mxu0
      %v3212 = vadd.f32 0.0, %v3211
      %v3213 = vpop.f32.mrb[0].mxu0
      %3214 = vmatprep.mubr.f32.mxu0 0.0
      %3215 = vmatmul.mubr.f32.gmra.mrb[0].mxu0 %v3073
      %v3216 = vpop.f32.mrb[0].mxu0
      %v3217 = vadd.f32 0.0, %v3216
      %v3218 = vpop.f32.mrb[0].mxu0
      %3219 = vmatprep.mubr.f32.mxu0 0.0
      %3220 = vmatmul.mubr.f32.gmra.mrb[0].mxu0 %v3074
      %v3221 = vpop.f32.mrb[0].mxu0
      %v3222 = vadd.f32 0.0, %v3221
      %v3223 = vpop.f32.mrb[0].mxu0
      %3224 = vmatprep.mubr.f32.mxu0 0.0
      %3225 = vmatmul.mubr.f32.gmra.mrb[0].mxu0 %v3075
      %v3226 = vpop.f32.mrb[0].mxu0
      %v3227 = vadd.f32 0.0, %v3226
      %v3228 = vpop.f32.mrb[0].mxu0
      %3229 = vmatprep.mubr.f32.mxu0 0.0
      %3230 = vmatmul.mubr.f32.gmra.mrb[0].mxu0 %v3076
      %v3231 = vpop.f32.mrb[0].mxu0
      %v3232 = vadd.f32 0.0, %v3231
      %v3233 = vpop.f32.mrb[0].mxu0
      %3234 = vmatprep.mubr.f32.mxu0 0.0
      %3235 = vmatmul.mubr.f32.gmra.mrb[0].mxu0 %v3077
      %v3236 = vpop.f32.mrb[0].mxu0
      %v3237 = vadd.f32 0.0, %v3236
      %v3238 = vpop.f32.mrb[0].mxu0
      %3239 = vmatprep.mubr.f32.mxu0 0.0
      %3240 = vmatmul.mubr.f32.gmra.mrb[0].mxu0 %v3078
      %v3241 = vpop.f32.mrb[0].mxu0
      %v3242 = vadd.f32 0.0, %v3241
      %v3243 = vpop.f32.mrb[0].mxu0
      %3244 = vmatprep.mubr.f32.mxu0 0.0
      %3245 = vmatmul.mubr.f32.gmra.mrb[0].mxu0 %v3079
      %v3246 = vpop.f32.mrb[0].mxu0
      %v3247 = vadd.f32 0.0, %v3246
      %v3248 = vpop.f32.mrb[0].mxu0
      %3249 = vmatprep.mubr.f32.mxu0 0.0
      %3250 = vmatmul.mubr.f32.gmra.mrb[0].mxu0 %v3080
      %v3251 = vpop.f32.mrb[0].mxu0
      %v3252 = vadd.f32 0.0, %v3251
      %v3253 = vpop.f32.mrb[0].mxu0
      %3254 = vmatprep.mubr.f32.mxu0 0.0
      %3255 = vmatmul.mubr.f32.gmra.mrb[0].mxu0 %v3081
      %v3256 = vpop.f32.mrb[0].mxu0
      %v3257 = vadd.f32 0.0, %v3256
      %v3258 = vpop.f32.mrb[0].mxu0
      %3259 = vmatprep.mubr.f32.mxu0 0.0
      %3260 = vmatmul.mubr.f32.gmra.mrb[0].mxu0 %v3082
      %v3261 = vpop.f32.mrb[0].mxu0
      %v3262 = vadd.f32 0.0, %v3261
      %v3263 = vpop.f32.mrb[0].mxu0
      %3264 = vmatprep.mubr.f32.mxu0 0.0
      %3265 = vmatmul.mubr.f32.gmra.mrb[0].mxu0 %v3083
      %v3266 = vpop.f32.mrb[0].mxu0
      %v3267 = vadd.f32 0.0, %v3266
      %v3268 = vpop.f32.mrb[0].mxu0
      %3269 = vmatprep.mubr.f32.mxu0 0.0
      %3270 = vmatmul.mubr.f32.gmra.mrb[0].mxu0 %v3084
      %v3271 = vpop.f32.mrb[0].mxu0
      %v3272 = vadd.f32 0.0, %v3271
      %v3273 = vpop.f32.mrb[0].mxu0
      %3274 = vmatprep.mubr.f32.mxu0 0.0
      %3275 = vmatmul.mubr.f32.gmra.mrb[0].mxu0 %v3085
      %v3276 = vpop.f32.mrb[0].mxu0
      %v3277 = vadd.f32 0.0, %v3276
      %v3278 = vpop.f32.mrb[0].mxu0
      %3279 = vmatprep.mubr.f32.mxu0 0.0
      %3280 = vmatmul.mubr.f32.gmra.mrb[0].mxu0 %v3086
      %v3281 = vpop.f32.mrb[0].mxu0
      %v3282 = vadd.f32 0.0, %v3281
      %v3283 = vpop.f32.mrb[0].mxu0
      %3284 = vmatprep.mubr.f32.mxu0 0.0
      %3285 = vmatmul.mubr.f32.gmra.mrb[0].mxu0 %v3087
      %v3286 = vpop.f32.mrb[0].mxu0
      %v3287 = vadd.f32 0.0, %v3286
      %v3288 = vpop.f32.mrb[0].mxu0
      %3289 = vmatprep.mubr.f32.mxu0 0.0
      %3290 = vmatmul.mubr.f32.gmra.mrb[0].mxu0 %v3088
      %v3291 = vpop.f32.mrb[0].mxu0
      %v3292 = vadd.f32 0.0, %v3291
      %v3293 = vpop.f32.mrb[0].mxu0
      %3294 = vmatprep.mubr.f32.mxu0 0.0
      %3295 = vmatmul.mubr.f32.gmra.mrb[0].mxu0 %v3089
      %v3296 = vpop.f32.mrb[0].mxu0
      %v3297 = vadd.f32 0.0, %v3296
      %v3298 = vpop.f32.mrb[0].mxu0
      %3299 = vmatprep.mubr.f32.mxu0 0.0
      %3300 = vmatmul.mubr.f32.gmra.mrb[0].mxu0 %v3090
      %v3301 = vpop.f32.mrb[0].mxu0
      %v3302 = vadd.f32 0.0, %v3301
      %v3303 = vpop.f32.mrb[0].mxu0
      %3304 = vmatprep.mubr.f32.mxu0 0.0
      %3305 = vmatmul.mubr.f32.gmra.mrb[0].mxu0 %v3091
      %v3306 = vpop.f32.mrb[0].mxu0
      %v3307 = vadd.f32 0.0, %v3306
      %v3308 = vpop.f32.mrb[0].mxu0
      %3309 = vmatprep.mubr.f32.mxu0 0.0
      %3310 = vmatmul.mubr.f32.gmra.mrb[0].mxu0 %v3092
      %v3311 = vpop.f32.mrb[0].mxu0
      %v3312 = vadd.f32 0.0, %v3311
      %v3313 = vpop.f32.mrb[0].mxu0
      %3314 = vmatprep.mubr.f32.mxu0 0.0
      %3315 = vmatmul.mubr.f32.gmra.mrb[0].mxu0 %v3093
      %v3316 = vpop.f32.mrb[0].mxu0
      %v3317 = vadd.f32 0.0, %v3316
      %v3318 = vpop.f32.mrb[0].mxu0
      %3319 = vmatprep.mubr.f32.mxu0 0.0
      %3320 = vmatmul.mubr.f32.gmra.mrb[0].mxu0 %v3094
      %v3321 = vpop.f32.mrb[0].mxu0
      %v3322 = vadd.f32 0.0, %v3321
      %v3323 = vpop.f32.mrb[0].mxu0
      %3324 = vmatprep.mubr.f32.mxu0 0.0
      %3325 = vmatmul.mubr.f32.gmra.mrb[0].mxu0 %v3095
      %v3326 = vpop.f32.mrb[0].mxu0
      %v3327 = vadd.f32 0.0, %v3326
      %v3328 = vpop.f32.mrb[0].mxu0
      %3329 = vmatprep.mubr.f32.mxu0 0.0
      %3330 = vmatmul.mubr.f32.gmra.mrb[0].mxu0 %v3096
      %v3331 = vpop.f32.mrb[0].mxu0
      %v3332 = vadd.f32 0.0, %v3331
      %v3333 = vpop.f32.mrb[0].mxu0
      %3334 = vmatprep.mubr.f32.mxu0 0.0
      %3335 = vmatmul.mubr.f32.gmra.mrb[0].mxu0 %v3097
      %v3336 = vpop.f32.mrb[0].mxu0
      %v3337 = vadd.f32 0.0, %v3336
      %v3338 = vpop.f32.mrb[0].mxu0
      %3339 = vmatprep.mubr.f32.mxu0 0.0
      %3340 = vmatmul.mubr.f32.gmra.mrb[0].mxu0 %v3098
      %v3341 = vpop.f32.mrb[0].mxu0
      %v3342 = vadd.f32 0.0, %v3341
      %v3343 = vpop.f32.mrb[0].mxu0
      %3344 = vmatprep.mubr.f32.mxu0 0.0
      %3345 = vmatmul.mubr.f32.gmra.mrb[0].mxu0 %v3099
      %v3346 = vpop.f32.mrb[0].mxu0
      %v3347 = vadd.f32 0.0, %v3346
      %v3348 = vpop.f32.mrb[0].mxu0
      %3349 = vmatprep.mubr.f32.mxu0 0.0
      %3350 = vmatmul.mubr.f32.gmra.mrb[0].mxu0 %v3100
      %v3351 = vpop.f32.mrb[0].mxu0
      %v3352 = vadd.f32 0.0, %v3351
      %v3353 = vpop.f32.mrb[0].mxu0
      %3354 = vmatprep.mubr.f32.mxu0 0.0
      %3355 = vmatmul.mubr.f32.gmra.mrb[0].mxu0 %v3101
      %v3356 = vpop.f32.mrb[0].mxu0
      %v3357 = vadd.f32 0.0, %v3356
      %v3358 = vpop.f32.mrb[0].mxu0
      %3359 = vmatprep.mubr.f32.mxu0 0.0
      %3360 = vmatmul.mubr.f32.gmra.mrb[0].mxu0 %v3102
      %v3361 = vpop.f32.mrb[0].mxu0
      %v3362 = vadd.f32 0.0, %v3361
      %v3363 = vpop.f32.mrb[0].mxu0
      %3364 = vdwg.mxu0
      %v3365 = vld [vmem:[#allocation3] sm:$0xff]
      %v3366 = vld [vmem:[#allocation3 + $0x8] sm:$0xff]
      %v3367 = vld [vmem:[#allocation3 + $0x10] sm:$0xff]
      %v3368 = vld [vmem:[#allocation3 + $0x18] sm:$0xff]
      %v3369 = vld [vmem:[#allocation3 + $0x20] sm:$0xff]
      %v3370 = vld [vmem:[#allocation3 + $0x28] sm:$0xff]
      %v3371 = vld [vmem:[#allocation3 + $0x30] sm:$0xff]
      %v3372 = vld [vmem:[#allocation3 + $0x38] sm:$0xff]
      %v3373 = vld [vmem:[#allocation3 + $0x40] sm:$0xff]
      %v3374 = vld [vmem:[#allocation3 + $0x48] sm:$0xff]
      %v3375 = vld [vmem:[#allocation3 + $0x50] sm:$0xff]
      %v3376 = vld [vmem:[#allocation3 + $0x58] sm:$0xff]
      %v3377 = vld [vmem:[#allocation3 + $0x60] sm:$0xff]
      %v3378 = vld [vmem:[#allocation3 + $0x68] sm:$0xff]
      %v3379 = vld [vmem:[#allocation3 + $0x70] sm:$0xff]
      %v3380 = vld [vmem:[#allocation3 + $0x78] sm:$0xff]
      %v3381 = vld [vmem:[#allocation3 + $0x80] sm:$0xff]
      %v3382 = vld [vmem:[#allocation3 + $0x88] sm:$0xff]
      %v3383 = vld [vmem:[#allocation3 + $0x90] sm:$0xff]
      %v3384 = vld [vmem:[#allocation3 + $0x98] sm:$0xff]
      %v3385 = vld [vmem:[#allocation3 + $0xa0] sm:$0xff]
      %v3386 = vld [vmem:[#allocation3 + $0xa8] sm:$0xff]
      %v3387 = vld [vmem:[#allocation3 + $0xb0] sm:$0xff]
      %v3388 = vld [vmem:[#allocation3 + $0xb8] sm:$0xff]
      %v3389 = vld [vmem:[#allocation3 + $0xc0] sm:$0xff]
      %v3390 = vld [vmem:[#allocation3 + $0xc8] sm:$0xff]
      %v3391 = vld [vmem:[#allocation3 + $0xd0] sm:$0xff]
      %v3392 = vld [vmem:[#allocation3 + $0xd8] sm:$0xff]
      %v3393 = vld [vmem:[#allocation3 + $0xe0] sm:$0xff]
      %v3394 = vld [vmem:[#allocation3 + $0xe8] sm:$0xff]
      %v3395 = vld [vmem:[#allocation3 + $0xf0] sm:$0xff]
      %v3396 = vld [vmem:[#allocation3 + $0xf8] sm:$0xff]
      %v3397 = vld [vmem:[#allocation3 + $0x100] sm:$0xff]
      %v3398 = vld [vmem:[#allocation3 + $0x108] sm:$0xff]
      %v3399 = vld [vmem:[#allocation3 + $0x110] sm:$0xff]
      %v3400 = vld [vmem:[#allocation3 + $0x118] sm:$0xff]
      %v3401 = vadd.f32 %v3365, %v3187
      %v3402 = vadd.f32 %v3366, %v3192
      %v3403 = vadd.f32 %v3367, %v3197
      %v3404 = vadd.f32 %v3368, %v3202
      %v3405 = vadd.f32 %v3369, %v3207
      %v3406 = vadd.f32 %v3370, %v3212
      %v3407 = vadd.f32 %v3371, %v3217
      %v3408 = vadd.f32 %v3372, %v3222
      %v3409 = vadd.f32 %v3373, %v3227
      %v3410 = vadd.f32 %v3374, %v3232
      %v3411 = vadd.f32 %v3375, %v3237
      %v3412 = vadd.f32 %v3376, %v3242
      %v3413 = vadd.f32 %v3377, %v3247
      %v3414 = vadd.f32 %v3378, %v3252
      %v3415 = vadd.f32 %v3379, %v3257
      %v3416 = vadd.f32 %v3380, %v3262
      %v3417 = vadd.f32 %v3381, %v3267
      %v3418 = vadd.f32 %v3382, %v3272
      %v3419 = vadd.f32 %v3383, %v3277
      %v3420 = vadd.f32 %v3384, %v3282
      %v3421 = vadd.f32 %v3385, %v3287
      %v3422 = vadd.f32 %v3386, %v3292
      %v3423 = vadd.f32 %v3387, %v3297
      %v3424 = vadd.f32 %v3388, %v3302
      %v3425 = vadd.f32 %v3389, %v3307
      %v3426 = vadd.f32 %v3390, %v3312
      %v3427 = vadd.f32 %v3391, %v3317
      %v3428 = vadd.f32 %v3392, %v3322
      %v3429 = vadd.f32 %v3393, %v3327
      %v3430 = vadd.f32 %v3394, %v3332
      %v3431 = vadd.f32 %v3395, %v3337
      %v3432 = vadd.f32 %v3396, %v3342
      %v3433 = vadd.f32 %v3397, %v3347
      %v3434 = vadd.f32 %v3398, %v3352
      %v3435 = vadd.f32 %v3399, %v3357
      %v3436 = vadd.f32 %v3400, %v3362
      %3437 = vst [vmem:[#allocation3] sm:$0xff] %v3401
      %3438 = vst [vmem:[#allocation3 + $0x8] sm:$0xff] %v3402
      %3439 = vst [vmem:[#allocation3 + $0x10] sm:$0xff] %v3403
      %3440 = vst [vmem:[#allocation3 + $0x18] sm:$0xff] %v3404
      %3441 = vst [vmem:[#allocation3 + $0x20] sm:$0xff] %v3405
      %3442 = vst [vmem:[#allocation3 + $0x28] sm:$0xff] %v3406
      %3443 = vst [vmem:[#allocation3 + $0x30] sm:$0xff] %v3407
      %3444 = vst [vmem:[#allocation3 + $0x38] sm:$0xff] %v3408
      %3445 = vst [vmem:[#allocation3 + $0x40] sm:$0xff] %v3409
      %3446 = vst [vmem:[#allocation3 + $0x48] sm:$0xff] %v3410
      %3447 = vst [vmem:[#allocation3 + $0x50] sm:$0xff] %v3411
      %3448 = vst [vmem:[#allocation3 + $0x58] sm:$0xff] %v3412
      %3449 = vst [vmem:[#allocation3 + $0x60] sm:$0xff] %v3413
      %3450 = vst [vmem:[#allocation3 + $0x68] sm:$0xff] %v3414
      %3451 = vst [vmem:[#allocation3 + $0x70] sm:$0xff] %v3415
      %3452 = vst [vmem:[#allocation3 + $0x78] sm:$0xff] %v3416
      %3453 = vst [vmem:[#allocation3 + $0x80] sm:$0xff] %v3417
      %3454 = vst [vmem:[#allocation3 + $0x88] sm:$0xff] %v3418
      %3455 = vst [vmem:[#allocation3 + $0x90] sm:$0xff] %v3419
      %3456 = vst [vmem:[#allocation3 + $0x98] sm:$0xff] %v3420
      %3457 = vst [vmem:[#allocation3 + $0xa0] sm:$0xff] %v3421
      %3458 = vst [vmem:[#allocation3 + $0xa8] sm:$0xff] %v3422
      %3459 = vst [vmem:[#allocation3 + $0xb0] sm:$0xff] %v3423
      %3460 = vst [vmem:[#allocation3 + $0xb8] sm:$0xff] %v3424
      %3461 = vst [vmem:[#allocation3 + $0xc0] sm:$0xff] %v3425
      %3462 = vst [vmem:[#allocation3 + $0xc8] sm:$0xff] %v3426
      %3463 = vst [vmem:[#allocation3 + $0xd0] sm:$0xff] %v3427
      %3464 = vst [vmem:[#allocation3 + $0xd8] sm:$0xff] %v3428
      %3465 = vst [vmem:[#allocation3 + $0xe0] sm:$0xff] %v3429
      %3466 = vst [vmem:[#allocation3 + $0xe8] sm:$0xff] %v3430
      %3467 = vst [vmem:[#allocation3 + $0xf0] sm:$0xff] %v3431
      %3468 = vst [vmem:[#allocation3 + $0xf8] sm:$0xff] %v3432
      %3469 = vst [vmem:[#allocation3 + $0x100] sm:$0xff] %v3433
      %3470 = vst [vmem:[#allocation3 + $0x108] sm:$0xff] %v3434
      %3471 = vst [vmem:[#allocation3 + $0x110] sm:$0xff] %v3435
      %3472 = vst [vmem:[#allocation3 + $0x118] sm:$0xff] %v3436
      %v3473 = vld [vmem:[%s246 + $0x2b] sm:$0xff]
      %v3474 = vld [vmem:[%s246 + $0x33] sm:$0xff]
      %v3475 = vld [vmem:[%s246 + $0x3b] sm:$0xff]
      %v3476 = vld [vmem:[%s246 + $0x43] sm:$0xff]
      %v3477 = vld [vmem:[%s246 + $0x4b] sm:$0xff]
      %v3478 = vld [vmem:[%s246 + $0x53] sm:$0xff]
      %v3479 = vld [vmem:[%s246 + $0x5b] sm:$0xff]
      %v3480 = vld [vmem:[%s246 + $0x63] sm:$0xff]
      %v3481 = vld [vmem:[%s246 + $0x6b] sm:$0xff]
      %v3482 = vld [vmem:[%s246 + $0x73] sm:$0xff]
      %v3483 = vld [vmem:[%s246 + $0x7b] sm:$0xff]
      %v3484 = vld [vmem:[%s246 + $0x83] sm:$0xff]
      %v3485 = vld [vmem:[%s246 + $0x8b] sm:$0xff]
      %v3486 = vld [vmem:[%s246 + $0x93] sm:$0xff]
      %v3487 = vld [vmem:[%s246 + $0x9b] sm:$0xff]
      %v3488 = vld [vmem:[%s246 + $0xa3] sm:$0xff]
      %v3489 = vld [vmem:[%s246 + $0xab] sm:$0xff]
      %v3490 = vld [vmem:[%s246 + $0xb3] sm:$0xff]
      %v3491 = vld [vmem:[%s246 + $0xbb] sm:$0xff]
      %v3492 = vld [vmem:[%s246 + $0xc3] sm:$0xff]
      %v3493 = vld [vmem:[%s246 + $0xcb] sm:$0xff]
      %v3494 = vld [vmem:[%s246 + $0xd3] sm:$0xff]
      %v3495 = vld [vmem:[%s246 + $0xdb] sm:$0xff]
      %v3496 = vld [vmem:[%s246 + $0xe3] sm:$0xff]
      %v3497 = vld [vmem:[%s246 + $0xeb] sm:$0xff]
      %v3498 = vld [vmem:[%s246 + $0xf3] sm:$0xff]
      %v3499 = vld [vmem:[%s246 + $0xfb] sm:$0xff]
      %v3500 = vld [vmem:[%s246 + $0x103] sm:$0xff]
      %v3501 = vld [vmem:[%s246 + $0x10b] sm:$0xff]
      %v3502 = vld [vmem:[%s246 + $0x113] sm:$0xff]
      %v3503 = vld [vmem:[%s246 + $0x11b] sm:$0xff]
      %v3504 = vld [vmem:[%s246 + $0x123] sm:$0xff]
      %v3505 = vld [vmem:[%s246 + $0x12b] sm:$0xff]
      %v3506 = vld [vmem:[%s246 + $0x133] sm:$0xff]
      %v3507 = vld [vmem:[%s246 + $0x13b] sm:$0xff]
      %v3508 = vld [vmem:[%s246 + $0x143] sm:$0xff]
      %s3509 = scalar_lea.vmem %s1, 1024
      %v3510 = vld [vmem:[%s3509] sm:$0xff]
      %v3511 = vld [vmem:[%s3509 + $0x8] sm:$0xff]
      %v3512 = vld [vmem:[%s3509 + $0x10] sm:$0xff]
      %v3513 = vld [vmem:[%s3509 + $0x18] sm:$0xff]
      %v3514 = vld [vmem:[%s3509 + $0x20] sm:$0xff]
      %v3515 = vld [vmem:[%s3509 + $0x28] sm:$0xff]
      %v3516 = vld [vmem:[%s3509 + $0x30] sm:$0xff]
      %v3517 = vld [vmem:[%s3509 + $0x38] sm:$0xff]
      %v3518 = vld [vmem:[%s3509 + $0x40] sm:$0xff]
      %v3519 = vld [vmem:[%s3509 + $0x48] sm:$0xff]
      %v3520 = vld [vmem:[%s3509 + $0x50] sm:$0xff]
      %v3521 = vld [vmem:[%s3509 + $0x58] sm:$0xff]
      %v3522 = vld [vmem:[%s3509 + $0x60] sm:$0xff]
      %v3523 = vld [vmem:[%s3509 + $0x68] sm:$0xff]
      %v3524 = vld [vmem:[%s3509 + $0x70] sm:$0xff]
      %v3525 = vld [vmem:[%s3509 + $0x78] sm:$0xff]
      %3526 = vmatprep.subr.mxu0 0.0
      %3527 = vmatpush1.msra.mxu0 %v3510
      %3528 = vmatprep.subr.mxu0 0.0
      %3529 = vmatpush1.msra.mxu0 %v3511
      %3530 = vmatprep.subr.mxu0 0.0
      %3531 = vmatpush1.msra.mxu0 %v3512
      %3532 = vmatprep.subr.mxu0 0.0
      %3533 = vmatpush1.msra.mxu0 %v3513
      %3534 = vmatprep.subr.mxu0 0.0
      %3535 = vmatpush1.msra.mxu0 %v3514
      %3536 = vmatprep.subr.mxu0 0.0
      %3537 = vmatpush1.msra.mxu0 %v3515
      %3538 = vmatprep.subr.mxu0 0.0
      %3539 = vmatpush1.msra.mxu0 %v3516
      %3540 = vmatprep.subr.mxu0 0.0
      %3541 = vmatpush1.msra.mxu0 %v3517
      %3542 = vmatprep.subr.mxu0 0.0
      %3543 = vmatpush1.msra.mxu0 %v3518
      %3544 = vmatprep.subr.mxu0 0.0
      %3545 = vmatpush1.msra.mxu0 %v3519
      %3546 = vmatprep.subr.mxu0 0.0
      %3547 = vmatpush1.msra.mxu0 %v3520
      %3548 = vmatprep.subr.mxu0 0.0
      %3549 = vmatpush1.msra.mxu0 %v3521
      %3550 = vmatprep.subr.mxu0 0.0
      %3551 = vmatpush1.msra.mxu0 %v3522
      %3552 = vmatprep.subr.mxu0 0.0
      %3553 = vmatpush1.msra.mxu0 %v3523
      %3554 = vmatprep.subr.mxu0 0.0
      %3555 = vmatpush1.msra.mxu0 %v3524
      %3556 = vmatprep.subr.mxu0 0.0
      %3557 = vmatpush1.msra.mxu0 %v3525
      %3558 = vmatprep.subr.mxu0 0.0
      %3559 = vmatpush1.msra.mxu0 0.0
      %3560 = vmatprep.subr.mxu0 0.0
      %3561 = vmatpush1.msra.mxu0 0.0
      %3562 = vmatprep.subr.mxu0 0.0
      %3563 = vmatpush1.msra.mxu0 0.0
      %3564 = vmatprep.subr.mxu0 0.0
      %3565 = vmatpush1.msra.mxu0 0.0
      %3566 = vmatprep.subr.mxu0 0.0
      %3567 = vmatpush1.msra.mxu0 0.0
      %3568 = vmatprep.subr.mxu0 0.0
      %3569 = vmatpush1.msra.mxu0 0.0
      %3570 = vmatprep.subr.mxu0 0.0
      %3571 = vmatpush1.msra.mxu0 0.0
      %3572 = vmatprep.subr.mxu0 0.0
      %3573 = vmatpush1.msra.mxu0 0.0
      %3574 = vmatprep.subr.mxu0 0.0
      %3575 = vmatpush1.msra.mxu0 0.0
      %3576 = vmatprep.subr.mxu0 0.0
      %3577 = vmatpush1.msra.mxu0 0.0
      %3578 = vmatprep.subr.mxu0 0.0
      %3579 = vmatpush1.msra.mxu0 0.0
      %3580 = vmatprep.subr.mxu0 0.0
      %3581 = vmatpush1.msra.mxu0 0.0
      %3582 = vmatprep.subr.mxu0 0.0
      %3583 = vmatpush1.msra.mxu0 0.0
      %3584 = vmatprep.subr.mxu0 0.0
      %3585 = vmatpush1.msra.mxu0 0.0
      %3586 = vmatprep.subr.mxu0 0.0
      %3587 = vmatpush1.msra.mxu0 0.0
      %3588 = vmatprep.subr.mxu0 0.0
      %3589 = vmatpush1.msra.mxu0 0.0
      %3590 = vmatprep.mubr.f32.mxu0 0.0
      %3591 = vmatmul.mubr.f32.gmra.mrb[0].mxu0 %v3473
      %v3592 = vpop.f32.mrb[0].mxu0
      %v3593 = vadd.f32 0.0, %v3592
      %v3594 = vpop.f32.mrb[0].mxu0
      %3595 = vmatprep.mubr.f32.mxu0 0.0
      %3596 = vmatmul.mubr.f32.gmra.mrb[0].mxu0 %v3474
      %v3597 = vpop.f32.mrb[0].mxu0
      %v3598 = vadd.f32 0.0, %v3597
      %v3599 = vpop.f32.mrb[0].mxu0
      %3600 = vmatprep.mubr.f32.mxu0 0.0
      %3601 = vmatmul.mubr.f32.gmra.mrb[0].mxu0 %v3475
      %v3602 = vpop.f32.mrb[0].mxu0
      %v3603 = vadd.f32 0.0, %v3602
      %v3604 = vpop.f32.mrb[0].mxu0
      %3605 = vmatprep.mubr.f32.mxu0 0.0
      %3606 = vmatmul.mubr.f32.gmra.mrb[0].mxu0 %v3476
      %v3607 = vpop.f32.mrb[0].mxu0
      %v3608 = vadd.f32 0.0, %v3607
      %v3609 = vpop.f32.mrb[0].mxu0
      %3610 = vmatprep.mubr.f32.mxu0 0.0
      %3611 = vmatmul.mubr.f32.gmra.mrb[0].mxu0 %v3477
      %v3612 = vpop.f32.mrb[0].mxu0
      %v3613 = vadd.f32 0.0, %v3612
      %v3614 = vpop.f32.mrb[0].mxu0
      %3615 = vmatprep.mubr.f32.mxu0 0.0
      %3616 = vmatmul.mubr.f32.gmra.mrb[0].mxu0 %v3478
      %v3617 = vpop.f32.mrb[0].mxu0
      %v3618 = vadd.f32 0.0, %v3617
      %v3619 = vpop.f32.mrb[0].mxu0
      %3620 = vmatprep.mubr.f32.mxu0 0.0
      %3621 = vmatmul.mubr.f32.gmra.mrb[0].mxu0 %v3479
      %v3622 = vpop.f32.mrb[0].mxu0
      %v3623 = vadd.f32 0.0, %v3622
      %v3624 = vpop.f32.mrb[0].mxu0
      %3625 = vmatprep.mubr.f32.mxu0 0.0
      %3626 = vmatmul.mubr.f32.gmra.mrb[0].mxu0 %v3480
      %v3627 = vpop.f32.mrb[0].mxu0
      %v3628 = vadd.f32 0.0, %v3627
      %v3629 = vpop.f32.mrb[0].mxu0
      %3630 = vmatprep.mubr.f32.mxu0 0.0
      %3631 = vmatmul.mubr.f32.gmra.mrb[0].mxu0 %v3481
      %v3632 = vpop.f32.mrb[0].mxu0
      %v3633 = vadd.f32 0.0, %v3632
      %v3634 = vpop.f32.mrb[0].mxu0
      %3635 = vmatprep.mubr.f32.mxu0 0.0
      %3636 = vmatmul.mubr.f32.gmra.mrb[0].mxu0 %v3482
      %v3637 = vpop.f32.mrb[0].mxu0
      %v3638 = vadd.f32 0.0, %v3637
      %v3639 = vpop.f32.mrb[0].mxu0
      %3640 = vmatprep.mubr.f32.mxu0 0.0
      %3641 = vmatmul.mubr.f32.gmra.mrb[0].mxu0 %v3483
      %v3642 = vpop.f32.mrb[0].mxu0
      %v3643 = vadd.f32 0.0, %v3642
      %v3644 = vpop.f32.mrb[0].mxu0
      %3645 = vmatprep.mubr.f32.mxu0 0.0
      %3646 = vmatmul.mubr.f32.gmra.mrb[0].mxu0 %v3484
      %v3647 = vpop.f32.mrb[0].mxu0
      %v3648 = vadd.f32 0.0, %v3647
      %v3649 = vpop.f32.mrb[0].mxu0
      %3650 = vmatprep.mubr.f32.mxu0 0.0
      %3651 = vmatmul.mubr.f32.gmra.mrb[0].mxu0 %v3485
      %v3652 = vpop.f32.mrb[0].mxu0
      %v3653 = vadd.f32 0.0, %v3652
      %v3654 = vpop.f32.mrb[0].mxu0
      %3655 = vmatprep.mubr.f32.mxu0 0.0
      %3656 = vmatmul.mubr.f32.gmra.mrb[0].mxu0 %v3486
      %v3657 = vpop.f32.mrb[0].mxu0
      %v3658 = vadd.f32 0.0, %v3657
      %v3659 = vpop.f32.mrb[0].mxu0
      %3660 = vmatprep.mubr.f32.mxu0 0.0
      %3661 = vmatmul.mubr.f32.gmra.mrb[0].mxu0 %v3487
      %v3662 = vpop.f32.mrb[0].mxu0
      %v3663 = vadd.f32 0.0, %v3662
      %v3664 = vpop.f32.mrb[0].mxu0
      %3665 = vmatprep.mubr.f32.mxu0 0.0
      %3666 = vmatmul.mubr.f32.gmra.mrb[0].mxu0 %v3488
      %v3667 = vpop.f32.mrb[0].mxu0
      %v3668 = vadd.f32 0.0, %v3667
      %v3669 = vpop.f32.mrb[0].mxu0
      %3670 = vmatprep.mubr.f32.mxu0 0.0
      %3671 = vmatmul.mubr.f32.gmra.mrb[0].mxu0 %v3489
      %v3672 = vpop.f32.mrb[0].mxu0
      %v3673 = vadd.f32 0.0, %v3672
      %v3674 = vpop.f32.mrb[0].mxu0
      %3675 = vmatprep.mubr.f32.mxu0 0.0
      %3676 = vmatmul.mubr.f32.gmra.mrb[0].mxu0 %v3490
      %v3677 = vpop.f32.mrb[0].mxu0
      %v3678 = vadd.f32 0.0, %v3677
      %v3679 = vpop.f32.mrb[0].mxu0
      %3680 = vmatprep.mubr.f32.mxu0 0.0
      %3681 = vmatmul.mubr.f32.gmra.mrb[0].mxu0 %v3491
      %v3682 = vpop.f32.mrb[0].mxu0
      %v3683 = vadd.f32 0.0, %v3682
      %v3684 = vpop.f32.mrb[0].mxu0
      %3685 = vmatprep.mubr.f32.mxu0 0.0
      %3686 = vmatmul.mubr.f32.gmra.mrb[0].mxu0 %v3492
      %v3687 = vpop.f32.mrb[0].mxu0
      %v3688 = vadd.f32 0.0, %v3687
      %v3689 = vpop.f32.mrb[0].mxu0
      %3690 = vmatprep.mubr.f32.mxu0 0.0
      %3691 = vmatmul.mubr.f32.gmra.mrb[0].mxu0 %v3493
      %v3692 = vpop.f32.mrb[0].mxu0
      %v3693 = vadd.f32 0.0, %v3692
      %v3694 = vpop.f32.mrb[0].mxu0
      %3695 = vmatprep.mubr.f32.mxu0 0.0
      %3696 = vmatmul.mubr.f32.gmra.mrb[0].mxu0 %v3494
      %v3697 = vpop.f32.mrb[0].mxu0
      %v3698 = vadd.f32 0.0, %v3697
      %v3699 = vpop.f32.mrb[0].mxu0
      %3700 = vmatprep.mubr.f32.mxu0 0.0
      %3701 = vmatmul.mubr.f32.gmra.mrb[0].mxu0 %v3495
      %v3702 = vpop.f32.mrb[0].mxu0
      %v3703 = vadd.f32 0.0, %v3702
      %v3704 = vpop.f32.mrb[0].mxu0
      %3705 = vmatprep.mubr.f32.mxu0 0.0
      %3706 = vmatmul.mubr.f32.gmra.mrb[0].mxu0 %v3496
      %v3707 = vpop.f32.mrb[0].mxu0
      %v3708 = vadd.f32 0.0, %v3707
      %v3709 = vpop.f32.mrb[0].mxu0
      %3710 = vmatprep.mubr.f32.mxu0 0.0
      %3711 = vmatmul.mubr.f32.gmra.mrb[0].mxu0 %v3497
      %v3712 = vpop.f32.mrb[0].mxu0
      %v3713 = vadd.f32 0.0, %v3712
      %v3714 = vpop.f32.mrb[0].mxu0
      %3715 = vmatprep.mubr.f32.mxu0 0.0
      %3716 = vmatmul.mubr.f32.gmra.mrb[0].mxu0 %v3498
      %v3717 = vpop.f32.mrb[0].mxu0
      %v3718 = vadd.f32 0.0, %v3717
      %v3719 = vpop.f32.mrb[0].mxu0
      %3720 = vmatprep.mubr.f32.mxu0 0.0
      %3721 = vmatmul.mubr.f32.gmra.mrb[0].mxu0 %v3499
      %v3722 = vpop.f32.mrb[0].mxu0
      %v3723 = vadd.f32 0.0, %v3722
      %v3724 = vpop.f32.mrb[0].mxu0
      %3725 = vmatprep.mubr.f32.mxu0 0.0
      %3726 = vmatmul.mubr.f32.gmra.mrb[0].mxu0 %v3500
      %v3727 = vpop.f32.mrb[0].mxu0
      %v3728 = vadd.f32 0.0, %v3727
      %v3729 = vpop.f32.mrb[0].mxu0
      %3730 = vmatprep.mubr.f32.mxu0 0.0
      %3731 = vmatmul.mubr.f32.gmra.mrb[0].mxu0 %v3501
      %v3732 = vpop.f32.mrb[0].mxu0
      %v3733 = vadd.f32 0.0, %v3732
      %v3734 = vpop.f32.mrb[0].mxu0
      %3735 = vmatprep.mubr.f32.mxu0 0.0
      %3736 = vmatmul.mubr.f32.gmra.mrb[0].mxu0 %v3502
      %v3737 = vpop.f32.mrb[0].mxu0
      %v3738 = vadd.f32 0.0, %v3737
      %v3739 = vpop.f32.mrb[0].mxu0
      %3740 = vmatprep.mubr.f32.mxu0 0.0
      %3741 = vmatmul.mubr.f32.gmra.mrb[0].mxu0 %v3503
      %v3742 = vpop.f32.mrb[0].mxu0
      %v3743 = vadd.f32 0.0, %v3742
      %v3744 = vpop.f32.mrb[0].mxu0
      %3745 = vmatprep.mubr.f32.mxu0 0.0
      %3746 = vmatmul.mubr.f32.gmra.mrb[0].mxu0 %v3504
      %v3747 = vpop.f32.mrb[0].mxu0
      %v3748 = vadd.f32 0.0, %v3747
      %v3749 = vpop.f32.mrb[0].mxu0
      %3750 = vmatprep.mubr.f32.mxu0 0.0
      %3751 = vmatmul.mubr.f32.gmra.mrb[0].mxu0 %v3505
      %v3752 = vpop.f32.mrb[0].mxu0
      %v3753 = vadd.f32 0.0, %v3752
      %v3754 = vpop.f32.mrb[0].mxu0
      %3755 = vmatprep.mubr.f32.mxu0 0.0
      %3756 = vmatmul.mubr.f32.gmra.mrb[0].mxu0 %v3506
      %v3757 = vpop.f32.mrb[0].mxu0
      %v3758 = vadd.f32 0.0, %v3757
      %v3759 = vpop.f32.mrb[0].mxu0
      %3760 = vmatprep.mubr.f32.mxu0 0.0
      %3761 = vmatmul.mubr.f32.gmra.mrb[0].mxu0 %v3507
      %v3762 = vpop.f32.mrb[0].mxu0
      %v3763 = vadd.f32 0.0, %v3762
      %v3764 = vpop.f32.mrb[0].mxu0
      %3765 = vmatprep.mubr.f32.mxu0 0.0
      %3766 = vmatmul.mubr.f32.gmra.mrb[0].mxu0 %v3508
      %v3767 = vpop.f32.mrb[0].mxu0
      %v3768 = vadd.f32 0.0, %v3767
      %v3769 = vpop.f32.mrb[0].mxu0
      %3770 = vdwg.mxu0
      %v3771 = vld [vmem:[#allocation3] sm:$0xff]
      %v3772 = vld [vmem:[#allocation3 + $0x8] sm:$0xff]
      %v3773 = vld [vmem:[#allocation3 + $0x10] sm:$0xff]
      %v3774 = vld [vmem:[#allocation3 + $0x18] sm:$0xff]
      %v3775 = vld [vmem:[#allocation3 + $0x20] sm:$0xff]
      %v3776 = vld [vmem:[#allocation3 + $0x28] sm:$0xff]
      %v3777 = vld [vmem:[#allocation3 + $0x30] sm:$0xff]
      %v3778 = vld [vmem:[#allocation3 + $0x38] sm:$0xff]
      %v3779 = vld [vmem:[#allocation3 + $0x40] sm:$0xff]
      %v3780 = vld [vmem:[#allocation3 + $0x48] sm:$0xff]
      %v3781 = vld [vmem:[#allocation3 + $0x50] sm:$0xff]
      %v3782 = vld [vmem:[#allocation3 + $0x58] sm:$0xff]
      %v3783 = vld [vmem:[#allocation3 + $0x60] sm:$0xff]
      %v3784 = vld [vmem:[#allocation3 + $0x68] sm:$0xff]
      %v3785 = vld [vmem:[#allocation3 + $0x70] sm:$0xff]
      %v3786 = vld [vmem:[#allocation3 + $0x78] sm:$0xff]
      %v3787 = vld [vmem:[#allocation3 + $0x80] sm:$0xff]
      %v3788 = vld [vmem:[#allocation3 + $0x88] sm:$0xff]
      %v3789 = vld [vmem:[#allocation3 + $0x90] sm:$0xff]
      %v3790 = vld [vmem:[#allocation3 + $0x98] sm:$0xff]
      %v3791 = vld [vmem:[#allocation3 + $0xa0] sm:$0xff]
      %v3792 = vld [vmem:[#allocation3 + $0xa8] sm:$0xff]
      %v3793 = vld [vmem:[#allocation3 + $0xb0] sm:$0xff]
      %v3794 = vld [vmem:[#allocation3 + $0xb8] sm:$0xff]
      %v3795 = vld [vmem:[#allocation3 + $0xc0] sm:$0xff]
      %v3796 = vld [vmem:[#allocation3 + $0xc8] sm:$0xff]
      %v3797 = vld [vmem:[#allocation3 + $0xd0] sm:$0xff]
      %v3798 = vld [vmem:[#allocation3 + $0xd8] sm:$0xff]
      %v3799 = vld [vmem:[#allocation3 + $0xe0] sm:$0xff]
      %v3800 = vld [vmem:[#allocation3 + $0xe8] sm:$0xff]
      %v3801 = vld [vmem:[#allocation3 + $0xf0] sm:$0xff]
      %v3802 = vld [vmem:[#allocation3 + $0xf8] sm:$0xff]
      %v3803 = vld [vmem:[#allocation3 + $0x100] sm:$0xff]
      %v3804 = vld [vmem:[#allocation3 + $0x108] sm:$0xff]
      %v3805 = vld [vmem:[#allocation3 + $0x110] sm:$0xff]
      %v3806 = vld [vmem:[#allocation3 + $0x118] sm:$0xff]
      %v3807 = vadd.f32 %v3771, %v3593
      %v3808 = vadd.f32 %v3772, %v3598
      %v3809 = vadd.f32 %v3773, %v3603
      %v3810 = vadd.f32 %v3774, %v3608
      %v3811 = vadd.f32 %v3775, %v3613
      %v3812 = vadd.f32 %v3776, %v3618
      %v3813 = vadd.f32 %v3777, %v3623
      %v3814 = vadd.f32 %v3778, %v3628
      %v3815 = vadd.f32 %v3779, %v3633
      %v3816 = vadd.f32 %v3780, %v3638
      %v3817 = vadd.f32 %v3781, %v3643
      %v3818 = vadd.f32 %v3782, %v3648
      %v3819 = vadd.f32 %v3783, %v3653
      %v3820 = vadd.f32 %v3784, %v3658
      %v3821 = vadd.f32 %v3785, %v3663
      %v3822 = vadd.f32 %v3786, %v3668
      %v3823 = vadd.f32 %v3787, %v3673
      %v3824 = vadd.f32 %v3788, %v3678
      %v3825 = vadd.f32 %v3789, %v3683
      %v3826 = vadd.f32 %v3790, %v3688
      %v3827 = vadd.f32 %v3791, %v3693
      %v3828 = vadd.f32 %v3792, %v3698
      %v3829 = vadd.f32 %v3793, %v3703
      %v3830 = vadd.f32 %v3794, %v3708
      %v3831 = vadd.f32 %v3795, %v3713
      %v3832 = vadd.f32 %v3796, %v3718
      %v3833 = vadd.f32 %v3797, %v3723
      %v3834 = vadd.f32 %v3798, %v3728
      %v3835 = vadd.f32 %v3799, %v3733
      %v3836 = vadd.f32 %v3800, %v3738
      %v3837 = vadd.f32 %v3801, %v3743
      %v3838 = vadd.f32 %v3802, %v3748
      %v3839 = vadd.f32 %v3803, %v3753
      %v3840 = vadd.f32 %v3804, %v3758
      %v3841 = vadd.f32 %v3805, %v3763
      %v3842 = vadd.f32 %v3806, %v3768
      %3843 = vst [vmem:[#allocation3] sm:$0xff] %v3807
      %3844 = vst [vmem:[#allocation3 + $0x8] sm:$0xff] %v3808
      %3845 = vst [vmem:[#allocation3 + $0x10] sm:$0xff] %v3809
      %3846 = vst [vmem:[#allocation3 + $0x18] sm:$0xff] %v3810
      %3847 = vst [vmem:[#allocation3 + $0x20] sm:$0xff] %v3811
      %3848 = vst [vmem:[#allocation3 + $0x28] sm:$0xff] %v3812
      %3849 = vst [vmem:[#allocation3 + $0x30] sm:$0xff] %v3813
      %3850 = vst [vmem:[#allocation3 + $0x38] sm:$0xff] %v3814
      %3851 = vst [vmem:[#allocation3 + $0x40] sm:$0xff] %v3815
      %3852 = vst [vmem:[#allocation3 + $0x48] sm:$0xff] %v3816
      %3853 = vst [vmem:[#allocation3 + $0x50] sm:$0xff] %v3817
      %3854 = vst [vmem:[#allocation3 + $0x58] sm:$0xff] %v3818
      %3855 = vst [vmem:[#allocation3 + $0x60] sm:$0xff] %v3819
      %3856 = vst [vmem:[#allocation3 + $0x68] sm:$0xff] %v3820
      %3857 = vst [vmem:[#allocation3 + $0x70] sm:$0xff] %v3821
      %3858 = vst [vmem:[#allocation3 + $0x78] sm:$0xff] %v3822
      %3859 = vst [vmem:[#allocation3 + $0x80] sm:$0xff] %v3823
      %3860 = vst [vmem:[#allocation3 + $0x88] sm:$0xff] %v3824
      %3861 = vst [vmem:[#allocation3 + $0x90] sm:$0xff] %v3825
      %3862 = vst [vmem:[#allocation3 + $0x98] sm:$0xff] %v3826
      %3863 = vst [vmem:[#allocation3 + $0xa0] sm:$0xff] %v3827
      %3864 = vst [vmem:[#allocation3 + $0xa8] sm:$0xff] %v3828
      %3865 = vst [vmem:[#allocation3 + $0xb0] sm:$0xff] %v3829
      %3866 = vst [vmem:[#allocation3 + $0xb8] sm:$0xff] %v3830
      %3867 = vst [vmem:[#allocation3 + $0xc0] sm:$0xff] %v3831
      %3868 = vst [vmem:[#allocation3 + $0xc8] sm:$0xff] %v3832
      %3869 = vst [vmem:[#allocation3 + $0xd0] sm:$0xff] %v3833
      %3870 = vst [vmem:[#allocation3 + $0xd8] sm:$0xff] %v3834
      %3871 = vst [vmem:[#allocation3 + $0xe0] sm:$0xff] %v3835
      %3872 = vst [vmem:[#allocation3 + $0xe8] sm:$0xff] %v3836
      %3873 = vst [vmem:[#allocation3 + $0xf0] sm:$0xff] %v3837
      %3874 = vst [vmem:[#allocation3 + $0xf8] sm:$0xff] %v3838
      %3875 = vst [vmem:[#allocation3 + $0x100] sm:$0xff] %v3839
      %3876 = vst [vmem:[#allocation3 + $0x108] sm:$0xff] %v3840
      %3877 = vst [vmem:[#allocation3 + $0x110] sm:$0xff] %v3841
      %3878 = vst [vmem:[#allocation3 + $0x118] sm:$0xff] %v3842
      %v3879 = vld [vmem:[#allocation3] sm:$0xff]
      %v3880 = vld [vmem:[#allocation3 + $0x8] sm:$0xff]
      %v3881 = vld [vmem:[#allocation3 + $0x10] sm:$0xff]
      %v3882 = vld [vmem:[#allocation3 + $0x18] sm:$0xff]
      %v3883 = vld [vmem:[#allocation3 + $0x20] sm:$0xff]
      %v3884 = vld [vmem:[#allocation3 + $0x28] sm:$0xff]
      %v3885 = vld [vmem:[#allocation3 + $0x30] sm:$0xff]
      %v3886 = vld [vmem:[#allocation3 + $0x38] sm:$0xff]
      %v3887 = vld [vmem:[#allocation3 + $0x40] sm:$0xff]
      %v3888 = vld [vmem:[#allocation3 + $0x48] sm:$0xff]
      %v3889 = vld [vmem:[#allocation3 + $0x50] sm:$0xff]
      %v3890 = vld [vmem:[#allocation3 + $0x58] sm:$0xff]
      %v3891 = vld [vmem:[#allocation3 + $0x60] sm:$0xff]
      %v3892 = vld [vmem:[#allocation3 + $0x68] sm:$0xff]
      %v3893 = vld [vmem:[#allocation3 + $0x70] sm:$0xff]
      %v3894 = vld [vmem:[#allocation3 + $0x78] sm:$0xff]
      %v3895 = vld [vmem:[#allocation3 + $0x80] sm:$0xff]
      %v3896 = vld [vmem:[#allocation3 + $0x88] sm:$0xff]
      %v3897 = vld [vmem:[#allocation3 + $0x90] sm:$0xff]
      %v3898 = vld [vmem:[#allocation3 + $0x98] sm:$0xff]
      %v3899 = vld [vmem:[#allocation3 + $0xa0] sm:$0xff]
      %v3900 = vld [vmem:[#allocation3 + $0xa8] sm:$0xff]
      %v3901 = vld [vmem:[#allocation3 + $0xb0] sm:$0xff]
      %v3902 = vld [vmem:[#allocation3 + $0xb8] sm:$0xff]
      %v3903 = vld [vmem:[#allocation3 + $0xc0] sm:$0xff]
      %v3904 = vld [vmem:[#allocation3 + $0xc8] sm:$0xff]
      %v3905 = vld [vmem:[#allocation3 + $0xd0] sm:$0xff]
      %v3906 = vld [vmem:[#allocation3 + $0xd8] sm:$0xff]
      %v3907 = vld [vmem:[#allocation3 + $0xe0] sm:$0xff]
      %v3908 = vld [vmem:[#allocation3 + $0xe8] sm:$0xff]
      %v3909 = vld [vmem:[#allocation3 + $0xf0] sm:$0xff]
      %v3910 = vld [vmem:[#allocation3 + $0xf8] sm:$0xff]
      %v3911 = vld [vmem:[#allocation3 + $0x100] sm:$0xff]
      %v3912 = vld [vmem:[#allocation3 + $0x108] sm:$0xff]
      %v3913 = vld [vmem:[#allocation3 + $0x110] sm:$0xff]
      %v3914 = vld [vmem:[#allocation3 + $0x118] sm:$0xff]
      %v3915 = vld [vmem:[%s2] sm:$0x1]
      %v3917 = vlaneseq
      %v3918 = vshrl.u32 %v3917, 7
      %v3919 = vsub.s32 0, %v3918
      %v3920 = vrot.slane %v3915, %v3919
      %v3922 = vadd.f32 %v3879, %v3920
      %v3923 = vadd.f32 %v3880, %v3920
      %v3924 = vadd.f32 %v3881, %v3920
      %v3925 = vadd.f32 %v3882, %v3920
      %v3926 = vadd.f32 %v3883, %v3920
      %v3927 = vadd.f32 %v3884, %v3920
      %v3928 = vadd.f32 %v3885, %v3920
      %v3929 = vadd.f32 %v3886, %v3920
      %v3930 = vadd.f32 %v3887, %v3920
      %v3931 = vadd.f32 %v3888, %v3920
      %v3932 = vadd.f32 %v3889, %v3920
      %v3933 = vadd.f32 %v3890, %v3920
      %v3934 = vadd.f32 %v3891, %v3920
      %v3935 = vadd.f32 %v3892, %v3920
      %v3936 = vadd.f32 %v3893, %v3920
      %v3937 = vadd.f32 %v3894, %v3920
      %v3938 = vadd.f32 %v3895, %v3920
      %v3939 = vadd.f32 %v3896, %v3920
      %v3940 = vadd.f32 %v3897, %v3920
      %v3941 = vadd.f32 %v3898, %v3920
      %v3942 = vadd.f32 %v3899, %v3920
      %v3943 = vadd.f32 %v3900, %v3920
      %v3944 = vadd.f32 %v3901, %v3920
      %v3945 = vadd.f32 %v3902, %v3920
      %v3946 = vadd.f32 %v3903, %v3920
      %v3947 = vadd.f32 %v3904, %v3920
      %v3948 = vadd.f32 %v3905, %v3920
      %v3949 = vadd.f32 %v3906, %v3920
      %v3950 = vadd.f32 %v3907, %v3920
      %v3951 = vadd.f32 %v3908, %v3920
      %v3952 = vadd.f32 %v3909, %v3920
      %v3953 = vadd.f32 %v3910, %v3920
      %v3954 = vadd.f32 %v3911, %v3920
      %v3955 = vadd.f32 %v3912, %v3920
      %v3956 = vadd.f32 %v3913, %v3920
      %v3957 = vadd.f32 %v3914, %v3920
      %v3958 = vmax.f32 %v3922, 0.0
      %v3959 = vmax.f32 %v3923, 0.0
      %v3960 = vmax.f32 %v3924, 0.0
      %v3961 = vmax.f32 %v3925, 0.0
      %v3962 = vmax.f32 %v3926, 0.0
      %v3963 = vmax.f32 %v3927, 0.0
      %v3964 = vmax.f32 %v3928, 0.0
      %v3965 = vmax.f32 %v3929, 0.0
      %v3966 = vmax.f32 %v3930, 0.0
      %v3967 = vmax.f32 %v3931, 0.0
      %v3968 = vmax.f32 %v3932, 0.0
      %v3969 = vmax.f32 %v3933, 0.0
      %v3970 = vmax.f32 %v3934, 0.0
      %v3971 = vmax.f32 %v3935, 0.0
      %v3972 = vmax.f32 %v3936, 0.0
      %v3973 = vmax.f32 %v3937, 0.0
      %v3974 = vmax.f32 %v3938, 0.0
      %v3975 = vmax.f32 %v3939, 0.0
      %v3976 = vmax.f32 %v3940, 0.0
      %v3977 = vmax.f32 %v3941, 0.0
      %v3978 = vmax.f32 %v3942, 0.0
      %v3979 = vmax.f32 %v3943, 0.0
      %v3980 = vmax.f32 %v3944, 0.0
      %v3981 = vmax.f32 %v3945, 0.0
      %v3982 = vmax.f32 %v3946, 0.0
      %v3983 = vmax.f32 %v3947, 0.0
      %v3984 = vmax.f32 %v3948, 0.0
      %v3985 = vmax.f32 %v3949, 0.0
      %v3986 = vmax.f32 %v3950, 0.0
      %v3987 = vmax.f32 %v3951, 0.0
      %v3988 = vmax.f32 %v3952, 0.0
      %v3989 = vmax.f32 %v3953, 0.0
      %v3990 = vmax.f32 %v3954, 0.0
      %v3991 = vmax.f32 %v3955, 0.0
      %v3992 = vmax.f32 %v3956, 0.0
      %v3993 = vmax.f32 %v3957, 0.0
      %v3994 = vld [vmem:[%s5] sm:$0xff]
      %v3995 = vld [vmem:[%s5 + $0x8] sm:$0xff]
      %v3996 = vld [vmem:[%s5 + $0x10] sm:$0xff]
      %v3997 = vld [vmem:[%s5 + $0x18] sm:$0xff]
      %v3998 = vld [vmem:[%s5 + $0x20] sm:$0xff]
      %v3999 = vld [vmem:[%s5 + $0x28] sm:$0xff]
      %v4000 = vld [vmem:[%s5 + $0x30] sm:$0xff]
      %v4001 = vld [vmem:[%s5 + $0x38] sm:$0xff]
      %v4002 = vld [vmem:[%s5 + $0x40] sm:$0xff]
      %v4003 = vld [vmem:[%s5 + $0x48] sm:$0xff]
      %v4004 = vld [vmem:[%s5 + $0x50] sm:$0xff]
      %v4005 = vld [vmem:[%s5 + $0x58] sm:$0xff]
      %v4006 = vld [vmem:[%s5 + $0x60] sm:$0xff]
      %v4007 = vld [vmem:[%s5 + $0x68] sm:$0xff]
      %v4008 = vld [vmem:[%s5 + $0x70] sm:$0xff]
      %v4009 = vld [vmem:[%s5 + $0x78] sm:$0xff]
      %v4010 = vld [vmem:[%s5 + $0x80] sm:$0xff]
      %v4011 = vld [vmem:[%s5 + $0x88] sm:$0xff]
      %v4012 = vld [vmem:[%s5 + $0x90] sm:$0xff]
      %v4013 = vld [vmem:[%s5 + $0x98] sm:$0xff]
      %v4014 = vld [vmem:[%s5 + $0xa0] sm:$0xff]
      %v4015 = vld [vmem:[%s5 + $0xa8] sm:$0xff]
      %v4016 = vld [vmem:[%s5 + $0xb0] sm:$0xff]
      %v4017 = vld [vmem:[%s5 + $0xb8] sm:$0xff]
      %v4018 = vld [vmem:[%s5 + $0xc0] sm:$0xff]
      %v4019 = vld [vmem:[%s5 + $0xc8] sm:$0xff]
      %v4020 = vld [vmem:[%s5 + $0xd0] sm:$0xff]
      %v4021 = vld [vmem:[%s5 + $0xd8] sm:$0xff]
      %v4022 = vld [vmem:[%s5 + $0xe0] sm:$0xff]
      %v4023 = vld [vmem:[%s5 + $0xe8] sm:$0xff]
      %v4024 = vld [vmem:[%s5 + $0xf0] sm:$0xff]
      %v4025 = vld [vmem:[%s5 + $0xf8] sm:$0xff]
      %v4026 = vld [vmem:[%s5 + $0x100] sm:$0xff]
      %v4027 = vld [vmem:[%s5 + $0x108] sm:$0xff]
      %v4028 = vld [vmem:[%s5 + $0x110] sm:$0xff]
      %v4029 = vld [vmem:[%s5 + $0x118] sm:$0xff]
      %4031 = vset.pattern.permute.xlu0 0
      %4032 = vperm.xlu0 %4031, %v3994
      %v4033 = vpop.permute.xlu0 %4032
      %4036 = vset.pattern.permute.xlu0 0
      %4037 = vperm.xlu0 %4036, %v3995
      %v4038 = vpop.permute.xlu0 %4037
      %4041 = vset.pattern.permute.xlu0 0
      %4042 = vperm.xlu0 %4041, %v3996
      %v4043 = vpop.permute.xlu0 %4042
      %4046 = vset.pattern.permute.xlu0 0
      %4047 = vperm.xlu0 %4046, %v3997
      %v4048 = vpop.permute.xlu0 %4047
      %4051 = vset.pattern.permute.xlu0 0
      %4052 = vperm.xlu0 %4051, %v3998
      %v4053 = vpop.permute.xlu0 %4052
      %4056 = vset.pattern.permute.xlu0 0
      %4057 = vperm.xlu0 %4056, %v3999
      %v4058 = vpop.permute.xlu0 %4057
      %4061 = vset.pattern.permute.xlu0 0
      %4062 = vperm.xlu0 %4061, %v4000
      %v4063 = vpop.permute.xlu0 %4062
      %4066 = vset.pattern.permute.xlu0 0
      %4067 = vperm.xlu0 %4066, %v4001
      %v4068 = vpop.permute.xlu0 %4067
      %4071 = vset.pattern.permute.xlu0 0
      %4072 = vperm.xlu0 %4071, %v4002
      %v4073 = vpop.permute.xlu0 %4072
      %4076 = vset.pattern.permute.xlu0 0
      %4077 = vperm.xlu0 %4076, %v4003
      %v4078 = vpop.permute.xlu0 %4077
      %4081 = vset.pattern.permute.xlu0 0
      %4082 = vperm.xlu0 %4081, %v4004
      %v4083 = vpop.permute.xlu0 %4082
      %4086 = vset.pattern.permute.xlu0 0
      %4087 = vperm.xlu0 %4086, %v4005
      %v4088 = vpop.permute.xlu0 %4087
      %4091 = vset.pattern.permute.xlu0 0
      %4092 = vperm.xlu0 %4091, %v4006
      %v4093 = vpop.permute.xlu0 %4092
      %4096 = vset.pattern.permute.xlu0 0
      %4097 = vperm.xlu0 %4096, %v4007
      %v4098 = vpop.permute.xlu0 %4097
      %4101 = vset.pattern.permute.xlu0 0
      %4102 = vperm.xlu0 %4101, %v4008
      %v4103 = vpop.permute.xlu0 %4102
      %4106 = vset.pattern.permute.xlu0 0
      %4107 = vperm.xlu0 %4106, %v4009
      %v4108 = vpop.permute.xlu0 %4107
      %4111 = vset.pattern.permute.xlu0 0
      %4112 = vperm.xlu0 %4111, %v4010
      %v4113 = vpop.permute.xlu0 %4112
      %4116 = vset.pattern.permute.xlu0 0
      %4117 = vperm.xlu0 %4116, %v4011
      %v4118 = vpop.permute.xlu0 %4117
      %4121 = vset.pattern.permute.xlu0 0
      %4122 = vperm.xlu0 %4121, %v4012
      %v4123 = vpop.permute.xlu0 %4122
      %4126 = vset.pattern.permute.xlu0 0
      %4127 = vperm.xlu0 %4126, %v4013
      %v4128 = vpop.permute.xlu0 %4127
      %4131 = vset.pattern.permute.xlu0 0
      %4132 = vperm.xlu0 %4131, %v4014
      %v4133 = vpop.permute.xlu0 %4132
      %4136 = vset.pattern.permute.xlu0 0
      %4137 = vperm.xlu0 %4136, %v4015
      %v4138 = vpop.permute.xlu0 %4137
      %4141 = vset.pattern.permute.xlu0 0
      %4142 = vperm.xlu0 %4141, %v4016
      %v4143 = vpop.permute.xlu0 %4142
      %4146 = vset.pattern.permute.xlu0 0
      %4147 = vperm.xlu0 %4146, %v4017
      %v4148 = vpop.permute.xlu0 %4147
      %4151 = vset.pattern.permute.xlu0 0
      %4152 = vperm.xlu0 %4151, %v4018
      %v4153 = vpop.permute.xlu0 %4152
      %4156 = vset.pattern.permute.xlu0 0
      %4157 = vperm.xlu0 %4156, %v4019
      %v4158 = vpop.permute.xlu0 %4157
      %4161 = vset.pattern.permute.xlu0 0
      %4162 = vperm.xlu0 %4161, %v4020
      %v4163 = vpop.permute.xlu0 %4162
      %4166 = vset.pattern.permute.xlu0 0
      %4167 = vperm.xlu0 %4166, %v4021
      %v4168 = vpop.permute.xlu0 %4167
      %4171 = vset.pattern.permute.xlu0 0
      %4172 = vperm.xlu0 %4171, %v4022
      %v4173 = vpop.permute.xlu0 %4172
      %4176 = vset.pattern.permute.xlu0 0
      %4177 = vperm.xlu0 %4176, %v4023
      %v4178 = vpop.permute.xlu0 %4177
      %4181 = vset.pattern.permute.xlu0 0
      %4182 = vperm.xlu0 %4181, %v4024
      %v4183 = vpop.permute.xlu0 %4182
      %4186 = vset.pattern.permute.xlu0 0
      %4187 = vperm.xlu0 %4186, %v4025
      %v4188 = vpop.permute.xlu0 %4187
      %4191 = vset.pattern.permute.xlu0 0
      %4192 = vperm.xlu0 %4191, %v4026
      %v4193 = vpop.permute.xlu0 %4192
      %4196 = vset.pattern.permute.xlu0 0
      %4197 = vperm.xlu0 %4196, %v4027
      %v4198 = vpop.permute.xlu0 %4197
      %4201 = vset.pattern.permute.xlu0 0
      %4202 = vperm.xlu0 %4201, %v4028
      %v4203 = vpop.permute.xlu0 %4202
      %4206 = vset.pattern.permute.xlu0 0
      %4207 = vperm.xlu0 %4206, %v4029
      %v4208 = vpop.permute.xlu0 %4207
      %v4210 = vmul.f32 %v3958, %v4033
      %v4211 = vmul.f32 %v3959, %v4038
      %v4212 = vmul.f32 %v3960, %v4043
      %v4213 = vmul.f32 %v3961, %v4048
      %v4214 = vmul.f32 %v3962, %v4053
      %v4215 = vmul.f32 %v3963, %v4058
      %v4216 = vmul.f32 %v3964, %v4063
      %v4217 = vmul.f32 %v3965, %v4068
      %v4218 = vmul.f32 %v3966, %v4073
      %v4219 = vmul.f32 %v3967, %v4078
      %v4220 = vmul.f32 %v3968, %v4083
      %v4221 = vmul.f32 %v3969, %v4088
      %v4222 = vmul.f32 %v3970, %v4093
      %v4223 = vmul.f32 %v3971, %v4098
      %v4224 = vmul.f32 %v3972, %v4103
      %v4225 = vmul.f32 %v3973, %v4108
      %v4226 = vmul.f32 %v3974, %v4113
      %v4227 = vmul.f32 %v3975, %v4118
      %v4228 = vmul.f32 %v3976, %v4123
      %v4229 = vmul.f32 %v3977, %v4128
      %v4230 = vmul.f32 %v3978, %v4133
      %v4231 = vmul.f32 %v3979, %v4138
      %v4232 = vmul.f32 %v3980, %v4143
      %v4233 = vmul.f32 %v3981, %v4148
      %v4234 = vmul.f32 %v3982, %v4153
      %v4235 = vmul.f32 %v3983, %v4158
      %v4236 = vmul.f32 %v3984, %v4163
      %v4237 = vmul.f32 %v3985, %v4168
      %v4238 = vmul.f32 %v3986, %v4173
      %v4239 = vmul.f32 %v3987, %v4178
      %v4240 = vmul.f32 %v3988, %v4183
      %v4241 = vmul.f32 %v3989, %v4188
      %v4242 = vmul.f32 %v3990, %v4193
      %v4243 = vmul.f32 %v3991, %v4198
      %v4244 = vmul.f32 %v3992, %v4203
      %v4245 = vmul.f32 %v3993, %v4208
      %4246 = vst [vmem:[#allocation2 + $0x18] sm:$0xff] %v4210
      %4247 = vst [vmem:[#allocation2 + $0x20] sm:$0xff] %v4211
      %4248 = vst [vmem:[#allocation2 + $0x28] sm:$0xff] %v4212
      %4249 = vst [vmem:[#allocation2 + $0x30] sm:$0xff] %v4213
      %4250 = vst [vmem:[#allocation2 + $0x38] sm:$0xff] %v4214
      %4251 = vst [vmem:[#allocation2 + $0x40] sm:$0xff] %v4215
      %4252 = vst [vmem:[#allocation2 + $0x48] sm:$0xff] %v4216
      %4253 = vst [vmem:[#allocation2 + $0x50] sm:$0xff] %v4217
      %4254 = vst [vmem:[#allocation2 + $0x58] sm:$0xff] %v4218
      %4255 = vst [vmem:[#allocation2 + $0x60] sm:$0xff] %v4219
      %4256 = vst [vmem:[#allocation2 + $0x68] sm:$0xff] %v4220
      %4257 = vst [vmem:[#allocation2 + $0x70] sm:$0xff] %v4221
      %4258 = vst [vmem:[#allocation2 + $0x78] sm:$0xff] %v4222
      %4259 = vst [vmem:[#allocation2 + $0x80] sm:$0xff] %v4223
      %4260 = vst [vmem:[#allocation2 + $0x88] sm:$0xff] %v4224
      %4261 = vst [vmem:[#allocation2 + $0x90] sm:$0xff] %v4225
      %4262 = vst [vmem:[#allocation2 + $0x98] sm:$0xff] %v4226
      %4263 = vst [vmem:[#allocation2 + $0xa0] sm:$0xff] %v4227
      %4264 = vst [vmem:[#allocation2 + $0xa8] sm:$0xff] %v4228
      %4265 = vst [vmem:[#allocation2 + $0xb0] sm:$0xff] %v4229
      %4266 = vst [vmem:[#allocation2 + $0xb8] sm:$0xff] %v4230
      %4267 = vst [vmem:[#allocation2 + $0xc0] sm:$0xff] %v4231
      %4268 = vst [vmem:[#allocation2 + $0xc8] sm:$0xff] %v4232
      %4269 = vst [vmem:[#allocation2 + $0xd0] sm:$0xff] %v4233
      %4270 = vst [vmem:[#allocation2 + $0xd8] sm:$0xff] %v4234
      %4271 = vst [vmem:[#allocation2 + $0xe0] sm:$0xff] %v4235
      %4272 = vst [vmem:[#allocation2 + $0xe8] sm:$0xff] %v4236
      %4273 = vst [vmem:[#allocation2 + $0xf0] sm:$0xff] %v4237
      %4274 = vst [vmem:[#allocation2 + $0xf8] sm:$0xff] %v4238
      %4275 = vst [vmem:[#allocation2 + $0x100] sm:$0xff] %v4239
      %4276 = vst [vmem:[#allocation2 + $0x108] sm:$0xff] %v4240
      %4277 = vst [vmem:[#allocation2 + $0x110] sm:$0xff] %v4241
      %4278 = vst [vmem:[#allocation2 + $0x118] sm:$0xff] %v4242
      %4279 = vst [vmem:[#allocation2 + $0x120] sm:$0xff] %v4243
      %4280 = vst [vmem:[#allocation2 + $0x128] sm:$0xff] %v4244
      %4281 = vst [vmem:[#allocation2 + $0x130] sm:$0xff] %v4245
      %v4282 = vld [vmem:[#allocation2 + $0x5] sm:$0xff]
      %v4283 = vld [vmem:[#allocation2 + $0xd] sm:$0xff]
      %v4284 = vld [vmem:[#allocation2 + $0x15] sm:$0xff]
      %v4285 = vld [vmem:[#allocation2 + $0x1d] sm:$0xff]
      %v4286 = vld [vmem:[#allocation2 + $0x25] sm:$0xff]
      %v4287 = vld [vmem:[#allocation2 + $0x2d] sm:$0xff]
      %v4288 = vld [vmem:[#allocation2 + $0x35] sm:$0xff]
      %v4289 = vld [vmem:[#allocation2 + $0x3d] sm:$0xff]
      %v4290 = vld [vmem:[#allocation2 + $0x45] sm:$0xff]
      %v4291 = vld [vmem:[#allocation2 + $0x4d] sm:$0xff]
      %v4292 = vld [vmem:[#allocation2 + $0x55] sm:$0xff]
      %v4293 = vld [vmem:[#allocation2 + $0x5d] sm:$0xff]
      %v4294 = vld [vmem:[#allocation2 + $0x65] sm:$0xff]
      %v4295 = vld [vmem:[#allocation2 + $0x6d] sm:$0xff]
      %v4296 = vld [vmem:[#allocation2 + $0x75] sm:$0xff]
      %v4297 = vld [vmem:[#allocation2 + $0x7d] sm:$0xff]
      %v4298 = vld [vmem:[#allocation2 + $0x85] sm:$0xff]
      %v4299 = vld [vmem:[#allocation2 + $0x8d] sm:$0xff]
      %v4300 = vld [vmem:[#allocation2 + $0x95] sm:$0xff]
      %v4301 = vld [vmem:[#allocation2 + $0x9d] sm:$0xff]
      %v4302 = vld [vmem:[#allocation2 + $0xa5] sm:$0xff]
      %v4303 = vld [vmem:[#allocation2 + $0xad] sm:$0xff]
      %v4304 = vld [vmem:[#allocation2 + $0xb5] sm:$0xff]
      %v4305 = vld [vmem:[#allocation2 + $0xbd] sm:$0xff]
      %v4306 = vld [vmem:[#allocation2 + $0xc5] sm:$0xff]
      %v4307 = vld [vmem:[#allocation2 + $0xcd] sm:$0xff]
      %v4308 = vld [vmem:[#allocation2 + $0xd5] sm:$0xff]
      %v4309 = vld [vmem:[#allocation2 + $0xdd] sm:$0xff]
      %v4310 = vld [vmem:[#allocation2 + $0xe5] sm:$0xff]
      %v4311 = vld [vmem:[#allocation2 + $0xed] sm:$0xff]
      %v4312 = vld [vmem:[#allocation2 + $0xf5] sm:$0xff]
      %v4313 = vld [vmem:[#allocation2 + $0xfd] sm:$0xff]
      %v4314 = vld [vmem:[#allocation2 + $0x105] sm:$0xff]
      %v4315 = vld [vmem:[#allocation2 + $0x10d] sm:$0xff]
      %v4316 = vld [vmem:[#allocation2 + $0x115] sm:$0xff]
      %v4317 = vld [vmem:[#allocation2 + $0x11d] sm:$0xff]
      %v4318 = vld [vmem:[%s3] sm:$0xff]
      %v4319 = vld [vmem:[%s3 + $0x8] sm:$0xff]
      %v4320 = vld [vmem:[%s3 + $0x10] sm:$0xff]
      %v4321 = vld [vmem:[%s3 + $0x18] sm:$0xff]
      %v4322 = vld [vmem:[%s3 + $0x20] sm:$0xff]
      %v4323 = vld [vmem:[%s3 + $0x28] sm:$0xff]
      %v4324 = vld [vmem:[%s3 + $0x30] sm:$0xff]
      %v4325 = vld [vmem:[%s3 + $0x38] sm:$0xff]
      %v4326 = vld [vmem:[%s3 + $0x40] sm:$0xff]
      %v4327 = vld [vmem:[%s3 + $0x48] sm:$0xff]
      %v4328 = vld [vmem:[%s3 + $0x50] sm:$0xff]
      %v4329 = vld [vmem:[%s3 + $0x58] sm:$0xff]
      %v4330 = vld [vmem:[%s3 + $0x60] sm:$0xff]
      %v4331 = vld [vmem:[%s3 + $0x68] sm:$0xff]
      %v4332 = vld [vmem:[%s3 + $0x70] sm:$0xff]
      %v4333 = vld [vmem:[%s3 + $0x78] sm:$0xff]
      %4334 = vmatprep.subr.mxu0 0.0
      %4335 = vmatpush1.msra.mxu0 %v4318
      %4336 = vmatprep.subr.mxu0 0.0
      %4337 = vmatpush1.msra.mxu0 %v4319
      %4338 = vmatprep.subr.mxu0 0.0
      %4339 = vmatpush1.msra.mxu0 %v4320
      %4340 = vmatprep.subr.mxu0 0.0
      %4341 = vmatpush1.msra.mxu0 %v4321
      %4342 = vmatprep.subr.mxu0 0.0
      %4343 = vmatpush1.msra.mxu0 %v4322
      %4344 = vmatprep.subr.mxu0 0.0
      %4345 = vmatpush1.msra.mxu0 %v4323
      %4346 = vmatprep.subr.mxu0 0.0
      %4347 = vmatpush1.msra.mxu0 %v4324
      %4348 = vmatprep.subr.mxu0 0.0
      %4349 = vmatpush1.msra.mxu0 %v4325
      %4350 = vmatprep.subr.mxu0 0.0
      %4351 = vmatpush1.msra.mxu0 %v4326
      %4352 = vmatprep.subr.mxu0 0.0
      %4353 = vmatpush1.msra.mxu0 %v4327
      %4354 = vmatprep.subr.mxu0 0.0
      %4355 = vmatpush1.msra.mxu0 %v4328
      %4356 = vmatprep.subr.mxu0 0.0
      %4357 = vmatpush1.msra.mxu0 %v4329
      %4358 = vmatprep.subr.mxu0 0.0
      %4359 = vmatpush1.msra.mxu0 %v4330
      %4360 = vmatprep.subr.mxu0 0.0
      %4361 = vmatpush1.msra.mxu0 %v4331
      %4362 = vmatprep.subr.mxu0 0.0
      %4363 = vmatpush1.msra.mxu0 %v4332
      %4364 = vmatprep.subr.mxu0 0.0
      %4365 = vmatpush1.msra.mxu0 %v4333
      %4366 = vmatprep.subr.mxu0 0.0
      %4367 = vmatpush1.msra.mxu0 0.0
      %4368 = vmatprep.subr.mxu0 0.0
      %4369 = vmatpush1.msra.mxu0 0.0
      %4370 = vmatprep.subr.mxu0 0.0
      %4371 = vmatpush1.msra.mxu0 0.0
      %4372 = vmatprep.subr.mxu0 0.0
      %4373 = vmatpush1.msra.mxu0 0.0
      %4374 = vmatprep.subr.mxu0 0.0
      %4375 = vmatpush1.msra.mxu0 0.0
      %4376 = vmatprep.subr.mxu0 0.0
      %4377 = vmatpush1.msra.mxu0 0.0
      %4378 = vmatprep.subr.mxu0 0.0
      %4379 = vmatpush1.msra.mxu0 0.0
      %4380 = vmatprep.subr.mxu0 0.0
      %4381 = vmatpush1.msra.mxu0 0.0
      %4382 = vmatprep.subr.mxu0 0.0
      %4383 = vmatpush1.msra.mxu0 0.0
      %4384 = vmatprep.subr.mxu0 0.0
      %4385 = vmatpush1.msra.mxu0 0.0
      %4386 = vmatprep.subr.mxu0 0.0
      %4387 = vmatpush1.msra.mxu0 0.0
      %4388 = vmatprep.subr.mxu0 0.0
      %4389 = vmatpush1.msra.mxu0 0.0
      %4390 = vmatprep.subr.mxu0 0.0
      %4391 = vmatpush1.msra.mxu0 0.0
      %4392 = vmatprep.subr.mxu0 0.0
      %4393 = vmatpush1.msra.mxu0 0.0
      %4394 = vmatprep.subr.mxu0 0.0
      %4395 = vmatpush1.msra.mxu0 0.0
      %4396 = vmatprep.subr.mxu0 0.0
      %4397 = vmatpush1.msra.mxu0 0.0
      %4398 = vmatprep.mubr.f32.mxu0 0.0
      %4399 = vmatmul.mubr.f32.gmra.mrb[0].mxu0 %v4282
      %v4400 = vpop.f32.mrb[0].mxu0
      %v4401 = vadd.f32 0.0, %v4400
      %v4402 = vpop.f32.mrb[0].mxu0
      %4403 = vmatprep.mubr.f32.mxu0 0.0
      %4404 = vmatmul.mubr.f32.gmra.mrb[0].mxu0 %v4283
      %v4405 = vpop.f32.mrb[0].mxu0
      %v4406 = vadd.f32 0.0, %v4405
      %v4407 = vpop.f32.mrb[0].mxu0
      %4408 = vmatprep.mubr.f32.mxu0 0.0
      %4409 = vmatmul.mubr.f32.gmra.mrb[0].mxu0 %v4284
      %v4410 = vpop.f32.mrb[0].mxu0
      %v4411 = vadd.f32 0.0, %v4410
      %v4412 = vpop.f32.mrb[0].mxu0
      %4413 = vmatprep.mubr.f32.mxu0 0.0
      %4414 = vmatmul.mubr.f32.gmra.mrb[0].mxu0 %v4285
      %v4415 = vpop.f32.mrb[0].mxu0
      %v4416 = vadd.f32 0.0, %v4415
      %v4417 = vpop.f32.mrb[0].mxu0
      %4418 = vmatprep.mubr.f32.mxu0 0.0
      %4419 = vmatmul.mubr.f32.gmra.mrb[0].mxu0 %v4286
      %v4420 = vpop.f32.mrb[0].mxu0
      %v4421 = vadd.f32 0.0, %v4420
      %v4422 = vpop.f32.mrb[0].mxu0
      %4423 = vmatprep.mubr.f32.mxu0 0.0
      %4424 = vmatmul.mubr.f32.gmra.mrb[0].mxu0 %v4287
      %v4425 = vpop.f32.mrb[0].mxu0
      %v4426 = vadd.f32 0.0, %v4425
      %v4427 = vpop.f32.mrb[0].mxu0
      %4428 = vmatprep.mubr.f32.mxu0 0.0
      %4429 = vmatmul.mubr.f32.gmra.mrb[0].mxu0 %v4288
      %v4430 = vpop.f32.mrb[0].mxu0
      %v4431 = vadd.f32 0.0, %v4430
      %v4432 = vpop.f32.mrb[0].mxu0
      %4433 = vmatprep.mubr.f32.mxu0 0.0
      %4434 = vmatmul.mubr.f32.gmra.mrb[0].mxu0 %v4289
      %v4435 = vpop.f32.mrb[0].mxu0
      %v4436 = vadd.f32 0.0, %v4435
      %v4437 = vpop.f32.mrb[0].mxu0
      %4438 = vmatprep.mubr.f32.mxu0 0.0
      %4439 = vmatmul.mubr.f32.gmra.mrb[0].mxu0 %v4290
      %v4440 = vpop.f32.mrb[0].mxu0
      %v4441 = vadd.f32 0.0, %v4440
      %v4442 = vpop.f32.mrb[0].mxu0
      %4443 = vmatprep.mubr.f32.mxu0 0.0
      %4444 = vmatmul.mubr.f32.gmra.mrb[0].mxu0 %v4291
      %v4445 = vpop.f32.mrb[0].mxu0
      %v4446 = vadd.f32 0.0, %v4445
      %v4447 = vpop.f32.mrb[0].mxu0
      %4448 = vmatprep.mubr.f32.mxu0 0.0
      %4449 = vmatmul.mubr.f32.gmra.mrb[0].mxu0 %v4292
      %v4450 = vpop.f32.mrb[0].mxu0
      %v4451 = vadd.f32 0.0, %v4450
      %v4452 = vpop.f32.mrb[0].mxu0
      %4453 = vmatprep.mubr.f32.mxu0 0.0
      %4454 = vmatmul.mubr.f32.gmra.mrb[0].mxu0 %v4293
      %v4455 = vpop.f32.mrb[0].mxu0
      %v4456 = vadd.f32 0.0, %v4455
      %v4457 = vpop.f32.mrb[0].mxu0
      %4458 = vmatprep.mubr.f32.mxu0 0.0
      %4459 = vmatmul.mubr.f32.gmra.mrb[0].mxu0 %v4294
      %v4460 = vpop.f32.mrb[0].mxu0
      %v4461 = vadd.f32 0.0, %v4460
      %v4462 = vpop.f32.mrb[0].mxu0
      %4463 = vmatprep.mubr.f32.mxu0 0.0
      %4464 = vmatmul.mubr.f32.gmra.mrb[0].mxu0 %v4295
      %v4465 = vpop.f32.mrb[0].mxu0
      %v4466 = vadd.f32 0.0, %v4465
      %v4467 = vpop.f32.mrb[0].mxu0
      %4468 = vmatprep.mubr.f32.mxu0 0.0
      %4469 = vmatmul.mubr.f32.gmra.mrb[0].mxu0 %v4296
      %v4470 = vpop.f32.mrb[0].mxu0
      %v4471 = vadd.f32 0.0, %v4470
      %v4472 = vpop.f32.mrb[0].mxu0
      %4473 = vmatprep.mubr.f32.mxu0 0.0
      %4474 = vmatmul.mubr.f32.gmra.mrb[0].mxu0 %v4297
      %v4475 = vpop.f32.mrb[0].mxu0
      %v4476 = vadd.f32 0.0, %v4475
      %v4477 = vpop.f32.mrb[0].mxu0
      %4478 = vmatprep.mubr.f32.mxu0 0.0
      %4479 = vmatmul.mubr.f32.gmra.mrb[0].mxu0 %v4298
      %v4480 = vpop.f32.mrb[0].mxu0
      %v4481 = vadd.f32 0.0, %v4480
      %v4482 = vpop.f32.mrb[0].mxu0
      %4483 = vmatprep.mubr.f32.mxu0 0.0
      %4484 = vmatmul.mubr.f32.gmra.mrb[0].mxu0 %v4299
      %v4485 = vpop.f32.mrb[0].mxu0
      %v4486 = vadd.f32 0.0, %v4485
      %v4487 = vpop.f32.mrb[0].mxu0
      %4488 = vmatprep.mubr.f32.mxu0 0.0
      %4489 = vmatmul.mubr.f32.gmra.mrb[0].mxu0 %v4300
      %v4490 = vpop.f32.mrb[0].mxu0
      %v4491 = vadd.f32 0.0, %v4490
      %v4492 = vpop.f32.mrb[0].mxu0
      %4493 = vmatprep.mubr.f32.mxu0 0.0
      %4494 = vmatmul.mubr.f32.gmra.mrb[0].mxu0 %v4301
      %v4495 = vpop.f32.mrb[0].mxu0
      %v4496 = vadd.f32 0.0, %v4495
      %v4497 = vpop.f32.mrb[0].mxu0
      %4498 = vmatprep.mubr.f32.mxu0 0.0
      %4499 = vmatmul.mubr.f32.gmra.mrb[0].mxu0 %v4302
      %v4500 = vpop.f32.mrb[0].mxu0
      %v4501 = vadd.f32 0.0, %v4500
      %v4502 = vpop.f32.mrb[0].mxu0
      %4503 = vmatprep.mubr.f32.mxu0 0.0
      %4504 = vmatmul.mubr.f32.gmra.mrb[0].mxu0 %v4303
      %v4505 = vpop.f32.mrb[0].mxu0
      %v4506 = vadd.f32 0.0, %v4505
      %v4507 = vpop.f32.mrb[0].mxu0
      %4508 = vmatprep.mubr.f32.mxu0 0.0
      %4509 = vmatmul.mubr.f32.gmra.mrb[0].mxu0 %v4304
      %v4510 = vpop.f32.mrb[0].mxu0
      %v4511 = vadd.f32 0.0, %v4510
      %v4512 = vpop.f32.mrb[0].mxu0
      %4513 = vmatprep.mubr.f32.mxu0 0.0
      %4514 = vmatmul.mubr.f32.gmra.mrb[0].mxu0 %v4305
      %v4515 = vpop.f32.mrb[0].mxu0
      %v4516 = vadd.f32 0.0, %v4515
      %v4517 = vpop.f32.mrb[0].mxu0
      %4518 = vmatprep.mubr.f32.mxu0 0.0
      %4519 = vmatmul.mubr.f32.gmra.mrb[0].mxu0 %v4306
      %v4520 = vpop.f32.mrb[0].mxu0
      %v4521 = vadd.f32 0.0, %v4520
      %v4522 = vpop.f32.mrb[0].mxu0
      %4523 = vmatprep.mubr.f32.mxu0 0.0
      %4524 = vmatmul.mubr.f32.gmra.mrb[0].mxu0 %v4307
      %v4525 = vpop.f32.mrb[0].mxu0
      %v4526 = vadd.f32 0.0, %v4525
      %v4527 = vpop.f32.mrb[0].mxu0
      %4528 = vmatprep.mubr.f32.mxu0 0.0
      %4529 = vmatmul.mubr.f32.gmra.mrb[0].mxu0 %v4308
      %v4530 = vpop.f32.mrb[0].mxu0
      %v4531 = vadd.f32 0.0, %v4530
      %v4532 = vpop.f32.mrb[0].mxu0
      %4533 = vmatprep.mubr.f32.mxu0 0.0
      %4534 = vmatmul.mubr.f32.gmra.mrb[0].mxu0 %v4309
      %v4535 = vpop.f32.mrb[0].mxu0
      %v4536 = vadd.f32 0.0, %v4535
      %v4537 = vpop.f32.mrb[0].mxu0
      %4538 = vmatprep.mubr.f32.mxu0 0.0
      %4539 = vmatmul.mubr.f32.gmra.mrb[0].mxu0 %v4310
      %v4540 = vpop.f32.mrb[0].mxu0
      %v4541 = vadd.f32 0.0, %v4540
      %v4542 = vpop.f32.mrb[0].mxu0
      %4543 = vmatprep.mubr.f32.mxu0 0.0
      %4544 = vmatmul.mubr.f32.gmra.mrb[0].mxu0 %v4311
      %v4545 = vpop.f32.mrb[0].mxu0
      %v4546 = vadd.f32 0.0, %v4545
      %v4547 = vpop.f32.mrb[0].mxu0
      %4548 = vmatprep.mubr.f32.mxu0 0.0
      %4549 = vmatmul.mubr.f32.gmra.mrb[0].mxu0 %v4312
      %v4550 = vpop.f32.mrb[0].mxu0
      %v4551 = vadd.f32 0.0, %v4550
      %v4552 = vpop.f32.mrb[0].mxu0
      %4553 = vmatprep.mubr.f32.mxu0 0.0
      %4554 = vmatmul.mubr.f32.gmra.mrb[0].mxu0 %v4313
      %v4555 = vpop.f32.mrb[0].mxu0
      %v4556 = vadd.f32 0.0, %v4555
      %v4557 = vpop.f32.mrb[0].mxu0
      %4558 = vmatprep.mubr.f32.mxu0 0.0
      %4559 = vmatmul.mubr.f32.gmra.mrb[0].mxu0 %v4314
      %v4560 = vpop.f32.mrb[0].mxu0
      %v4561 = vadd.f32 0.0, %v4560
      %v4562 = vpop.f32.mrb[0].mxu0
      %4563 = vmatprep.mubr.f32.mxu0 0.0
      %4564 = vmatmul.mubr.f32.gmra.mrb[0].mxu0 %v4315
      %v4565 = vpop.f32.mrb[0].mxu0
      %v4566 = vadd.f32 0.0, %v4565
      %v4567 = vpop.f32.mrb[0].mxu0
      %4568 = vmatprep.mubr.f32.mxu0 0.0
      %4569 = vmatmul.mubr.f32.gmra.mrb[0].mxu0 %v4316
      %v4570 = vpop.f32.mrb[0].mxu0
      %v4571 = vadd.f32 0.0, %v4570
      %v4572 = vpop.f32.mrb[0].mxu0
      %4573 = vmatprep.mubr.f32.mxu0 0.0
      %4574 = vmatmul.mubr.f32.gmra.mrb[0].mxu0 %v4317
      %v4575 = vpop.f32.mrb[0].mxu0
      %v4576 = vadd.f32 0.0, %v4575
      %v4577 = vpop.f32.mrb[0].mxu0
      %4578 = vdwg.mxu0
      %4579 = vst [vmem:[#allocation3] sm:$0xff] %v4401
      %4580 = vst [vmem:[#allocation3 + $0x8] sm:$0xff] %v4406
      %4581 = vst [vmem:[#allocation3 + $0x10] sm:$0xff] %v4411
      %4582 = vst [vmem:[#allocation3 + $0x18] sm:$0xff] %v4416
      %4583 = vst [vmem:[#allocation3 + $0x20] sm:$0xff] %v4421
      %4584 = vst [vmem:[#allocation3 + $0x28] sm:$0xff] %v4426
      %4585 = vst [vmem:[#allocation3 + $0x30] sm:$0xff] %v4431
      %4586 = vst [vmem:[#allocation3 + $0x38] sm:$0xff] %v4436
      %4587 = vst [vmem:[#allocation3 + $0x40] sm:$0xff] %v4441
      %4588 = vst [vmem:[#allocation3 + $0x48] sm:$0xff] %v4446
      %4589 = vst [vmem:[#allocation3 + $0x50] sm:$0xff] %v4451
      %4590 = vst [vmem:[#allocation3 + $0x58] sm:$0xff] %v4456
      %4591 = vst [vmem:[#allocation3 + $0x60] sm:$0xff] %v4461
      %4592 = vst [vmem:[#allocation3 + $0x68] sm:$0xff] %v4466
      %4593 = vst [vmem:[#allocation3 + $0x70] sm:$0xff] %v4471
      %4594 = vst [vmem:[#allocation3 + $0x78] sm:$0xff] %v4476
      %4595 = vst [vmem:[#allocation3 + $0x80] sm:$0xff] %v4481
      %4596 = vst [vmem:[#allocation3 + $0x88] sm:$0xff] %v4486
      %4597 = vst [vmem:[#allocation3 + $0x90] sm:$0xff] %v4491
      %4598 = vst [vmem:[#allocation3 + $0x98] sm:$0xff] %v4496
      %4599 = vst [vmem:[#allocation3 + $0xa0] sm:$0xff] %v4501
      %4600 = vst [vmem:[#allocation3 + $0xa8] sm:$0xff] %v4506
      %4601 = vst [vmem:[#allocation3 + $0xb0] sm:$0xff] %v4511
      %4602 = vst [vmem:[#allocation3 + $0xb8] sm:$0xff] %v4516
      %4603 = vst [vmem:[#allocation3 + $0xc0] sm:$0xff] %v4521
      %4604 = vst [vmem:[#allocation3 + $0xc8] sm:$0xff] %v4526
      %4605 = vst [vmem:[#allocation3 + $0xd0] sm:$0xff] %v4531
      %4606 = vst [vmem:[#allocation3 + $0xd8] sm:$0xff] %v4536
      %4607 = vst [vmem:[#allocation3 + $0xe0] sm:$0xff] %v4541
      %4608 = vst [vmem:[#allocation3 + $0xe8] sm:$0xff] %v4546
      %4609 = vst [vmem:[#allocation3 + $0xf0] sm:$0xff] %v4551
      %4610 = vst [vmem:[#allocation3 + $0xf8] sm:$0xff] %v4556
      %4611 = vst [vmem:[#allocation3 + $0x100] sm:$0xff] %v4561
      %4612 = vst [vmem:[#allocation3 + $0x108] sm:$0xff] %v4566
      %4613 = vst [vmem:[#allocation3 + $0x110] sm:$0xff] %v4571
      %4614 = vst [vmem:[#allocation3 + $0x118] sm:$0xff] %v4576
      %v4615 = vld [vmem:[#allocation2 + $0x6] sm:$0xff]
      %v4616 = vld [vmem:[#allocation2 + $0xe] sm:$0xff]
      %v4617 = vld [vmem:[#allocation2 + $0x16] sm:$0xff]
      %v4618 = vld [vmem:[#allocation2 + $0x1e] sm:$0xff]
      %v4619 = vld [vmem:[#allocation2 + $0x26] sm:$0xff]
      %v4620 = vld [vmem:[#allocation2 + $0x2e] sm:$0xff]
      %v4621 = vld [vmem:[#allocation2 + $0x36] sm:$0xff]
      %v4622 = vld [vmem:[#allocation2 + $0x3e] sm:$0xff]
      %v4623 = vld [vmem:[#allocation2 + $0x46] sm:$0xff]
      %v4624 = vld [vmem:[#allocation2 + $0x4e] sm:$0xff]
      %v4625 = vld [vmem:[#allocation2 + $0x56] sm:$0xff]
      %v4626 = vld [vmem:[#allocation2 + $0x5e] sm:$0xff]
      %v4627 = vld [vmem:[#allocation2 + $0x66] sm:$0xff]
      %v4628 = vld [vmem:[#allocation2 + $0x6e] sm:$0xff]
      %v4629 = vld [vmem:[#allocation2 + $0x76] sm:$0xff]
      %v4630 = vld [vmem:[#allocation2 + $0x7e] sm:$0xff]
      %v4631 = vld [vmem:[#allocation2 + $0x86] sm:$0xff]
      %v4632 = vld [vmem:[#allocation2 + $0x8e] sm:$0xff]
      %v4633 = vld [vmem:[#allocation2 + $0x96] sm:$0xff]
      %v4634 = vld [vmem:[#allocation2 + $0x9e] sm:$0xff]
      %v4635 = vld [vmem:[#allocation2 + $0xa6] sm:$0xff]
      %v4636 = vld [vmem:[#allocation2 + $0xae] sm:$0xff]
      %v4637 = vld [vmem:[#allocation2 + $0xb6] sm:$0xff]
      %v4638 = vld [vmem:[#allocation2 + $0xbe] sm:$0xff]
      %v4639 = vld [vmem:[#allocation2 + $0xc6] sm:$0xff]
      %v4640 = vld [vmem:[#allocation2 + $0xce] sm:$0xff]
      %v4641 = vld [vmem:[#allocation2 + $0xd6] sm:$0xff]
      %v4642 = vld [vmem:[#allocation2 + $0xde] sm:$0xff]
      %v4643 = vld [vmem:[#allocation2 + $0xe6] sm:$0xff]
      %v4644 = vld [vmem:[#allocation2 + $0xee] sm:$0xff]
      %v4645 = vld [vmem:[#allocation2 + $0xf6] sm:$0xff]
      %v4646 = vld [vmem:[#allocation2 + $0xfe] sm:$0xff]
      %v4647 = vld [vmem:[#allocation2 + $0x106] sm:$0xff]
      %v4648 = vld [vmem:[#allocation2 + $0x10e] sm:$0xff]
      %v4649 = vld [vmem:[#allocation2 + $0x116] sm:$0xff]
      %v4650 = vld [vmem:[#allocation2 + $0x11e] sm:$0xff]
      %s4651 = scalar_lea.vmem %s3, 128
      %v4652 = vld [vmem:[%s4651] sm:$0xff]
      %v4653 = vld [vmem:[%s4651 + $0x8] sm:$0xff]
      %v4654 = vld [vmem:[%s4651 + $0x10] sm:$0xff]
      %v4655 = vld [vmem:[%s4651 + $0x18] sm:$0xff]
      %v4656 = vld [vmem:[%s4651 + $0x20] sm:$0xff]
      %v4657 = vld [vmem:[%s4651 + $0x28] sm:$0xff]
      %v4658 = vld [vmem:[%s4651 + $0x30] sm:$0xff]
      %v4659 = vld [vmem:[%s4651 + $0x38] sm:$0xff]
      %v4660 = vld [vmem:[%s4651 + $0x40] sm:$0xff]
      %v4661 = vld [vmem:[%s4651 + $0x48] sm:$0xff]
      %v4662 = vld [vmem:[%s4651 + $0x50] sm:$0xff]
      %v4663 = vld [vmem:[%s4651 + $0x58] sm:$0xff]
      %v4664 = vld [vmem:[%s4651 + $0x60] sm:$0xff]
      %v4665 = vld [vmem:[%s4651 + $0x68] sm:$0xff]
      %v4666 = vld [vmem:[%s4651 + $0x70] sm:$0xff]
      %v4667 = vld [vmem:[%s4651 + $0x78] sm:$0xff]
      %4668 = vmatprep.subr.mxu0 0.0
      %4669 = vmatpush1.msra.mxu0 %v4652
      %4670 = vmatprep.subr.mxu0 0.0
      %4671 = vmatpush1.msra.mxu0 %v4653
      %4672 = vmatprep.subr.mxu0 0.0
      %4673 = vmatpush1.msra.mxu0 %v4654
      %4674 = vmatprep.subr.mxu0 0.0
      %4675 = vmatpush1.msra.mxu0 %v4655
      %4676 = vmatprep.subr.mxu0 0.0
      %4677 = vmatpush1.msra.mxu0 %v4656
      %4678 = vmatprep.subr.mxu0 0.0
      %4679 = vmatpush1.msra.mxu0 %v4657
      %4680 = vmatprep.subr.mxu0 0.0
      %4681 = vmatpush1.msra.mxu0 %v4658
      %4682 = vmatprep.subr.mxu0 0.0
      %4683 = vmatpush1.msra.mxu0 %v4659
      %4684 = vmatprep.subr.mxu0 0.0
      %4685 = vmatpush1.msra.mxu0 %v4660
      %4686 = vmatprep.subr.mxu0 0.0
      %4687 = vmatpush1.msra.mxu0 %v4661
      %4688 = vmatprep.subr.mxu0 0.0
      %4689 = vmatpush1.msra.mxu0 %v4662
      %4690 = vmatprep.subr.mxu0 0.0
      %4691 = vmatpush1.msra.mxu0 %v4663
      %4692 = vmatprep.subr.mxu0 0.0
      %4693 = vmatpush1.msra.mxu0 %v4664
      %4694 = vmatprep.subr.mxu0 0.0
      %4695 = vmatpush1.msra.mxu0 %v4665
      %4696 = vmatprep.subr.mxu0 0.0
      %4697 = vmatpush1.msra.mxu0 %v4666
      %4698 = vmatprep.subr.mxu0 0.0
      %4699 = vmatpush1.msra.mxu0 %v4667
      %4700 = vmatprep.subr.mxu0 0.0
      %4701 = vmatpush1.msra.mxu0 0.0
      %4702 = vmatprep.subr.mxu0 0.0
      %4703 = vmatpush1.msra.mxu0 0.0
      %4704 = vmatprep.subr.mxu0 0.0
      %4705 = vmatpush1.msra.mxu0 0.0
      %4706 = vmatprep.subr.mxu0 0.0
      %4707 = vmatpush1.msra.mxu0 0.0
      %4708 = vmatprep.subr.mxu0 0.0
      %4709 = vmatpush1.msra.mxu0 0.0
      %4710 = vmatprep.subr.mxu0 0.0
      %4711 = vmatpush1.msra.mxu0 0.0
      %4712 = vmatprep.subr.mxu0 0.0
      %4713 = vmatpush1.msra.mxu0 0.0
      %4714 = vmatprep.subr.mxu0 0.0
      %4715 = vmatpush1.msra.mxu0 0.0
      %4716 = vmatprep.subr.mxu0 0.0
      %4717 = vmatpush1.msra.mxu0 0.0
      %4718 = vmatprep.subr.mxu0 0.0
      %4719 = vmatpush1.msra.mxu0 0.0
      %4720 = vmatprep.subr.mxu0 0.0
      %4721 = vmatpush1.msra.mxu0 0.0
      %4722 = vmatprep.subr.mxu0 0.0
      %4723 = vmatpush1.msra.mxu0 0.0
      %4724 = vmatprep.subr.mxu0 0.0
      %4725 = vmatpush1.msra.mxu0 0.0
      %4726 = vmatprep.subr.mxu0 0.0
      %4727 = vmatpush1.msra.mxu0 0.0
      %4728 = vmatprep.subr.mxu0 0.0
      %4729 = vmatpush1.msra.mxu0 0.0
      %4730 = vmatprep.subr.mxu0 0.0
      %4731 = vmatpush1.msra.mxu0 0.0
      %4732 = vmatprep.mubr.f32.mxu0 0.0
      %4733 = vmatmul.mubr.f32.gmra.mrb[0].mxu0 %v4615
      %v4734 = vpop.f32.mrb[0].mxu0
      %v4735 = vadd.f32 0.0, %v4734
      %v4736 = vpop.f32.mrb[0].mxu0
      %4737 = vmatprep.mubr.f32.mxu0 0.0
      %4738 = vmatmul.mubr.f32.gmra.mrb[0].mxu0 %v4616
      %v4739 = vpop.f32.mrb[0].mxu0
      %v4740 = vadd.f32 0.0, %v4739
      %v4741 = vpop.f32.mrb[0].mxu0
      %4742 = vmatprep.mubr.f32.mxu0 0.0
      %4743 = vmatmul.mubr.f32.gmra.mrb[0].mxu0 %v4617
      %v4744 = vpop.f32.mrb[0].mxu0
      %v4745 = vadd.f32 0.0, %v4744
      %v4746 = vpop.f32.mrb[0].mxu0
      %4747 = vmatprep.mubr.f32.mxu0 0.0
      %4748 = vmatmul.mubr.f32.gmra.mrb[0].mxu0 %v4618
      %v4749 = vpop.f32.mrb[0].mxu0
      %v4750 = vadd.f32 0.0, %v4749
      %v4751 = vpop.f32.mrb[0].mxu0
      %4752 = vmatprep.mubr.f32.mxu0 0.0
      %4753 = vmatmul.mubr.f32.gmra.mrb[0].mxu0 %v4619
      %v4754 = vpop.f32.mrb[0].mxu0
      %v4755 = vadd.f32 0.0, %v4754
      %v4756 = vpop.f32.mrb[0].mxu0
      %4757 = vmatprep.mubr.f32.mxu0 0.0
      %4758 = vmatmul.mubr.f32.gmra.mrb[0].mxu0 %v4620
      %v4759 = vpop.f32.mrb[0].mxu0
      %v4760 = vadd.f32 0.0, %v4759
      %v4761 = vpop.f32.mrb[0].mxu0
      %4762 = vmatprep.mubr.f32.mxu0 0.0
      %4763 = vmatmul.mubr.f32.gmra.mrb[0].mxu0 %v4621
      %v4764 = vpop.f32.mrb[0].mxu0
      %v4765 = vadd.f32 0.0, %v4764
      %v4766 = vpop.f32.mrb[0].mxu0
      %4767 = vmatprep.mubr.f32.mxu0 0.0
      %4768 = vmatmul.mubr.f32.gmra.mrb[0].mxu0 %v4622
      %v4769 = vpop.f32.mrb[0].mxu0
      %v4770 = vadd.f32 0.0, %v4769
      %v4771 = vpop.f32.mrb[0].mxu0
      %4772 = vmatprep.mubr.f32.mxu0 0.0
      %4773 = vmatmul.mubr.f32.gmra.mrb[0].mxu0 %v4623
      %v4774 = vpop.f32.mrb[0].mxu0
      %v4775 = vadd.f32 0.0, %v4774
      %v4776 = vpop.f32.mrb[0].mxu0
      %4777 = vmatprep.mubr.f32.mxu0 0.0
      %4778 = vmatmul.mubr.f32.gmra.mrb[0].mxu0 %v4624
      %v4779 = vpop.f32.mrb[0].mxu0
      %v4780 = vadd.f32 0.0, %v4779
      %v4781 = vpop.f32.mrb[0].mxu0
      %4782 = vmatprep.mubr.f32.mxu0 0.0
      %4783 = vmatmul.mubr.f32.gmra.mrb[0].mxu0 %v4625
      %v4784 = vpop.f32.mrb[0].mxu0
      %v4785 = vadd.f32 0.0, %v4784
      %v4786 = vpop.f32.mrb[0].mxu0
      %4787 = vmatprep.mubr.f32.mxu0 0.0
      %4788 = vmatmul.mubr.f32.gmra.mrb[0].mxu0 %v4626
      %v4789 = vpop.f32.mrb[0].mxu0
      %v4790 = vadd.f32 0.0, %v4789
      %v4791 = vpop.f32.mrb[0].mxu0
      %4792 = vmatprep.mubr.f32.mxu0 0.0
      %4793 = vmatmul.mubr.f32.gmra.mrb[0].mxu0 %v4627
      %v4794 = vpop.f32.mrb[0].mxu0
      %v4795 = vadd.f32 0.0, %v4794
      %v4796 = vpop.f32.mrb[0].mxu0
      %4797 = vmatprep.mubr.f32.mxu0 0.0
      %4798 = vmatmul.mubr.f32.gmra.mrb[0].mxu0 %v4628
      %v4799 = vpop.f32.mrb[0].mxu0
      %v4800 = vadd.f32 0.0, %v4799
      %v4801 = vpop.f32.mrb[0].mxu0
      %4802 = vmatprep.mubr.f32.mxu0 0.0
      %4803 = vmatmul.mubr.f32.gmra.mrb[0].mxu0 %v4629
      %v4804 = vpop.f32.mrb[0].mxu0
      %v4805 = vadd.f32 0.0, %v4804
      %v4806 = vpop.f32.mrb[0].mxu0
      %4807 = vmatprep.mubr.f32.mxu0 0.0
      %4808 = vmatmul.mubr.f32.gmra.mrb[0].mxu0 %v4630
      %v4809 = vpop.f32.mrb[0].mxu0
      %v4810 = vadd.f32 0.0, %v4809
      %v4811 = vpop.f32.mrb[0].mxu0
      %4812 = vmatprep.mubr.f32.mxu0 0.0
      %4813 = vmatmul.mubr.f32.gmra.mrb[0].mxu0 %v4631
      %v4814 = vpop.f32.mrb[0].mxu0
      %v4815 = vadd.f32 0.0, %v4814
      %v4816 = vpop.f32.mrb[0].mxu0
      %4817 = vmatprep.mubr.f32.mxu0 0.0
      %4818 = vmatmul.mubr.f32.gmra.mrb[0].mxu0 %v4632
      %v4819 = vpop.f32.mrb[0].mxu0
      %v4820 = vadd.f32 0.0, %v4819
      %v4821 = vpop.f32.mrb[0].mxu0
      %4822 = vmatprep.mubr.f32.mxu0 0.0
      %4823 = vmatmul.mubr.f32.gmra.mrb[0].mxu0 %v4633
      %v4824 = vpop.f32.mrb[0].mxu0
      %v4825 = vadd.f32 0.0, %v4824
      %v4826 = vpop.f32.mrb[0].mxu0
      %4827 = vmatprep.mubr.f32.mxu0 0.0
      %4828 = vmatmul.mubr.f32.gmra.mrb[0].mxu0 %v4634
      %v4829 = vpop.f32.mrb[0].mxu0
      %v4830 = vadd.f32 0.0, %v4829
      %v4831 = vpop.f32.mrb[0].mxu0
      %4832 = vmatprep.mubr.f32.mxu0 0.0
      %4833 = vmatmul.mubr.f32.gmra.mrb[0].mxu0 %v4635
      %v4834 = vpop.f32.mrb[0].mxu0
      %v4835 = vadd.f32 0.0, %v4834
      %v4836 = vpop.f32.mrb[0].mxu0
      %4837 = vmatprep.mubr.f32.mxu0 0.0
      %4838 = vmatmul.mubr.f32.gmra.mrb[0].mxu0 %v4636
      %v4839 = vpop.f32.mrb[0].mxu0
      %v4840 = vadd.f32 0.0, %v4839
      %v4841 = vpop.f32.mrb[0].mxu0
      %4842 = vmatprep.mubr.f32.mxu0 0.0
      %4843 = vmatmul.mubr.f32.gmra.mrb[0].mxu0 %v4637
      %v4844 = vpop.f32.mrb[0].mxu0
      %v4845 = vadd.f32 0.0, %v4844
      %v4846 = vpop.f32.mrb[0].mxu0
      %4847 = vmatprep.mubr.f32.mxu0 0.0
      %4848 = vmatmul.mubr.f32.gmra.mrb[0].mxu0 %v4638
      %v4849 = vpop.f32.mrb[0].mxu0
      %v4850 = vadd.f32 0.0, %v4849
      %v4851 = vpop.f32.mrb[0].mxu0
      %4852 = vmatprep.mubr.f32.mxu0 0.0
      %4853 = vmatmul.mubr.f32.gmra.mrb[0].mxu0 %v4639
      %v4854 = vpop.f32.mrb[0].mxu0
      %v4855 = vadd.f32 0.0, %v4854
      %v4856 = vpop.f32.mrb[0].mxu0
      %4857 = vmatprep.mubr.f32.mxu0 0.0
      %4858 = vmatmul.mubr.f32.gmra.mrb[0].mxu0 %v4640
      %v4859 = vpop.f32.mrb[0].mxu0
      %v4860 = vadd.f32 0.0, %v4859
      %v4861 = vpop.f32.mrb[0].mxu0
      %4862 = vmatprep.mubr.f32.mxu0 0.0
      %4863 = vmatmul.mubr.f32.gmra.mrb[0].mxu0 %v4641
      %v4864 = vpop.f32.mrb[0].mxu0
      %v4865 = vadd.f32 0.0, %v4864
      %v4866 = vpop.f32.mrb[0].mxu0
      %4867 = vmatprep.mubr.f32.mxu0 0.0
      %4868 = vmatmul.mubr.f32.gmra.mrb[0].mxu0 %v4642
      %v4869 = vpop.f32.mrb[0].mxu0
      %v4870 = vadd.f32 0.0, %v4869
      %v4871 = vpop.f32.mrb[0].mxu0
      %4872 = vmatprep.mubr.f32.mxu0 0.0
      %4873 = vmatmul.mubr.f32.gmra.mrb[0].mxu0 %v4643
      %v4874 = vpop.f32.mrb[0].mxu0
      %v4875 = vadd.f32 0.0, %v4874
      %v4876 = vpop.f32.mrb[0].mxu0
      %4877 = vmatprep.mubr.f32.mxu0 0.0
      %4878 = vmatmul.mubr.f32.gmra.mrb[0].mxu0 %v4644
      %v4879 = vpop.f32.mrb[0].mxu0
      %v4880 = vadd.f32 0.0, %v4879
      %v4881 = vpop.f32.mrb[0].mxu0
      %4882 = vmatprep.mubr.f32.mxu0 0.0
      %4883 = vmatmul.mubr.f32.gmra.mrb[0].mxu0 %v4645
      %v4884 = vpop.f32.mrb[0].mxu0
      %v4885 = vadd.f32 0.0, %v4884
      %v4886 = vpop.f32.mrb[0].mxu0
      %4887 = vmatprep.mubr.f32.mxu0 0.0
      %4888 = vmatmul.mubr.f32.gmra.mrb[0].mxu0 %v4646
      %v4889 = vpop.f32.mrb[0].mxu0
      %v4890 = vadd.f32 0.0, %v4889
      %v4891 = vpop.f32.mrb[0].mxu0
      %4892 = vmatprep.mubr.f32.mxu0 0.0
      %4893 = vmatmul.mubr.f32.gmra.mrb[0].mxu0 %v4647
      %v4894 = vpop.f32.mrb[0].mxu0
      %v4895 = vadd.f32 0.0, %v4894
      %v4896 = vpop.f32.mrb[0].mxu0
      %4897 = vmatprep.mubr.f32.mxu0 0.0
      %4898 = vmatmul.mubr.f32.gmra.mrb[0].mxu0 %v4648
      %v4899 = vpop.f32.mrb[0].mxu0
      %v4900 = vadd.f32 0.0, %v4899
      %v4901 = vpop.f32.mrb[0].mxu0
      %4902 = vmatprep.mubr.f32.mxu0 0.0
      %4903 = vmatmul.mubr.f32.gmra.mrb[0].mxu0 %v4649
      %v4904 = vpop.f32.mrb[0].mxu0
      %v4905 = vadd.f32 0.0, %v4904
      %v4906 = vpop.f32.mrb[0].mxu0
      %4907 = vmatprep.mubr.f32.mxu0 0.0
      %4908 = vmatmul.mubr.f32.gmra.mrb[0].mxu0 %v4650
      %v4909 = vpop.f32.mrb[0].mxu0
      %v4910 = vadd.f32 0.0, %v4909
      %v4911 = vpop.f32.mrb[0].mxu0
      %4912 = vdwg.mxu0
      %v4913 = vld [vmem:[#allocation3] sm:$0xff]
      %v4914 = vld [vmem:[#allocation3 + $0x8] sm:$0xff]
      %v4915 = vld [vmem:[#allocation3 + $0x10] sm:$0xff]
      %v4916 = vld [vmem:[#allocation3 + $0x18] sm:$0xff]
      %v4917 = vld [vmem:[#allocation3 + $0x20] sm:$0xff]
      %v4918 = vld [vmem:[#allocation3 + $0x28] sm:$0xff]
      %v4919 = vld [vmem:[#allocation3 + $0x30] sm:$0xff]
      %v4920 = vld [vmem:[#allocation3 + $0x38] sm:$0xff]
      %v4921 = vld [vmem:[#allocation3 + $0x40] sm:$0xff]
      %v4922 = vld [vmem:[#allocation3 + $0x48] sm:$0xff]
      %v4923 = vld [vmem:[#allocation3 + $0x50] sm:$0xff]
      %v4924 = vld [vmem:[#allocation3 + $0x58] sm:$0xff]
      %v4925 = vld [vmem:[#allocation3 + $0x60] sm:$0xff]
      %v4926 = vld [vmem:[#allocation3 + $0x68] sm:$0xff]
      %v4927 = vld [vmem:[#allocation3 + $0x70] sm:$0xff]
      %v4928 = vld [vmem:[#allocation3 + $0x78] sm:$0xff]
      %v4929 = vld [vmem:[#allocation3 + $0x80] sm:$0xff]
      %v4930 = vld [vmem:[#allocation3 + $0x88] sm:$0xff]
      %v4931 = vld [vmem:[#allocation3 + $0x90] sm:$0xff]
      %v4932 = vld [vmem:[#allocation3 + $0x98] sm:$0xff]
      %v4933 = vld [vmem:[#allocation3 + $0xa0] sm:$0xff]
      %v4934 = vld [vmem:[#allocation3 + $0xa8] sm:$0xff]
      %v4935 = vld [vmem:[#allocation3 + $0xb0] sm:$0xff]
      %v4936 = vld [vmem:[#allocation3 + $0xb8] sm:$0xff]
      %v4937 = vld [vmem:[#allocation3 + $0xc0] sm:$0xff]
      %v4938 = vld [vmem:[#allocation3 + $0xc8] sm:$0xff]
      %v4939 = vld [vmem:[#allocation3 + $0xd0] sm:$0xff]
      %v4940 = vld [vmem:[#allocation3 + $0xd8] sm:$0xff]
      %v4941 = vld [vmem:[#allocation3 + $0xe0] sm:$0xff]
      %v4942 = vld [vmem:[#allocation3 + $0xe8] sm:$0xff]
      %v4943 = vld [vmem:[#allocation3 + $0xf0] sm:$0xff]
      %v4944 = vld [vmem:[#allocation3 + $0xf8] sm:$0xff]
      %v4945 = vld [vmem:[#allocation3 + $0x100] sm:$0xff]
      %v4946 = vld [vmem:[#allocation3 + $0x108] sm:$0xff]
      %v4947 = vld [vmem:[#allocation3 + $0x110] sm:$0xff]
      %v4948 = vld [vmem:[#allocation3 + $0x118] sm:$0xff]
      %v4949 = vadd.f32 %v4913, %v4735
      %v4950 = vadd.f32 %v4914, %v4740
      %v4951 = vadd.f32 %v4915, %v4745
      %v4952 = vadd.f32 %v4916, %v4750
      %v4953 = vadd.f32 %v4917, %v4755
      %v4954 = vadd.f32 %v4918, %v4760
      %v4955 = vadd.f32 %v4919, %v4765
      %v4956 = vadd.f32 %v4920, %v4770
      %v4957 = vadd.f32 %v4921, %v4775
      %v4958 = vadd.f32 %v4922, %v4780
      %v4959 = vadd.f32 %v4923, %v4785
      %v4960 = vadd.f32 %v4924, %v4790
      %v4961 = vadd.f32 %v4925, %v4795
      %v4962 = vadd.f32 %v4926, %v4800
      %v4963 = vadd.f32 %v4927, %v4805
      %v4964 = vadd.f32 %v4928, %v4810
      %v4965 = vadd.f32 %v4929, %v4815
      %v4966 = vadd.f32 %v4930, %v4820
      %v4967 = vadd.f32 %v4931, %v4825
      %v4968 = vadd.f32 %v4932, %v4830
      %v4969 = vadd.f32 %v4933, %v4835
      %v4970 = vadd.f32 %v4934, %v4840
      %v4971 = vadd.f32 %v4935, %v4845
      %v4972 = vadd.f32 %v4936, %v4850
      %v4973 = vadd.f32 %v4937, %v4855
      %v4974 = vadd.f32 %v4938, %v4860
      %v4975 = vadd.f32 %v4939, %v4865
      %v4976 = vadd.f32 %v4940, %v4870
      %v4977 = vadd.f32 %v4941, %v4875
      %v4978 = vadd.f32 %v4942, %v4880
      %v4979 = vadd.f32 %v4943, %v4885
      %v4980 = vadd.f32 %v4944, %v4890
      %v4981 = vadd.f32 %v4945, %v4895
      %v4982 = vadd.f32 %v4946, %v4900
      %v4983 = vadd.f32 %v4947, %v4905
      %v4984 = vadd.f32 %v4948, %v4910
      %4985 = vst [vmem:[#allocation3] sm:$0xff] %v4949
      %4986 = vst [vmem:[#allocation3 + $0x8] sm:$0xff] %v4950
      %4987 = vst [vmem:[#allocation3 + $0x10] sm:$0xff] %v4951
      %4988 = vst [vmem:[#allocation3 + $0x18] sm:$0xff] %v4952
      %4989 = vst [vmem:[#allocation3 + $0x20] sm:$0xff] %v4953
      %4990 = vst [vmem:[#allocation3 + $0x28] sm:$0xff] %v4954
      %4991 = vst [vmem:[#allocation3 + $0x30] sm:$0xff] %v4955
      %4992 = vst [vmem:[#allocation3 + $0x38] sm:$0xff] %v4956
      %4993 = vst [vmem:[#allocation3 + $0x40] sm:$0xff] %v4957
      %4994 = vst [vmem:[#allocation3 + $0x48] sm:$0xff] %v4958
      %4995 = vst [vmem:[#allocation3 + $0x50] sm:$0xff] %v4959
      %4996 = vst [vmem:[#allocation3 + $0x58] sm:$0xff] %v4960
      %4997 = vst [vmem:[#allocation3 + $0x60] sm:$0xff] %v4961
      %4998 = vst [vmem:[#allocation3 + $0x68] sm:$0xff] %v4962
      %4999 = vst [vmem:[#allocation3 + $0x70] sm:$0xff] %v4963
      %5000 = vst [vmem:[#allocation3 + $0x78] sm:$0xff] %v4964
      %5001 = vst [vmem:[#allocation3 + $0x80] sm:$0xff] %v4965
      %5002 = vst [vmem:[#allocation3 + $0x88] sm:$0xff] %v4966
      %5003 = vst [vmem:[#allocation3 + $0x90] sm:$0xff] %v4967
      %5004 = vst [vmem:[#allocation3 + $0x98] sm:$0xff] %v4968
      %5005 = vst [vmem:[#allocation3 + $0xa0] sm:$0xff] %v4969
      %5006 = vst [vmem:[#allocation3 + $0xa8] sm:$0xff] %v4970
      %5007 = vst [vmem:[#allocation3 + $0xb0] sm:$0xff] %v4971
      %5008 = vst [vmem:[#allocation3 + $0xb8] sm:$0xff] %v4972
      %5009 = vst [vmem:[#allocation3 + $0xc0] sm:$0xff] %v4973
      %5010 = vst [vmem:[#allocation3 + $0xc8] sm:$0xff] %v4974
      %5011 = vst [vmem:[#allocation3 + $0xd0] sm:$0xff] %v4975
      %5012 = vst [vmem:[#allocation3 + $0xd8] sm:$0xff] %v4976
      %5013 = vst [vmem:[#allocation3 + $0xe0] sm:$0xff] %v4977
      %5014 = vst [vmem:[#allocation3 + $0xe8] sm:$0xff] %v4978
      %5015 = vst [vmem:[#allocation3 + $0xf0] sm:$0xff] %v4979
      %5016 = vst [vmem:[#allocation3 + $0xf8] sm:$0xff] %v4980
      %5017 = vst [vmem:[#allocation3 + $0x100] sm:$0xff] %v4981
      %5018 = vst [vmem:[#allocation3 + $0x108] sm:$0xff] %v4982
      %5019 = vst [vmem:[#allocation3 + $0x110] sm:$0xff] %v4983
      %5020 = vst [vmem:[#allocation3 + $0x118] sm:$0xff] %v4984
      %v5021 = vld [vmem:[#allocation2 + $0x7] sm:$0xff]
      %v5022 = vld [vmem:[#allocation2 + $0xf] sm:$0xff]
      %v5023 = vld [vmem:[#allocation2 + $0x17] sm:$0xff]
      %v5024 = vld [vmem:[#allocation2 + $0x1f] sm:$0xff]
      %v5025 = vld [vmem:[#allocation2 + $0x27] sm:$0xff]
      %v5026 = vld [vmem:[#allocation2 + $0x2f] sm:$0xff]
      %v5027 = vld [vmem:[#allocation2 + $0x37] sm:$0xff]
      %v5028 = vld [vmem:[#allocation2 + $0x3f] sm:$0xff]
      %v5029 = vld [vmem:[#allocation2 + $0x47] sm:$0xff]
      %v5030 = vld [vmem:[#allocation2 + $0x4f] sm:$0xff]
      %v5031 = vld [vmem:[#allocation2 + $0x57] sm:$0xff]
      %v5032 = vld [vmem:[#allocation2 + $0x5f] sm:$0xff]
      %v5033 = vld [vmem:[#allocation2 + $0x67] sm:$0xff]
      %v5034 = vld [vmem:[#allocation2 + $0x6f] sm:$0xff]
      %v5035 = vld [vmem:[#allocation2 + $0x77] sm:$0xff]
      %v5036 = vld [vmem:[#allocation2 + $0x7f] sm:$0xff]
      %v5037 = vld [vmem:[#allocation2 + $0x87] sm:$0xff]
      %v5038 = vld [vmem:[#allocation2 + $0x8f] sm:$0xff]
      %v5039 = vld [vmem:[#allocation2 + $0x97] sm:$0xff]
      %v5040 = vld [vmem:[#allocation2 + $0x9f] sm:$0xff]
      %v5041 = vld [vmem:[#allocation2 + $0xa7] sm:$0xff]
      %v5042 = vld [vmem:[#allocation2 + $0xaf] sm:$0xff]
      %v5043 = vld [vmem:[#allocation2 + $0xb7] sm:$0xff]
      %v5044 = vld [vmem:[#allocation2 + $0xbf] sm:$0xff]
      %v5045 = vld [vmem:[#allocation2 + $0xc7] sm:$0xff]
      %v5046 = vld [vmem:[#allocation2 + $0xcf] sm:$0xff]
      %v5047 = vld [vmem:[#allocation2 + $0xd7] sm:$0xff]
      %v5048 = vld [vmem:[#allocation2 + $0xdf] sm:$0xff]
      %v5049 = vld [vmem:[#allocation2 + $0xe7] sm:$0xff]
      %v5050 = vld [vmem:[#allocation2 + $0xef] sm:$0xff]
      %v5051 = vld [vmem:[#allocation2 + $0xf7] sm:$0xff]
      %v5052 = vld [vmem:[#allocation2 + $0xff] sm:$0xff]
      %v5053 = vld [vmem:[#allocation2 + $0x107] sm:$0xff]
      %v5054 = vld [vmem:[#allocation2 + $0x10f] sm:$0xff]
      %v5055 = vld [vmem:[#allocation2 + $0x117] sm:$0xff]
      %v5056 = vld [vmem:[#allocation2 + $0x11f] sm:$0xff]
      %s5057 = scalar_lea.vmem %s3, 256
      %v5058 = vld [vmem:[%s5057] sm:$0xff]
      %v5059 = vld [vmem:[%s5057 + $0x8] sm:$0xff]
      %v5060 = vld [vmem:[%s5057 + $0x10] sm:$0xff]
      %v5061 = vld [vmem:[%s5057 + $0x18] sm:$0xff]
      %v5062 = vld [vmem:[%s5057 + $0x20] sm:$0xff]
      %v5063 = vld [vmem:[%s5057 + $0x28] sm:$0xff]
      %v5064 = vld [vmem:[%s5057 + $0x30] sm:$0xff]
      %v5065 = vld [vmem:[%s5057 + $0x38] sm:$0xff]
      %v5066 = vld [vmem:[%s5057 + $0x40] sm:$0xff]
      %v5067 = vld [vmem:[%s5057 + $0x48] sm:$0xff]
      %v5068 = vld [vmem:[%s5057 + $0x50] sm:$0xff]
      %v5069 = vld [vmem:[%s5057 + $0x58] sm:$0xff]
      %v5070 = vld [vmem:[%s5057 + $0x60] sm:$0xff]
      %v5071 = vld [vmem:[%s5057 + $0x68] sm:$0xff]
      %v5072 = vld [vmem:[%s5057 + $0x70] sm:$0xff]
      %v5073 = vld [vmem:[%s5057 + $0x78] sm:$0xff]
      %5074 = vmatprep.subr.mxu0 0.0
      %5075 = vmatpush1.msra.mxu0 %v5058
      %5076 = vmatprep.subr.mxu0 0.0
      %5077 = vmatpush1.msra.mxu0 %v5059
      %5078 = vmatprep.subr.mxu0 0.0
      %5079 = vmatpush1.msra.mxu0 %v5060
      %5080 = vmatprep.subr.mxu0 0.0
      %5081 = vmatpush1.msra.mxu0 %v5061
      %5082 = vmatprep.subr.mxu0 0.0
      %5083 = vmatpush1.msra.mxu0 %v5062
      %5084 = vmatprep.subr.mxu0 0.0
      %5085 = vmatpush1.msra.mxu0 %v5063
      %5086 = vmatprep.subr.mxu0 0.0
      %5087 = vmatpush1.msra.mxu0 %v5064
      %5088 = vmatprep.subr.mxu0 0.0
      %5089 = vmatpush1.msra.mxu0 %v5065
      %5090 = vmatprep.subr.mxu0 0.0
      %5091 = vmatpush1.msra.mxu0 %v5066
      %5092 = vmatprep.subr.mxu0 0.0
      %5093 = vmatpush1.msra.mxu0 %v5067
      %5094 = vmatprep.subr.mxu0 0.0
      %5095 = vmatpush1.msra.mxu0 %v5068
      %5096 = vmatprep.subr.mxu0 0.0
      %5097 = vmatpush1.msra.mxu0 %v5069
      %5098 = vmatprep.subr.mxu0 0.0
      %5099 = vmatpush1.msra.mxu0 %v5070
      %5100 = vmatprep.subr.mxu0 0.0
      %5101 = vmatpush1.msra.mxu0 %v5071
      %5102 = vmatprep.subr.mxu0 0.0
      %5103 = vmatpush1.msra.mxu0 %v5072
      %5104 = vmatprep.subr.mxu0 0.0
      %5105 = vmatpush1.msra.mxu0 %v5073
      %5106 = vmatprep.subr.mxu0 0.0
      %5107 = vmatpush1.msra.mxu0 0.0
      %5108 = vmatprep.subr.mxu0 0.0
      %5109 = vmatpush1.msra.mxu0 0.0
      %5110 = vmatprep.subr.mxu0 0.0
      %5111 = vmatpush1.msra.mxu0 0.0
      %5112 = vmatprep.subr.mxu0 0.0
      %5113 = vmatpush1.msra.mxu0 0.0
      %5114 = vmatprep.subr.mxu0 0.0
      %5115 = vmatpush1.msra.mxu0 0.0
      %5116 = vmatprep.subr.mxu0 0.0
      %5117 = vmatpush1.msra.mxu0 0.0
      %5118 = vmatprep.subr.mxu0 0.0
      %5119 = vmatpush1.msra.mxu0 0.0
      %5120 = vmatprep.subr.mxu0 0.0
      %5121 = vmatpush1.msra.mxu0 0.0
      %5122 = vmatprep.subr.mxu0 0.0
      %5123 = vmatpush1.msra.mxu0 0.0
      %5124 = vmatprep.subr.mxu0 0.0
      %5125 = vmatpush1.msra.mxu0 0.0
      %5126 = vmatprep.subr.mxu0 0.0
      %5127 = vmatpush1.msra.mxu0 0.0
      %5128 = vmatprep.subr.mxu0 0.0
      %5129 = vmatpush1.msra.mxu0 0.0
      %5130 = vmatprep.subr.mxu0 0.0
      %5131 = vmatpush1.msra.mxu0 0.0
      %5132 = vmatprep.subr.mxu0 0.0
      %5133 = vmatpush1.msra.mxu0 0.0
      %5134 = vmatprep.subr.mxu0 0.0
      %5135 = vmatpush1.msra.mxu0 0.0
      %5136 = vmatprep.subr.mxu0 0.0
      %5137 = vmatpush1.msra.mxu0 0.0
      %5138 = vmatprep.mubr.f32.mxu0 0.0
      %5139 = vmatmul.mubr.f32.gmra.mrb[0].mxu0 %v5021
      %v5140 = vpop.f32.mrb[0].mxu0
      %v5141 = vadd.f32 0.0, %v5140
      %v5142 = vpop.f32.mrb[0].mxu0
      %5143 = vmatprep.mubr.f32.mxu0 0.0
      %5144 = vmatmul.mubr.f32.gmra.mrb[0].mxu0 %v5022
      %v5145 = vpop.f32.mrb[0].mxu0
      %v5146 = vadd.f32 0.0, %v5145
      %v5147 = vpop.f32.mrb[0].mxu0
      %5148 = vmatprep.mubr.f32.mxu0 0.0
      %5149 = vmatmul.mubr.f32.gmra.mrb[0].mxu0 %v5023
      %v5150 = vpop.f32.mrb[0].mxu0
      %v5151 = vadd.f32 0.0, %v5150
      %v5152 = vpop.f32.mrb[0].mxu0
      %5153 = vmatprep.mubr.f32.mxu0 0.0
      %5154 = vmatmul.mubr.f32.gmra.mrb[0].mxu0 %v5024
      %v5155 = vpop.f32.mrb[0].mxu0
      %v5156 = vadd.f32 0.0, %v5155
      %v5157 = vpop.f32.mrb[0].mxu0
      %5158 = vmatprep.mubr.f32.mxu0 0.0
      %5159 = vmatmul.mubr.f32.gmra.mrb[0].mxu0 %v5025
      %v5160 = vpop.f32.mrb[0].mxu0
      %v5161 = vadd.f32 0.0, %v5160
      %v5162 = vpop.f32.mrb[0].mxu0
      %5163 = vmatprep.mubr.f32.mxu0 0.0
      %5164 = vmatmul.mubr.f32.gmra.mrb[0].mxu0 %v5026
      %v5165 = vpop.f32.mrb[0].mxu0
      %v5166 = vadd.f32 0.0, %v5165
      %v5167 = vpop.f32.mrb[0].mxu0
      %5168 = vmatprep.mubr.f32.mxu0 0.0
      %5169 = vmatmul.mubr.f32.gmra.mrb[0].mxu0 %v5027
      %v5170 = vpop.f32.mrb[0].mxu0
      %v5171 = vadd.f32 0.0, %v5170
      %v5172 = vpop.f32.mrb[0].mxu0
      %5173 = vmatprep.mubr.f32.mxu0 0.0
      %5174 = vmatmul.mubr.f32.gmra.mrb[0].mxu0 %v5028
      %v5175 = vpop.f32.mrb[0].mxu0
      %v5176 = vadd.f32 0.0, %v5175
      %v5177 = vpop.f32.mrb[0].mxu0
      %5178 = vmatprep.mubr.f32.mxu0 0.0
      %5179 = vmatmul.mubr.f32.gmra.mrb[0].mxu0 %v5029
      %v5180 = vpop.f32.mrb[0].mxu0
      %v5181 = vadd.f32 0.0, %v5180
      %v5182 = vpop.f32.mrb[0].mxu0
      %5183 = vmatprep.mubr.f32.mxu0 0.0
      %5184 = vmatmul.mubr.f32.gmra.mrb[0].mxu0 %v5030
      %v5185 = vpop.f32.mrb[0].mxu0
      %v5186 = vadd.f32 0.0, %v5185
      %v5187 = vpop.f32.mrb[0].mxu0
      %5188 = vmatprep.mubr.f32.mxu0 0.0
      %5189 = vmatmul.mubr.f32.gmra.mrb[0].mxu0 %v5031
      %v5190 = vpop.f32.mrb[0].mxu0
      %v5191 = vadd.f32 0.0, %v5190
      %v5192 = vpop.f32.mrb[0].mxu0
      %5193 = vmatprep.mubr.f32.mxu0 0.0
      %5194 = vmatmul.mubr.f32.gmra.mrb[0].mxu0 %v5032
      %v5195 = vpop.f32.mrb[0].mxu0
      %v5196 = vadd.f32 0.0, %v5195
      %v5197 = vpop.f32.mrb[0].mxu0
      %5198 = vmatprep.mubr.f32.mxu0 0.0
      %5199 = vmatmul.mubr.f32.gmra.mrb[0].mxu0 %v5033
      %v5200 = vpop.f32.mrb[0].mxu0
      %v5201 = vadd.f32 0.0, %v5200
      %v5202 = vpop.f32.mrb[0].mxu0
      %5203 = vmatprep.mubr.f32.mxu0 0.0
      %5204 = vmatmul.mubr.f32.gmra.mrb[0].mxu0 %v5034
      %v5205 = vpop.f32.mrb[0].mxu0
      %v5206 = vadd.f32 0.0, %v5205
      %v5207 = vpop.f32.mrb[0].mxu0
      %5208 = vmatprep.mubr.f32.mxu0 0.0
      %5209 = vmatmul.mubr.f32.gmra.mrb[0].mxu0 %v5035
      %v5210 = vpop.f32.mrb[0].mxu0
      %v5211 = vadd.f32 0.0, %v5210
      %v5212 = vpop.f32.mrb[0].mxu0
      %5213 = vmatprep.mubr.f32.mxu0 0.0
      %5214 = vmatmul.mubr.f32.gmra.mrb[0].mxu0 %v5036
      %v5215 = vpop.f32.mrb[0].mxu0
      %v5216 = vadd.f32 0.0, %v5215
      %v5217 = vpop.f32.mrb[0].mxu0
      %5218 = vmatprep.mubr.f32.mxu0 0.0
      %5219 = vmatmul.mubr.f32.gmra.mrb[0].mxu0 %v5037
      %v5220 = vpop.f32.mrb[0].mxu0
      %v5221 = vadd.f32 0.0, %v5220
      %v5222 = vpop.f32.mrb[0].mxu0
      %5223 = vmatprep.mubr.f32.mxu0 0.0
      %5224 = vmatmul.mubr.f32.gmra.mrb[0].mxu0 %v5038
      %v5225 = vpop.f32.mrb[0].mxu0
      %v5226 = vadd.f32 0.0, %v5225
      %v5227 = vpop.f32.mrb[0].mxu0
      %5228 = vmatprep.mubr.f32.mxu0 0.0
      %5229 = vmatmul.mubr.f32.gmra.mrb[0].mxu0 %v5039
      %v5230 = vpop.f32.mrb[0].mxu0
      %v5231 = vadd.f32 0.0, %v5230
      %v5232 = vpop.f32.mrb[0].mxu0
      %5233 = vmatprep.mubr.f32.mxu0 0.0
      %5234 = vmatmul.mubr.f32.gmra.mrb[0].mxu0 %v5040
      %v5235 = vpop.f32.mrb[0].mxu0
      %v5236 = vadd.f32 0.0, %v5235
      %v5237 = vpop.f32.mrb[0].mxu0
      %5238 = vmatprep.mubr.f32.mxu0 0.0
      %5239 = vmatmul.mubr.f32.gmra.mrb[0].mxu0 %v5041
      %v5240 = vpop.f32.mrb[0].mxu0
      %v5241 = vadd.f32 0.0, %v5240
      %v5242 = vpop.f32.mrb[0].mxu0
      %5243 = vmatprep.mubr.f32.mxu0 0.0
      %5244 = vmatmul.mubr.f32.gmra.mrb[0].mxu0 %v5042
      %v5245 = vpop.f32.mrb[0].mxu0
      %v5246 = vadd.f32 0.0, %v5245
      %v5247 = vpop.f32.mrb[0].mxu0
      %5248 = vmatprep.mubr.f32.mxu0 0.0
      %5249 = vmatmul.mubr.f32.gmra.mrb[0].mxu0 %v5043
      %v5250 = vpop.f32.mrb[0].mxu0
      %v5251 = vadd.f32 0.0, %v5250
      %v5252 = vpop.f32.mrb[0].mxu0
      %5253 = vmatprep.mubr.f32.mxu0 0.0
      %5254 = vmatmul.mubr.f32.gmra.mrb[0].mxu0 %v5044
      %v5255 = vpop.f32.mrb[0].mxu0
      %v5256 = vadd.f32 0.0, %v5255
      %v5257 = vpop.f32.mrb[0].mxu0
      %5258 = vmatprep.mubr.f32.mxu0 0.0
      %5259 = vmatmul.mubr.f32.gmra.mrb[0].mxu0 %v5045
      %v5260 = vpop.f32.mrb[0].mxu0
      %v5261 = vadd.f32 0.0, %v5260
      %v5262 = vpop.f32.mrb[0].mxu0
      %5263 = vmatprep.mubr.f32.mxu0 0.0
      %5264 = vmatmul.mubr.f32.gmra.mrb[0].mxu0 %v5046
      %v5265 = vpop.f32.mrb[0].mxu0
      %v5266 = vadd.f32 0.0, %v5265
      %v5267 = vpop.f32.mrb[0].mxu0
      %5268 = vmatprep.mubr.f32.mxu0 0.0
      %5269 = vmatmul.mubr.f32.gmra.mrb[0].mxu0 %v5047
      %v5270 = vpop.f32.mrb[0].mxu0
      %v5271 = vadd.f32 0.0, %v5270
      %v5272 = vpop.f32.mrb[0].mxu0
      %5273 = vmatprep.mubr.f32.mxu0 0.0
      %5274 = vmatmul.mubr.f32.gmra.mrb[0].mxu0 %v5048
      %v5275 = vpop.f32.mrb[0].mxu0
      %v5276 = vadd.f32 0.0, %v5275
      %v5277 = vpop.f32.mrb[0].mxu0
      %5278 = vmatprep.mubr.f32.mxu0 0.0
      %5279 = vmatmul.mubr.f32.gmra.mrb[0].mxu0 %v5049
      %v5280 = vpop.f32.mrb[0].mxu0
      %v5281 = vadd.f32 0.0, %v5280
      %v5282 = vpop.f32.mrb[0].mxu0
      %5283 = vmatprep.mubr.f32.mxu0 0.0
      %5284 = vmatmul.mubr.f32.gmra.mrb[0].mxu0 %v5050
      %v5285 = vpop.f32.mrb[0].mxu0
      %v5286 = vadd.f32 0.0, %v5285
      %v5287 = vpop.f32.mrb[0].mxu0
      %5288 = vmatprep.mubr.f32.mxu0 0.0
      %5289 = vmatmul.mubr.f32.gmra.mrb[0].mxu0 %v5051
      %v5290 = vpop.f32.mrb[0].mxu0
      %v5291 = vadd.f32 0.0, %v5290
      %v5292 = vpop.f32.mrb[0].mxu0
      %5293 = vmatprep.mubr.f32.mxu0 0.0
      %5294 = vmatmul.mubr.f32.gmra.mrb[0].mxu0 %v5052
      %v5295 = vpop.f32.mrb[0].mxu0
      %v5296 = vadd.f32 0.0, %v5295
      %v5297 = vpop.f32.mrb[0].mxu0
      %5298 = vmatprep.mubr.f32.mxu0 0.0
      %5299 = vmatmul.mubr.f32.gmra.mrb[0].mxu0 %v5053
      %v5300 = vpop.f32.mrb[0].mxu0
      %v5301 = vadd.f32 0.0, %v5300
      %v5302 = vpop.f32.mrb[0].mxu0
      %5303 = vmatprep.mubr.f32.mxu0 0.0
      %5304 = vmatmul.mubr.f32.gmra.mrb[0].mxu0 %v5054
      %v5305 = vpop.f32.mrb[0].mxu0
      %v5306 = vadd.f32 0.0, %v5305
      %v5307 = vpop.f32.mrb[0].mxu0
      %5308 = vmatprep.mubr.f32.mxu0 0.0
      %5309 = vmatmul.mubr.f32.gmra.mrb[0].mxu0 %v5055
      %v5310 = vpop.f32.mrb[0].mxu0
      %v5311 = vadd.f32 0.0, %v5310
      %v5312 = vpop.f32.mrb[0].mxu0
      %5313 = vmatprep.mubr.f32.mxu0 0.0
      %5314 = vmatmul.mubr.f32.gmra.mrb[0].mxu0 %v5056
      %v5315 = vpop.f32.mrb[0].mxu0
      %v5316 = vadd.f32 0.0, %v5315
      %v5317 = vpop.f32.mrb[0].mxu0
      %5318 = vdwg.mxu0
      %v5319 = vld [vmem:[#allocation3] sm:$0xff]
      %v5320 = vld [vmem:[#allocation3 + $0x8] sm:$0xff]
      %v5321 = vld [vmem:[#allocation3 + $0x10] sm:$0xff]
      %v5322 = vld [vmem:[#allocation3 + $0x18] sm:$0xff]
      %v5323 = vld [vmem:[#allocation3 + $0x20] sm:$0xff]
      %v5324 = vld [vmem:[#allocation3 + $0x28] sm:$0xff]
      %v5325 = vld [vmem:[#allocation3 + $0x30] sm:$0xff]
      %v5326 = vld [vmem:[#allocation3 + $0x38] sm:$0xff]
      %v5327 = vld [vmem:[#allocation3 + $0x40] sm:$0xff]
      %v5328 = vld [vmem:[#allocation3 + $0x48] sm:$0xff]
      %v5329 = vld [vmem:[#allocation3 + $0x50] sm:$0xff]
      %v5330 = vld [vmem:[#allocation3 + $0x58] sm:$0xff]
      %v5331 = vld [vmem:[#allocation3 + $0x60] sm:$0xff]
      %v5332 = vld [vmem:[#allocation3 + $0x68] sm:$0xff]
      %v5333 = vld [vmem:[#allocation3 + $0x70] sm:$0xff]
      %v5334 = vld [vmem:[#allocation3 + $0x78] sm:$0xff]
      %v5335 = vld [vmem:[#allocation3 + $0x80] sm:$0xff]
      %v5336 = vld [vmem:[#allocation3 + $0x88] sm:$0xff]
      %v5337 = vld [vmem:[#allocation3 + $0x90] sm:$0xff]
      %v5338 = vld [vmem:[#allocation3 + $0x98] sm:$0xff]
      %v5339 = vld [vmem:[#allocation3 + $0xa0] sm:$0xff]
      %v5340 = vld [vmem:[#allocation3 + $0xa8] sm:$0xff]
      %v5341 = vld [vmem:[#allocation3 + $0xb0] sm:$0xff]
      %v5342 = vld [vmem:[#allocation3 + $0xb8] sm:$0xff]
      %v5343 = vld [vmem:[#allocation3 + $0xc0] sm:$0xff]
      %v5344 = vld [vmem:[#allocation3 + $0xc8] sm:$0xff]
      %v5345 = vld [vmem:[#allocation3 + $0xd0] sm:$0xff]
      %v5346 = vld [vmem:[#allocation3 + $0xd8] sm:$0xff]
      %v5347 = vld [vmem:[#allocation3 + $0xe0] sm:$0xff]
      %v5348 = vld [vmem:[#allocation3 + $0xe8] sm:$0xff]
      %v5349 = vld [vmem:[#allocation3 + $0xf0] sm:$0xff]
      %v5350 = vld [vmem:[#allocation3 + $0xf8] sm:$0xff]
      %v5351 = vld [vmem:[#allocation3 + $0x100] sm:$0xff]
      %v5352 = vld [vmem:[#allocation3 + $0x108] sm:$0xff]
      %v5353 = vld [vmem:[#allocation3 + $0x110] sm:$0xff]
      %v5354 = vld [vmem:[#allocation3 + $0x118] sm:$0xff]
      %v5355 = vadd.f32 %v5319, %v5141
      %v5356 = vadd.f32 %v5320, %v5146
      %v5357 = vadd.f32 %v5321, %v5151
      %v5358 = vadd.f32 %v5322, %v5156
      %v5359 = vadd.f32 %v5323, %v5161
      %v5360 = vadd.f32 %v5324, %v5166
      %v5361 = vadd.f32 %v5325, %v5171
      %v5362 = vadd.f32 %v5326, %v5176
      %v5363 = vadd.f32 %v5327, %v5181
      %v5364 = vadd.f32 %v5328, %v5186
      %v5365 = vadd.f32 %v5329, %v5191
      %v5366 = vadd.f32 %v5330, %v5196
      %v5367 = vadd.f32 %v5331, %v5201
      %v5368 = vadd.f32 %v5332, %v5206
      %v5369 = vadd.f32 %v5333, %v5211
      %v5370 = vadd.f32 %v5334, %v5216
      %v5371 = vadd.f32 %v5335, %v5221
      %v5372 = vadd.f32 %v5336, %v5226
      %v5373 = vadd.f32 %v5337, %v5231
      %v5374 = vadd.f32 %v5338, %v5236
      %v5375 = vadd.f32 %v5339, %v5241
      %v5376 = vadd.f32 %v5340, %v5246
      %v5377 = vadd.f32 %v5341, %v5251
      %v5378 = vadd.f32 %v5342, %v5256
      %v5379 = vadd.f32 %v5343, %v5261
      %v5380 = vadd.f32 %v5344, %v5266
      %v5381 = vadd.f32 %v5345, %v5271
      %v5382 = vadd.f32 %v5346, %v5276
      %v5383 = vadd.f32 %v5347, %v5281
      %v5384 = vadd.f32 %v5348, %v5286
      %v5385 = vadd.f32 %v5349, %v5291
      %v5386 = vadd.f32 %v5350, %v5296
      %v5387 = vadd.f32 %v5351, %v5301
      %v5388 = vadd.f32 %v5352, %v5306
      %v5389 = vadd.f32 %v5353, %v5311
      %v5390 = vadd.f32 %v5354, %v5316
      %5391 = vst [vmem:[#allocation3] sm:$0xff] %v5355
      %5392 = vst [vmem:[#allocation3 + $0x8] sm:$0xff] %v5356
      %5393 = vst [vmem:[#allocation3 + $0x10] sm:$0xff] %v5357
      %5394 = vst [vmem:[#allocation3 + $0x18] sm:$0xff] %v5358
      %5395 = vst [vmem:[#allocation3 + $0x20] sm:$0xff] %v5359
      %5396 = vst [vmem:[#allocation3 + $0x28] sm:$0xff] %v5360
      %5397 = vst [vmem:[#allocation3 + $0x30] sm:$0xff] %v5361
      %5398 = vst [vmem:[#allocation3 + $0x38] sm:$0xff] %v5362
      %5399 = vst [vmem:[#allocation3 + $0x40] sm:$0xff] %v5363
      %5400 = vst [vmem:[#allocation3 + $0x48] sm:$0xff] %v5364
      %5401 = vst [vmem:[#allocation3 + $0x50] sm:$0xff] %v5365
      %5402 = vst [vmem:[#allocation3 + $0x58] sm:$0xff] %v5366
      %5403 = vst [vmem:[#allocation3 + $0x60] sm:$0xff] %v5367
      %5404 = vst [vmem:[#allocation3 + $0x68] sm:$0xff] %v5368
      %5405 = vst [vmem:[#allocation3 + $0x70] sm:$0xff] %v5369
      %5406 = vst [vmem:[#allocation3 + $0x78] sm:$0xff] %v5370
      %5407 = vst [vmem:[#allocation3 + $0x80] sm:$0xff] %v5371
      %5408 = vst [vmem:[#allocation3 + $0x88] sm:$0xff] %v5372
      %5409 = vst [vmem:[#allocation3 + $0x90] sm:$0xff] %v5373
      %5410 = vst [vmem:[#allocation3 + $0x98] sm:$0xff] %v5374
      %5411 = vst [vmem:[#allocation3 + $0xa0] sm:$0xff] %v5375
      %5412 = vst [vmem:[#allocation3 + $0xa8] sm:$0xff] %v5376
      %5413 = vst [vmem:[#allocation3 + $0xb0] sm:$0xff] %v5377
      %5414 = vst [vmem:[#allocation3 + $0xb8] sm:$0xff] %v5378
      %5415 = vst [vmem:[#allocation3 + $0xc0] sm:$0xff] %v5379
      %5416 = vst [vmem:[#allocation3 + $0xc8] sm:$0xff] %v5380
      %5417 = vst [vmem:[#allocation3 + $0xd0] sm:$0xff] %v5381
      %5418 = vst [vmem:[#allocation3 + $0xd8] sm:$0xff] %v5382
      %5419 = vst [vmem:[#allocation3 + $0xe0] sm:$0xff] %v5383
      %5420 = vst [vmem:[#allocation3 + $0xe8] sm:$0xff] %v5384
      %5421 = vst [vmem:[#allocation3 + $0xf0] sm:$0xff] %v5385
      %5422 = vst [vmem:[#allocation3 + $0xf8] sm:$0xff] %v5386
      %5423 = vst [vmem:[#allocation3 + $0x100] sm:$0xff] %v5387
      %5424 = vst [vmem:[#allocation3 + $0x108] sm:$0xff] %v5388
      %5425 = vst [vmem:[#allocation3 + $0x110] sm:$0xff] %v5389
      %5426 = vst [vmem:[#allocation3 + $0x118] sm:$0xff] %v5390
      %v5427 = vld [vmem:[#allocation2 + $0x17] sm:$0xff]
      %v5428 = vld [vmem:[#allocation2 + $0x1f] sm:$0xff]
      %v5429 = vld [vmem:[#allocation2 + $0x27] sm:$0xff]
      %v5430 = vld [vmem:[#allocation2 + $0x2f] sm:$0xff]
      %v5431 = vld [vmem:[#allocation2 + $0x37] sm:$0xff]
      %v5432 = vld [vmem:[#allocation2 + $0x3f] sm:$0xff]
      %v5433 = vld [vmem:[#allocation2 + $0x47] sm:$0xff]
      %v5434 = vld [vmem:[#allocation2 + $0x4f] sm:$0xff]
      %v5435 = vld [vmem:[#allocation2 + $0x57] sm:$0xff]
      %v5436 = vld [vmem:[#allocation2 + $0x5f] sm:$0xff]
      %v5437 = vld [vmem:[#allocation2 + $0x67] sm:$0xff]
      %v5438 = vld [vmem:[#allocation2 + $0x6f] sm:$0xff]
      %v5439 = vld [vmem:[#allocation2 + $0x77] sm:$0xff]
      %v5440 = vld [vmem:[#allocation2 + $0x7f] sm:$0xff]
      %v5441 = vld [vmem:[#allocation2 + $0x87] sm:$0xff]
      %v5442 = vld [vmem:[#allocation2 + $0x8f] sm:$0xff]
      %v5443 = vld [vmem:[#allocation2 + $0x97] sm:$0xff]
      %v5444 = vld [vmem:[#allocation2 + $0x9f] sm:$0xff]
      %v5445 = vld [vmem:[#allocation2 + $0xa7] sm:$0xff]
      %v5446 = vld [vmem:[#allocation2 + $0xaf] sm:$0xff]
      %v5447 = vld [vmem:[#allocation2 + $0xb7] sm:$0xff]
      %v5448 = vld [vmem:[#allocation2 + $0xbf] sm:$0xff]
      %v5449 = vld [vmem:[#allocation2 + $0xc7] sm:$0xff]
      %v5450 = vld [vmem:[#allocation2 + $0xcf] sm:$0xff]
      %v5451 = vld [vmem:[#allocation2 + $0xd7] sm:$0xff]
      %v5452 = vld [vmem:[#allocation2 + $0xdf] sm:$0xff]
      %v5453 = vld [vmem:[#allocation2 + $0xe7] sm:$0xff]
      %v5454 = vld [vmem:[#allocation2 + $0xef] sm:$0xff]
      %v5455 = vld [vmem:[#allocation2 + $0xf7] sm:$0xff]
      %v5456 = vld [vmem:[#allocation2 + $0xff] sm:$0xff]
      %v5457 = vld [vmem:[#allocation2 + $0x107] sm:$0xff]
      %v5458 = vld [vmem:[#allocation2 + $0x10f] sm:$0xff]
      %v5459 = vld [vmem:[#allocation2 + $0x117] sm:$0xff]
      %v5460 = vld [vmem:[#allocation2 + $0x11f] sm:$0xff]
      %v5461 = vld [vmem:[#allocation2 + $0x127] sm:$0xff]
      %v5462 = vld [vmem:[#allocation2 + $0x12f] sm:$0xff]
      %s5463 = scalar_lea.vmem %s3, 384
      %v5464 = vld [vmem:[%s5463] sm:$0xff]
      %v5465 = vld [vmem:[%s5463 + $0x8] sm:$0xff]
      %v5466 = vld [vmem:[%s5463 + $0x10] sm:$0xff]
      %v5467 = vld [vmem:[%s5463 + $0x18] sm:$0xff]
      %v5468 = vld [vmem:[%s5463 + $0x20] sm:$0xff]
      %v5469 = vld [vmem:[%s5463 + $0x28] sm:$0xff]
      %v5470 = vld [vmem:[%s5463 + $0x30] sm:$0xff]
      %v5471 = vld [vmem:[%s5463 + $0x38] sm:$0xff]
      %v5472 = vld [vmem:[%s5463 + $0x40] sm:$0xff]
      %v5473 = vld [vmem:[%s5463 + $0x48] sm:$0xff]
      %v5474 = vld [vmem:[%s5463 + $0x50] sm:$0xff]
      %v5475 = vld [vmem:[%s5463 + $0x58] sm:$0xff]
      %v5476 = vld [vmem:[%s5463 + $0x60] sm:$0xff]
      %v5477 = vld [vmem:[%s5463 + $0x68] sm:$0xff]
      %v5478 = vld [vmem:[%s5463 + $0x70] sm:$0xff]
      %v5479 = vld [vmem:[%s5463 + $0x78] sm:$0xff]
      %5480 = vmatprep.subr.mxu0 0.0
      %5481 = vmatpush1.msra.mxu0 %v5464
      %5482 = vmatprep.subr.mxu0 0.0
      %5483 = vmatpush1.msra.mxu0 %v5465
      %5484 = vmatprep.subr.mxu0 0.0
      %5485 = vmatpush1.msra.mxu0 %v5466
      %5486 = vmatprep.subr.mxu0 0.0
      %5487 = vmatpush1.msra.mxu0 %v5467
      %5488 = vmatprep.subr.mxu0 0.0
      %5489 = vmatpush1.msra.mxu0 %v5468
      %5490 = vmatprep.subr.mxu0 0.0
      %5491 = vmatpush1.msra.mxu0 %v5469
      %5492 = vmatprep.subr.mxu0 0.0
      %5493 = vmatpush1.msra.mxu0 %v5470
      %5494 = vmatprep.subr.mxu0 0.0
      %5495 = vmatpush1.msra.mxu0 %v5471
      %5496 = vmatprep.subr.mxu0 0.0
      %5497 = vmatpush1.msra.mxu0 %v5472
      %5498 = vmatprep.subr.mxu0 0.0
      %5499 = vmatpush1.msra.mxu0 %v5473
      %5500 = vmatprep.subr.mxu0 0.0
      %5501 = vmatpush1.msra.mxu0 %v5474
      %5502 = vmatprep.subr.mxu0 0.0
      %5503 = vmatpush1.msra.mxu0 %v5475
      %5504 = vmatprep.subr.mxu0 0.0
      %5505 = vmatpush1.msra.mxu0 %v5476
      %5506 = vmatprep.subr.mxu0 0.0
      %5507 = vmatpush1.msra.mxu0 %v5477
      %5508 = vmatprep.subr.mxu0 0.0
      %5509 = vmatpush1.msra.mxu0 %v5478
      %5510 = vmatprep.subr.mxu0 0.0
      %5511 = vmatpush1.msra.mxu0 %v5479
      %5512 = vmatprep.subr.mxu0 0.0
      %5513 = vmatpush1.msra.mxu0 0.0
      %5514 = vmatprep.subr.mxu0 0.0
      %5515 = vmatpush1.msra.mxu0 0.0
      %5516 = vmatprep.subr.mxu0 0.0
      %5517 = vmatpush1.msra.mxu0 0.0
      %5518 = vmatprep.subr.mxu0 0.0
      %5519 = vmatpush1.msra.mxu0 0.0
      %5520 = vmatprep.subr.mxu0 0.0
      %5521 = vmatpush1.msra.mxu0 0.0
      %5522 = vmatprep.subr.mxu0 0.0
      %5523 = vmatpush1.msra.mxu0 0.0
      %5524 = vmatprep.subr.mxu0 0.0
      %5525 = vmatpush1.msra.mxu0 0.0
      %5526 = vmatprep.subr.mxu0 0.0
      %5527 = vmatpush1.msra.mxu0 0.0
      %5528 = vmatprep.subr.mxu0 0.0
      %5529 = vmatpush1.msra.mxu0 0.0
      %5530 = vmatprep.subr.mxu0 0.0
      %5531 = vmatpush1.msra.mxu0 0.0
      %5532 = vmatprep.subr.mxu0 0.0
      %5533 = vmatpush1.msra.mxu0 0.0
      %5534 = vmatprep.subr.mxu0 0.0
      %5535 = vmatpush1.msra.mxu0 0.0
      %5536 = vmatprep.subr.mxu0 0.0
      %5537 = vmatpush1.msra.mxu0 0.0
      %5538 = vmatprep.subr.mxu0 0.0
      %5539 = vmatpush1.msra.mxu0 0.0
      %5540 = vmatprep.subr.mxu0 0.0
      %5541 = vmatpush1.msra.mxu0 0.0
      %5542 = vmatprep.subr.mxu0 0.0
      %5543 = vmatpush1.msra.mxu0 0.0
      %5544 = vmatprep.mubr.f32.mxu0 0.0
      %5545 = vmatmul.mubr.f32.gmra.mrb[0].mxu0 %v5427
      %v5546 = vpop.f32.mrb[0].mxu0
      %v5547 = vadd.f32 0.0, %v5546
      %v5548 = vpop.f32.mrb[0].mxu0
      %5549 = vmatprep.mubr.f32.mxu0 0.0
      %5550 = vmatmul.mubr.f32.gmra.mrb[0].mxu0 %v5428
      %v5551 = vpop.f32.mrb[0].mxu0
      %v5552 = vadd.f32 0.0, %v5551
      %v5553 = vpop.f32.mrb[0].mxu0
      %5554 = vmatprep.mubr.f32.mxu0 0.0
      %5555 = vmatmul.mubr.f32.gmra.mrb[0].mxu0 %v5429
      %v5556 = vpop.f32.mrb[0].mxu0
      %v5557 = vadd.f32 0.0, %v5556
      %v5558 = vpop.f32.mrb[0].mxu0
      %5559 = vmatprep.mubr.f32.mxu0 0.0
      %5560 = vmatmul.mubr.f32.gmra.mrb[0].mxu0 %v5430
      %v5561 = vpop.f32.mrb[0].mxu0
      %v5562 = vadd.f32 0.0, %v5561
      %v5563 = vpop.f32.mrb[0].mxu0
      %5564 = vmatprep.mubr.f32.mxu0 0.0
      %5565 = vmatmul.mubr.f32.gmra.mrb[0].mxu0 %v5431
      %v5566 = vpop.f32.mrb[0].mxu0
      %v5567 = vadd.f32 0.0, %v5566
      %v5568 = vpop.f32.mrb[0].mxu0
      %5569 = vmatprep.mubr.f32.mxu0 0.0
      %5570 = vmatmul.mubr.f32.gmra.mrb[0].mxu0 %v5432
      %v5571 = vpop.f32.mrb[0].mxu0
      %v5572 = vadd.f32 0.0, %v5571
      %v5573 = vpop.f32.mrb[0].mxu0
      %5574 = vmatprep.mubr.f32.mxu0 0.0
      %5575 = vmatmul.mubr.f32.gmra.mrb[0].mxu0 %v5433
      %v5576 = vpop.f32.mrb[0].mxu0
      %v5577 = vadd.f32 0.0, %v5576
      %v5578 = vpop.f32.mrb[0].mxu0
      %5579 = vmatprep.mubr.f32.mxu0 0.0
      %5580 = vmatmul.mubr.f32.gmra.mrb[0].mxu0 %v5434
      %v5581 = vpop.f32.mrb[0].mxu0
      %v5582 = vadd.f32 0.0, %v5581
      %v5583 = vpop.f32.mrb[0].mxu0
      %5584 = vmatprep.mubr.f32.mxu0 0.0
      %5585 = vmatmul.mubr.f32.gmra.mrb[0].mxu0 %v5435
      %v5586 = vpop.f32.mrb[0].mxu0
      %v5587 = vadd.f32 0.0, %v5586
      %v5588 = vpop.f32.mrb[0].mxu0
      %5589 = vmatprep.mubr.f32.mxu0 0.0
      %5590 = vmatmul.mubr.f32.gmra.mrb[0].mxu0 %v5436
      %v5591 = vpop.f32.mrb[0].mxu0
      %v5592 = vadd.f32 0.0, %v5591
      %v5593 = vpop.f32.mrb[0].mxu0
      %5594 = vmatprep.mubr.f32.mxu0 0.0
      %5595 = vmatmul.mubr.f32.gmra.mrb[0].mxu0 %v5437
      %v5596 = vpop.f32.mrb[0].mxu0
      %v5597 = vadd.f32 0.0, %v5596
      %v5598 = vpop.f32.mrb[0].mxu0
      %5599 = vmatprep.mubr.f32.mxu0 0.0
      %5600 = vmatmul.mubr.f32.gmra.mrb[0].mxu0 %v5438
      %v5601 = vpop.f32.mrb[0].mxu0
      %v5602 = vadd.f32 0.0, %v5601
      %v5603 = vpop.f32.mrb[0].mxu0
      %5604 = vmatprep.mubr.f32.mxu0 0.0
      %5605 = vmatmul.mubr.f32.gmra.mrb[0].mxu0 %v5439
      %v5606 = vpop.f32.mrb[0].mxu0
      %v5607 = vadd.f32 0.0, %v5606
      %v5608 = vpop.f32.mrb[0].mxu0
      %5609 = vmatprep.mubr.f32.mxu0 0.0
      %5610 = vmatmul.mubr.f32.gmra.mrb[0].mxu0 %v5440
      %v5611 = vpop.f32.mrb[0].mxu0
      %v5612 = vadd.f32 0.0, %v5611
      %v5613 = vpop.f32.mrb[0].mxu0
      %5614 = vmatprep.mubr.f32.mxu0 0.0
      %5615 = vmatmul.mubr.f32.gmra.mrb[0].mxu0 %v5441
      %v5616 = vpop.f32.mrb[0].mxu0
      %v5617 = vadd.f32 0.0, %v5616
      %v5618 = vpop.f32.mrb[0].mxu0
      %5619 = vmatprep.mubr.f32.mxu0 0.0
      %5620 = vmatmul.mubr.f32.gmra.mrb[0].mxu0 %v5442
      %v5621 = vpop.f32.mrb[0].mxu0
      %v5622 = vadd.f32 0.0, %v5621
      %v5623 = vpop.f32.mrb[0].mxu0
      %5624 = vmatprep.mubr.f32.mxu0 0.0
      %5625 = vmatmul.mubr.f32.gmra.mrb[0].mxu0 %v5443
      %v5626 = vpop.f32.mrb[0].mxu0
      %v5627 = vadd.f32 0.0, %v5626
      %v5628 = vpop.f32.mrb[0].mxu0
      %5629 = vmatprep.mubr.f32.mxu0 0.0
      %5630 = vmatmul.mubr.f32.gmra.mrb[0].mxu0 %v5444
      %v5631 = vpop.f32.mrb[0].mxu0
      %v5632 = vadd.f32 0.0, %v5631
      %v5633 = vpop.f32.mrb[0].mxu0
      %5634 = vmatprep.mubr.f32.mxu0 0.0
      %5635 = vmatmul.mubr.f32.gmra.mrb[0].mxu0 %v5445
      %v5636 = vpop.f32.mrb[0].mxu0
      %v5637 = vadd.f32 0.0, %v5636
      %v5638 = vpop.f32.mrb[0].mxu0
      %5639 = vmatprep.mubr.f32.mxu0 0.0
      %5640 = vmatmul.mubr.f32.gmra.mrb[0].mxu0 %v5446
      %v5641 = vpop.f32.mrb[0].mxu0
      %v5642 = vadd.f32 0.0, %v5641
      %v5643 = vpop.f32.mrb[0].mxu0
      %5644 = vmatprep.mubr.f32.mxu0 0.0
      %5645 = vmatmul.mubr.f32.gmra.mrb[0].mxu0 %v5447
      %v5646 = vpop.f32.mrb[0].mxu0
      %v5647 = vadd.f32 0.0, %v5646
      %v5648 = vpop.f32.mrb[0].mxu0
      %5649 = vmatprep.mubr.f32.mxu0 0.0
      %5650 = vmatmul.mubr.f32.gmra.mrb[0].mxu0 %v5448
      %v5651 = vpop.f32.mrb[0].mxu0
      %v5652 = vadd.f32 0.0, %v5651
      %v5653 = vpop.f32.mrb[0].mxu0
      %5654 = vmatprep.mubr.f32.mxu0 0.0
      %5655 = vmatmul.mubr.f32.gmra.mrb[0].mxu0 %v5449
      %v5656 = vpop.f32.mrb[0].mxu0
      %v5657 = vadd.f32 0.0, %v5656
      %v5658 = vpop.f32.mrb[0].mxu0
      %5659 = vmatprep.mubr.f32.mxu0 0.0
      %5660 = vmatmul.mubr.f32.gmra.mrb[0].mxu0 %v5450
      %v5661 = vpop.f32.mrb[0].mxu0
      %v5662 = vadd.f32 0.0, %v5661
      %v5663 = vpop.f32.mrb[0].mxu0
      %5664 = vmatprep.mubr.f32.mxu0 0.0
      %5665 = vmatmul.mubr.f32.gmra.mrb[0].mxu0 %v5451
      %v5666 = vpop.f32.mrb[0].mxu0
      %v5667 = vadd.f32 0.0, %v5666
      %v5668 = vpop.f32.mrb[0].mxu0
      %5669 = vmatprep.mubr.f32.mxu0 0.0
      %5670 = vmatmul.mubr.f32.gmra.mrb[0].mxu0 %v5452
      %v5671 = vpop.f32.mrb[0].mxu0
      %v5672 = vadd.f32 0.0, %v5671
      %v5673 = vpop.f32.mrb[0].mxu0
      %5674 = vmatprep.mubr.f32.mxu0 0.0
      %5675 = vmatmul.mubr.f32.gmra.mrb[0].mxu0 %v5453
      %v5676 = vpop.f32.mrb[0].mxu0
      %v5677 = vadd.f32 0.0, %v5676
      %v5678 = vpop.f32.mrb[0].mxu0
      %5679 = vmatprep.mubr.f32.mxu0 0.0
      %5680 = vmatmul.mubr.f32.gmra.mrb[0].mxu0 %v5454
      %v5681 = vpop.f32.mrb[0].mxu0
      %v5682 = vadd.f32 0.0, %v5681
      %v5683 = vpop.f32.mrb[0].mxu0
      %5684 = vmatprep.mubr.f32.mxu0 0.0
      %5685 = vmatmul.mubr.f32.gmra.mrb[0].mxu0 %v5455
      %v5686 = vpop.f32.mrb[0].mxu0
      %v5687 = vadd.f32 0.0, %v5686
      %v5688 = vpop.f32.mrb[0].mxu0
      %5689 = vmatprep.mubr.f32.mxu0 0.0
      %5690 = vmatmul.mubr.f32.gmra.mrb[0].mxu0 %v5456
      %v5691 = vpop.f32.mrb[0].mxu0
      %v5692 = vadd.f32 0.0, %v5691
      %v5693 = vpop.f32.mrb[0].mxu0
      %5694 = vmatprep.mubr.f32.mxu0 0.0
      %5695 = vmatmul.mubr.f32.gmra.mrb[0].mxu0 %v5457
      %v5696 = vpop.f32.mrb[0].mxu0
      %v5697 = vadd.f32 0.0, %v5696
      %v5698 = vpop.f32.mrb[0].mxu0
      %5699 = vmatprep.mubr.f32.mxu0 0.0
      %5700 = vmatmul.mubr.f32.gmra.mrb[0].mxu0 %v5458
      %v5701 = vpop.f32.mrb[0].mxu0
      %v5702 = vadd.f32 0.0, %v5701
      %v5703 = vpop.f32.mrb[0].mxu0
      %5704 = vmatprep.mubr.f32.mxu0 0.0
      %5705 = vmatmul.mubr.f32.gmra.mrb[0].mxu0 %v5459
      %v5706 = vpop.f32.mrb[0].mxu0
      %v5707 = vadd.f32 0.0, %v5706
      %v5708 = vpop.f32.mrb[0].mxu0
      %5709 = vmatprep.mubr.f32.mxu0 0.0
      %5710 = vmatmul.mubr.f32.gmra.mrb[0].mxu0 %v5460
      %v5711 = vpop.f32.mrb[0].mxu0
      %v5712 = vadd.f32 0.0, %v5711
      %v5713 = vpop.f32.mrb[0].mxu0
      %5714 = vmatprep.mubr.f32.mxu0 0.0
      %5715 = vmatmul.mubr.f32.gmra.mrb[0].mxu0 %v5461
      %v5716 = vpop.f32.mrb[0].mxu0
      %v5717 = vadd.f32 0.0, %v5716
      %v5718 = vpop.f32.mrb[0].mxu0
      %5719 = vmatprep.mubr.f32.mxu0 0.0
      %5720 = vmatmul.mubr.f32.gmra.mrb[0].mxu0 %v5462
      %v5721 = vpop.f32.mrb[0].mxu0
      %v5722 = vadd.f32 0.0, %v5721
      %v5723 = vpop.f32.mrb[0].mxu0
      %5724 = vdwg.mxu0
      %v5725 = vld [vmem:[#allocation3] sm:$0xff]
      %v5726 = vld [vmem:[#allocation3 + $0x8] sm:$0xff]
      %v5727 = vld [vmem:[#allocation3 + $0x10] sm:$0xff]
      %v5728 = vld [vmem:[#allocation3 + $0x18] sm:$0xff]
      %v5729 = vld [vmem:[#allocation3 + $0x20] sm:$0xff]
      %v5730 = vld [vmem:[#allocation3 + $0x28] sm:$0xff]
      %v5731 = vld [vmem:[#allocation3 + $0x30] sm:$0xff]
      %v5732 = vld [vmem:[#allocation3 + $0x38] sm:$0xff]
      %v5733 = vld [vmem:[#allocation3 + $0x40] sm:$0xff]
      %v5734 = vld [vmem:[#allocation3 + $0x48] sm:$0xff]
      %v5735 = vld [vmem:[#allocation3 + $0x50] sm:$0xff]
      %v5736 = vld [vmem:[#allocation3 + $0x58] sm:$0xff]
      %v5737 = vld [vmem:[#allocation3 + $0x60] sm:$0xff]
      %v5738 = vld [vmem:[#allocation3 + $0x68] sm:$0xff]
      %v5739 = vld [vmem:[#allocation3 + $0x70] sm:$0xff]
      %v5740 = vld [vmem:[#allocation3 + $0x78] sm:$0xff]
      %v5741 = vld [vmem:[#allocation3 + $0x80] sm:$0xff]
      %v5742 = vld [vmem:[#allocation3 + $0x88] sm:$0xff]
      %v5743 = vld [vmem:[#allocation3 + $0x90] sm:$0xff]
      %v5744 = vld [vmem:[#allocation3 + $0x98] sm:$0xff]
      %v5745 = vld [vmem:[#allocation3 + $0xa0] sm:$0xff]
      %v5746 = vld [vmem:[#allocation3 + $0xa8] sm:$0xff]
      %v5747 = vld [vmem:[#allocation3 + $0xb0] sm:$0xff]
      %v5748 = vld [vmem:[#allocation3 + $0xb8] sm:$0xff]
      %v5749 = vld [vmem:[#allocation3 + $0xc0] sm:$0xff]
      %v5750 = vld [vmem:[#allocation3 + $0xc8] sm:$0xff]
      %v5751 = vld [vmem:[#allocation3 + $0xd0] sm:$0xff]
      %v5752 = vld [vmem:[#allocation3 + $0xd8] sm:$0xff]
      %v5753 = vld [vmem:[#allocation3 + $0xe0] sm:$0xff]
      %v5754 = vld [vmem:[#allocation3 + $0xe8] sm:$0xff]
      %v5755 = vld [vmem:[#allocation3 + $0xf0] sm:$0xff]
      %v5756 = vld [vmem:[#allocation3 + $0xf8] sm:$0xff]
      %v5757 = vld [vmem:[#allocation3 + $0x100] sm:$0xff]
      %v5758 = vld [vmem:[#allocation3 + $0x108] sm:$0xff]
      %v5759 = vld [vmem:[#allocation3 + $0x110] sm:$0xff]
      %v5760 = vld [vmem:[#allocation3 + $0x118] sm:$0xff]
      %v5761 = vadd.f32 %v5725, %v5547
      %v5762 = vadd.f32 %v5726, %v5552
      %v5763 = vadd.f32 %v5727, %v5557
      %v5764 = vadd.f32 %v5728, %v5562
      %v5765 = vadd.f32 %v5729, %v5567
      %v5766 = vadd.f32 %v5730, %v5572
      %v5767 = vadd.f32 %v5731, %v5577
      %v5768 = vadd.f32 %v5732, %v5582
      %v5769 = vadd.f32 %v5733, %v5587
      %v5770 = vadd.f32 %v5734, %v5592
      %v5771 = vadd.f32 %v5735, %v5597
      %v5772 = vadd.f32 %v5736, %v5602
      %v5773 = vadd.f32 %v5737, %v5607
      %v5774 = vadd.f32 %v5738, %v5612
      %v5775 = vadd.f32 %v5739, %v5617
      %v5776 = vadd.f32 %v5740, %v5622
      %v5777 = vadd.f32 %v5741, %v5627
      %v5778 = vadd.f32 %v5742, %v5632
      %v5779 = vadd.f32 %v5743, %v5637
      %v5780 = vadd.f32 %v5744, %v5642
      %v5781 = vadd.f32 %v5745, %v5647
      %v5782 = vadd.f32 %v5746, %v5652
      %v5783 = vadd.f32 %v5747, %v5657
      %v5784 = vadd.f32 %v5748, %v5662
      %v5785 = vadd.f32 %v5749, %v5667
      %v5786 = vadd.f32 %v5750, %v5672
      %v5787 = vadd.f32 %v5751, %v5677
      %v5788 = vadd.f32 %v5752, %v5682
      %v5789 = vadd.f32 %v5753, %v5687
      %v5790 = vadd.f32 %v5754, %v5692
      %v5791 = vadd.f32 %v5755, %v5697
      %v5792 = vadd.f32 %v5756, %v5702
      %v5793 = vadd.f32 %v5757, %v5707
      %v5794 = vadd.f32 %v5758, %v5712
      %v5795 = vadd.f32 %v5759, %v5717
      %v5796 = vadd.f32 %v5760, %v5722
      %5797 = vst [vmem:[#allocation3] sm:$0xff] %v5761
      %5798 = vst [vmem:[#allocation3 + $0x8] sm:$0xff] %v5762
      %5799 = vst [vmem:[#allocation3 + $0x10] sm:$0xff] %v5763
      %5800 = vst [vmem:[#allocation3 + $0x18] sm:$0xff] %v5764
      %5801 = vst [vmem:[#allocation3 + $0x20] sm:$0xff] %v5765
      %5802 = vst [vmem:[#allocation3 + $0x28] sm:$0xff] %v5766
      %5803 = vst [vmem:[#allocation3 + $0x30] sm:$0xff] %v5767
      %5804 = vst [vmem:[#allocation3 + $0x38] sm:$0xff] %v5768
      %5805 = vst [vmem:[#allocation3 + $0x40] sm:$0xff] %v5769
      %5806 = vst [vmem:[#allocation3 + $0x48] sm:$0xff] %v5770
      %5807 = vst [vmem:[#allocation3 + $0x50] sm:$0xff] %v5771
      %5808 = vst [vmem:[#allocation3 + $0x58] sm:$0xff] %v5772
      %5809 = vst [vmem:[#allocation3 + $0x60] sm:$0xff] %v5773
      %5810 = vst [vmem:[#allocation3 + $0x68] sm:$0xff] %v5774
      %5811 = vst [vmem:[#allocation3 + $0x70] sm:$0xff] %v5775
      %5812 = vst [vmem:[#allocation3 + $0x78] sm:$0xff] %v5776
      %5813 = vst [vmem:[#allocation3 + $0x80] sm:$0xff] %v5777
      %5814 = vst [vmem:[#allocation3 + $0x88] sm:$0xff] %v5778
      %5815 = vst [vmem:[#allocation3 + $0x90] sm:$0xff] %v5779
      %5816 = vst [vmem:[#allocation3 + $0x98] sm:$0xff] %v5780
      %5817 = vst [vmem:[#allocation3 + $0xa0] sm:$0xff] %v5781
      %5818 = vst [vmem:[#allocation3 + $0xa8] sm:$0xff] %v5782
      %5819 = vst [vmem:[#allocation3 + $0xb0] sm:$0xff] %v5783
      %5820 = vst [vmem:[#allocation3 + $0xb8] sm:$0xff] %v5784
      %5821 = vst [vmem:[#allocation3 + $0xc0] sm:$0xff] %v5785
      %5822 = vst [vmem:[#allocation3 + $0xc8] sm:$0xff] %v5786
      %5823 = vst [vmem:[#allocation3 + $0xd0] sm:$0xff] %v5787
      %5824 = vst [vmem:[#allocation3 + $0xd8] sm:$0xff] %v5788
      %5825 = vst [vmem:[#allocation3 + $0xe0] sm:$0xff] %v5789
      %5826 = vst [vmem:[#allocation3 + $0xe8] sm:$0xff] %v5790
      %5827 = vst [vmem:[#allocation3 + $0xf0] sm:$0xff] %v5791
      %5828 = vst [vmem:[#allocation3 + $0xf8] sm:$0xff] %v5792
      %5829 = vst [vmem:[#allocation3 + $0x100] sm:$0xff] %v5793
      %5830 = vst [vmem:[#allocation3 + $0x108] sm:$0xff] %v5794
      %5831 = vst [vmem:[#allocation3 + $0x110] sm:$0xff] %v5795
      %5832 = vst [vmem:[#allocation3 + $0x118] sm:$0xff] %v5796
      %v5833 = vld [vmem:[#allocation2 + $0x18] sm:$0xff]
      %v5834 = vld [vmem:[#allocation2 + $0x20] sm:$0xff]
      %v5835 = vld [vmem:[#allocation2 + $0x28] sm:$0xff]
      %v5836 = vld [vmem:[#allocation2 + $0x30] sm:$0xff]
      %v5837 = vld [vmem:[#allocation2 + $0x38] sm:$0xff]
      %v5838 = vld [vmem:[#allocation2 + $0x40] sm:$0xff]
      %v5839 = vld [vmem:[#allocation2 + $0x48] sm:$0xff]
      %v5840 = vld [vmem:[#allocation2 + $0x50] sm:$0xff]
      %v5841 = vld [vmem:[#allocation2 + $0x58] sm:$0xff]
      %v5842 = vld [vmem:[#allocation2 + $0x60] sm:$0xff]
      %v5843 = vld [vmem:[#allocation2 + $0x68] sm:$0xff]
      %v5844 = vld [vmem:[#allocation2 + $0x70] sm:$0xff]
      %v5845 = vld [vmem:[#allocation2 + $0x78] sm:$0xff]
      %v5846 = vld [vmem:[#allocation2 + $0x80] sm:$0xff]
      %v5847 = vld [vmem:[#allocation2 + $0x88] sm:$0xff]
      %v5848 = vld [vmem:[#allocation2 + $0x90] sm:$0xff]
      %v5849 = vld [vmem:[#allocation2 + $0x98] sm:$0xff]
      %v5850 = vld [vmem:[#allocation2 + $0xa0] sm:$0xff]
      %v5851 = vld [vmem:[#allocation2 + $0xa8] sm:$0xff]
      %v5852 = vld [vmem:[#allocation2 + $0xb0] sm:$0xff]
      %v5853 = vld [vmem:[#allocation2 + $0xb8] sm:$0xff]
      %v5854 = vld [vmem:[#allocation2 + $0xc0] sm:$0xff]
      %v5855 = vld [vmem:[#allocation2 + $0xc8] sm:$0xff]
      %v5856 = vld [vmem:[#allocation2 + $0xd0] sm:$0xff]
      %v5857 = vld [vmem:[#allocation2 + $0xd8] sm:$0xff]
      %v5858 = vld [vmem:[#allocation2 + $0xe0] sm:$0xff]
      %v5859 = vld [vmem:[#allocation2 + $0xe8] sm:$0xff]
      %v5860 = vld [vmem:[#allocation2 + $0xf0] sm:$0xff]
      %v5861 = vld [vmem:[#allocation2 + $0xf8] sm:$0xff]
      %v5862 = vld [vmem:[#allocation2 + $0x100] sm:$0xff]
      %v5863 = vld [vmem:[#allocation2 + $0x108] sm:$0xff]
      %v5864 = vld [vmem:[#allocation2 + $0x110] sm:$0xff]
      %v5865 = vld [vmem:[#allocation2 + $0x118] sm:$0xff]
      %v5866 = vld [vmem:[#allocation2 + $0x120] sm:$0xff]
      %v5867 = vld [vmem:[#allocation2 + $0x128] sm:$0xff]
      %v5868 = vld [vmem:[#allocation2 + $0x130] sm:$0xff]
      %s5869 = scalar_lea.vmem %s3, 512
      %v5870 = vld [vmem:[%s5869] sm:$0xff]
      %v5871 = vld [vmem:[%s5869 + $0x8] sm:$0xff]
      %v5872 = vld [vmem:[%s5869 + $0x10] sm:$0xff]
      %v5873 = vld [vmem:[%s5869 + $0x18] sm:$0xff]
      %v5874 = vld [vmem:[%s5869 + $0x20] sm:$0xff]
      %v5875 = vld [vmem:[%s5869 + $0x28] sm:$0xff]
      %v5876 = vld [vmem:[%s5869 + $0x30] sm:$0xff]
      %v5877 = vld [vmem:[%s5869 + $0x38] sm:$0xff]
      %v5878 = vld [vmem:[%s5869 + $0x40] sm:$0xff]
      %v5879 = vld [vmem:[%s5869 + $0x48] sm:$0xff]
      %v5880 = vld [vmem:[%s5869 + $0x50] sm:$0xff]
      %v5881 = vld [vmem:[%s5869 + $0x58] sm:$0xff]
      %v5882 = vld [vmem:[%s5869 + $0x60] sm:$0xff]
      %v5883 = vld [vmem:[%s5869 + $0x68] sm:$0xff]
      %v5884 = vld [vmem:[%s5869 + $0x70] sm:$0xff]
      %v5885 = vld [vmem:[%s5869 + $0x78] sm:$0xff]
      %5886 = vmatprep.subr.mxu0 0.0
      %5887 = vmatpush1.msra.mxu0 %v5870
      %5888 = vmatprep.subr.mxu0 0.0
      %5889 = vmatpush1.msra.mxu0 %v5871
      %5890 = vmatprep.subr.mxu0 0.0
      %5891 = vmatpush1.msra.mxu0 %v5872
      %5892 = vmatprep.subr.mxu0 0.0
      %5893 = vmatpush1.msra.mxu0 %v5873
      %5894 = vmatprep.subr.mxu0 0.0
      %5895 = vmatpush1.msra.mxu0 %v5874
      %5896 = vmatprep.subr.mxu0 0.0
      %5897 = vmatpush1.msra.mxu0 %v5875
      %5898 = vmatprep.subr.mxu0 0.0
      %5899 = vmatpush1.msra.mxu0 %v5876
      %5900 = vmatprep.subr.mxu0 0.0
      %5901 = vmatpush1.msra.mxu0 %v5877
      %5902 = vmatprep.subr.mxu0 0.0
      %5903 = vmatpush1.msra.mxu0 %v5878
      %5904 = vmatprep.subr.mxu0 0.0
      %5905 = vmatpush1.msra.mxu0 %v5879
      %5906 = vmatprep.subr.mxu0 0.0
      %5907 = vmatpush1.msra.mxu0 %v5880
      %5908 = vmatprep.subr.mxu0 0.0
      %5909 = vmatpush1.msra.mxu0 %v5881
      %5910 = vmatprep.subr.mxu0 0.0
      %5911 = vmatpush1.msra.mxu0 %v5882
      %5912 = vmatprep.subr.mxu0 0.0
      %5913 = vmatpush1.msra.mxu0 %v5883
      %5914 = vmatprep.subr.mxu0 0.0
      %5915 = vmatpush1.msra.mxu0 %v5884
      %5916 = vmatprep.subr.mxu0 0.0
      %5917 = vmatpush1.msra.mxu0 %v5885
      %5918 = vmatprep.subr.mxu0 0.0
      %5919 = vmatpush1.msra.mxu0 0.0
      %5920 = vmatprep.subr.mxu0 0.0
      %5921 = vmatpush1.msra.mxu0 0.0
      %5922 = vmatprep.subr.mxu0 0.0
      %5923 = vmatpush1.msra.mxu0 0.0
      %5924 = vmatprep.subr.mxu0 0.0
      %5925 = vmatpush1.msra.mxu0 0.0
      %5926 = vmatprep.subr.mxu0 0.0
      %5927 = vmatpush1.msra.mxu0 0.0
      %5928 = vmatprep.subr.mxu0 0.0
      %5929 = vmatpush1.msra.mxu0 0.0
      %5930 = vmatprep.subr.mxu0 0.0
      %5931 = vmatpush1.msra.mxu0 0.0
      %5932 = vmatprep.subr.mxu0 0.0
      %5933 = vmatpush1.msra.mxu0 0.0
      %5934 = vmatprep.subr.mxu0 0.0
      %5935 = vmatpush1.msra.mxu0 0.0
      %5936 = vmatprep.subr.mxu0 0.0
      %5937 = vmatpush1.msra.mxu0 0.0
      %5938 = vmatprep.subr.mxu0 0.0
      %5939 = vmatpush1.msra.mxu0 0.0
      %5940 = vmatprep.subr.mxu0 0.0
      %5941 = vmatpush1.msra.mxu0 0.0
      %5942 = vmatprep.subr.mxu0 0.0
      %5943 = vmatpush1.msra.mxu0 0.0
      %5944 = vmatprep.subr.mxu0 0.0
      %5945 = vmatpush1.msra.mxu0 0.0
      %5946 = vmatprep.subr.mxu0 0.0
      %5947 = vmatpush1.msra.mxu0 0.0
      %5948 = vmatprep.subr.mxu0 0.0
      %5949 = vmatpush1.msra.mxu0 0.0
      %5950 = vmatprep.mubr.f32.mxu0 0.0
      %5951 = vmatmul.mubr.f32.gmra.mrb[0].mxu0 %v5833
      %v5952 = vpop.f32.mrb[0].mxu0
      %v5953 = vadd.f32 0.0, %v5952
      %v5954 = vpop.f32.mrb[0].mxu0
      %5955 = vmatprep.mubr.f32.mxu0 0.0
      %5956 = vmatmul.mubr.f32.gmra.mrb[0].mxu0 %v5834
      %v5957 = vpop.f32.mrb[0].mxu0
      %v5958 = vadd.f32 0.0, %v5957
      %v5959 = vpop.f32.mrb[0].mxu0
      %5960 = vmatprep.mubr.f32.mxu0 0.0
      %5961 = vmatmul.mubr.f32.gmra.mrb[0].mxu0 %v5835
      %v5962 = vpop.f32.mrb[0].mxu0
      %v5963 = vadd.f32 0.0, %v5962
      %v5964 = vpop.f32.mrb[0].mxu0
      %5965 = vmatprep.mubr.f32.mxu0 0.0
      %5966 = vmatmul.mubr.f32.gmra.mrb[0].mxu0 %v5836
      %v5967 = vpop.f32.mrb[0].mxu0
      %v5968 = vadd.f32 0.0, %v5967
      %v5969 = vpop.f32.mrb[0].mxu0
      %5970 = vmatprep.mubr.f32.mxu0 0.0
      %5971 = vmatmul.mubr.f32.gmra.mrb[0].mxu0 %v5837
      %v5972 = vpop.f32.mrb[0].mxu0
      %v5973 = vadd.f32 0.0, %v5972
      %v5974 = vpop.f32.mrb[0].mxu0
      %5975 = vmatprep.mubr.f32.mxu0 0.0
      %5976 = vmatmul.mubr.f32.gmra.mrb[0].mxu0 %v5838
      %v5977 = vpop.f32.mrb[0].mxu0
      %v5978 = vadd.f32 0.0, %v5977
      %v5979 = vpop.f32.mrb[0].mxu0
      %5980 = vmatprep.mubr.f32.mxu0 0.0
      %5981 = vmatmul.mubr.f32.gmra.mrb[0].mxu0 %v5839
      %v5982 = vpop.f32.mrb[0].mxu0
      %v5983 = vadd.f32 0.0, %v5982
      %v5984 = vpop.f32.mrb[0].mxu0
      %5985 = vmatprep.mubr.f32.mxu0 0.0
      %5986 = vmatmul.mubr.f32.gmra.mrb[0].mxu0 %v5840
      %v5987 = vpop.f32.mrb[0].mxu0
      %v5988 = vadd.f32 0.0, %v5987
      %v5989 = vpop.f32.mrb[0].mxu0
      %5990 = vmatprep.mubr.f32.mxu0 0.0
      %5991 = vmatmul.mubr.f32.gmra.mrb[0].mxu0 %v5841
      %v5992 = vpop.f32.mrb[0].mxu0
      %v5993 = vadd.f32 0.0, %v5992
      %v5994 = vpop.f32.mrb[0].mxu0
      %5995 = vmatprep.mubr.f32.mxu0 0.0
      %5996 = vmatmul.mubr.f32.gmra.mrb[0].mxu0 %v5842
      %v5997 = vpop.f32.mrb[0].mxu0
      %v5998 = vadd.f32 0.0, %v5997
      %v5999 = vpop.f32.mrb[0].mxu0
      %6000 = vmatprep.mubr.f32.mxu0 0.0
      %6001 = vmatmul.mubr.f32.gmra.mrb[0].mxu0 %v5843
      %v6002 = vpop.f32.mrb[0].mxu0
      %v6003 = vadd.f32 0.0, %v6002
      %v6004 = vpop.f32.mrb[0].mxu0
      %6005 = vmatprep.mubr.f32.mxu0 0.0
      %6006 = vmatmul.mubr.f32.gmra.mrb[0].mxu0 %v5844
      %v6007 = vpop.f32.mrb[0].mxu0
      %v6008 = vadd.f32 0.0, %v6007
      %v6009 = vpop.f32.mrb[0].mxu0
      %6010 = vmatprep.mubr.f32.mxu0 0.0
      %6011 = vmatmul.mubr.f32.gmra.mrb[0].mxu0 %v5845
      %v6012 = vpop.f32.mrb[0].mxu0
      %v6013 = vadd.f32 0.0, %v6012
      %v6014 = vpop.f32.mrb[0].mxu0
      %6015 = vmatprep.mubr.f32.mxu0 0.0
      %6016 = vmatmul.mubr.f32.gmra.mrb[0].mxu0 %v5846
      %v6017 = vpop.f32.mrb[0].mxu0
      %v6018 = vadd.f32 0.0, %v6017
      %v6019 = vpop.f32.mrb[0].mxu0
      %6020 = vmatprep.mubr.f32.mxu0 0.0
      %6021 = vmatmul.mubr.f32.gmra.mrb[0].mxu0 %v5847
      %v6022 = vpop.f32.mrb[0].mxu0
      %v6023 = vadd.f32 0.0, %v6022
      %v6024 = vpop.f32.mrb[0].mxu0
      %6025 = vmatprep.mubr.f32.mxu0 0.0
      %6026 = vmatmul.mubr.f32.gmra.mrb[0].mxu0 %v5848
      %v6027 = vpop.f32.mrb[0].mxu0
      %v6028 = vadd.f32 0.0, %v6027
      %v6029 = vpop.f32.mrb[0].mxu0
      %6030 = vmatprep.mubr.f32.mxu0 0.0
      %6031 = vmatmul.mubr.f32.gmra.mrb[0].mxu0 %v5849
      %v6032 = vpop.f32.mrb[0].mxu0
      %v6033 = vadd.f32 0.0, %v6032
      %v6034 = vpop.f32.mrb[0].mxu0
      %6035 = vmatprep.mubr.f32.mxu0 0.0
      %6036 = vmatmul.mubr.f32.gmra.mrb[0].mxu0 %v5850
      %v6037 = vpop.f32.mrb[0].mxu0
      %v6038 = vadd.f32 0.0, %v6037
      %v6039 = vpop.f32.mrb[0].mxu0
      %6040 = vmatprep.mubr.f32.mxu0 0.0
      %6041 = vmatmul.mubr.f32.gmra.mrb[0].mxu0 %v5851
      %v6042 = vpop.f32.mrb[0].mxu0
      %v6043 = vadd.f32 0.0, %v6042
      %v6044 = vpop.f32.mrb[0].mxu0
      %6045 = vmatprep.mubr.f32.mxu0 0.0
      %6046 = vmatmul.mubr.f32.gmra.mrb[0].mxu0 %v5852
      %v6047 = vpop.f32.mrb[0].mxu0
      %v6048 = vadd.f32 0.0, %v6047
      %v6049 = vpop.f32.mrb[0].mxu0
      %6050 = vmatprep.mubr.f32.mxu0 0.0
      %6051 = vmatmul.mubr.f32.gmra.mrb[0].mxu0 %v5853
      %v6052 = vpop.f32.mrb[0].mxu0
      %v6053 = vadd.f32 0.0, %v6052
      %v6054 = vpop.f32.mrb[0].mxu0
      %6055 = vmatprep.mubr.f32.mxu0 0.0
      %6056 = vmatmul.mubr.f32.gmra.mrb[0].mxu0 %v5854
      %v6057 = vpop.f32.mrb[0].mxu0
      %v6058 = vadd.f32 0.0, %v6057
      %v6059 = vpop.f32.mrb[0].mxu0
      %6060 = vmatprep.mubr.f32.mxu0 0.0
      %6061 = vmatmul.mubr.f32.gmra.mrb[0].mxu0 %v5855
      %v6062 = vpop.f32.mrb[0].mxu0
      %v6063 = vadd.f32 0.0, %v6062
      %v6064 = vpop.f32.mrb[0].mxu0
      %6065 = vmatprep.mubr.f32.mxu0 0.0
      %6066 = vmatmul.mubr.f32.gmra.mrb[0].mxu0 %v5856
      %v6067 = vpop.f32.mrb[0].mxu0
      %v6068 = vadd.f32 0.0, %v6067
      %v6069 = vpop.f32.mrb[0].mxu0
      %6070 = vmatprep.mubr.f32.mxu0 0.0
      %6071 = vmatmul.mubr.f32.gmra.mrb[0].mxu0 %v5857
      %v6072 = vpop.f32.mrb[0].mxu0
      %v6073 = vadd.f32 0.0, %v6072
      %v6074 = vpop.f32.mrb[0].mxu0
      %6075 = vmatprep.mubr.f32.mxu0 0.0
      %6076 = vmatmul.mubr.f32.gmra.mrb[0].mxu0 %v5858
      %v6077 = vpop.f32.mrb[0].mxu0
      %v6078 = vadd.f32 0.0, %v6077
      %v6079 = vpop.f32.mrb[0].mxu0
      %6080 = vmatprep.mubr.f32.mxu0 0.0
      %6081 = vmatmul.mubr.f32.gmra.mrb[0].mxu0 %v5859
      %v6082 = vpop.f32.mrb[0].mxu0
      %v6083 = vadd.f32 0.0, %v6082
      %v6084 = vpop.f32.mrb[0].mxu0
      %6085 = vmatprep.mubr.f32.mxu0 0.0
      %6086 = vmatmul.mubr.f32.gmra.mrb[0].mxu0 %v5860
      %v6087 = vpop.f32.mrb[0].mxu0
      %v6088 = vadd.f32 0.0, %v6087
      %v6089 = vpop.f32.mrb[0].mxu0
      %6090 = vmatprep.mubr.f32.mxu0 0.0
      %6091 = vmatmul.mubr.f32.gmra.mrb[0].mxu0 %v5861
      %v6092 = vpop.f32.mrb[0].mxu0
      %v6093 = vadd.f32 0.0, %v6092
      %v6094 = vpop.f32.mrb[0].mxu0
      %6095 = vmatprep.mubr.f32.mxu0 0.0
      %6096 = vmatmul.mubr.f32.gmra.mrb[0].mxu0 %v5862
      %v6097 = vpop.f32.mrb[0].mxu0
      %v6098 = vadd.f32 0.0, %v6097
      %v6099 = vpop.f32.mrb[0].mxu0
      %6100 = vmatprep.mubr.f32.mxu0 0.0
      %6101 = vmatmul.mubr.f32.gmra.mrb[0].mxu0 %v5863
      %v6102 = vpop.f32.mrb[0].mxu0
      %v6103 = vadd.f32 0.0, %v6102
      %v6104 = vpop.f32.mrb[0].mxu0
      %6105 = vmatprep.mubr.f32.mxu0 0.0
      %6106 = vmatmul.mubr.f32.gmra.mrb[0].mxu0 %v5864
      %v6107 = vpop.f32.mrb[0].mxu0
      %v6108 = vadd.f32 0.0, %v6107
      %v6109 = vpop.f32.mrb[0].mxu0
      %6110 = vmatprep.mubr.f32.mxu0 0.0
      %6111 = vmatmul.mubr.f32.gmra.mrb[0].mxu0 %v5865
      %v6112 = vpop.f32.mrb[0].mxu0
      %v6113 = vadd.f32 0.0, %v6112
      %v6114 = vpop.f32.mrb[0].mxu0
      %6115 = vmatprep.mubr.f32.mxu0 0.0
      %6116 = vmatmul.mubr.f32.gmra.mrb[0].mxu0 %v5866
      %v6117 = vpop.f32.mrb[0].mxu0
      %v6118 = vadd.f32 0.0, %v6117
      %v6119 = vpop.f32.mrb[0].mxu0
      %6120 = vmatprep.mubr.f32.mxu0 0.0
      %6121 = vmatmul.mubr.f32.gmra.mrb[0].mxu0 %v5867
      %v6122 = vpop.f32.mrb[0].mxu0
      %v6123 = vadd.f32 0.0, %v6122
      %v6124 = vpop.f32.mrb[0].mxu0
      %6125 = vmatprep.mubr.f32.mxu0 0.0
      %6126 = vmatmul.mubr.f32.gmra.mrb[0].mxu0 %v5868
      %v6127 = vpop.f32.mrb[0].mxu0
      %v6128 = vadd.f32 0.0, %v6127
      %v6129 = vpop.f32.mrb[0].mxu0
      %6130 = vdwg.mxu0
      %v6131 = vld [vmem:[#allocation3] sm:$0xff]
      %v6132 = vld [vmem:[#allocation3 + $0x8] sm:$0xff]
      %v6133 = vld [vmem:[#allocation3 + $0x10] sm:$0xff]
      %v6134 = vld [vmem:[#allocation3 + $0x18] sm:$0xff]
      %v6135 = vld [vmem:[#allocation3 + $0x20] sm:$0xff]
      %v6136 = vld [vmem:[#allocation3 + $0x28] sm:$0xff]
      %v6137 = vld [vmem:[#allocation3 + $0x30] sm:$0xff]
      %v6138 = vld [vmem:[#allocation3 + $0x38] sm:$0xff]
      %v6139 = vld [vmem:[#allocation3 + $0x40] sm:$0xff]
      %v6140 = vld [vmem:[#allocation3 + $0x48] sm:$0xff]
      %v6141 = vld [vmem:[#allocation3 + $0x50] sm:$0xff]
      %v6142 = vld [vmem:[#allocation3 + $0x58] sm:$0xff]
      %v6143 = vld [vmem:[#allocation3 + $0x60] sm:$0xff]
      %v6144 = vld [vmem:[#allocation3 + $0x68] sm:$0xff]
      %v6145 = vld [vmem:[#allocation3 + $0x70] sm:$0xff]
      %v6146 = vld [vmem:[#allocation3 + $0x78] sm:$0xff]
      %v6147 = vld [vmem:[#allocation3 + $0x80] sm:$0xff]
      %v6148 = vld [vmem:[#allocation3 + $0x88] sm:$0xff]
      %v6149 = vld [vmem:[#allocation3 + $0x90] sm:$0xff]
      %v6150 = vld [vmem:[#allocation3 + $0x98] sm:$0xff]
      %v6151 = vld [vmem:[#allocation3 + $0xa0] sm:$0xff]
      %v6152 = vld [vmem:[#allocation3 + $0xa8] sm:$0xff]
      %v6153 = vld [vmem:[#allocation3 + $0xb0] sm:$0xff]
      %v6154 = vld [vmem:[#allocation3 + $0xb8] sm:$0xff]
      %v6155 = vld [vmem:[#allocation3 + $0xc0] sm:$0xff]
      %v6156 = vld [vmem:[#allocation3 + $0xc8] sm:$0xff]
      %v6157 = vld [vmem:[#allocation3 + $0xd0] sm:$0xff]
      %v6158 = vld [vmem:[#allocation3 + $0xd8] sm:$0xff]
      %v6159 = vld [vmem:[#allocation3 + $0xe0] sm:$0xff]
      %v6160 = vld [vmem:[#allocation3 + $0xe8] sm:$0xff]
      %v6161 = vld [vmem:[#allocation3 + $0xf0] sm:$0xff]
      %v6162 = vld [vmem:[#allocation3 + $0xf8] sm:$0xff]
      %v6163 = vld [vmem:[#allocation3 + $0x100] sm:$0xff]
      %v6164 = vld [vmem:[#allocation3 + $0x108] sm:$0xff]
      %v6165 = vld [vmem:[#allocation3 + $0x110] sm:$0xff]
      %v6166 = vld [vmem:[#allocation3 + $0x118] sm:$0xff]
      %v6167 = vadd.f32 %v6131, %v5953
      %v6168 = vadd.f32 %v6132, %v5958
      %v6169 = vadd.f32 %v6133, %v5963
      %v6170 = vadd.f32 %v6134, %v5968
      %v6171 = vadd.f32 %v6135, %v5973
      %v6172 = vadd.f32 %v6136, %v5978
      %v6173 = vadd.f32 %v6137, %v5983
      %v6174 = vadd.f32 %v6138, %v5988
      %v6175 = vadd.f32 %v6139, %v5993
      %v6176 = vadd.f32 %v6140, %v5998
      %v6177 = vadd.f32 %v6141, %v6003
      %v6178 = vadd.f32 %v6142, %v6008
      %v6179 = vadd.f32 %v6143, %v6013
      %v6180 = vadd.f32 %v6144, %v6018
      %v6181 = vadd.f32 %v6145, %v6023
      %v6182 = vadd.f32 %v6146, %v6028
      %v6183 = vadd.f32 %v6147, %v6033
      %v6184 = vadd.f32 %v6148, %v6038
      %v6185 = vadd.f32 %v6149, %v6043
      %v6186 = vadd.f32 %v6150, %v6048
      %v6187 = vadd.f32 %v6151, %v6053
      %v6188 = vadd.f32 %v6152, %v6058
      %v6189 = vadd.f32 %v6153, %v6063
      %v6190 = vadd.f32 %v6154, %v6068
      %v6191 = vadd.f32 %v6155, %v6073
      %v6192 = vadd.f32 %v6156, %v6078
      %v6193 = vadd.f32 %v6157, %v6083
      %v6194 = vadd.f32 %v6158, %v6088
      %v6195 = vadd.f32 %v6159, %v6093
      %v6196 = vadd.f32 %v6160, %v6098
      %v6197 = vadd.f32 %v6161, %v6103
      %v6198 = vadd.f32 %v6162, %v6108
      %v6199 = vadd.f32 %v6163, %v6113
      %v6200 = vadd.f32 %v6164, %v6118
      %v6201 = vadd.f32 %v6165, %v6123
      %v6202 = vadd.f32 %v6166, %v6128
      %6203 = vst [vmem:[#allocation3] sm:$0xff] %v6167
      %6204 = vst [vmem:[#allocation3 + $0x8] sm:$0xff] %v6168
      %6205 = vst [vmem:[#allocation3 + $0x10] sm:$0xff] %v6169
      %6206 = vst [vmem:[#allocation3 + $0x18] sm:$0xff] %v6170
      %6207 = vst [vmem:[#allocation3 + $0x20] sm:$0xff] %v6171
      %6208 = vst [vmem:[#allocation3 + $0x28] sm:$0xff] %v6172
      %6209 = vst [vmem:[#allocation3 + $0x30] sm:$0xff] %v6173
      %6210 = vst [vmem:[#allocation3 + $0x38] sm:$0xff] %v6174
      %6211 = vst [vmem:[#allocation3 + $0x40] sm:$0xff] %v6175
      %6212 = vst [vmem:[#allocation3 + $0x48] sm:$0xff] %v6176
      %6213 = vst [vmem:[#allocation3 + $0x50] sm:$0xff] %v6177
      %6214 = vst [vmem:[#allocation3 + $0x58] sm:$0xff] %v6178
      %6215 = vst [vmem:[#allocation3 + $0x60] sm:$0xff] %v6179
      %6216 = vst [vmem:[#allocation3 + $0x68] sm:$0xff] %v6180
      %6217 = vst [vmem:[#allocation3 + $0x70] sm:$0xff] %v6181
      %6218 = vst [vmem:[#allocation3 + $0x78] sm:$0xff] %v6182
      %6219 = vst [vmem:[#allocation3 + $0x80] sm:$0xff] %v6183
      %6220 = vst [vmem:[#allocation3 + $0x88] sm:$0xff] %v6184
      %6221 = vst [vmem:[#allocation3 + $0x90] sm:$0xff] %v6185
      %6222 = vst [vmem:[#allocation3 + $0x98] sm:$0xff] %v6186
      %6223 = vst [vmem:[#allocation3 + $0xa0] sm:$0xff] %v6187
      %6224 = vst [vmem:[#allocation3 + $0xa8] sm:$0xff] %v6188
      %6225 = vst [vmem:[#allocation3 + $0xb0] sm:$0xff] %v6189
      %6226 = vst [vmem:[#allocation3 + $0xb8] sm:$0xff] %v6190
      %6227 = vst [vmem:[#allocation3 + $0xc0] sm:$0xff] %v6191
      %6228 = vst [vmem:[#allocation3 + $0xc8] sm:$0xff] %v6192
      %6229 = vst [vmem:[#allocation3 + $0xd0] sm:$0xff] %v6193
      %6230 = vst [vmem:[#allocation3 + $0xd8] sm:$0xff] %v6194
      %6231 = vst [vmem:[#allocation3 + $0xe0] sm:$0xff] %v6195
      %6232 = vst [vmem:[#allocation3 + $0xe8] sm:$0xff] %v6196
      %6233 = vst [vmem:[#allocation3 + $0xf0] sm:$0xff] %v6197
      %6234 = vst [vmem:[#allocation3 + $0xf8] sm:$0xff] %v6198
      %6235 = vst [vmem:[#allocation3 + $0x100] sm:$0xff] %v6199
      %6236 = vst [vmem:[#allocation3 + $0x108] sm:$0xff] %v6200
      %6237 = vst [vmem:[#allocation3 + $0x110] sm:$0xff] %v6201
      %6238 = vst [vmem:[#allocation3 + $0x118] sm:$0xff] %v6202
      %v6239 = vld [vmem:[#allocation2 + $0x19] sm:$0xff]
      %v6240 = vld [vmem:[#allocation2 + $0x21] sm:$0xff]
      %v6241 = vld [vmem:[#allocation2 + $0x29] sm:$0xff]
      %v6242 = vld [vmem:[#allocation2 + $0x31] sm:$0xff]
      %v6243 = vld [vmem:[#allocation2 + $0x39] sm:$0xff]
      %v6244 = vld [vmem:[#allocation2 + $0x41] sm:$0xff]
      %v6245 = vld [vmem:[#allocation2 + $0x49] sm:$0xff]
      %v6246 = vld [vmem:[#allocation2 + $0x51] sm:$0xff]
      %v6247 = vld [vmem:[#allocation2 + $0x59] sm:$0xff]
      %v6248 = vld [vmem:[#allocation2 + $0x61] sm:$0xff]
      %v6249 = vld [vmem:[#allocation2 + $0x69] sm:$0xff]
      %v6250 = vld [vmem:[#allocation2 + $0x71] sm:$0xff]
      %v6251 = vld [vmem:[#allocation2 + $0x79] sm:$0xff]
      %v6252 = vld [vmem:[#allocation2 + $0x81] sm:$0xff]
      %v6253 = vld [vmem:[#allocation2 + $0x89] sm:$0xff]
      %v6254 = vld [vmem:[#allocation2 + $0x91] sm:$0xff]
      %v6255 = vld [vmem:[#allocation2 + $0x99] sm:$0xff]
      %v6256 = vld [vmem:[#allocation2 + $0xa1] sm:$0xff]
      %v6257 = vld [vmem:[#allocation2 + $0xa9] sm:$0xff]
      %v6258 = vld [vmem:[#allocation2 + $0xb1] sm:$0xff]
      %v6259 = vld [vmem:[#allocation2 + $0xb9] sm:$0xff]
      %v6260 = vld [vmem:[#allocation2 + $0xc1] sm:$0xff]
      %v6261 = vld [vmem:[#allocation2 + $0xc9] sm:$0xff]
      %v6262 = vld [vmem:[#allocation2 + $0xd1] sm:$0xff]
      %v6263 = vld [vmem:[#allocation2 + $0xd9] sm:$0xff]
      %v6264 = vld [vmem:[#allocation2 + $0xe1] sm:$0xff]
      %v6265 = vld [vmem:[#allocation2 + $0xe9] sm:$0xff]
      %v6266 = vld [vmem:[#allocation2 + $0xf1] sm:$0xff]
      %v6267 = vld [vmem:[#allocation2 + $0xf9] sm:$0xff]
      %v6268 = vld [vmem:[#allocation2 + $0x101] sm:$0xff]
      %v6269 = vld [vmem:[#allocation2 + $0x109] sm:$0xff]
      %v6270 = vld [vmem:[#allocation2 + $0x111] sm:$0xff]
      %v6271 = vld [vmem:[#allocation2 + $0x119] sm:$0xff]
      %v6272 = vld [vmem:[#allocation2 + $0x121] sm:$0xff]
      %v6273 = vld [vmem:[#allocation2 + $0x129] sm:$0xff]
      %v6274 = vld [vmem:[#allocation2 + $0x131] sm:$0xff]
      %s6275 = scalar_lea.vmem %s3, 640
      %v6276 = vld [vmem:[%s6275] sm:$0xff]
      %v6277 = vld [vmem:[%s6275 + $0x8] sm:$0xff]
      %v6278 = vld [vmem:[%s6275 + $0x10] sm:$0xff]
      %v6279 = vld [vmem:[%s6275 + $0x18] sm:$0xff]
      %v6280 = vld [vmem:[%s6275 + $0x20] sm:$0xff]
      %v6281 = vld [vmem:[%s6275 + $0x28] sm:$0xff]
      %v6282 = vld [vmem:[%s6275 + $0x30] sm:$0xff]
      %v6283 = vld [vmem:[%s6275 + $0x38] sm:$0xff]
      %v6284 = vld [vmem:[%s6275 + $0x40] sm:$0xff]
      %v6285 = vld [vmem:[%s6275 + $0x48] sm:$0xff]
      %v6286 = vld [vmem:[%s6275 + $0x50] sm:$0xff]
      %v6287 = vld [vmem:[%s6275 + $0x58] sm:$0xff]
      %v6288 = vld [vmem:[%s6275 + $0x60] sm:$0xff]
      %v6289 = vld [vmem:[%s6275 + $0x68] sm:$0xff]
      %v6290 = vld [vmem:[%s6275 + $0x70] sm:$0xff]
      %v6291 = vld [vmem:[%s6275 + $0x78] sm:$0xff]
      %6292 = vmatprep.subr.mxu0 0.0
      %6293 = vmatpush1.msra.mxu0 %v6276
      %6294 = vmatprep.subr.mxu0 0.0
      %6295 = vmatpush1.msra.mxu0 %v6277
      %6296 = vmatprep.subr.mxu0 0.0
      %6297 = vmatpush1.msra.mxu0 %v6278
      %6298 = vmatprep.subr.mxu0 0.0
      %6299 = vmatpush1.msra.mxu0 %v6279
      %6300 = vmatprep.subr.mxu0 0.0
      %6301 = vmatpush1.msra.mxu0 %v6280
      %6302 = vmatprep.subr.mxu0 0.0
      %6303 = vmatpush1.msra.mxu0 %v6281
      %6304 = vmatprep.subr.mxu0 0.0
      %6305 = vmatpush1.msra.mxu0 %v6282
      %6306 = vmatprep.subr.mxu0 0.0
      %6307 = vmatpush1.msra.mxu0 %v6283
      %6308 = vmatprep.subr.mxu0 0.0
      %6309 = vmatpush1.msra.mxu0 %v6284
      %6310 = vmatprep.subr.mxu0 0.0
      %6311 = vmatpush1.msra.mxu0 %v6285
      %6312 = vmatprep.subr.mxu0 0.0
      %6313 = vmatpush1.msra.mxu0 %v6286
      %6314 = vmatprep.subr.mxu0 0.0
      %6315 = vmatpush1.msra.mxu0 %v6287
      %6316 = vmatprep.subr.mxu0 0.0
      %6317 = vmatpush1.msra.mxu0 %v6288
      %6318 = vmatprep.subr.mxu0 0.0
      %6319 = vmatpush1.msra.mxu0 %v6289
      %6320 = vmatprep.subr.mxu0 0.0
      %6321 = vmatpush1.msra.mxu0 %v6290
      %6322 = vmatprep.subr.mxu0 0.0
      %6323 = vmatpush1.msra.mxu0 %v6291
      %6324 = vmatprep.subr.mxu0 0.0
      %6325 = vmatpush1.msra.mxu0 0.0
      %6326 = vmatprep.subr.mxu0 0.0
      %6327 = vmatpush1.msra.mxu0 0.0
      %6328 = vmatprep.subr.mxu0 0.0
      %6329 = vmatpush1.msra.mxu0 0.0
      %6330 = vmatprep.subr.mxu0 0.0
      %6331 = vmatpush1.msra.mxu0 0.0
      %6332 = vmatprep.subr.mxu0 0.0
      %6333 = vmatpush1.msra.mxu0 0.0
      %6334 = vmatprep.subr.mxu0 0.0
      %6335 = vmatpush1.msra.mxu0 0.0
      %6336 = vmatprep.subr.mxu0 0.0
      %6337 = vmatpush1.msra.mxu0 0.0
      %6338 = vmatprep.subr.mxu0 0.0
      %6339 = vmatpush1.msra.mxu0 0.0
      %6340 = vmatprep.subr.mxu0 0.0
      %6341 = vmatpush1.msra.mxu0 0.0
      %6342 = vmatprep.subr.mxu0 0.0
      %6343 = vmatpush1.msra.mxu0 0.0
      %6344 = vmatprep.subr.mxu0 0.0
      %6345 = vmatpush1.msra.mxu0 0.0
      %6346 = vmatprep.subr.mxu0 0.0
      %6347 = vmatpush1.msra.mxu0 0.0
      %6348 = vmatprep.subr.mxu0 0.0
      %6349 = vmatpush1.msra.mxu0 0.0
      %6350 = vmatprep.subr.mxu0 0.0
      %6351 = vmatpush1.msra.mxu0 0.0
      %6352 = vmatprep.subr.mxu0 0.0
      %6353 = vmatpush1.msra.mxu0 0.0
      %6354 = vmatprep.subr.mxu0 0.0
      %6355 = vmatpush1.msra.mxu0 0.0
      %6356 = vmatprep.mubr.f32.mxu0 0.0
      %6357 = vmatmul.mubr.f32.gmra.mrb[0].mxu0 %v6239
      %v6358 = vpop.f32.mrb[0].mxu0
      %v6359 = vadd.f32 0.0, %v6358
      %v6360 = vpop.f32.mrb[0].mxu0
      %6361 = vmatprep.mubr.f32.mxu0 0.0
      %6362 = vmatmul.mubr.f32.gmra.mrb[0].mxu0 %v6240
      %v6363 = vpop.f32.mrb[0].mxu0
      %v6364 = vadd.f32 0.0, %v6363
      %v6365 = vpop.f32.mrb[0].mxu0
      %6366 = vmatprep.mubr.f32.mxu0 0.0
      %6367 = vmatmul.mubr.f32.gmra.mrb[0].mxu0 %v6241
      %v6368 = vpop.f32.mrb[0].mxu0
      %v6369 = vadd.f32 0.0, %v6368
      %v6370 = vpop.f32.mrb[0].mxu0
      %6371 = vmatprep.mubr.f32.mxu0 0.0
      %6372 = vmatmul.mubr.f32.gmra.mrb[0].mxu0 %v6242
      %v6373 = vpop.f32.mrb[0].mxu0
      %v6374 = vadd.f32 0.0, %v6373
      %v6375 = vpop.f32.mrb[0].mxu0
      %6376 = vmatprep.mubr.f32.mxu0 0.0
      %6377 = vmatmul.mubr.f32.gmra.mrb[0].mxu0 %v6243
      %v6378 = vpop.f32.mrb[0].mxu0
      %v6379 = vadd.f32 0.0, %v6378
      %v6380 = vpop.f32.mrb[0].mxu0
      %6381 = vmatprep.mubr.f32.mxu0 0.0
      %6382 = vmatmul.mubr.f32.gmra.mrb[0].mxu0 %v6244
      %v6383 = vpop.f32.mrb[0].mxu0
      %v6384 = vadd.f32 0.0, %v6383
      %v6385 = vpop.f32.mrb[0].mxu0
      %6386 = vmatprep.mubr.f32.mxu0 0.0
      %6387 = vmatmul.mubr.f32.gmra.mrb[0].mxu0 %v6245
      %v6388 = vpop.f32.mrb[0].mxu0
      %v6389 = vadd.f32 0.0, %v6388
      %v6390 = vpop.f32.mrb[0].mxu0
      %6391 = vmatprep.mubr.f32.mxu0 0.0
      %6392 = vmatmul.mubr.f32.gmra.mrb[0].mxu0 %v6246
      %v6393 = vpop.f32.mrb[0].mxu0
      %v6394 = vadd.f32 0.0, %v6393
      %v6395 = vpop.f32.mrb[0].mxu0
      %6396 = vmatprep.mubr.f32.mxu0 0.0
      %6397 = vmatmul.mubr.f32.gmra.mrb[0].mxu0 %v6247
      %v6398 = vpop.f32.mrb[0].mxu0
      %v6399 = vadd.f32 0.0, %v6398
      %v6400 = vpop.f32.mrb[0].mxu0
      %6401 = vmatprep.mubr.f32.mxu0 0.0
      %6402 = vmatmul.mubr.f32.gmra.mrb[0].mxu0 %v6248
      %v6403 = vpop.f32.mrb[0].mxu0
      %v6404 = vadd.f32 0.0, %v6403
      %v6405 = vpop.f32.mrb[0].mxu0
      %6406 = vmatprep.mubr.f32.mxu0 0.0
      %6407 = vmatmul.mubr.f32.gmra.mrb[0].mxu0 %v6249
      %v6408 = vpop.f32.mrb[0].mxu0
      %v6409 = vadd.f32 0.0, %v6408
      %v6410 = vpop.f32.mrb[0].mxu0
      %6411 = vmatprep.mubr.f32.mxu0 0.0
      %6412 = vmatmul.mubr.f32.gmra.mrb[0].mxu0 %v6250
      %v6413 = vpop.f32.mrb[0].mxu0
      %v6414 = vadd.f32 0.0, %v6413
      %v6415 = vpop.f32.mrb[0].mxu0
      %6416 = vmatprep.mubr.f32.mxu0 0.0
      %6417 = vmatmul.mubr.f32.gmra.mrb[0].mxu0 %v6251
      %v6418 = vpop.f32.mrb[0].mxu0
      %v6419 = vadd.f32 0.0, %v6418
      %v6420 = vpop.f32.mrb[0].mxu0
      %6421 = vmatprep.mubr.f32.mxu0 0.0
      %6422 = vmatmul.mubr.f32.gmra.mrb[0].mxu0 %v6252
      %v6423 = vpop.f32.mrb[0].mxu0
      %v6424 = vadd.f32 0.0, %v6423
      %v6425 = vpop.f32.mrb[0].mxu0
      %6426 = vmatprep.mubr.f32.mxu0 0.0
      %6427 = vmatmul.mubr.f32.gmra.mrb[0].mxu0 %v6253
      %v6428 = vpop.f32.mrb[0].mxu0
      %v6429 = vadd.f32 0.0, %v6428
      %v6430 = vpop.f32.mrb[0].mxu0
      %6431 = vmatprep.mubr.f32.mxu0 0.0
      %6432 = vmatmul.mubr.f32.gmra.mrb[0].mxu0 %v6254
      %v6433 = vpop.f32.mrb[0].mxu0
      %v6434 = vadd.f32 0.0, %v6433
      %v6435 = vpop.f32.mrb[0].mxu0
      %6436 = vmatprep.mubr.f32.mxu0 0.0
      %6437 = vmatmul.mubr.f32.gmra.mrb[0].mxu0 %v6255
      %v6438 = vpop.f32.mrb[0].mxu0
      %v6439 = vadd.f32 0.0, %v6438
      %v6440 = vpop.f32.mrb[0].mxu0
      %6441 = vmatprep.mubr.f32.mxu0 0.0
      %6442 = vmatmul.mubr.f32.gmra.mrb[0].mxu0 %v6256
      %v6443 = vpop.f32.mrb[0].mxu0
      %v6444 = vadd.f32 0.0, %v6443
      %v6445 = vpop.f32.mrb[0].mxu0
      %6446 = vmatprep.mubr.f32.mxu0 0.0
      %6447 = vmatmul.mubr.f32.gmra.mrb[0].mxu0 %v6257
      %v6448 = vpop.f32.mrb[0].mxu0
      %v6449 = vadd.f32 0.0, %v6448
      %v6450 = vpop.f32.mrb[0].mxu0
      %6451 = vmatprep.mubr.f32.mxu0 0.0
      %6452 = vmatmul.mubr.f32.gmra.mrb[0].mxu0 %v6258
      %v6453 = vpop.f32.mrb[0].mxu0
      %v6454 = vadd.f32 0.0, %v6453
      %v6455 = vpop.f32.mrb[0].mxu0
      %6456 = vmatprep.mubr.f32.mxu0 0.0
      %6457 = vmatmul.mubr.f32.gmra.mrb[0].mxu0 %v6259
      %v6458 = vpop.f32.mrb[0].mxu0
      %v6459 = vadd.f32 0.0, %v6458
      %v6460 = vpop.f32.mrb[0].mxu0
      %6461 = vmatprep.mubr.f32.mxu0 0.0
      %6462 = vmatmul.mubr.f32.gmra.mrb[0].mxu0 %v6260
      %v6463 = vpop.f32.mrb[0].mxu0
      %v6464 = vadd.f32 0.0, %v6463
      %v6465 = vpop.f32.mrb[0].mxu0
      %6466 = vmatprep.mubr.f32.mxu0 0.0
      %6467 = vmatmul.mubr.f32.gmra.mrb[0].mxu0 %v6261
      %v6468 = vpop.f32.mrb[0].mxu0
      %v6469 = vadd.f32 0.0, %v6468
      %v6470 = vpop.f32.mrb[0].mxu0
      %6471 = vmatprep.mubr.f32.mxu0 0.0
      %6472 = vmatmul.mubr.f32.gmra.mrb[0].mxu0 %v6262
      %v6473 = vpop.f32.mrb[0].mxu0
      %v6474 = vadd.f32 0.0, %v6473
      %v6475 = vpop.f32.mrb[0].mxu0
      %6476 = vmatprep.mubr.f32.mxu0 0.0
      %6477 = vmatmul.mubr.f32.gmra.mrb[0].mxu0 %v6263
      %v6478 = vpop.f32.mrb[0].mxu0
      %v6479 = vadd.f32 0.0, %v6478
      %v6480 = vpop.f32.mrb[0].mxu0
      %6481 = vmatprep.mubr.f32.mxu0 0.0
      %6482 = vmatmul.mubr.f32.gmra.mrb[0].mxu0 %v6264
      %v6483 = vpop.f32.mrb[0].mxu0
      %v6484 = vadd.f32 0.0, %v6483
      %v6485 = vpop.f32.mrb[0].mxu0
      %6486 = vmatprep.mubr.f32.mxu0 0.0
      %6487 = vmatmul.mubr.f32.gmra.mrb[0].mxu0 %v6265
      %v6488 = vpop.f32.mrb[0].mxu0
      %v6489 = vadd.f32 0.0, %v6488
      %v6490 = vpop.f32.mrb[0].mxu0
      %6491 = vmatprep.mubr.f32.mxu0 0.0
      %6492 = vmatmul.mubr.f32.gmra.mrb[0].mxu0 %v6266
      %v6493 = vpop.f32.mrb[0].mxu0
      %v6494 = vadd.f32 0.0, %v6493
      %v6495 = vpop.f32.mrb[0].mxu0
      %6496 = vmatprep.mubr.f32.mxu0 0.0
      %6497 = vmatmul.mubr.f32.gmra.mrb[0].mxu0 %v6267
      %v6498 = vpop.f32.mrb[0].mxu0
      %v6499 = vadd.f32 0.0, %v6498
      %v6500 = vpop.f32.mrb[0].mxu0
      %6501 = vmatprep.mubr.f32.mxu0 0.0
      %6502 = vmatmul.mubr.f32.gmra.mrb[0].mxu0 %v6268
      %v6503 = vpop.f32.mrb[0].mxu0
      %v6504 = vadd.f32 0.0, %v6503
      %v6505 = vpop.f32.mrb[0].mxu0
      %6506 = vmatprep.mubr.f32.mxu0 0.0
      %6507 = vmatmul.mubr.f32.gmra.mrb[0].mxu0 %v6269
      %v6508 = vpop.f32.mrb[0].mxu0
      %v6509 = vadd.f32 0.0, %v6508
      %v6510 = vpop.f32.mrb[0].mxu0
      %6511 = vmatprep.mubr.f32.mxu0 0.0
      %6512 = vmatmul.mubr.f32.gmra.mrb[0].mxu0 %v6270
      %v6513 = vpop.f32.mrb[0].mxu0
      %v6514 = vadd.f32 0.0, %v6513
      %v6515 = vpop.f32.mrb[0].mxu0
      %6516 = vmatprep.mubr.f32.mxu0 0.0
      %6517 = vmatmul.mubr.f32.gmra.mrb[0].mxu0 %v6271
      %v6518 = vpop.f32.mrb[0].mxu0
      %v6519 = vadd.f32 0.0, %v6518
      %v6520 = vpop.f32.mrb[0].mxu0
      %6521 = vmatprep.mubr.f32.mxu0 0.0
      %6522 = vmatmul.mubr.f32.gmra.mrb[0].mxu0 %v6272
      %v6523 = vpop.f32.mrb[0].mxu0
      %v6524 = vadd.f32 0.0, %v6523
      %v6525 = vpop.f32.mrb[0].mxu0
      %6526 = vmatprep.mubr.f32.mxu0 0.0
      %6527 = vmatmul.mubr.f32.gmra.mrb[0].mxu0 %v6273
      %v6528 = vpop.f32.mrb[0].mxu0
      %v6529 = vadd.f32 0.0, %v6528
      %v6530 = vpop.f32.mrb[0].mxu0
      %6531 = vmatprep.mubr.f32.mxu0 0.0
      %6532 = vmatmul.mubr.f32.gmra.mrb[0].mxu0 %v6274
      %v6533 = vpop.f32.mrb[0].mxu0
      %v6534 = vadd.f32 0.0, %v6533
      %v6535 = vpop.f32.mrb[0].mxu0
      %6536 = vdwg.mxu0
      %v6537 = vld [vmem:[#allocation3] sm:$0xff]
      %v6538 = vld [vmem:[#allocation3 + $0x8] sm:$0xff]
      %v6539 = vld [vmem:[#allocation3 + $0x10] sm:$0xff]
      %v6540 = vld [vmem:[#allocation3 + $0x18] sm:$0xff]
      %v6541 = vld [vmem:[#allocation3 + $0x20] sm:$0xff]
      %v6542 = vld [vmem:[#allocation3 + $0x28] sm:$0xff]
      %v6543 = vld [vmem:[#allocation3 + $0x30] sm:$0xff]
      %v6544 = vld [vmem:[#allocation3 + $0x38] sm:$0xff]
      %v6545 = vld [vmem:[#allocation3 + $0x40] sm:$0xff]
      %v6546 = vld [vmem:[#allocation3 + $0x48] sm:$0xff]
      %v6547 = vld [vmem:[#allocation3 + $0x50] sm:$0xff]
      %v6548 = vld [vmem:[#allocation3 + $0x58] sm:$0xff]
      %v6549 = vld [vmem:[#allocation3 + $0x60] sm:$0xff]
      %v6550 = vld [vmem:[#allocation3 + $0x68] sm:$0xff]
      %v6551 = vld [vmem:[#allocation3 + $0x70] sm:$0xff]
      %v6552 = vld [vmem:[#allocation3 + $0x78] sm:$0xff]
      %v6553 = vld [vmem:[#allocation3 + $0x80] sm:$0xff]
      %v6554 = vld [vmem:[#allocation3 + $0x88] sm:$0xff]
      %v6555 = vld [vmem:[#allocation3 + $0x90] sm:$0xff]
      %v6556 = vld [vmem:[#allocation3 + $0x98] sm:$0xff]
      %v6557 = vld [vmem:[#allocation3 + $0xa0] sm:$0xff]
      %v6558 = vld [vmem:[#allocation3 + $0xa8] sm:$0xff]
      %v6559 = vld [vmem:[#allocation3 + $0xb0] sm:$0xff]
      %v6560 = vld [vmem:[#allocation3 + $0xb8] sm:$0xff]
      %v6561 = vld [vmem:[#allocation3 + $0xc0] sm:$0xff]
      %v6562 = vld [vmem:[#allocation3 + $0xc8] sm:$0xff]
      %v6563 = vld [vmem:[#allocation3 + $0xd0] sm:$0xff]
      %v6564 = vld [vmem:[#allocation3 + $0xd8] sm:$0xff]
      %v6565 = vld [vmem:[#allocation3 + $0xe0] sm:$0xff]
      %v6566 = vld [vmem:[#allocation3 + $0xe8] sm:$0xff]
      %v6567 = vld [vmem:[#allocation3 + $0xf0] sm:$0xff]
      %v6568 = vld [vmem:[#allocation3 + $0xf8] sm:$0xff]
      %v6569 = vld [vmem:[#allocation3 + $0x100] sm:$0xff]
      %v6570 = vld [vmem:[#allocation3 + $0x108] sm:$0xff]
      %v6571 = vld [vmem:[#allocation3 + $0x110] sm:$0xff]
      %v6572 = vld [vmem:[#allocation3 + $0x118] sm:$0xff]
      %v6573 = vadd.f32 %v6537, %v6359
      %v6574 = vadd.f32 %v6538, %v6364
      %v6575 = vadd.f32 %v6539, %v6369
      %v6576 = vadd.f32 %v6540, %v6374
      %v6577 = vadd.f32 %v6541, %v6379
      %v6578 = vadd.f32 %v6542, %v6384
      %v6579 = vadd.f32 %v6543, %v6389
      %v6580 = vadd.f32 %v6544, %v6394
      %v6581 = vadd.f32 %v6545, %v6399
      %v6582 = vadd.f32 %v6546, %v6404
      %v6583 = vadd.f32 %v6547, %v6409
      %v6584 = vadd.f32 %v6548, %v6414
      %v6585 = vadd.f32 %v6549, %v6419
      %v6586 = vadd.f32 %v6550, %v6424
      %v6587 = vadd.f32 %v6551, %v6429
      %v6588 = vadd.f32 %v6552, %v6434
      %v6589 = vadd.f32 %v6553, %v6439
      %v6590 = vadd.f32 %v6554, %v6444
      %v6591 = vadd.f32 %v6555, %v6449
      %v6592 = vadd.f32 %v6556, %v6454
      %v6593 = vadd.f32 %v6557, %v6459
      %v6594 = vadd.f32 %v6558, %v6464
      %v6595 = vadd.f32 %v6559, %v6469
      %v6596 = vadd.f32 %v6560, %v6474
      %v6597 = vadd.f32 %v6561, %v6479
      %v6598 = vadd.f32 %v6562, %v6484
      %v6599 = vadd.f32 %v6563, %v6489
      %v6600 = vadd.f32 %v6564, %v6494
      %v6601 = vadd.f32 %v6565, %v6499
      %v6602 = vadd.f32 %v6566, %v6504
      %v6603 = vadd.f32 %v6567, %v6509
      %v6604 = vadd.f32 %v6568, %v6514
      %v6605 = vadd.f32 %v6569, %v6519
      %v6606 = vadd.f32 %v6570, %v6524
      %v6607 = vadd.f32 %v6571, %v6529
      %v6608 = vadd.f32 %v6572, %v6534
      %6609 = vst [vmem:[#allocation3] sm:$0xff] %v6573
      %6610 = vst [vmem:[#allocation3 + $0x8] sm:$0xff] %v6574
      %6611 = vst [vmem:[#allocation3 + $0x10] sm:$0xff] %v6575
      %6612 = vst [vmem:[#allocation3 + $0x18] sm:$0xff] %v6576
      %6613 = vst [vmem:[#allocation3 + $0x20] sm:$0xff] %v6577
      %6614 = vst [vmem:[#allocation3 + $0x28] sm:$0xff] %v6578
      %6615 = vst [vmem:[#allocation3 + $0x30] sm:$0xff] %v6579
      %6616 = vst [vmem:[#allocation3 + $0x38] sm:$0xff] %v6580
      %6617 = vst [vmem:[#allocation3 + $0x40] sm:$0xff] %v6581
      %6618 = vst [vmem:[#allocation3 + $0x48] sm:$0xff] %v6582
      %6619 = vst [vmem:[#allocation3 + $0x50] sm:$0xff] %v6583
      %6620 = vst [vmem:[#allocation3 + $0x58] sm:$0xff] %v6584
      %6621 = vst [vmem:[#allocation3 + $0x60] sm:$0xff] %v6585
      %6622 = vst [vmem:[#allocation3 + $0x68] sm:$0xff] %v6586
      %6623 = vst [vmem:[#allocation3 + $0x70] sm:$0xff] %v6587
      %6624 = vst [vmem:[#allocation3 + $0x78] sm:$0xff] %v6588
      %6625 = vst [vmem:[#allocation3 + $0x80] sm:$0xff] %v6589
      %6626 = vst [vmem:[#allocation3 + $0x88] sm:$0xff] %v6590
      %6627 = vst [vmem:[#allocation3 + $0x90] sm:$0xff] %v6591
      %6628 = vst [vmem:[#allocation3 + $0x98] sm:$0xff] %v6592
      %6629 = vst [vmem:[#allocation3 + $0xa0] sm:$0xff] %v6593
      %6630 = vst [vmem:[#allocation3 + $0xa8] sm:$0xff] %v6594
      %6631 = vst [vmem:[#allocation3 + $0xb0] sm:$0xff] %v6595
      %6632 = vst [vmem:[#allocation3 + $0xb8] sm:$0xff] %v6596
      %6633 = vst [vmem:[#allocation3 + $0xc0] sm:$0xff] %v6597
      %6634 = vst [vmem:[#allocation3 + $0xc8] sm:$0xff] %v6598
      %6635 = vst [vmem:[#allocation3 + $0xd0] sm:$0xff] %v6599
      %6636 = vst [vmem:[#allocation3 + $0xd8] sm:$0xff] %v6600
      %6637 = vst [vmem:[#allocation3 + $0xe0] sm:$0xff] %v6601
      %6638 = vst [vmem:[#allocation3 + $0xe8] sm:$0xff] %v6602
      %6639 = vst [vmem:[#allocation3 + $0xf0] sm:$0xff] %v6603
      %6640 = vst [vmem:[#allocation3 + $0xf8] sm:$0xff] %v6604
      %6641 = vst [vmem:[#allocation3 + $0x100] sm:$0xff] %v6605
      %6642 = vst [vmem:[#allocation3 + $0x108] sm:$0xff] %v6606
      %6643 = vst [vmem:[#allocation3 + $0x110] sm:$0xff] %v6607
      %6644 = vst [vmem:[#allocation3 + $0x118] sm:$0xff] %v6608
      %v6645 = vld [vmem:[#allocation2 + $0x29] sm:$0xff]
      %v6646 = vld [vmem:[#allocation2 + $0x31] sm:$0xff]
      %v6647 = vld [vmem:[#allocation2 + $0x39] sm:$0xff]
      %v6648 = vld [vmem:[#allocation2 + $0x41] sm:$0xff]
      %v6649 = vld [vmem:[#allocation2 + $0x49] sm:$0xff]
      %v6650 = vld [vmem:[#allocation2 + $0x51] sm:$0xff]
      %v6651 = vld [vmem:[#allocation2 + $0x59] sm:$0xff]
      %v6652 = vld [vmem:[#allocation2 + $0x61] sm:$0xff]
      %v6653 = vld [vmem:[#allocation2 + $0x69] sm:$0xff]
      %v6654 = vld [vmem:[#allocation2 + $0x71] sm:$0xff]
      %v6655 = vld [vmem:[#allocation2 + $0x79] sm:$0xff]
      %v6656 = vld [vmem:[#allocation2 + $0x81] sm:$0xff]
      %v6657 = vld [vmem:[#allocation2 + $0x89] sm:$0xff]
      %v6658 = vld [vmem:[#allocation2 + $0x91] sm:$0xff]
      %v6659 = vld [vmem:[#allocation2 + $0x99] sm:$0xff]
      %v6660 = vld [vmem:[#allocation2 + $0xa1] sm:$0xff]
      %v6661 = vld [vmem:[#allocation2 + $0xa9] sm:$0xff]
      %v6662 = vld [vmem:[#allocation2 + $0xb1] sm:$0xff]
      %v6663 = vld [vmem:[#allocation2 + $0xb9] sm:$0xff]
      %v6664 = vld [vmem:[#allocation2 + $0xc1] sm:$0xff]
      %v6665 = vld [vmem:[#allocation2 + $0xc9] sm:$0xff]
      %v6666 = vld [vmem:[#allocation2 + $0xd1] sm:$0xff]
      %v6667 = vld [vmem:[#allocation2 + $0xd9] sm:$0xff]
      %v6668 = vld [vmem:[#allocation2 + $0xe1] sm:$0xff]
      %v6669 = vld [vmem:[#allocation2 + $0xe9] sm:$0xff]
      %v6670 = vld [vmem:[#allocation2 + $0xf1] sm:$0xff]
      %v6671 = vld [vmem:[#allocation2 + $0xf9] sm:$0xff]
      %v6672 = vld [vmem:[#allocation2 + $0x101] sm:$0xff]
      %v6673 = vld [vmem:[#allocation2 + $0x109] sm:$0xff]
      %v6674 = vld [vmem:[#allocation2 + $0x111] sm:$0xff]
      %v6675 = vld [vmem:[#allocation2 + $0x119] sm:$0xff]
      %v6676 = vld [vmem:[#allocation2 + $0x121] sm:$0xff]
      %v6677 = vld [vmem:[#allocation2 + $0x129] sm:$0xff]
      %v6678 = vld [vmem:[#allocation2 + $0x131] sm:$0xff]
      %v6679 = vld [vmem:[#allocation2 + $0x139] sm:$0xff]
      %v6680 = vld [vmem:[#allocation2 + $0x141] sm:$0xff]
      %s6681 = scalar_lea.vmem %s3, 768
      %v6682 = vld [vmem:[%s6681] sm:$0xff]
      %v6683 = vld [vmem:[%s6681 + $0x8] sm:$0xff]
      %v6684 = vld [vmem:[%s6681 + $0x10] sm:$0xff]
      %v6685 = vld [vmem:[%s6681 + $0x18] sm:$0xff]
      %v6686 = vld [vmem:[%s6681 + $0x20] sm:$0xff]
      %v6687 = vld [vmem:[%s6681 + $0x28] sm:$0xff]
      %v6688 = vld [vmem:[%s6681 + $0x30] sm:$0xff]
      %v6689 = vld [vmem:[%s6681 + $0x38] sm:$0xff]
      %v6690 = vld [vmem:[%s6681 + $0x40] sm:$0xff]
      %v6691 = vld [vmem:[%s6681 + $0x48] sm:$0xff]
      %v6692 = vld [vmem:[%s6681 + $0x50] sm:$0xff]
      %v6693 = vld [vmem:[%s6681 + $0x58] sm:$0xff]
      %v6694 = vld [vmem:[%s6681 + $0x60] sm:$0xff]
      %v6695 = vld [vmem:[%s6681 + $0x68] sm:$0xff]
      %v6696 = vld [vmem:[%s6681 + $0x70] sm:$0xff]
      %v6697 = vld [vmem:[%s6681 + $0x78] sm:$0xff]
      %6698 = vmatprep.subr.mxu0 0.0
      %6699 = vmatpush1.msra.mxu0 %v6682
      %6700 = vmatprep.subr.mxu0 0.0
      %6701 = vmatpush1.msra.mxu0 %v6683
      %6702 = vmatprep.subr.mxu0 0.0
      %6703 = vmatpush1.msra.mxu0 %v6684
      %6704 = vmatprep.subr.mxu0 0.0
      %6705 = vmatpush1.msra.mxu0 %v6685
      %6706 = vmatprep.subr.mxu0 0.0
      %6707 = vmatpush1.msra.mxu0 %v6686
      %6708 = vmatprep.subr.mxu0 0.0
      %6709 = vmatpush1.msra.mxu0 %v6687
      %6710 = vmatprep.subr.mxu0 0.0
      %6711 = vmatpush1.msra.mxu0 %v6688
      %6712 = vmatprep.subr.mxu0 0.0
      %6713 = vmatpush1.msra.mxu0 %v6689
      %6714 = vmatprep.subr.mxu0 0.0
      %6715 = vmatpush1.msra.mxu0 %v6690
      %6716 = vmatprep.subr.mxu0 0.0
      %6717 = vmatpush1.msra.mxu0 %v6691
      %6718 = vmatprep.subr.mxu0 0.0
      %6719 = vmatpush1.msra.mxu0 %v6692
      %6720 = vmatprep.subr.mxu0 0.0
      %6721 = vmatpush1.msra.mxu0 %v6693
      %6722 = vmatprep.subr.mxu0 0.0
      %6723 = vmatpush1.msra.mxu0 %v6694
      %6724 = vmatprep.subr.mxu0 0.0
      %6725 = vmatpush1.msra.mxu0 %v6695
      %6726 = vmatprep.subr.mxu0 0.0
      %6727 = vmatpush1.msra.mxu0 %v6696
      %6728 = vmatprep.subr.mxu0 0.0
      %6729 = vmatpush1.msra.mxu0 %v6697
      %6730 = vmatprep.subr.mxu0 0.0
      %6731 = vmatpush1.msra.mxu0 0.0
      %6732 = vmatprep.subr.mxu0 0.0
      %6733 = vmatpush1.msra.mxu0 0.0
      %6734 = vmatprep.subr.mxu0 0.0
      %6735 = vmatpush1.msra.mxu0 0.0
      %6736 = vmatprep.subr.mxu0 0.0
      %6737 = vmatpush1.msra.mxu0 0.0
      %6738 = vmatprep.subr.mxu0 0.0
      %6739 = vmatpush1.msra.mxu0 0.0
      %6740 = vmatprep.subr.mxu0 0.0
      %6741 = vmatpush1.msra.mxu0 0.0
      %6742 = vmatprep.subr.mxu0 0.0
      %6743 = vmatpush1.msra.mxu0 0.0
      %6744 = vmatprep.subr.mxu0 0.0
      %6745 = vmatpush1.msra.mxu0 0.0
      %6746 = vmatprep.subr.mxu0 0.0
      %6747 = vmatpush1.msra.mxu0 0.0
      %6748 = vmatprep.subr.mxu0 0.0
      %6749 = vmatpush1.msra.mxu0 0.0
      %6750 = vmatprep.subr.mxu0 0.0
      %6751 = vmatpush1.msra.mxu0 0.0
      %6752 = vmatprep.subr.mxu0 0.0
      %6753 = vmatpush1.msra.mxu0 0.0
      %6754 = vmatprep.subr.mxu0 0.0
      %6755 = vmatpush1.msra.mxu0 0.0
      %6756 = vmatprep.subr.mxu0 0.0
      %6757 = vmatpush1.msra.mxu0 0.0
      %6758 = vmatprep.subr.mxu0 0.0
      %6759 = vmatpush1.msra.mxu0 0.0
      %6760 = vmatprep.subr.mxu0 0.0
      %6761 = vmatpush1.msra.mxu0 0.0
      %6762 = vmatprep.mubr.f32.mxu0 0.0
      %6763 = vmatmul.mubr.f32.gmra.mrb[0].mxu0 %v6645
      %v6764 = vpop.f32.mrb[0].mxu0
      %v6765 = vadd.f32 0.0, %v6764
      %v6766 = vpop.f32.mrb[0].mxu0
      %6767 = vmatprep.mubr.f32.mxu0 0.0
      %6768 = vmatmul.mubr.f32.gmra.mrb[0].mxu0 %v6646
      %v6769 = vpop.f32.mrb[0].mxu0
      %v6770 = vadd.f32 0.0, %v6769
      %v6771 = vpop.f32.mrb[0].mxu0
      %6772 = vmatprep.mubr.f32.mxu0 0.0
      %6773 = vmatmul.mubr.f32.gmra.mrb[0].mxu0 %v6647
      %v6774 = vpop.f32.mrb[0].mxu0
      %v6775 = vadd.f32 0.0, %v6774
      %v6776 = vpop.f32.mrb[0].mxu0
      %6777 = vmatprep.mubr.f32.mxu0 0.0
      %6778 = vmatmul.mubr.f32.gmra.mrb[0].mxu0 %v6648
      %v6779 = vpop.f32.mrb[0].mxu0
      %v6780 = vadd.f32 0.0, %v6779
      %v6781 = vpop.f32.mrb[0].mxu0
      %6782 = vmatprep.mubr.f32.mxu0 0.0
      %6783 = vmatmul.mubr.f32.gmra.mrb[0].mxu0 %v6649
      %v6784 = vpop.f32.mrb[0].mxu0
      %v6785 = vadd.f32 0.0, %v6784
      %v6786 = vpop.f32.mrb[0].mxu0
      %6787 = vmatprep.mubr.f32.mxu0 0.0
      %6788 = vmatmul.mubr.f32.gmra.mrb[0].mxu0 %v6650
      %v6789 = vpop.f32.mrb[0].mxu0
      %v6790 = vadd.f32 0.0, %v6789
      %v6791 = vpop.f32.mrb[0].mxu0
      %6792 = vmatprep.mubr.f32.mxu0 0.0
      %6793 = vmatmul.mubr.f32.gmra.mrb[0].mxu0 %v6651
      %v6794 = vpop.f32.mrb[0].mxu0
      %v6795 = vadd.f32 0.0, %v6794
      %v6796 = vpop.f32.mrb[0].mxu0
      %6797 = vmatprep.mubr.f32.mxu0 0.0
      %6798 = vmatmul.mubr.f32.gmra.mrb[0].mxu0 %v6652
      %v6799 = vpop.f32.mrb[0].mxu0
      %v6800 = vadd.f32 0.0, %v6799
      %v6801 = vpop.f32.mrb[0].mxu0
      %6802 = vmatprep.mubr.f32.mxu0 0.0
      %6803 = vmatmul.mubr.f32.gmra.mrb[0].mxu0 %v6653
      %v6804 = vpop.f32.mrb[0].mxu0
      %v6805 = vadd.f32 0.0, %v6804
      %v6806 = vpop.f32.mrb[0].mxu0
      %6807 = vmatprep.mubr.f32.mxu0 0.0
      %6808 = vmatmul.mubr.f32.gmra.mrb[0].mxu0 %v6654
      %v6809 = vpop.f32.mrb[0].mxu0
      %v6810 = vadd.f32 0.0, %v6809
      %v6811 = vpop.f32.mrb[0].mxu0
      %6812 = vmatprep.mubr.f32.mxu0 0.0
      %6813 = vmatmul.mubr.f32.gmra.mrb[0].mxu0 %v6655
      %v6814 = vpop.f32.mrb[0].mxu0
      %v6815 = vadd.f32 0.0, %v6814
      %v6816 = vpop.f32.mrb[0].mxu0
      %6817 = vmatprep.mubr.f32.mxu0 0.0
      %6818 = vmatmul.mubr.f32.gmra.mrb[0].mxu0 %v6656
      %v6819 = vpop.f32.mrb[0].mxu0
      %v6820 = vadd.f32 0.0, %v6819
      %v6821 = vpop.f32.mrb[0].mxu0
      %6822 = vmatprep.mubr.f32.mxu0 0.0
      %6823 = vmatmul.mubr.f32.gmra.mrb[0].mxu0 %v6657
      %v6824 = vpop.f32.mrb[0].mxu0
      %v6825 = vadd.f32 0.0, %v6824
      %v6826 = vpop.f32.mrb[0].mxu0
      %6827 = vmatprep.mubr.f32.mxu0 0.0
      %6828 = vmatmul.mubr.f32.gmra.mrb[0].mxu0 %v6658
      %v6829 = vpop.f32.mrb[0].mxu0
      %v6830 = vadd.f32 0.0, %v6829
      %v6831 = vpop.f32.mrb[0].mxu0
      %6832 = vmatprep.mubr.f32.mxu0 0.0
      %6833 = vmatmul.mubr.f32.gmra.mrb[0].mxu0 %v6659
      %v6834 = vpop.f32.mrb[0].mxu0
      %v6835 = vadd.f32 0.0, %v6834
      %v6836 = vpop.f32.mrb[0].mxu0
      %6837 = vmatprep.mubr.f32.mxu0 0.0
      %6838 = vmatmul.mubr.f32.gmra.mrb[0].mxu0 %v6660
      %v6839 = vpop.f32.mrb[0].mxu0
      %v6840 = vadd.f32 0.0, %v6839
      %v6841 = vpop.f32.mrb[0].mxu0
      %6842 = vmatprep.mubr.f32.mxu0 0.0
      %6843 = vmatmul.mubr.f32.gmra.mrb[0].mxu0 %v6661
      %v6844 = vpop.f32.mrb[0].mxu0
      %v6845 = vadd.f32 0.0, %v6844
      %v6846 = vpop.f32.mrb[0].mxu0
      %6847 = vmatprep.mubr.f32.mxu0 0.0
      %6848 = vmatmul.mubr.f32.gmra.mrb[0].mxu0 %v6662
      %v6849 = vpop.f32.mrb[0].mxu0
      %v6850 = vadd.f32 0.0, %v6849
      %v6851 = vpop.f32.mrb[0].mxu0
      %6852 = vmatprep.mubr.f32.mxu0 0.0
      %6853 = vmatmul.mubr.f32.gmra.mrb[0].mxu0 %v6663
      %v6854 = vpop.f32.mrb[0].mxu0
      %v6855 = vadd.f32 0.0, %v6854
      %v6856 = vpop.f32.mrb[0].mxu0
      %6857 = vmatprep.mubr.f32.mxu0 0.0
      %6858 = vmatmul.mubr.f32.gmra.mrb[0].mxu0 %v6664
      %v6859 = vpop.f32.mrb[0].mxu0
      %v6860 = vadd.f32 0.0, %v6859
      %v6861 = vpop.f32.mrb[0].mxu0
      %6862 = vmatprep.mubr.f32.mxu0 0.0
      %6863 = vmatmul.mubr.f32.gmra.mrb[0].mxu0 %v6665
      %v6864 = vpop.f32.mrb[0].mxu0
      %v6865 = vadd.f32 0.0, %v6864
      %v6866 = vpop.f32.mrb[0].mxu0
      %6867 = vmatprep.mubr.f32.mxu0 0.0
      %6868 = vmatmul.mubr.f32.gmra.mrb[0].mxu0 %v6666
      %v6869 = vpop.f32.mrb[0].mxu0
      %v6870 = vadd.f32 0.0, %v6869
      %v6871 = vpop.f32.mrb[0].mxu0
      %6872 = vmatprep.mubr.f32.mxu0 0.0
      %6873 = vmatmul.mubr.f32.gmra.mrb[0].mxu0 %v6667
      %v6874 = vpop.f32.mrb[0].mxu0
      %v6875 = vadd.f32 0.0, %v6874
      %v6876 = vpop.f32.mrb[0].mxu0
      %6877 = vmatprep.mubr.f32.mxu0 0.0
      %6878 = vmatmul.mubr.f32.gmra.mrb[0].mxu0 %v6668
      %v6879 = vpop.f32.mrb[0].mxu0
      %v6880 = vadd.f32 0.0, %v6879
      %v6881 = vpop.f32.mrb[0].mxu0
      %6882 = vmatprep.mubr.f32.mxu0 0.0
      %6883 = vmatmul.mubr.f32.gmra.mrb[0].mxu0 %v6669
      %v6884 = vpop.f32.mrb[0].mxu0
      %v6885 = vadd.f32 0.0, %v6884
      %v6886 = vpop.f32.mrb[0].mxu0
      %6887 = vmatprep.mubr.f32.mxu0 0.0
      %6888 = vmatmul.mubr.f32.gmra.mrb[0].mxu0 %v6670
      %v6889 = vpop.f32.mrb[0].mxu0
      %v6890 = vadd.f32 0.0, %v6889
      %v6891 = vpop.f32.mrb[0].mxu0
      %6892 = vmatprep.mubr.f32.mxu0 0.0
      %6893 = vmatmul.mubr.f32.gmra.mrb[0].mxu0 %v6671
      %v6894 = vpop.f32.mrb[0].mxu0
      %v6895 = vadd.f32 0.0, %v6894
      %v6896 = vpop.f32.mrb[0].mxu0
      %6897 = vmatprep.mubr.f32.mxu0 0.0
      %6898 = vmatmul.mubr.f32.gmra.mrb[0].mxu0 %v6672
      %v6899 = vpop.f32.mrb[0].mxu0
      %v6900 = vadd.f32 0.0, %v6899
      %v6901 = vpop.f32.mrb[0].mxu0
      %6902 = vmatprep.mubr.f32.mxu0 0.0
      %6903 = vmatmul.mubr.f32.gmra.mrb[0].mxu0 %v6673
      %v6904 = vpop.f32.mrb[0].mxu0
      %v6905 = vadd.f32 0.0, %v6904
      %v6906 = vpop.f32.mrb[0].mxu0
      %6907 = vmatprep.mubr.f32.mxu0 0.0
      %6908 = vmatmul.mubr.f32.gmra.mrb[0].mxu0 %v6674
      %v6909 = vpop.f32.mrb[0].mxu0
      %v6910 = vadd.f32 0.0, %v6909
      %v6911 = vpop.f32.mrb[0].mxu0
      %6912 = vmatprep.mubr.f32.mxu0 0.0
      %6913 = vmatmul.mubr.f32.gmra.mrb[0].mxu0 %v6675
      %v6914 = vpop.f32.mrb[0].mxu0
      %v6915 = vadd.f32 0.0, %v6914
      %v6916 = vpop.f32.mrb[0].mxu0
      %6917 = vmatprep.mubr.f32.mxu0 0.0
      %6918 = vmatmul.mubr.f32.gmra.mrb[0].mxu0 %v6676
      %v6919 = vpop.f32.mrb[0].mxu0
      %v6920 = vadd.f32 0.0, %v6919
      %v6921 = vpop.f32.mrb[0].mxu0
      %6922 = vmatprep.mubr.f32.mxu0 0.0
      %6923 = vmatmul.mubr.f32.gmra.mrb[0].mxu0 %v6677
      %v6924 = vpop.f32.mrb[0].mxu0
      %v6925 = vadd.f32 0.0, %v6924
      %v6926 = vpop.f32.mrb[0].mxu0
      %6927 = vmatprep.mubr.f32.mxu0 0.0
      %6928 = vmatmul.mubr.f32.gmra.mrb[0].mxu0 %v6678
      %v6929 = vpop.f32.mrb[0].mxu0
      %v6930 = vadd.f32 0.0, %v6929
      %v6931 = vpop.f32.mrb[0].mxu0
      %6932 = vmatprep.mubr.f32.mxu0 0.0
      %6933 = vmatmul.mubr.f32.gmra.mrb[0].mxu0 %v6679
      %v6934 = vpop.f32.mrb[0].mxu0
      %v6935 = vadd.f32 0.0, %v6934
      %v6936 = vpop.f32.mrb[0].mxu0
      %6937 = vmatprep.mubr.f32.mxu0 0.0
      %6938 = vmatmul.mubr.f32.gmra.mrb[0].mxu0 %v6680
      %v6939 = vpop.f32.mrb[0].mxu0
      %v6940 = vadd.f32 0.0, %v6939
      %v6941 = vpop.f32.mrb[0].mxu0
      %6942 = vdwg.mxu0
      %v6943 = vld [vmem:[#allocation3] sm:$0xff]
      %v6944 = vld [vmem:[#allocation3 + $0x8] sm:$0xff]
      %v6945 = vld [vmem:[#allocation3 + $0x10] sm:$0xff]
      %v6946 = vld [vmem:[#allocation3 + $0x18] sm:$0xff]
      %v6947 = vld [vmem:[#allocation3 + $0x20] sm:$0xff]
      %v6948 = vld [vmem:[#allocation3 + $0x28] sm:$0xff]
      %v6949 = vld [vmem:[#allocation3 + $0x30] sm:$0xff]
      %v6950 = vld [vmem:[#allocation3 + $0x38] sm:$0xff]
      %v6951 = vld [vmem:[#allocation3 + $0x40] sm:$0xff]
      %v6952 = vld [vmem:[#allocation3 + $0x48] sm:$0xff]
      %v6953 = vld [vmem:[#allocation3 + $0x50] sm:$0xff]
      %v6954 = vld [vmem:[#allocation3 + $0x58] sm:$0xff]
      %v6955 = vld [vmem:[#allocation3 + $0x60] sm:$0xff]
      %v6956 = vld [vmem:[#allocation3 + $0x68] sm:$0xff]
      %v6957 = vld [vmem:[#allocation3 + $0x70] sm:$0xff]
      %v6958 = vld [vmem:[#allocation3 + $0x78] sm:$0xff]
      %v6959 = vld [vmem:[#allocation3 + $0x80] sm:$0xff]
      %v6960 = vld [vmem:[#allocation3 + $0x88] sm:$0xff]
      %v6961 = vld [vmem:[#allocation3 + $0x90] sm:$0xff]
      %v6962 = vld [vmem:[#allocation3 + $0x98] sm:$0xff]
      %v6963 = vld [vmem:[#allocation3 + $0xa0] sm:$0xff]
      %v6964 = vld [vmem:[#allocation3 + $0xa8] sm:$0xff]
      %v6965 = vld [vmem:[#allocation3 + $0xb0] sm:$0xff]
      %v6966 = vld [vmem:[#allocation3 + $0xb8] sm:$0xff]
      %v6967 = vld [vmem:[#allocation3 + $0xc0] sm:$0xff]
      %v6968 = vld [vmem:[#allocation3 + $0xc8] sm:$0xff]
      %v6969 = vld [vmem:[#allocation3 + $0xd0] sm:$0xff]
      %v6970 = vld [vmem:[#allocation3 + $0xd8] sm:$0xff]
      %v6971 = vld [vmem:[#allocation3 + $0xe0] sm:$0xff]
      %v6972 = vld [vmem:[#allocation3 + $0xe8] sm:$0xff]
      %v6973 = vld [vmem:[#allocation3 + $0xf0] sm:$0xff]
      %v6974 = vld [vmem:[#allocation3 + $0xf8] sm:$0xff]
      %v6975 = vld [vmem:[#allocation3 + $0x100] sm:$0xff]
      %v6976 = vld [vmem:[#allocation3 + $0x108] sm:$0xff]
      %v6977 = vld [vmem:[#allocation3 + $0x110] sm:$0xff]
      %v6978 = vld [vmem:[#allocation3 + $0x118] sm:$0xff]
      %v6979 = vadd.f32 %v6943, %v6765
      %v6980 = vadd.f32 %v6944, %v6770
      %v6981 = vadd.f32 %v6945, %v6775
      %v6982 = vadd.f32 %v6946, %v6780
      %v6983 = vadd.f32 %v6947, %v6785
      %v6984 = vadd.f32 %v6948, %v6790
      %v6985 = vadd.f32 %v6949, %v6795
      %v6986 = vadd.f32 %v6950, %v6800
      %v6987 = vadd.f32 %v6951, %v6805
      %v6988 = vadd.f32 %v6952, %v6810
      %v6989 = vadd.f32 %v6953, %v6815
      %v6990 = vadd.f32 %v6954, %v6820
      %v6991 = vadd.f32 %v6955, %v6825
      %v6992 = vadd.f32 %v6956, %v6830
      %v6993 = vadd.f32 %v6957, %v6835
      %v6994 = vadd.f32 %v6958, %v6840
      %v6995 = vadd.f32 %v6959, %v6845
      %v6996 = vadd.f32 %v6960, %v6850
      %v6997 = vadd.f32 %v6961, %v6855
      %v6998 = vadd.f32 %v6962, %v6860
      %v6999 = vadd.f32 %v6963, %v6865
      %v7000 = vadd.f32 %v6964, %v6870
      %v7001 = vadd.f32 %v6965, %v6875
      %v7002 = vadd.f32 %v6966, %v6880
      %v7003 = vadd.f32 %v6967, %v6885
      %v7004 = vadd.f32 %v6968, %v6890
      %v7005 = vadd.f32 %v6969, %v6895
      %v7006 = vadd.f32 %v6970, %v6900
      %v7007 = vadd.f32 %v6971, %v6905
      %v7008 = vadd.f32 %v6972, %v6910
      %v7009 = vadd.f32 %v6973, %v6915
      %v7010 = vadd.f32 %v6974, %v6920
      %v7011 = vadd.f32 %v6975, %v6925
      %v7012 = vadd.f32 %v6976, %v6930
      %v7013 = vadd.f32 %v6977, %v6935
      %v7014 = vadd.f32 %v6978, %v6940
      %7015 = vst [vmem:[#allocation3] sm:$0xff] %v6979
      %7016 = vst [vmem:[#allocation3 + $0x8] sm:$0xff] %v6980
      %7017 = vst [vmem:[#allocation3 + $0x10] sm:$0xff] %v6981
      %7018 = vst [vmem:[#allocation3 + $0x18] sm:$0xff] %v6982
      %7019 = vst [vmem:[#allocation3 + $0x20] sm:$0xff] %v6983
      %7020 = vst [vmem:[#allocation3 + $0x28] sm:$0xff] %v6984
      %7021 = vst [vmem:[#allocation3 + $0x30] sm:$0xff] %v6985
      %7022 = vst [vmem:[#allocation3 + $0x38] sm:$0xff] %v6986
      %7023 = vst [vmem:[#allocation3 + $0x40] sm:$0xff] %v6987
      %7024 = vst [vmem:[#allocation3 + $0x48] sm:$0xff] %v6988
      %7025 = vst [vmem:[#allocation3 + $0x50] sm:$0xff] %v6989
      %7026 = vst [vmem:[#allocation3 + $0x58] sm:$0xff] %v6990
      %7027 = vst [vmem:[#allocation3 + $0x60] sm:$0xff] %v6991
      %7028 = vst [vmem:[#allocation3 + $0x68] sm:$0xff] %v6992
      %7029 = vst [vmem:[#allocation3 + $0x70] sm:$0xff] %v6993
      %7030 = vst [vmem:[#allocation3 + $0x78] sm:$0xff] %v6994
      %7031 = vst [vmem:[#allocation3 + $0x80] sm:$0xff] %v6995
      %7032 = vst [vmem:[#allocation3 + $0x88] sm:$0xff] %v6996
      %7033 = vst [vmem:[#allocation3 + $0x90] sm:$0xff] %v6997
      %7034 = vst [vmem:[#allocation3 + $0x98] sm:$0xff] %v6998
      %7035 = vst [vmem:[#allocation3 + $0xa0] sm:$0xff] %v6999
      %7036 = vst [vmem:[#allocation3 + $0xa8] sm:$0xff] %v7000
      %7037 = vst [vmem:[#allocation3 + $0xb0] sm:$0xff] %v7001
      %7038 = vst [vmem:[#allocation3 + $0xb8] sm:$0xff] %v7002
      %7039 = vst [vmem:[#allocation3 + $0xc0] sm:$0xff] %v7003
      %7040 = vst [vmem:[#allocation3 + $0xc8] sm:$0xff] %v7004
      %7041 = vst [vmem:[#allocation3 + $0xd0] sm:$0xff] %v7005
      %7042 = vst [vmem:[#allocation3 + $0xd8] sm:$0xff] %v7006
      %7043 = vst [vmem:[#allocation3 + $0xe0] sm:$0xff] %v7007
      %7044 = vst [vmem:[#allocation3 + $0xe8] sm:$0xff] %v7008
      %7045 = vst [vmem:[#allocation3 + $0xf0] sm:$0xff] %v7009
      %7046 = vst [vmem:[#allocation3 + $0xf8] sm:$0xff] %v7010
      %7047 = vst [vmem:[#allocation3 + $0x100] sm:$0xff] %v7011
      %7048 = vst [vmem:[#allocation3 + $0x108] sm:$0xff] %v7012
      %7049 = vst [vmem:[#allocation3 + $0x110] sm:$0xff] %v7013
      %7050 = vst [vmem:[#allocation3 + $0x118] sm:$0xff] %v7014
      %v7051 = vld [vmem:[#allocation2 + $0x2a] sm:$0xff]
      %v7052 = vld [vmem:[#allocation2 + $0x32] sm:$0xff]
      %v7053 = vld [vmem:[#allocation2 + $0x3a] sm:$0xff]
      %v7054 = vld [vmem:[#allocation2 + $0x42] sm:$0xff]
      %v7055 = vld [vmem:[#allocation2 + $0x4a] sm:$0xff]
      %v7056 = vld [vmem:[#allocation2 + $0x52] sm:$0xff]
      %v7057 = vld [vmem:[#allocation2 + $0x5a] sm:$0xff]
      %v7058 = vld [vmem:[#allocation2 + $0x62] sm:$0xff]
      %v7059 = vld [vmem:[#allocation2 + $0x6a] sm:$0xff]
      %v7060 = vld [vmem:[#allocation2 + $0x72] sm:$0xff]
      %v7061 = vld [vmem:[#allocation2 + $0x7a] sm:$0xff]
      %v7062 = vld [vmem:[#allocation2 + $0x82] sm:$0xff]
      %v7063 = vld [vmem:[#allocation2 + $0x8a] sm:$0xff]
      %v7064 = vld [vmem:[#allocation2 + $0x92] sm:$0xff]
      %v7065 = vld [vmem:[#allocation2 + $0x9a] sm:$0xff]
      %v7066 = vld [vmem:[#allocation2 + $0xa2] sm:$0xff]
      %v7067 = vld [vmem:[#allocation2 + $0xaa] sm:$0xff]
      %v7068 = vld [vmem:[#allocation2 + $0xb2] sm:$0xff]
      %v7069 = vld [vmem:[#allocation2 + $0xba] sm:$0xff]
      %v7070 = vld [vmem:[#allocation2 + $0xc2] sm:$0xff]
      %v7071 = vld [vmem:[#allocation2 + $0xca] sm:$0xff]
      %v7072 = vld [vmem:[#allocation2 + $0xd2] sm:$0xff]
      %v7073 = vld [vmem:[#allocation2 + $0xda] sm:$0xff]
      %v7074 = vld [vmem:[#allocation2 + $0xe2] sm:$0xff]
      %v7075 = vld [vmem:[#allocation2 + $0xea] sm:$0xff]
      %v7076 = vld [vmem:[#allocation2 + $0xf2] sm:$0xff]
      %v7077 = vld [vmem:[#allocation2 + $0xfa] sm:$0xff]
      %v7078 = vld [vmem:[#allocation2 + $0x102] sm:$0xff]
      %v7079 = vld [vmem:[#allocation2 + $0x10a] sm:$0xff]
      %v7080 = vld [vmem:[#allocation2 + $0x112] sm:$0xff]
      %v7081 = vld [vmem:[#allocation2 + $0x11a] sm:$0xff]
      %v7082 = vld [vmem:[#allocation2 + $0x122] sm:$0xff]
      %v7083 = vld [vmem:[#allocation2 + $0x12a] sm:$0xff]
      %v7084 = vld [vmem:[#allocation2 + $0x132] sm:$0xff]
      %v7085 = vld [vmem:[#allocation2 + $0x13a] sm:$0xff]
      %v7086 = vld [vmem:[#allocation2 + $0x142] sm:$0xff]
      %s7087 = scalar_lea.vmem %s3, 896
      %v7088 = vld [vmem:[%s7087] sm:$0xff]
      %v7089 = vld [vmem:[%s7087 + $0x8] sm:$0xff]
      %v7090 = vld [vmem:[%s7087 + $0x10] sm:$0xff]
      %v7091 = vld [vmem:[%s7087 + $0x18] sm:$0xff]
      %v7092 = vld [vmem:[%s7087 + $0x20] sm:$0xff]
      %v7093 = vld [vmem:[%s7087 + $0x28] sm:$0xff]
      %v7094 = vld [vmem:[%s7087 + $0x30] sm:$0xff]
      %v7095 = vld [vmem:[%s7087 + $0x38] sm:$0xff]
      %v7096 = vld [vmem:[%s7087 + $0x40] sm:$0xff]
      %v7097 = vld [vmem:[%s7087 + $0x48] sm:$0xff]
      %v7098 = vld [vmem:[%s7087 + $0x50] sm:$0xff]
      %v7099 = vld [vmem:[%s7087 + $0x58] sm:$0xff]
      %v7100 = vld [vmem:[%s7087 + $0x60] sm:$0xff]
      %v7101 = vld [vmem:[%s7087 + $0x68] sm:$0xff]
      %v7102 = vld [vmem:[%s7087 + $0x70] sm:$0xff]
      %v7103 = vld [vmem:[%s7087 + $0x78] sm:$0xff]
      %7104 = vmatprep.subr.mxu0 0.0
      %7105 = vmatpush1.msra.mxu0 %v7088
      %7106 = vmatprep.subr.mxu0 0.0
      %7107 = vmatpush1.msra.mxu0 %v7089
      %7108 = vmatprep.subr.mxu0 0.0
      %7109 = vmatpush1.msra.mxu0 %v7090
      %7110 = vmatprep.subr.mxu0 0.0
      %7111 = vmatpush1.msra.mxu0 %v7091
      %7112 = vmatprep.subr.mxu0 0.0
      %7113 = vmatpush1.msra.mxu0 %v7092
      %7114 = vmatprep.subr.mxu0 0.0
      %7115 = vmatpush1.msra.mxu0 %v7093
      %7116 = vmatprep.subr.mxu0 0.0
      %7117 = vmatpush1.msra.mxu0 %v7094
      %7118 = vmatprep.subr.mxu0 0.0
      %7119 = vmatpush1.msra.mxu0 %v7095
      %7120 = vmatprep.subr.mxu0 0.0
      %7121 = vmatpush1.msra.mxu0 %v7096
      %7122 = vmatprep.subr.mxu0 0.0
      %7123 = vmatpush1.msra.mxu0 %v7097
      %7124 = vmatprep.subr.mxu0 0.0
      %7125 = vmatpush1.msra.mxu0 %v7098
      %7126 = vmatprep.subr.mxu0 0.0
      %7127 = vmatpush1.msra.mxu0 %v7099
      %7128 = vmatprep.subr.mxu0 0.0
      %7129 = vmatpush1.msra.mxu0 %v7100
      %7130 = vmatprep.subr.mxu0 0.0
      %7131 = vmatpush1.msra.mxu0 %v7101
      %7132 = vmatprep.subr.mxu0 0.0
      %7133 = vmatpush1.msra.mxu0 %v7102
      %7134 = vmatprep.subr.mxu0 0.0
      %7135 = vmatpush1.msra.mxu0 %v7103
      %7136 = vmatprep.subr.mxu0 0.0
      %7137 = vmatpush1.msra.mxu0 0.0
      %7138 = vmatprep.subr.mxu0 0.0
      %7139 = vmatpush1.msra.mxu0 0.0
      %7140 = vmatprep.subr.mxu0 0.0
      %7141 = vmatpush1.msra.mxu0 0.0
      %7142 = vmatprep.subr.mxu0 0.0
      %7143 = vmatpush1.msra.mxu0 0.0
      %7144 = vmatprep.subr.mxu0 0.0
      %7145 = vmatpush1.msra.mxu0 0.0
      %7146 = vmatprep.subr.mxu0 0.0
      %7147 = vmatpush1.msra.mxu0 0.0
      %7148 = vmatprep.subr.mxu0 0.0
      %7149 = vmatpush1.msra.mxu0 0.0
      %7150 = vmatprep.subr.mxu0 0.0
      %7151 = vmatpush1.msra.mxu0 0.0
      %7152 = vmatprep.subr.mxu0 0.0
      %7153 = vmatpush1.msra.mxu0 0.0
      %7154 = vmatprep.subr.mxu0 0.0
      %7155 = vmatpush1.msra.mxu0 0.0
      %7156 = vmatprep.subr.mxu0 0.0
      %7157 = vmatpush1.msra.mxu0 0.0
      %7158 = vmatprep.subr.mxu0 0.0
      %7159 = vmatpush1.msra.mxu0 0.0
      %7160 = vmatprep.subr.mxu0 0.0
      %7161 = vmatpush1.msra.mxu0 0.0
      %7162 = vmatprep.subr.mxu0 0.0
      %7163 = vmatpush1.msra.mxu0 0.0
      %7164 = vmatprep.subr.mxu0 0.0
      %7165 = vmatpush1.msra.mxu0 0.0
      %7166 = vmatprep.subr.mxu0 0.0
      %7167 = vmatpush1.msra.mxu0 0.0
      %7168 = vmatprep.mubr.f32.mxu0 0.0
      %7169 = vmatmul.mubr.f32.gmra.mrb[0].mxu0 %v7051
      %v7170 = vpop.f32.mrb[0].mxu0
      %v7171 = vadd.f32 0.0, %v7170
      %v7172 = vpop.f32.mrb[0].mxu0
      %7173 = vmatprep.mubr.f32.mxu0 0.0
      %7174 = vmatmul.mubr.f32.gmra.mrb[0].mxu0 %v7052
      %v7175 = vpop.f32.mrb[0].mxu0
      %v7176 = vadd.f32 0.0, %v7175
      %v7177 = vpop.f32.mrb[0].mxu0
      %7178 = vmatprep.mubr.f32.mxu0 0.0
      %7179 = vmatmul.mubr.f32.gmra.mrb[0].mxu0 %v7053
      %v7180 = vpop.f32.mrb[0].mxu0
      %v7181 = vadd.f32 0.0, %v7180
      %v7182 = vpop.f32.mrb[0].mxu0
      %7183 = vmatprep.mubr.f32.mxu0 0.0
      %7184 = vmatmul.mubr.f32.gmra.mrb[0].mxu0 %v7054
      %v7185 = vpop.f32.mrb[0].mxu0
      %v7186 = vadd.f32 0.0, %v7185
      %v7187 = vpop.f32.mrb[0].mxu0
      %7188 = vmatprep.mubr.f32.mxu0 0.0
      %7189 = vmatmul.mubr.f32.gmra.mrb[0].mxu0 %v7055
      %v7190 = vpop.f32.mrb[0].mxu0
      %v7191 = vadd.f32 0.0, %v7190
      %v7192 = vpop.f32.mrb[0].mxu0
      %7193 = vmatprep.mubr.f32.mxu0 0.0
      %7194 = vmatmul.mubr.f32.gmra.mrb[0].mxu0 %v7056
      %v7195 = vpop.f32.mrb[0].mxu0
      %v7196 = vadd.f32 0.0, %v7195
      %v7197 = vpop.f32.mrb[0].mxu0
      %7198 = vmatprep.mubr.f32.mxu0 0.0
      %7199 = vmatmul.mubr.f32.gmra.mrb[0].mxu0 %v7057
      %v7200 = vpop.f32.mrb[0].mxu0
      %v7201 = vadd.f32 0.0, %v7200
      %v7202 = vpop.f32.mrb[0].mxu0
      %7203 = vmatprep.mubr.f32.mxu0 0.0
      %7204 = vmatmul.mubr.f32.gmra.mrb[0].mxu0 %v7058
      %v7205 = vpop.f32.mrb[0].mxu0
      %v7206 = vadd.f32 0.0, %v7205
      %v7207 = vpop.f32.mrb[0].mxu0
      %7208 = vmatprep.mubr.f32.mxu0 0.0
      %7209 = vmatmul.mubr.f32.gmra.mrb[0].mxu0 %v7059
      %v7210 = vpop.f32.mrb[0].mxu0
      %v7211 = vadd.f32 0.0, %v7210
      %v7212 = vpop.f32.mrb[0].mxu0
      %7213 = vmatprep.mubr.f32.mxu0 0.0
      %7214 = vmatmul.mubr.f32.gmra.mrb[0].mxu0 %v7060
      %v7215 = vpop.f32.mrb[0].mxu0
      %v7216 = vadd.f32 0.0, %v7215
      %v7217 = vpop.f32.mrb[0].mxu0
      %7218 = vmatprep.mubr.f32.mxu0 0.0
      %7219 = vmatmul.mubr.f32.gmra.mrb[0].mxu0 %v7061
      %v7220 = vpop.f32.mrb[0].mxu0
      %v7221 = vadd.f32 0.0, %v7220
      %v7222 = vpop.f32.mrb[0].mxu0
      %7223 = vmatprep.mubr.f32.mxu0 0.0
      %7224 = vmatmul.mubr.f32.gmra.mrb[0].mxu0 %v7062
      %v7225 = vpop.f32.mrb[0].mxu0
      %v7226 = vadd.f32 0.0, %v7225
      %v7227 = vpop.f32.mrb[0].mxu0
      %7228 = vmatprep.mubr.f32.mxu0 0.0
      %7229 = vmatmul.mubr.f32.gmra.mrb[0].mxu0 %v7063
      %v7230 = vpop.f32.mrb[0].mxu0
      %v7231 = vadd.f32 0.0, %v7230
      %v7232 = vpop.f32.mrb[0].mxu0
      %7233 = vmatprep.mubr.f32.mxu0 0.0
      %7234 = vmatmul.mubr.f32.gmra.mrb[0].mxu0 %v7064
      %v7235 = vpop.f32.mrb[0].mxu0
      %v7236 = vadd.f32 0.0, %v7235
      %v7237 = vpop.f32.mrb[0].mxu0
      %7238 = vmatprep.mubr.f32.mxu0 0.0
      %7239 = vmatmul.mubr.f32.gmra.mrb[0].mxu0 %v7065
      %v7240 = vpop.f32.mrb[0].mxu0
      %v7241 = vadd.f32 0.0, %v7240
      %v7242 = vpop.f32.mrb[0].mxu0
      %7243 = vmatprep.mubr.f32.mxu0 0.0
      %7244 = vmatmul.mubr.f32.gmra.mrb[0].mxu0 %v7066
      %v7245 = vpop.f32.mrb[0].mxu0
      %v7246 = vadd.f32 0.0, %v7245
      %v7247 = vpop.f32.mrb[0].mxu0
      %7248 = vmatprep.mubr.f32.mxu0 0.0
      %7249 = vmatmul.mubr.f32.gmra.mrb[0].mxu0 %v7067
      %v7250 = vpop.f32.mrb[0].mxu0
      %v7251 = vadd.f32 0.0, %v7250
      %v7252 = vpop.f32.mrb[0].mxu0
      %7253 = vmatprep.mubr.f32.mxu0 0.0
      %7254 = vmatmul.mubr.f32.gmra.mrb[0].mxu0 %v7068
      %v7255 = vpop.f32.mrb[0].mxu0
      %v7256 = vadd.f32 0.0, %v7255
      %v7257 = vpop.f32.mrb[0].mxu0
      %7258 = vmatprep.mubr.f32.mxu0 0.0
      %7259 = vmatmul.mubr.f32.gmra.mrb[0].mxu0 %v7069
      %v7260 = vpop.f32.mrb[0].mxu0
      %v7261 = vadd.f32 0.0, %v7260
      %v7262 = vpop.f32.mrb[0].mxu0
      %7263 = vmatprep.mubr.f32.mxu0 0.0
      %7264 = vmatmul.mubr.f32.gmra.mrb[0].mxu0 %v7070
      %v7265 = vpop.f32.mrb[0].mxu0
      %v7266 = vadd.f32 0.0, %v7265
      %v7267 = vpop.f32.mrb[0].mxu0
      %7268 = vmatprep.mubr.f32.mxu0 0.0
      %7269 = vmatmul.mubr.f32.gmra.mrb[0].mxu0 %v7071
      %v7270 = vpop.f32.mrb[0].mxu0
      %v7271 = vadd.f32 0.0, %v7270
      %v7272 = vpop.f32.mrb[0].mxu0
      %7273 = vmatprep.mubr.f32.mxu0 0.0
      %7274 = vmatmul.mubr.f32.gmra.mrb[0].mxu0 %v7072
      %v7275 = vpop.f32.mrb[0].mxu0
      %v7276 = vadd.f32 0.0, %v7275
      %v7277 = vpop.f32.mrb[0].mxu0
      %7278 = vmatprep.mubr.f32.mxu0 0.0
      %7279 = vmatmul.mubr.f32.gmra.mrb[0].mxu0 %v7073
      %v7280 = vpop.f32.mrb[0].mxu0
      %v7281 = vadd.f32 0.0, %v7280
      %v7282 = vpop.f32.mrb[0].mxu0
      %7283 = vmatprep.mubr.f32.mxu0 0.0
      %7284 = vmatmul.mubr.f32.gmra.mrb[0].mxu0 %v7074
      %v7285 = vpop.f32.mrb[0].mxu0
      %v7286 = vadd.f32 0.0, %v7285
      %v7287 = vpop.f32.mrb[0].mxu0
      %7288 = vmatprep.mubr.f32.mxu0 0.0
      %7289 = vmatmul.mubr.f32.gmra.mrb[0].mxu0 %v7075
      %v7290 = vpop.f32.mrb[0].mxu0
      %v7291 = vadd.f32 0.0, %v7290
      %v7292 = vpop.f32.mrb[0].mxu0
      %7293 = vmatprep.mubr.f32.mxu0 0.0
      %7294 = vmatmul.mubr.f32.gmra.mrb[0].mxu0 %v7076
      %v7295 = vpop.f32.mrb[0].mxu0
      %v7296 = vadd.f32 0.0, %v7295
      %v7297 = vpop.f32.mrb[0].mxu0
      %7298 = vmatprep.mubr.f32.mxu0 0.0
      %7299 = vmatmul.mubr.f32.gmra.mrb[0].mxu0 %v7077
      %v7300 = vpop.f32.mrb[0].mxu0
      %v7301 = vadd.f32 0.0, %v7300
      %v7302 = vpop.f32.mrb[0].mxu0
      %7303 = vmatprep.mubr.f32.mxu0 0.0
      %7304 = vmatmul.mubr.f32.gmra.mrb[0].mxu0 %v7078
      %v7305 = vpop.f32.mrb[0].mxu0
      %v7306 = vadd.f32 0.0, %v7305
      %v7307 = vpop.f32.mrb[0].mxu0
      %7308 = vmatprep.mubr.f32.mxu0 0.0
      %7309 = vmatmul.mubr.f32.gmra.mrb[0].mxu0 %v7079
      %v7310 = vpop.f32.mrb[0].mxu0
      %v7311 = vadd.f32 0.0, %v7310
      %v7312 = vpop.f32.mrb[0].mxu0
      %7313 = vmatprep.mubr.f32.mxu0 0.0
      %7314 = vmatmul.mubr.f32.gmra.mrb[0].mxu0 %v7080
      %v7315 = vpop.f32.mrb[0].mxu0
      %v7316 = vadd.f32 0.0, %v7315
      %v7317 = vpop.f32.mrb[0].mxu0
      %7318 = vmatprep.mubr.f32.mxu0 0.0
      %7319 = vmatmul.mubr.f32.gmra.mrb[0].mxu0 %v7081
      %v7320 = vpop.f32.mrb[0].mxu0
      %v7321 = vadd.f32 0.0, %v7320
      %v7322 = vpop.f32.mrb[0].mxu0
      %7323 = vmatprep.mubr.f32.mxu0 0.0
      %7324 = vmatmul.mubr.f32.gmra.mrb[0].mxu0 %v7082
      %v7325 = vpop.f32.mrb[0].mxu0
      %v7326 = vadd.f32 0.0, %v7325
      %v7327 = vpop.f32.mrb[0].mxu0
      %7328 = vmatprep.mubr.f32.mxu0 0.0
      %7329 = vmatmul.mubr.f32.gmra.mrb[0].mxu0 %v7083
      %v7330 = vpop.f32.mrb[0].mxu0
      %v7331 = vadd.f32 0.0, %v7330
      %v7332 = vpop.f32.mrb[0].mxu0
      %7333 = vmatprep.mubr.f32.mxu0 0.0
      %7334 = vmatmul.mubr.f32.gmra.mrb[0].mxu0 %v7084
      %v7335 = vpop.f32.mrb[0].mxu0
      %v7336 = vadd.f32 0.0, %v7335
      %v7337 = vpop.f32.mrb[0].mxu0
      %7338 = vmatprep.mubr.f32.mxu0 0.0
      %7339 = vmatmul.mubr.f32.gmra.mrb[0].mxu0 %v7085
      %v7340 = vpop.f32.mrb[0].mxu0
      %v7341 = vadd.f32 0.0, %v7340
      %v7342 = vpop.f32.mrb[0].mxu0
      %7343 = vmatprep.mubr.f32.mxu0 0.0
      %7344 = vmatmul.mubr.f32.gmra.mrb[0].mxu0 %v7086
      %v7345 = vpop.f32.mrb[0].mxu0
      %v7346 = vadd.f32 0.0, %v7345
      %v7347 = vpop.f32.mrb[0].mxu0
      %7348 = vdwg.mxu0
      %v7349 = vld [vmem:[#allocation3] sm:$0xff]
      %v7350 = vld [vmem:[#allocation3 + $0x8] sm:$0xff]
      %v7351 = vld [vmem:[#allocation3 + $0x10] sm:$0xff]
      %v7352 = vld [vmem:[#allocation3 + $0x18] sm:$0xff]
      %v7353 = vld [vmem:[#allocation3 + $0x20] sm:$0xff]
      %v7354 = vld [vmem:[#allocation3 + $0x28] sm:$0xff]
      %v7355 = vld [vmem:[#allocation3 + $0x30] sm:$0xff]
      %v7356 = vld [vmem:[#allocation3 + $0x38] sm:$0xff]
      %v7357 = vld [vmem:[#allocation3 + $0x40] sm:$0xff]
      %v7358 = vld [vmem:[#allocation3 + $0x48] sm:$0xff]
      %v7359 = vld [vmem:[#allocation3 + $0x50] sm:$0xff]
      %v7360 = vld [vmem:[#allocation3 + $0x58] sm:$0xff]
      %v7361 = vld [vmem:[#allocation3 + $0x60] sm:$0xff]
      %v7362 = vld [vmem:[#allocation3 + $0x68] sm:$0xff]
      %v7363 = vld [vmem:[#allocation3 + $0x70] sm:$0xff]
      %v7364 = vld [vmem:[#allocation3 + $0x78] sm:$0xff]
      %v7365 = vld [vmem:[#allocation3 + $0x80] sm:$0xff]
      %v7366 = vld [vmem:[#allocation3 + $0x88] sm:$0xff]
      %v7367 = vld [vmem:[#allocation3 + $0x90] sm:$0xff]
      %v7368 = vld [vmem:[#allocation3 + $0x98] sm:$0xff]
      %v7369 = vld [vmem:[#allocation3 + $0xa0] sm:$0xff]
      %v7370 = vld [vmem:[#allocation3 + $0xa8] sm:$0xff]
      %v7371 = vld [vmem:[#allocation3 + $0xb0] sm:$0xff]
      %v7372 = vld [vmem:[#allocation3 + $0xb8] sm:$0xff]
      %v7373 = vld [vmem:[#allocation3 + $0xc0] sm:$0xff]
      %v7374 = vld [vmem:[#allocation3 + $0xc8] sm:$0xff]
      %v7375 = vld [vmem:[#allocation3 + $0xd0] sm:$0xff]
      %v7376 = vld [vmem:[#allocation3 + $0xd8] sm:$0xff]
      %v7377 = vld [vmem:[#allocation3 + $0xe0] sm:$0xff]
      %v7378 = vld [vmem:[#allocation3 + $0xe8] sm:$0xff]
      %v7379 = vld [vmem:[#allocation3 + $0xf0] sm:$0xff]
      %v7380 = vld [vmem:[#allocation3 + $0xf8] sm:$0xff]
      %v7381 = vld [vmem:[#allocation3 + $0x100] sm:$0xff]
      %v7382 = vld [vmem:[#allocation3 + $0x108] sm:$0xff]
      %v7383 = vld [vmem:[#allocation3 + $0x110] sm:$0xff]
      %v7384 = vld [vmem:[#allocation3 + $0x118] sm:$0xff]
      %v7385 = vadd.f32 %v7349, %v7171
      %v7386 = vadd.f32 %v7350, %v7176
      %v7387 = vadd.f32 %v7351, %v7181
      %v7388 = vadd.f32 %v7352, %v7186
      %v7389 = vadd.f32 %v7353, %v7191
      %v7390 = vadd.f32 %v7354, %v7196
      %v7391 = vadd.f32 %v7355, %v7201
      %v7392 = vadd.f32 %v7356, %v7206
      %v7393 = vadd.f32 %v7357, %v7211
      %v7394 = vadd.f32 %v7358, %v7216
      %v7395 = vadd.f32 %v7359, %v7221
      %v7396 = vadd.f32 %v7360, %v7226
      %v7397 = vadd.f32 %v7361, %v7231
      %v7398 = vadd.f32 %v7362, %v7236
      %v7399 = vadd.f32 %v7363, %v7241
      %v7400 = vadd.f32 %v7364, %v7246
      %v7401 = vadd.f32 %v7365, %v7251
      %v7402 = vadd.f32 %v7366, %v7256
      %v7403 = vadd.f32 %v7367, %v7261
      %v7404 = vadd.f32 %v7368, %v7266
      %v7405 = vadd.f32 %v7369, %v7271
      %v7406 = vadd.f32 %v7370, %v7276
      %v7407 = vadd.f32 %v7371, %v7281
      %v7408 = vadd.f32 %v7372, %v7286
      %v7409 = vadd.f32 %v7373, %v7291
      %v7410 = vadd.f32 %v7374, %v7296
      %v7411 = vadd.f32 %v7375, %v7301
      %v7412 = vadd.f32 %v7376, %v7306
      %v7413 = vadd.f32 %v7377, %v7311
      %v7414 = vadd.f32 %v7378, %v7316
      %v7415 = vadd.f32 %v7379, %v7321
      %v7416 = vadd.f32 %v7380, %v7326
      %v7417 = vadd.f32 %v7381, %v7331
      %v7418 = vadd.f32 %v7382, %v7336
      %v7419 = vadd.f32 %v7383, %v7341
      %v7420 = vadd.f32 %v7384, %v7346
      %7421 = vst [vmem:[#allocation3] sm:$0xff] %v7385
      %7422 = vst [vmem:[#allocation3 + $0x8] sm:$0xff] %v7386
      %7423 = vst [vmem:[#allocation3 + $0x10] sm:$0xff] %v7387
      %7424 = vst [vmem:[#allocation3 + $0x18] sm:$0xff] %v7388
      %7425 = vst [vmem:[#allocation3 + $0x20] sm:$0xff] %v7389
      %7426 = vst [vmem:[#allocation3 + $0x28] sm:$0xff] %v7390
      %7427 = vst [vmem:[#allocation3 + $0x30] sm:$0xff] %v7391
      %7428 = vst [vmem:[#allocation3 + $0x38] sm:$0xff] %v7392
      %7429 = vst [vmem:[#allocation3 + $0x40] sm:$0xff] %v7393
      %7430 = vst [vmem:[#allocation3 + $0x48] sm:$0xff] %v7394
      %7431 = vst [vmem:[#allocation3 + $0x50] sm:$0xff] %v7395
      %7432 = vst [vmem:[#allocation3 + $0x58] sm:$0xff] %v7396
      %7433 = vst [vmem:[#allocation3 + $0x60] sm:$0xff] %v7397
      %7434 = vst [vmem:[#allocation3 + $0x68] sm:$0xff] %v7398
      %7435 = vst [vmem:[#allocation3 + $0x70] sm:$0xff] %v7399
      %7436 = vst [vmem:[#allocation3 + $0x78] sm:$0xff] %v7400
      %7437 = vst [vmem:[#allocation3 + $0x80] sm:$0xff] %v7401
      %7438 = vst [vmem:[#allocation3 + $0x88] sm:$0xff] %v7402
      %7439 = vst [vmem:[#allocation3 + $0x90] sm:$0xff] %v7403
      %7440 = vst [vmem:[#allocation3 + $0x98] sm:$0xff] %v7404
      %7441 = vst [vmem:[#allocation3 + $0xa0] sm:$0xff] %v7405
      %7442 = vst [vmem:[#allocation3 + $0xa8] sm:$0xff] %v7406
      %7443 = vst [vmem:[#allocation3 + $0xb0] sm:$0xff] %v7407
      %7444 = vst [vmem:[#allocation3 + $0xb8] sm:$0xff] %v7408
      %7445 = vst [vmem:[#allocation3 + $0xc0] sm:$0xff] %v7409
      %7446 = vst [vmem:[#allocation3 + $0xc8] sm:$0xff] %v7410
      %7447 = vst [vmem:[#allocation3 + $0xd0] sm:$0xff] %v7411
      %7448 = vst [vmem:[#allocation3 + $0xd8] sm:$0xff] %v7412
      %7449 = vst [vmem:[#allocation3 + $0xe0] sm:$0xff] %v7413
      %7450 = vst [vmem:[#allocation3 + $0xe8] sm:$0xff] %v7414
      %7451 = vst [vmem:[#allocation3 + $0xf0] sm:$0xff] %v7415
      %7452 = vst [vmem:[#allocation3 + $0xf8] sm:$0xff] %v7416
      %7453 = vst [vmem:[#allocation3 + $0x100] sm:$0xff] %v7417
      %7454 = vst [vmem:[#allocation3 + $0x108] sm:$0xff] %v7418
      %7455 = vst [vmem:[#allocation3 + $0x110] sm:$0xff] %v7419
      %7456 = vst [vmem:[#allocation3 + $0x118] sm:$0xff] %v7420
      %v7457 = vld [vmem:[#allocation2 + $0x2b] sm:$0xff]
      %v7458 = vld [vmem:[#allocation2 + $0x33] sm:$0xff]
      %v7459 = vld [vmem:[#allocation2 + $0x3b] sm:$0xff]
      %v7460 = vld [vmem:[#allocation2 + $0x43] sm:$0xff]
      %v7461 = vld [vmem:[#allocation2 + $0x4b] sm:$0xff]
      %v7462 = vld [vmem:[#allocation2 + $0x53] sm:$0xff]
      %v7463 = vld [vmem:[#allocation2 + $0x5b] sm:$0xff]
      %v7464 = vld [vmem:[#allocation2 + $0x63] sm:$0xff]
      %v7465 = vld [vmem:[#allocation2 + $0x6b] sm:$0xff]
      %v7466 = vld [vmem:[#allocation2 + $0x73] sm:$0xff]
      %v7467 = vld [vmem:[#allocation2 + $0x7b] sm:$0xff]
      %v7468 = vld [vmem:[#allocation2 + $0x83] sm:$0xff]
      %v7469 = vld [vmem:[#allocation2 + $0x8b] sm:$0xff]
      %v7470 = vld [vmem:[#allocation2 + $0x93] sm:$0xff]
      %v7471 = vld [vmem:[#allocation2 + $0x9b] sm:$0xff]
      %v7472 = vld [vmem:[#allocation2 + $0xa3] sm:$0xff]
      %v7473 = vld [vmem:[#allocation2 + $0xab] sm:$0xff]
      %v7474 = vld [vmem:[#allocation2 + $0xb3] sm:$0xff]
      %v7475 = vld [vmem:[#allocation2 + $0xbb] sm:$0xff]
      %v7476 = vld [vmem:[#allocation2 + $0xc3] sm:$0xff]
      %v7477 = vld [vmem:[#allocation2 + $0xcb] sm:$0xff]
      %v7478 = vld [vmem:[#allocation2 + $0xd3] sm:$0xff]
      %v7479 = vld [vmem:[#allocation2 + $0xdb] sm:$0xff]
      %v7480 = vld [vmem:[#allocation2 + $0xe3] sm:$0xff]
      %v7481 = vld [vmem:[#allocation2 + $0xeb] sm:$0xff]
      %v7482 = vld [vmem:[#allocation2 + $0xf3] sm:$0xff]
      %v7483 = vld [vmem:[#allocation2 + $0xfb] sm:$0xff]
      %v7484 = vld [vmem:[#allocation2 + $0x103] sm:$0xff]
      %v7485 = vld [vmem:[#allocation2 + $0x10b] sm:$0xff]
      %v7486 = vld [vmem:[#allocation2 + $0x113] sm:$0xff]
      %v7487 = vld [vmem:[#allocation2 + $0x11b] sm:$0xff]
      %v7488 = vld [vmem:[#allocation2 + $0x123] sm:$0xff]
      %v7489 = vld [vmem:[#allocation2 + $0x12b] sm:$0xff]
      %v7490 = vld [vmem:[#allocation2 + $0x133] sm:$0xff]
      %v7491 = vld [vmem:[#allocation2 + $0x13b] sm:$0xff]
      %v7492 = vld [vmem:[#allocation2 + $0x143] sm:$0xff]
      %s7493 = scalar_lea.vmem %s3, 1024
      %v7494 = vld [vmem:[%s7493] sm:$0xff]
      %v7495 = vld [vmem:[%s7493 + $0x8] sm:$0xff]
      %v7496 = vld [vmem:[%s7493 + $0x10] sm:$0xff]
      %v7497 = vld [vmem:[%s7493 + $0x18] sm:$0xff]
      %v7498 = vld [vmem:[%s7493 + $0x20] sm:$0xff]
      %v7499 = vld [vmem:[%s7493 + $0x28] sm:$0xff]
      %v7500 = vld [vmem:[%s7493 + $0x30] sm:$0xff]
      %v7501 = vld [vmem:[%s7493 + $0x38] sm:$0xff]
      %v7502 = vld [vmem:[%s7493 + $0x40] sm:$0xff]
      %v7503 = vld [vmem:[%s7493 + $0x48] sm:$0xff]
      %v7504 = vld [vmem:[%s7493 + $0x50] sm:$0xff]
      %v7505 = vld [vmem:[%s7493 + $0x58] sm:$0xff]
      %v7506 = vld [vmem:[%s7493 + $0x60] sm:$0xff]
      %v7507 = vld [vmem:[%s7493 + $0x68] sm:$0xff]
      %v7508 = vld [vmem:[%s7493 + $0x70] sm:$0xff]
      %v7509 = vld [vmem:[%s7493 + $0x78] sm:$0xff]
      %7510 = vmatprep.subr.mxu0 0.0
      %7511 = vmatpush1.msra.mxu0 %v7494
      %7512 = vmatprep.subr.mxu0 0.0
      %7513 = vmatpush1.msra.mxu0 %v7495
      %7514 = vmatprep.subr.mxu0 0.0
      %7515 = vmatpush1.msra.mxu0 %v7496
      %7516 = vmatprep.subr.mxu0 0.0
      %7517 = vmatpush1.msra.mxu0 %v7497
      %7518 = vmatprep.subr.mxu0 0.0
      %7519 = vmatpush1.msra.mxu0 %v7498
      %7520 = vmatprep.subr.mxu0 0.0
      %7521 = vmatpush1.msra.mxu0 %v7499
      %7522 = vmatprep.subr.mxu0 0.0
      %7523 = vmatpush1.msra.mxu0 %v7500
      %7524 = vmatprep.subr.mxu0 0.0
      %7525 = vmatpush1.msra.mxu0 %v7501
      %7526 = vmatprep.subr.mxu0 0.0
      %7527 = vmatpush1.msra.mxu0 %v7502
      %7528 = vmatprep.subr.mxu0 0.0
      %7529 = vmatpush1.msra.mxu0 %v7503
      %7530 = vmatprep.subr.mxu0 0.0
      %7531 = vmatpush1.msra.mxu0 %v7504
      %7532 = vmatprep.subr.mxu0 0.0
      %7533 = vmatpush1.msra.mxu0 %v7505
      %7534 = vmatprep.subr.mxu0 0.0
      %7535 = vmatpush1.msra.mxu0 %v7506
      %7536 = vmatprep.subr.mxu0 0.0
      %7537 = vmatpush1.msra.mxu0 %v7507
      %7538 = vmatprep.subr.mxu0 0.0
      %7539 = vmatpush1.msra.mxu0 %v7508
      %7540 = vmatprep.subr.mxu0 0.0
      %7541 = vmatpush1.msra.mxu0 %v7509
      %7542 = vmatprep.subr.mxu0 0.0
      %7543 = vmatpush1.msra.mxu0 0.0
      %7544 = vmatprep.subr.mxu0 0.0
      %7545 = vmatpush1.msra.mxu0 0.0
      %7546 = vmatprep.subr.mxu0 0.0
      %7547 = vmatpush1.msra.mxu0 0.0
      %7548 = vmatprep.subr.mxu0 0.0
      %7549 = vmatpush1.msra.mxu0 0.0
      %7550 = vmatprep.subr.mxu0 0.0
      %7551 = vmatpush1.msra.mxu0 0.0
      %7552 = vmatprep.subr.mxu0 0.0
      %7553 = vmatpush1.msra.mxu0 0.0
      %7554 = vmatprep.subr.mxu0 0.0
      %7555 = vmatpush1.msra.mxu0 0.0
      %7556 = vmatprep.subr.mxu0 0.0
      %7557 = vmatpush1.msra.mxu0 0.0
      %7558 = vmatprep.subr.mxu0 0.0
      %7559 = vmatpush1.msra.mxu0 0.0
      %7560 = vmatprep.subr.mxu0 0.0
      %7561 = vmatpush1.msra.mxu0 0.0
      %7562 = vmatprep.subr.mxu0 0.0
      %7563 = vmatpush1.msra.mxu0 0.0
      %7564 = vmatprep.subr.mxu0 0.0
      %7565 = vmatpush1.msra.mxu0 0.0
      %7566 = vmatprep.subr.mxu0 0.0
      %7567 = vmatpush1.msra.mxu0 0.0
      %7568 = vmatprep.subr.mxu0 0.0
      %7569 = vmatpush1.msra.mxu0 0.0
      %7570 = vmatprep.subr.mxu0 0.0
      %7571 = vmatpush1.msra.mxu0 0.0
      %7572 = vmatprep.subr.mxu0 0.0
      %7573 = vmatpush1.msra.mxu0 0.0
      %7574 = vmatprep.mubr.f32.mxu0 0.0
      %7575 = vmatmul.mubr.f32.gmra.mrb[0].mxu0 %v7457
      %v7576 = vpop.f32.mrb[0].mxu0
      %v7577 = vadd.f32 0.0, %v7576
      %v7578 = vpop.f32.mrb[0].mxu0
      %7579 = vmatprep.mubr.f32.mxu0 0.0
      %7580 = vmatmul.mubr.f32.gmra.mrb[0].mxu0 %v7458
      %v7581 = vpop.f32.mrb[0].mxu0
      %v7582 = vadd.f32 0.0, %v7581
      %v7583 = vpop.f32.mrb[0].mxu0
      %7584 = vmatprep.mubr.f32.mxu0 0.0
      %7585 = vmatmul.mubr.f32.gmra.mrb[0].mxu0 %v7459
      %v7586 = vpop.f32.mrb[0].mxu0
      %v7587 = vadd.f32 0.0, %v7586
      %v7588 = vpop.f32.mrb[0].mxu0
      %7589 = vmatprep.mubr.f32.mxu0 0.0
      %7590 = vmatmul.mubr.f32.gmra.mrb[0].mxu0 %v7460
      %v7591 = vpop.f32.mrb[0].mxu0
      %v7592 = vadd.f32 0.0, %v7591
      %v7593 = vpop.f32.mrb[0].mxu0
      %7594 = vmatprep.mubr.f32.mxu0 0.0
      %7595 = vmatmul.mubr.f32.gmra.mrb[0].mxu0 %v7461
      %v7596 = vpop.f32.mrb[0].mxu0
      %v7597 = vadd.f32 0.0, %v7596
      %v7598 = vpop.f32.mrb[0].mxu0
      %7599 = vmatprep.mubr.f32.mxu0 0.0
      %7600 = vmatmul.mubr.f32.gmra.mrb[0].mxu0 %v7462
      %v7601 = vpop.f32.mrb[0].mxu0
      %v7602 = vadd.f32 0.0, %v7601
      %v7603 = vpop.f32.mrb[0].mxu0
      %7604 = vmatprep.mubr.f32.mxu0 0.0
      %7605 = vmatmul.mubr.f32.gmra.mrb[0].mxu0 %v7463
      %v7606 = vpop.f32.mrb[0].mxu0
      %v7607 = vadd.f32 0.0, %v7606
      %v7608 = vpop.f32.mrb[0].mxu0
      %7609 = vmatprep.mubr.f32.mxu0 0.0
      %7610 = vmatmul.mubr.f32.gmra.mrb[0].mxu0 %v7464
      %v7611 = vpop.f32.mrb[0].mxu0
      %v7612 = vadd.f32 0.0, %v7611
      %v7613 = vpop.f32.mrb[0].mxu0
      %7614 = vmatprep.mubr.f32.mxu0 0.0
      %7615 = vmatmul.mubr.f32.gmra.mrb[0].mxu0 %v7465
      %v7616 = vpop.f32.mrb[0].mxu0
      %v7617 = vadd.f32 0.0, %v7616
      %v7618 = vpop.f32.mrb[0].mxu0
      %7619 = vmatprep.mubr.f32.mxu0 0.0
      %7620 = vmatmul.mubr.f32.gmra.mrb[0].mxu0 %v7466
      %v7621 = vpop.f32.mrb[0].mxu0
      %v7622 = vadd.f32 0.0, %v7621
      %v7623 = vpop.f32.mrb[0].mxu0
      %7624 = vmatprep.mubr.f32.mxu0 0.0
      %7625 = vmatmul.mubr.f32.gmra.mrb[0].mxu0 %v7467
      %v7626 = vpop.f32.mrb[0].mxu0
      %v7627 = vadd.f32 0.0, %v7626
      %v7628 = vpop.f32.mrb[0].mxu0
      %7629 = vmatprep.mubr.f32.mxu0 0.0
      %7630 = vmatmul.mubr.f32.gmra.mrb[0].mxu0 %v7468
      %v7631 = vpop.f32.mrb[0].mxu0
      %v7632 = vadd.f32 0.0, %v7631
      %v7633 = vpop.f32.mrb[0].mxu0
      %7634 = vmatprep.mubr.f32.mxu0 0.0
      %7635 = vmatmul.mubr.f32.gmra.mrb[0].mxu0 %v7469
      %v7636 = vpop.f32.mrb[0].mxu0
      %v7637 = vadd.f32 0.0, %v7636
      %v7638 = vpop.f32.mrb[0].mxu0
      %7639 = vmatprep.mubr.f32.mxu0 0.0
      %7640 = vmatmul.mubr.f32.gmra.mrb[0].mxu0 %v7470
      %v7641 = vpop.f32.mrb[0].mxu0
      %v7642 = vadd.f32 0.0, %v7641
      %v7643 = vpop.f32.mrb[0].mxu0
      %7644 = vmatprep.mubr.f32.mxu0 0.0
      %7645 = vmatmul.mubr.f32.gmra.mrb[0].mxu0 %v7471
      %v7646 = vpop.f32.mrb[0].mxu0
      %v7647 = vadd.f32 0.0, %v7646
      %v7648 = vpop.f32.mrb[0].mxu0
      %7649 = vmatprep.mubr.f32.mxu0 0.0
      %7650 = vmatmul.mubr.f32.gmra.mrb[0].mxu0 %v7472
      %v7651 = vpop.f32.mrb[0].mxu0
      %v7652 = vadd.f32 0.0, %v7651
      %v7653 = vpop.f32.mrb[0].mxu0
      %7654 = vmatprep.mubr.f32.mxu0 0.0
      %7655 = vmatmul.mubr.f32.gmra.mrb[0].mxu0 %v7473
      %v7656 = vpop.f32.mrb[0].mxu0
      %v7657 = vadd.f32 0.0, %v7656
      %v7658 = vpop.f32.mrb[0].mxu0
      %7659 = vmatprep.mubr.f32.mxu0 0.0
      %7660 = vmatmul.mubr.f32.gmra.mrb[0].mxu0 %v7474
      %v7661 = vpop.f32.mrb[0].mxu0
      %v7662 = vadd.f32 0.0, %v7661
      %v7663 = vpop.f32.mrb[0].mxu0
      %7664 = vmatprep.mubr.f32.mxu0 0.0
      %7665 = vmatmul.mubr.f32.gmra.mrb[0].mxu0 %v7475
      %v7666 = vpop.f32.mrb[0].mxu0
      %v7667 = vadd.f32 0.0, %v7666
      %v7668 = vpop.f32.mrb[0].mxu0
      %7669 = vmatprep.mubr.f32.mxu0 0.0
      %7670 = vmatmul.mubr.f32.gmra.mrb[0].mxu0 %v7476
      %v7671 = vpop.f32.mrb[0].mxu0
      %v7672 = vadd.f32 0.0, %v7671
      %v7673 = vpop.f32.mrb[0].mxu0
      %7674 = vmatprep.mubr.f32.mxu0 0.0
      %7675 = vmatmul.mubr.f32.gmra.mrb[0].mxu0 %v7477
      %v7676 = vpop.f32.mrb[0].mxu0
      %v7677 = vadd.f32 0.0, %v7676
      %v7678 = vpop.f32.mrb[0].mxu0
      %7679 = vmatprep.mubr.f32.mxu0 0.0
      %7680 = vmatmul.mubr.f32.gmra.mrb[0].mxu0 %v7478
      %v7681 = vpop.f32.mrb[0].mxu0
      %v7682 = vadd.f32 0.0, %v7681
      %v7683 = vpop.f32.mrb[0].mxu0
      %7684 = vmatprep.mubr.f32.mxu0 0.0
      %7685 = vmatmul.mubr.f32.gmra.mrb[0].mxu0 %v7479
      %v7686 = vpop.f32.mrb[0].mxu0
      %v7687 = vadd.f32 0.0, %v7686
      %v7688 = vpop.f32.mrb[0].mxu0
      %7689 = vmatprep.mubr.f32.mxu0 0.0
      %7690 = vmatmul.mubr.f32.gmra.mrb[0].mxu0 %v7480
      %v7691 = vpop.f32.mrb[0].mxu0
      %v7692 = vadd.f32 0.0, %v7691
      %v7693 = vpop.f32.mrb[0].mxu0
      %7694 = vmatprep.mubr.f32.mxu0 0.0
      %7695 = vmatmul.mubr.f32.gmra.mrb[0].mxu0 %v7481
      %v7696 = vpop.f32.mrb[0].mxu0
      %v7697 = vadd.f32 0.0, %v7696
      %v7698 = vpop.f32.mrb[0].mxu0
      %7699 = vmatprep.mubr.f32.mxu0 0.0
      %7700 = vmatmul.mubr.f32.gmra.mrb[0].mxu0 %v7482
      %v7701 = vpop.f32.mrb[0].mxu0
      %v7702 = vadd.f32 0.0, %v7701
      %v7703 = vpop.f32.mrb[0].mxu0
      %7704 = vmatprep.mubr.f32.mxu0 0.0
      %7705 = vmatmul.mubr.f32.gmra.mrb[0].mxu0 %v7483
      %v7706 = vpop.f32.mrb[0].mxu0
      %v7707 = vadd.f32 0.0, %v7706
      %v7708 = vpop.f32.mrb[0].mxu0
      %7709 = vmatprep.mubr.f32.mxu0 0.0
      %7710 = vmatmul.mubr.f32.gmra.mrb[0].mxu0 %v7484
      %v7711 = vpop.f32.mrb[0].mxu0
      %v7712 = vadd.f32 0.0, %v7711
      %v7713 = vpop.f32.mrb[0].mxu0
      %7714 = vmatprep.mubr.f32.mxu0 0.0
      %7715 = vmatmul.mubr.f32.gmra.mrb[0].mxu0 %v7485
      %v7716 = vpop.f32.mrb[0].mxu0
      %v7717 = vadd.f32 0.0, %v7716
      %v7718 = vpop.f32.mrb[0].mxu0
      %7719 = vmatprep.mubr.f32.mxu0 0.0
      %7720 = vmatmul.mubr.f32.gmra.mrb[0].mxu0 %v7486
      %v7721 = vpop.f32.mrb[0].mxu0
      %v7722 = vadd.f32 0.0, %v7721
      %v7723 = vpop.f32.mrb[0].mxu0
      %7724 = vmatprep.mubr.f32.mxu0 0.0
      %7725 = vmatmul.mubr.f32.gmra.mrb[0].mxu0 %v7487
      %v7726 = vpop.f32.mrb[0].mxu0
      %v7727 = vadd.f32 0.0, %v7726
      %v7728 = vpop.f32.mrb[0].mxu0
      %7729 = vmatprep.mubr.f32.mxu0 0.0
      %7730 = vmatmul.mubr.f32.gmra.mrb[0].mxu0 %v7488
      %v7731 = vpop.f32.mrb[0].mxu0
      %v7732 = vadd.f32 0.0, %v7731
      %v7733 = vpop.f32.mrb[0].mxu0
      %7734 = vmatprep.mubr.f32.mxu0 0.0
      %7735 = vmatmul.mubr.f32.gmra.mrb[0].mxu0 %v7489
      %v7736 = vpop.f32.mrb[0].mxu0
      %v7737 = vadd.f32 0.0, %v7736
      %v7738 = vpop.f32.mrb[0].mxu0
      %7739 = vmatprep.mubr.f32.mxu0 0.0
      %7740 = vmatmul.mubr.f32.gmra.mrb[0].mxu0 %v7490
      %v7741 = vpop.f32.mrb[0].mxu0
      %v7742 = vadd.f32 0.0, %v7741
      %v7743 = vpop.f32.mrb[0].mxu0
      %7744 = vmatprep.mubr.f32.mxu0 0.0
      %7745 = vmatmul.mubr.f32.gmra.mrb[0].mxu0 %v7491
      %v7746 = vpop.f32.mrb[0].mxu0
      %v7747 = vadd.f32 0.0, %v7746
      %v7748 = vpop.f32.mrb[0].mxu0
      %7749 = vmatprep.mubr.f32.mxu0 0.0
      %7750 = vmatmul.mubr.f32.gmra.mrb[0].mxu0 %v7492
      %v7751 = vpop.f32.mrb[0].mxu0
      %v7752 = vadd.f32 0.0, %v7751
      %v7753 = vpop.f32.mrb[0].mxu0
      %7754 = vdwg.mxu0
      %v7755 = vld [vmem:[#allocation3] sm:$0xff]
      %v7756 = vld [vmem:[#allocation3 + $0x8] sm:$0xff]
      %v7757 = vld [vmem:[#allocation3 + $0x10] sm:$0xff]
      %v7758 = vld [vmem:[#allocation3 + $0x18] sm:$0xff]
      %v7759 = vld [vmem:[#allocation3 + $0x20] sm:$0xff]
      %v7760 = vld [vmem:[#allocation3 + $0x28] sm:$0xff]
      %v7761 = vld [vmem:[#allocation3 + $0x30] sm:$0xff]
      %v7762 = vld [vmem:[#allocation3 + $0x38] sm:$0xff]
      %v7763 = vld [vmem:[#allocation3 + $0x40] sm:$0xff]
      %v7764 = vld [vmem:[#allocation3 + $0x48] sm:$0xff]
      %v7765 = vld [vmem:[#allocation3 + $0x50] sm:$0xff]
      %v7766 = vld [vmem:[#allocation3 + $0x58] sm:$0xff]
      %v7767 = vld [vmem:[#allocation3 + $0x60] sm:$0xff]
      %v7768 = vld [vmem:[#allocation3 + $0x68] sm:$0xff]
      %v7769 = vld [vmem:[#allocation3 + $0x70] sm:$0xff]
      %v7770 = vld [vmem:[#allocation3 + $0x78] sm:$0xff]
      %v7771 = vld [vmem:[#allocation3 + $0x80] sm:$0xff]
      %v7772 = vld [vmem:[#allocation3 + $0x88] sm:$0xff]
      %v7773 = vld [vmem:[#allocation3 + $0x90] sm:$0xff]
      %v7774 = vld [vmem:[#allocation3 + $0x98] sm:$0xff]
      %v7775 = vld [vmem:[#allocation3 + $0xa0] sm:$0xff]
      %v7776 = vld [vmem:[#allocation3 + $0xa8] sm:$0xff]
      %v7777 = vld [vmem:[#allocation3 + $0xb0] sm:$0xff]
      %v7778 = vld [vmem:[#allocation3 + $0xb8] sm:$0xff]
      %v7779 = vld [vmem:[#allocation3 + $0xc0] sm:$0xff]
      %v7780 = vld [vmem:[#allocation3 + $0xc8] sm:$0xff]
      %v7781 = vld [vmem:[#allocation3 + $0xd0] sm:$0xff]
      %v7782 = vld [vmem:[#allocation3 + $0xd8] sm:$0xff]
      %v7783 = vld [vmem:[#allocation3 + $0xe0] sm:$0xff]
      %v7784 = vld [vmem:[#allocation3 + $0xe8] sm:$0xff]
      %v7785 = vld [vmem:[#allocation3 + $0xf0] sm:$0xff]
      %v7786 = vld [vmem:[#allocation3 + $0xf8] sm:$0xff]
      %v7787 = vld [vmem:[#allocation3 + $0x100] sm:$0xff]
      %v7788 = vld [vmem:[#allocation3 + $0x108] sm:$0xff]
      %v7789 = vld [vmem:[#allocation3 + $0x110] sm:$0xff]
      %v7790 = vld [vmem:[#allocation3 + $0x118] sm:$0xff]
      %v7791 = vadd.f32 %v7755, %v7577
      %v7792 = vadd.f32 %v7756, %v7582
      %v7793 = vadd.f32 %v7757, %v7587
      %v7794 = vadd.f32 %v7758, %v7592
      %v7795 = vadd.f32 %v7759, %v7597
      %v7796 = vadd.f32 %v7760, %v7602
      %v7797 = vadd.f32 %v7761, %v7607
      %v7798 = vadd.f32 %v7762, %v7612
      %v7799 = vadd.f32 %v7763, %v7617
      %v7800 = vadd.f32 %v7764, %v7622
      %v7801 = vadd.f32 %v7765, %v7627
      %v7802 = vadd.f32 %v7766, %v7632
      %v7803 = vadd.f32 %v7767, %v7637
      %v7804 = vadd.f32 %v7768, %v7642
      %v7805 = vadd.f32 %v7769, %v7647
      %v7806 = vadd.f32 %v7770, %v7652
      %v7807 = vadd.f32 %v7771, %v7657
      %v7808 = vadd.f32 %v7772, %v7662
      %v7809 = vadd.f32 %v7773, %v7667
      %v7810 = vadd.f32 %v7774, %v7672
      %v7811 = vadd.f32 %v7775, %v7677
      %v7812 = vadd.f32 %v7776, %v7682
      %v7813 = vadd.f32 %v7777, %v7687
      %v7814 = vadd.f32 %v7778, %v7692
      %v7815 = vadd.f32 %v7779, %v7697
      %v7816 = vadd.f32 %v7780, %v7702
      %v7817 = vadd.f32 %v7781, %v7707
      %v7818 = vadd.f32 %v7782, %v7712
      %v7819 = vadd.f32 %v7783, %v7717
      %v7820 = vadd.f32 %v7784, %v7722
      %v7821 = vadd.f32 %v7785, %v7727
      %v7822 = vadd.f32 %v7786, %v7732
      %v7823 = vadd.f32 %v7787, %v7737
      %v7824 = vadd.f32 %v7788, %v7742
      %v7825 = vadd.f32 %v7789, %v7747
      %v7826 = vadd.f32 %v7790, %v7752
      %7827 = vst [vmem:[#allocation3] sm:$0xff] %v7791
      %7828 = vst [vmem:[#allocation3 + $0x8] sm:$0xff] %v7792
      %7829 = vst [vmem:[#allocation3 + $0x10] sm:$0xff] %v7793
      %7830 = vst [vmem:[#allocation3 + $0x18] sm:$0xff] %v7794
      %7831 = vst [vmem:[#allocation3 + $0x20] sm:$0xff] %v7795
      %7832 = vst [vmem:[#allocation3 + $0x28] sm:$0xff] %v7796
      %7833 = vst [vmem:[#allocation3 + $0x30] sm:$0xff] %v7797
      %7834 = vst [vmem:[#allocation3 + $0x38] sm:$0xff] %v7798
      %7835 = vst [vmem:[#allocation3 + $0x40] sm:$0xff] %v7799
      %7836 = vst [vmem:[#allocation3 + $0x48] sm:$0xff] %v7800
      %7837 = vst [vmem:[#allocation3 + $0x50] sm:$0xff] %v7801
      %7838 = vst [vmem:[#allocation3 + $0x58] sm:$0xff] %v7802
      %7839 = vst [vmem:[#allocation3 + $0x60] sm:$0xff] %v7803
      %7840 = vst [vmem:[#allocation3 + $0x68] sm:$0xff] %v7804
      %7841 = vst [vmem:[#allocation3 + $0x70] sm:$0xff] %v7805
      %7842 = vst [vmem:[#allocation3 + $0x78] sm:$0xff] %v7806
      %7843 = vst [vmem:[#allocation3 + $0x80] sm:$0xff] %v7807
      %7844 = vst [vmem:[#allocation3 + $0x88] sm:$0xff] %v7808
      %7845 = vst [vmem:[#allocation3 + $0x90] sm:$0xff] %v7809
      %7846 = vst [vmem:[#allocation3 + $0x98] sm:$0xff] %v7810
      %7847 = vst [vmem:[#allocation3 + $0xa0] sm:$0xff] %v7811
      %7848 = vst [vmem:[#allocation3 + $0xa8] sm:$0xff] %v7812
      %7849 = vst [vmem:[#allocation3 + $0xb0] sm:$0xff] %v7813
      %7850 = vst [vmem:[#allocation3 + $0xb8] sm:$0xff] %v7814
      %7851 = vst [vmem:[#allocation3 + $0xc0] sm:$0xff] %v7815
      %7852 = vst [vmem:[#allocation3 + $0xc8] sm:$0xff] %v7816
      %7853 = vst [vmem:[#allocation3 + $0xd0] sm:$0xff] %v7817
      %7854 = vst [vmem:[#allocation3 + $0xd8] sm:$0xff] %v7818
      %7855 = vst [vmem:[#allocation3 + $0xe0] sm:$0xff] %v7819
      %7856 = vst [vmem:[#allocation3 + $0xe8] sm:$0xff] %v7820
      %7857 = vst [vmem:[#allocation3 + $0xf0] sm:$0xff] %v7821
      %7858 = vst [vmem:[#allocation3 + $0xf8] sm:$0xff] %v7822
      %7859 = vst [vmem:[#allocation3 + $0x100] sm:$0xff] %v7823
      %7860 = vst [vmem:[#allocation3 + $0x108] sm:$0xff] %v7824
      %7861 = vst [vmem:[#allocation3 + $0x110] sm:$0xff] %v7825
      %7862 = vst [vmem:[#allocation3 + $0x118] sm:$0xff] %v7826
      %v7863 = vld [vmem:[#allocation3] sm:$0xff]
      %v7864 = vld [vmem:[#allocation3 + $0x8] sm:$0xff]
      %v7865 = vld [vmem:[#allocation3 + $0x10] sm:$0xff]
      %v7866 = vld [vmem:[#allocation3 + $0x18] sm:$0xff]
      %v7867 = vld [vmem:[#allocation3 + $0x20] sm:$0xff]
      %v7868 = vld [vmem:[#allocation3 + $0x28] sm:$0xff]
      %v7869 = vld [vmem:[#allocation3 + $0x30] sm:$0xff]
      %v7870 = vld [vmem:[#allocation3 + $0x38] sm:$0xff]
      %v7871 = vld [vmem:[#allocation3 + $0x40] sm:$0xff]
      %v7872 = vld [vmem:[#allocation3 + $0x48] sm:$0xff]
      %v7873 = vld [vmem:[#allocation3 + $0x50] sm:$0xff]
      %v7874 = vld [vmem:[#allocation3 + $0x58] sm:$0xff]
      %v7875 = vld [vmem:[#allocation3 + $0x60] sm:$0xff]
      %v7876 = vld [vmem:[#allocation3 + $0x68] sm:$0xff]
      %v7877 = vld [vmem:[#allocation3 + $0x70] sm:$0xff]
      %v7878 = vld [vmem:[#allocation3 + $0x78] sm:$0xff]
      %v7879 = vld [vmem:[#allocation3 + $0x80] sm:$0xff]
      %v7880 = vld [vmem:[#allocation3 + $0x88] sm:$0xff]
      %v7881 = vld [vmem:[#allocation3 + $0x90] sm:$0xff]
      %v7882 = vld [vmem:[#allocation3 + $0x98] sm:$0xff]
      %v7883 = vld [vmem:[#allocation3 + $0xa0] sm:$0xff]
      %v7884 = vld [vmem:[#allocation3 + $0xa8] sm:$0xff]
      %v7885 = vld [vmem:[#allocation3 + $0xb0] sm:$0xff]
      %v7886 = vld [vmem:[#allocation3 + $0xb8] sm:$0xff]
      %v7887 = vld [vmem:[#allocation3 + $0xc0] sm:$0xff]
      %v7888 = vld [vmem:[#allocation3 + $0xc8] sm:$0xff]
      %v7889 = vld [vmem:[#allocation3 + $0xd0] sm:$0xff]
      %v7890 = vld [vmem:[#allocation3 + $0xd8] sm:$0xff]
      %v7891 = vld [vmem:[#allocation3 + $0xe0] sm:$0xff]
      %v7892 = vld [vmem:[#allocation3 + $0xe8] sm:$0xff]
      %v7893 = vld [vmem:[#allocation3 + $0xf0] sm:$0xff]
      %v7894 = vld [vmem:[#allocation3 + $0xf8] sm:$0xff]
      %v7895 = vld [vmem:[#allocation3 + $0x100] sm:$0xff]
      %v7896 = vld [vmem:[#allocation3 + $0x108] sm:$0xff]
      %v7897 = vld [vmem:[#allocation3 + $0x110] sm:$0xff]
      %v7898 = vld [vmem:[#allocation3 + $0x118] sm:$0xff]
      %v7899 = vld [vmem:[%s4] sm:$0x1]
      %v7901 = vlaneseq
      %v7902 = vshrl.u32 %v7901, 7
      %v7903 = vsub.s32 0, %v7902
      %v7904 = vrot.slane %v7899, %v7903
      %v7906 = vadd.f32 %v7863, %v7904
      %v7907 = vadd.f32 %v7864, %v7904
      %v7908 = vadd.f32 %v7865, %v7904
      %v7909 = vadd.f32 %v7866, %v7904
      %v7910 = vadd.f32 %v7867, %v7904
      %v7911 = vadd.f32 %v7868, %v7904
      %v7912 = vadd.f32 %v7869, %v7904
      %v7913 = vadd.f32 %v7870, %v7904
      %v7914 = vadd.f32 %v7871, %v7904
      %v7915 = vadd.f32 %v7872, %v7904
      %v7916 = vadd.f32 %v7873, %v7904
      %v7917 = vadd.f32 %v7874, %v7904
      %v7918 = vadd.f32 %v7875, %v7904
      %v7919 = vadd.f32 %v7876, %v7904
      %v7920 = vadd.f32 %v7877, %v7904
      %v7921 = vadd.f32 %v7878, %v7904
      %v7922 = vadd.f32 %v7879, %v7904
      %v7923 = vadd.f32 %v7880, %v7904
      %v7924 = vadd.f32 %v7881, %v7904
      %v7925 = vadd.f32 %v7882, %v7904
      %v7926 = vadd.f32 %v7883, %v7904
      %v7927 = vadd.f32 %v7884, %v7904
      %v7928 = vadd.f32 %v7885, %v7904
      %v7929 = vadd.f32 %v7886, %v7904
      %v7930 = vadd.f32 %v7887, %v7904
      %v7931 = vadd.f32 %v7888, %v7904
      %v7932 = vadd.f32 %v7889, %v7904
      %v7933 = vadd.f32 %v7890, %v7904
      %v7934 = vadd.f32 %v7891, %v7904
      %v7935 = vadd.f32 %v7892, %v7904
      %v7936 = vadd.f32 %v7893, %v7904
      %v7937 = vadd.f32 %v7894, %v7904
      %v7938 = vadd.f32 %v7895, %v7904
      %v7939 = vadd.f32 %v7896, %v7904
      %v7940 = vadd.f32 %v7897, %v7904
      %v7941 = vadd.f32 %v7898, %v7904
      %v7942 = vld [vmem:[%s246 + $0x18] sm:$0xff]
      %v7943 = vld [vmem:[%s246 + $0x20] sm:$0xff]
      %v7944 = vld [vmem:[%s246 + $0x28] sm:$0xff]
      %v7945 = vld [vmem:[%s246 + $0x30] sm:$0xff]
      %v7946 = vld [vmem:[%s246 + $0x38] sm:$0xff]
      %v7947 = vld [vmem:[%s246 + $0x40] sm:$0xff]
      %v7948 = vld [vmem:[%s246 + $0x48] sm:$0xff]
      %v7949 = vld [vmem:[%s246 + $0x50] sm:$0xff]
      %v7950 = vld [vmem:[%s246 + $0x58] sm:$0xff]
      %v7951 = vld [vmem:[%s246 + $0x60] sm:$0xff]
      %v7952 = vld [vmem:[%s246 + $0x68] sm:$0xff]
      %v7953 = vld [vmem:[%s246 + $0x70] sm:$0xff]
      %v7954 = vld [vmem:[%s246 + $0x78] sm:$0xff]
      %v7955 = vld [vmem:[%s246 + $0x80] sm:$0xff]
      %v7956 = vld [vmem:[%s246 + $0x88] sm:$0xff]
      %v7957 = vld [vmem:[%s246 + $0x90] sm:$0xff]
      %v7958 = vld [vmem:[%s246 + $0x98] sm:$0xff]
      %v7959 = vld [vmem:[%s246 + $0xa0] sm:$0xff]
      %v7960 = vld [vmem:[%s246 + $0xa8] sm:$0xff]
      %v7961 = vld [vmem:[%s246 + $0xb0] sm:$0xff]
      %v7962 = vld [vmem:[%s246 + $0xb8] sm:$0xff]
      %v7963 = vld [vmem:[%s246 + $0xc0] sm:$0xff]
      %v7964 = vld [vmem:[%s246 + $0xc8] sm:$0xff]
      %v7965 = vld [vmem:[%s246 + $0xd0] sm:$0xff]
      %v7966 = vld [vmem:[%s246 + $0xd8] sm:$0xff]
      %v7967 = vld [vmem:[%s246 + $0xe0] sm:$0xff]
      %v7968 = vld [vmem:[%s246 + $0xe8] sm:$0xff]
      %v7969 = vld [vmem:[%s246 + $0xf0] sm:$0xff]
      %v7970 = vld [vmem:[%s246 + $0xf8] sm:$0xff]
      %v7971 = vld [vmem:[%s246 + $0x100] sm:$0xff]
      %v7972 = vld [vmem:[%s246 + $0x108] sm:$0xff]
      %v7973 = vld [vmem:[%s246 + $0x110] sm:$0xff]
      %v7974 = vld [vmem:[%s246 + $0x118] sm:$0xff]
      %v7975 = vld [vmem:[%s246 + $0x120] sm:$0xff]
      %v7976 = vld [vmem:[%s246 + $0x128] sm:$0xff]
      %v7977 = vld [vmem:[%s246 + $0x130] sm:$0xff]
      %v7978 = vadd.f32 %v7906, %v7942
      %v7979 = vadd.f32 %v7907, %v7943
      %v7980 = vadd.f32 %v7908, %v7944
      %v7981 = vadd.f32 %v7909, %v7945
      %v7982 = vadd.f32 %v7910, %v7946
      %v7983 = vadd.f32 %v7911, %v7947
      %v7984 = vadd.f32 %v7912, %v7948
      %v7985 = vadd.f32 %v7913, %v7949
      %v7986 = vadd.f32 %v7914, %v7950
      %v7987 = vadd.f32 %v7915, %v7951
      %v7988 = vadd.f32 %v7916, %v7952
      %v7989 = vadd.f32 %v7917, %v7953
      %v7990 = vadd.f32 %v7918, %v7954
      %v7991 = vadd.f32 %v7919, %v7955
      %v7992 = vadd.f32 %v7920, %v7956
      %v7993 = vadd.f32 %v7921, %v7957
      %v7994 = vadd.f32 %v7922, %v7958
      %v7995 = vadd.f32 %v7923, %v7959
      %v7996 = vadd.f32 %v7924, %v7960
      %v7997 = vadd.f32 %v7925, %v7961
      %v7998 = vadd.f32 %v7926, %v7962
      %v7999 = vadd.f32 %v7927, %v7963
      %v8000 = vadd.f32 %v7928, %v7964
      %v8001 = vadd.f32 %v7929, %v7965
      %v8002 = vadd.f32 %v7930, %v7966
      %v8003 = vadd.f32 %v7931, %v7967
      %v8004 = vadd.f32 %v7932, %v7968
      %v8005 = vadd.f32 %v7933, %v7969
      %v8006 = vadd.f32 %v7934, %v7970
      %v8007 = vadd.f32 %v7935, %v7971
      %v8008 = vadd.f32 %v7936, %v7972
      %v8009 = vadd.f32 %v7937, %v7973
      %v8010 = vadd.f32 %v7938, %v7974
      %v8011 = vadd.f32 %v7939, %v7975
      %v8012 = vadd.f32 %v7940, %v7976
      %v8013 = vadd.f32 %v7941, %v7977
      %v8014 = vmax.f32 %v7978, 0.0
      %v8015 = vmax.f32 %v7979, 0.0
      %v8016 = vmax.f32 %v7980, 0.0
      %v8017 = vmax.f32 %v7981, 0.0
      %v8018 = vmax.f32 %v7982, 0.0
      %v8019 = vmax.f32 %v7983, 0.0
      %v8020 = vmax.f32 %v7984, 0.0
      %v8021 = vmax.f32 %v7985, 0.0
      %v8022 = vmax.f32 %v7986, 0.0
      %v8023 = vmax.f32 %v7987, 0.0
      %v8024 = vmax.f32 %v7988, 0.0
      %v8025 = vmax.f32 %v7989, 0.0
      %v8026 = vmax.f32 %v7990, 0.0
      %v8027 = vmax.f32 %v7991, 0.0
      %v8028 = vmax.f32 %v7992, 0.0
      %v8029 = vmax.f32 %v7993, 0.0
      %v8030 = vmax.f32 %v7994, 0.0
      %v8031 = vmax.f32 %v7995, 0.0
      %v8032 = vmax.f32 %v7996, 0.0
      %v8033 = vmax.f32 %v7997, 0.0
      %v8034 = vmax.f32 %v7998, 0.0
      %v8035 = vmax.f32 %v7999, 0.0
      %v8036 = vmax.f32 %v8000, 0.0
      %v8037 = vmax.f32 %v8001, 0.0
      %v8038 = vmax.f32 %v8002, 0.0
      %v8039 = vmax.f32 %v8003, 0.0
      %v8040 = vmax.f32 %v8004, 0.0
      %v8041 = vmax.f32 %v8005, 0.0
      %v8042 = vmax.f32 %v8006, 0.0
      %v8043 = vmax.f32 %v8007, 0.0
      %v8044 = vmax.f32 %v8008, 0.0
      %v8045 = vmax.f32 %v8009, 0.0
      %v8046 = vmax.f32 %v8010, 0.0
      %v8047 = vmax.f32 %v8011, 0.0
      %v8048 = vmax.f32 %v8012, 0.0
      %v8049 = vmax.f32 %v8013, 0.0
      %8050 = vst [vmem:[%s251] sm:$0xff] %v8014
      %8051 = vst [vmem:[%s251 + $0x8] sm:$0xff] %v8015
      %8052 = vst [vmem:[%s251 + $0x10] sm:$0xff] %v8016
      %8053 = vst [vmem:[%s251 + $0x18] sm:$0xff] %v8017
      %8054 = vst [vmem:[%s251 + $0x20] sm:$0xff] %v8018
      %8055 = vst [vmem:[%s251 + $0x28] sm:$0xff] %v8019
      %8056 = vst [vmem:[%s251 + $0x30] sm:$0xff] %v8020
      %8057 = vst [vmem:[%s251 + $0x38] sm:$0xff] %v8021
      %8058 = vst [vmem:[%s251 + $0x40] sm:$0xff] %v8022
      %8059 = vst [vmem:[%s251 + $0x48] sm:$0xff] %v8023
      %8060 = vst [vmem:[%s251 + $0x50] sm:$0xff] %v8024
      %8061 = vst [vmem:[%s251 + $0x58] sm:$0xff] %v8025
      %8062 = vst [vmem:[%s251 + $0x60] sm:$0xff] %v8026
      %8063 = vst [vmem:[%s251 + $0x68] sm:$0xff] %v8027
      %8064 = vst [vmem:[%s251 + $0x70] sm:$0xff] %v8028
      %8065 = vst [vmem:[%s251 + $0x78] sm:$0xff] %v8029
      %8066 = vst [vmem:[%s251 + $0x80] sm:$0xff] %v8030
      %8067 = vst [vmem:[%s251 + $0x88] sm:$0xff] %v8031
      %8068 = vst [vmem:[%s251 + $0x90] sm:$0xff] %v8032
      %8069 = vst [vmem:[%s251 + $0x98] sm:$0xff] %v8033
      %8070 = vst [vmem:[%s251 + $0xa0] sm:$0xff] %v8034
      %8071 = vst [vmem:[%s251 + $0xa8] sm:$0xff] %v8035
      %8072 = vst [vmem:[%s251 + $0xb0] sm:$0xff] %v8036
      %8073 = vst [vmem:[%s251 + $0xb8] sm:$0xff] %v8037
      %8074 = vst [vmem:[%s251 + $0xc0] sm:$0xff] %v8038
      %8075 = vst [vmem:[%s251 + $0xc8] sm:$0xff] %v8039
      %8076 = vst [vmem:[%s251 + $0xd0] sm:$0xff] %v8040
      %8077 = vst [vmem:[%s251 + $0xd8] sm:$0xff] %v8041
      %8078 = vst [vmem:[%s251 + $0xe0] sm:$0xff] %v8042
      %8079 = vst [vmem:[%s251 + $0xe8] sm:$0xff] %v8043
      %8080 = vst [vmem:[%s251 + $0xf0] sm:$0xff] %v8044
      %8081 = vst [vmem:[%s251 + $0xf8] sm:$0xff] %v8045
      %8082 = vst [vmem:[%s251 + $0x100] sm:$0xff] %v8046
      %8083 = vst [vmem:[%s251 + $0x108] sm:$0xff] %v8047
      %8084 = vst [vmem:[%s251 + $0x110] sm:$0xff] %v8048
      %8085 = vst [vmem:[%s251 + $0x118] sm:$0xff] %v8049
      %p8086 = scmp.lt.s32.totalorder %s17, 1
      %s8087 = scalar_select %p8086, %s17, 1
      %s8088 = smul.addr %s8087, 36
      %s8089 = smul.addr %s8088, 8
      %s8090 = scalar_lea.vmem %s6, %s8089
      // Predicated region
      $region49: #{basic_block_forward.1} parent=43 // pred_check
        %p8091 = pneg %p166
      $region50: #{basic_block_forward.1} parent=43 // pred_check_branch
        %8093 = sbr.rel (%p8091) target = $region52
      $region51: #{basic_block_forward.1} parent=43 // pred_region
        _
      $region52: #{basic_block_forward.1} parent=43 // pred_fallthru
        _
    $region44: #{basic_block_forward.1} parent=5 // pred_fallthru
      _
    %p8094 = scmp.le.s32.totalorder 2, %s12
    // Predicated region
    $region53: #{basic_block_forward.1} parent=5 // pred_check
      %p8095 = pneg %p8094
    $region54: #{basic_block_forward.1} parent=5 // pred_check_branch
      %8097 = sbr.rel (%p8095) target = $region56
    $region55: #{basic_block_forward.1} parent=5 // pred_region
      %s8098 = ssub.s32 %s12, 2
      // Predicated region
      $region57: #{basic_block_forward.1} parent=55 // pred_check
        %p8099 = pneg %p172
      $region58: #{basic_block_forward.1} parent=55 // pred_check_branch
        %8101 = sbr.rel (%p8099) target = $region60
      $region59: #{basic_block_forward.1} parent=55 // pred_region
        %p8102 = scmp.lt.s32.totalorder %s18, 1
        %s8103 = scalar_select %p8102, %s18, 1
        %s8104 = smul.addr %s8103, 36
        %s8105 = smul.addr %s8104, 8
        %s8106 = scalar_lea.vmem %s6, %s8105
      $region60: #{basic_block_forward.1} parent=55 // pred_fallthru
        _
    $region56: #{basic_block_forward.1} parent=5 // pred_fallthru
      _
  $region6: #{basic_block_forward.1} parent=0 // loop_footer
    %s16 = sadd.s32 1, %s12
  $region7: #{basic_block_forward.1} parent=0 // loop_footer_branch
    %11 = sbr.rel target = $region3
  $region8: #{basic_block_forward.1} parent=0 // loop_exit
    _

</llo_original>
